<compile_context>
chip_gen: v5e
topology: v5e:2x2
jax: 0.10.0
libtpu: 0.0.40
codegen_flags: <defaults>
</compile_context>

<pallas_src>
from collections import namedtuple

import numpy as np
import jax
import jax.numpy as jnp
from jax import lax
from jax.experimental import pallas as pl
from jax.experimental.pallas import tpu as pltpu

BN_EPS = 1e-5

# (cin, cout, kernel, stride, followed_by_bn_relu)
CONV_CFG = [
    (1, 3, 5, 2, True),
    (3, 6, 5, 2, True),
    (6, 9, 5, 2, True),
    (9, 12, 5, 1, True),
    (12, 18, 5, 1, False),
]

LayerDims = namedtuple(
    "LayerDims", "cin cout k stride has_bn h w h_pad oh ow oh_pad")


def _pad8(n):
    return ((n + 7) // 8) * 8


def _layer_geometry(h0, w0):
    dims = []
    h, w, h_pad = h0, w0, _pad8(h0)
    for (cin, cout, k, stride, has_bn) in CONV_CFG:
        oh = (h - k) // stride + 1
        ow = (w - k) // stride + 1
        oh_pad = _pad8(oh)
        dims.append(LayerDims(cin, cout, k, stride, has_bn,
                              h, w, h_pad, oh, ow, oh_pad))
        h, w, h_pad = oh, ow, oh_pad
    return dims


# ----------------------- parameters & operand preparation -------------------

def init_params(key):
    """Deterministic synthetic parameters with PyTorch layouts."""
    params = {"conv": [], "linear": None}
    for (cin, cout, k, _, has_bn) in CONV_CFG:
        key, kw_, kb_, kg_, kbt_ = jax.random.split(key, 5)
        w = 0.1 * jax.random.normal(kw_, (cout, cin, k, k), jnp.float32)
        b = 0.1 * jax.random.normal(kb_, (cout,), jnp.float32)
        if has_bn:
            gamma = 1.0 + 0.1 * jax.random.normal(kg_, (cout,), jnp.float32)
            beta = 0.1 * jax.random.normal(kbt_, (cout,), jnp.float32)
        else:
            gamma = beta = None
        params["conv"].append((w, b, gamma, beta))
    key, kw_, kb_ = jax.random.split(key, 3)
    lw = 0.05 * jax.random.normal(kw_, (1, 252), jnp.float32)   # (out, in)
    lb = 0.05 * jax.random.normal(kb_, (1,), jnp.float32)
    params["linear"] = (lw, lb)
    return params


def _conv_matrix(w, oh, oh_pad, h_in, h_in_pad, stride):
    """M_cat[co*oh_pad + o, (kj*cin + c)*h_in_pad + stride*o + ki] = w[co,c,ki,kj].

    Rows with o >= oh are zero (sublane padding) so the conv output's padded
    rows are exactly zero.
    """
    w = np.asarray(w, np.float32)
    cout, cin, k, _ = w.shape
    m = np.zeros((cout * oh_pad, k * cin * h_in_pad), np.float32)
    sh = (cout, oh, cin, k, k)
    co = np.arange(cout).reshape(cout, 1, 1, 1, 1)
    o = np.arange(oh).reshape(1, oh, 1, 1, 1)
    c = np.arange(cin).reshape(1, 1, cin, 1, 1)
    ki = np.arange(k).reshape(1, 1, 1, k, 1)
    kj = np.arange(k).reshape(1, 1, 1, 1, k)
    rows = np.broadcast_to(co * oh_pad + o, sh).ravel()
    cols = np.broadcast_to((kj * cin + c) * h_in_pad + stride * o + ki, sh).ravel()
    vals = np.broadcast_to(w[:, None, :, :, :], sh).ravel()
    m[rows, cols] = vals
    return m


def _select_matrices(k, w_in, ow, stride, n_img):
    """S[kj, n*w_in + stride*o + kj, n*ow + o] = 1 (block-diagonal over batch)."""
    s = np.zeros((k, n_img * w_in, n_img * ow), np.float32)
    n = np.arange(n_img).reshape(n_img, 1)
    o = np.arange(ow).reshape(1, ow)
    cols = (n * ow + o).ravel()
    for kj in range(k):
        rows = (n * w_in + stride * o + kj).ravel()
        s[kj, rows, cols] = 1.0
    return s


def prepare_operands(params, x_shape):
    """All weight-side preprocessing, hoisted out of the forward path."""
    n_img, _, h0, w0 = x_shape
    dims = _layer_geometry(h0, w0)
    ops = {"m": [], "s": [], "r": [], "rtg": [], "beta_row": []}

    for d, (w, b, g, bt) in zip(dims, params["conv"]):
        # bf16 matmul operands (exact for the 0/1 S; weights lose ~0.4% rel).
        ops["m"].append(jnp.asarray(
            _conv_matrix(w, d.oh, d.oh_pad, d.h, d.h_pad, d.stride), jnp.bfloat16))
        ops["s"].append(jnp.asarray(
            _select_matrices(d.k, d.w, d.ow, d.stride, n_img), jnp.bfloat16))

        if d.has_bn:
            rows = d.cout * d.oh_pad
            r = np.zeros((d.cout, rows), np.float32)      # channel indicator
            rtg = np.zeros((rows, d.cout), np.float32)    # indicator * gamma
            brow = np.zeros((rows, 1), np.float32)        # per-row beta
            g_np = np.asarray(g, np.float32)
            bt_np = np.asarray(bt, np.float32)
            for co in range(d.cout):
                sl = slice(co * d.oh_pad, co * d.oh_pad + d.oh)   # valid rows only
                r[co, sl] = 1.0
                rtg[sl, co] = g_np[co]
                brow[sl, 0] = bt_np[co]
            ops["r"].append(jnp.asarray(r))
            ops["rtg"].append(jnp.asarray(rtg))
            ops["beta_row"].append(jnp.asarray(brow))
        else:
            # NOTE: conv1-4 biases are intentionally unused: adding a per-channel
            # constant before training-mode BatchNorm is a no-op.
            ops["r"].append(None)
            ops["rtg"].append(None)
            ops["beta_row"].append(None)

    # Linear(252,1): bake the NCHW flatten order + row padding into lw_tiled,
    # build the per-image lane group-selection matrix G, and fold conv5's bias
    # into the linear bias.
    d5 = dims[-1]
    lw, lb = params["linear"]
    lw_np = np.asarray(lw, np.float32).reshape(d5.cout, d5.oh, d5.ow)
    lw_pad = np.zeros((d5.cout * d5.oh_pad, d5.ow), np.float32)
    for co in range(d5.cout):
        lw_pad[co * d5.oh_pad: co * d5.oh_pad + d5.oh, :] = lw_np[co]
    lw_tiled = np.tile(lw_pad, (1, n_img))                     # (rows, N*OW5)
    g_sel = np.zeros((n_img * d5.ow, n_img), np.float32)       # lane groups -> image
    for n in range(n_img):
        g_sel[n * d5.ow:(n + 1) * d5.ow, n] = 1.0
    b5 = np.asarray(params["conv"][-1][1], np.float32)
    lb_eff = float(np.asarray(lb)[0] + np.sum(lw_np * b5[:, None, None]))

    ops["lw"] = jnp.asarray(lw_tiled)
    ops["g"] = jnp.asarray(g_sel)
    ops["lb"] = jnp.asarray([[lb_eff]], jnp.float32)
    return ops


# ------------------------------- fused kernel --------------------------------

def eye_classifier_forward(ops, x_nchw):
    n_img, _, h0, w0 = x_nchw.shape
    dims = _layer_geometry(h0, w0)

    # Only trace-time data-path op: lay the (N,1,H,W) input out as the
    # lane-dense, sublane-padded slab A[h, n*W + w].
    x_slab = jnp.transpose(x_nchw[:, 0].astype(jnp.float32), (1, 0, 2))
    x_slab = x_slab.reshape(h0, n_img * w0)
    x_slab = jnp.pad(x_slab, ((0, dims[0].h_pad - h0), (0, 0)))

    def kernel(*refs):
        o_ref = refs[-1]
        it = iter(refs[:-1])
        x_ref = next(it)
        per_layer = []
        for d in dims:
            m_ref, s_ref = next(it), next(it)
            if d.has_bn:
                per_layer.append((m_ref, s_ref, next(it), next(it), next(it)))
            else:
                per_layer.append((m_ref, s_ref, None, None, None))
        lw_ref, g_ref, lb_ref = next(it), next(it), next(it)

        act = x_ref[...]                                    # f32 (Cin*H_pad, N*W)
        for d, (m_ref, s_ref, r_ref, rtg_ref, brow_ref) in zip(dims, per_layer):
            # ---- Conv2d: k column-selection matmuls feeding ONE contraction
            #      y = M_cat @ vstack_kj(A @ S_kj),  K = k*Cin*H_pad.
            act_bf = act.astype(jnp.bfloat16)
            cols = [jnp.dot(act_bf, s_ref[kj], preferred_element_type=jnp.float32)
                    for kj in range(d.k)]
            # blocks are Cin*H_pad (multiple of 8) rows each -> aligned concat
            b_stack = jnp.concatenate(cols, axis=0).astype(jnp.bfloat16)
            y = jnp.dot(m_ref[...], b_stack,
                        preferred_element_type=jnp.float32)  # (Cout*OH_pad, N*OW)

            if d.has_bn:
                # ---- training-mode BatchNorm2d + ReLU, matrix-form stats (f32)
                inv_cnt = 1.0 / float(n_img * d.oh * d.ow)
                rowsum = jnp.sum(y, axis=1, keepdims=True)          # (rows, 1)
                rowsq = jnp.sum(y * y, axis=1, keepdims=True)       # (rows, 1)
                s1 = jnp.dot(r_ref[...], rowsum,
                             preferred_element_type=jnp.float32)    # (cout, 1)
                s2 = jnp.dot(r_ref[...], rowsq,
                             preferred_element_type=jnp.float32)
                mean = s1 * inv_cnt
                var = jnp.maximum(s2 * inv_cnt - mean * mean, 0.0)
                inv_std = lax.rsqrt(var + BN_EPS)                   # (cout, 1)
                row_scale = jnp.dot(rtg_ref[...], inv_std,
                                    preferred_element_type=jnp.float32)
                row_shift = brow_ref[...] - jnp.dot(
                    rtg_ref[...], mean * inv_std,
                    preferred_element_type=jnp.float32)
                # padded rows have row_scale = row_shift = 0 -> stay exactly 0
                act = jnp.maximum(y * row_scale + row_shift, 0.0)
            else:
                act = y     # conv5: its bias is folded into lb_ref

        # ---- Flatten (NCHW order baked into lw_tiled) + Linear + Sigmoid ----
        elem = act * lw_ref[...]                            # (rows, N*OW5)
        per_img = jnp.dot(elem, g_ref[...],
                          preferred_element_type=jnp.float32)        # (rows, N)
        logits = jnp.sum(per_img, axis=0, keepdims=True) + lb_ref[...]  # (1, N)
        o_ref[...] = jax.nn.sigmoid(logits)

    args = [x_slab]
    for li, d in enumerate(dims):
        args += [ops["m"][li], ops["s"][li]]
        if d.has_bn:
            args += [ops["r"][li], ops["rtg"][li], ops["beta_row"][li]]
    args += [ops["lw"], ops["g"], ops["lb"]]

    # TODO(synk): the v7x batch-parallel grid from the review is NOT applied:
    # training-mode BatchNorm couples statistics across the batch, so a
    # per-image grid step would change the math; doing it correctly needs a
    # cross-TensorCore stat exchange (CMEM + barrier), out of scope here.
    vmem = pl.BlockSpec(memory_space=pltpu.MemorySpace.VMEM)
    out = pl.pallas_call(
        kernel,
        out_shape=jax.ShapeDtypeStruct((1, n_img), jnp.float32),
        in_specs=[vmem] * len(args),
        out_specs=vmem,
    )(*args)
    return out.reshape(n_img, 1)


# ------------------------------ pure-JAX reference ---------------------------

def reference_forward(params, x):
    """f32 reference matching the PyTorch module (training-mode BatchNorm)."""
    act = x.astype(jnp.float32)
    for (cin, cout, k, stride, has_bn), (w, b, g, bt) in zip(CONV_CFG, params["conv"]):
        act = lax.conv_general_dilated(
            act, w, window_strides=(stride, stride), padding="VALID",
            dimension_numbers=("NCHW", "OIHW", "NCHW"),
            precision=lax.Precision.HIGHEST)
        act = act + b.reshape(1, cout, 1, 1)
        if has_bn:
            mean = jnp.mean(act, axis=(0, 2, 3), keepdims=True)
            var = jnp.mean(jnp.square(act - mean), axis=(0, 2, 3), keepdims=True)
            act = (act - mean) * lax.rsqrt(var + BN_EPS)
            act = act * g.reshape(1, cout, 1, 1) + bt.reshape(1, cout, 1, 1)
            act = jnp.maximum(act, 0.0)
    lw, lb = params["linear"]
    flat = act.reshape(act.shape[0], -1)
    logits = jnp.dot(flat, lw.T, precision=lax.Precision.HIGHEST) + lb
    return jax.nn.sigmoid(logits)


if __name__ == "__main__":
    key = jax.random.PRNGKey(0)
    kp, kx = jax.random.split(key)
    params = init_params(kp)
    # Smallest spatial size compatible with Linear(252, 1):
    # 101x141 -> 49x69 -> 23x33 -> 10x15 -> 6x11 -> 2x7, and 18*2*7 = 252.
    x = jax.random.normal(kx, (2, 1, 101, 141), jnp.float32)

    ops = prepare_operands(params, x.shape)        # one-time weight-side prep
    out = jax.jit(eye_classifier_forward)(ops, x)
    out = jax.block_until_ready(out)

    ref = jax.block_until_ready(reference_forward(params, x))

    assert out.shape == (2, 1), out.shape
    assert bool(jnp.all(jnp.isfinite(out)))
    assert bool(jnp.all((out >= 0.0) & (out <= 1.0)))
    max_err = float(jnp.max(jnp.abs(out - ref)))
    assert max_err < 5e-2, f"kernel vs reference max abs diff = {max_err}"
    print("KERNEL_OK")
</pallas_src>

<mosaic_0001>
module attributes {stable_mosaic.version = 11 : i64} {
  func.func @kernel(%arg0: memref<104x282xf32, #tpu.memory_space<vmem>>, %arg1: memref<168x520xbf16, #tpu.memory_space<vmem>>, %arg2: memref<5x282x138xbf16, #tpu.memory_space<vmem>>, %arg3: memref<3x168xf32, #tpu.memory_space<vmem>>, %arg4: memref<168x3xf32, #tpu.memory_space<vmem>>, %arg5: memref<168x1xf32, #tpu.memory_space<vmem>>, %arg6: memref<144x840xbf16, #tpu.memory_space<vmem>>, %arg7: memref<5x138x66xbf16, #tpu.memory_space<vmem>>, %arg8: memref<6x144xf32, #tpu.memory_space<vmem>>, %arg9: memref<144x6xf32, #tpu.memory_space<vmem>>, %arg10: memref<144x1xf32, #tpu.memory_space<vmem>>, %arg11: memref<144x720xbf16, #tpu.memory_space<vmem>>, %arg12: memref<5x66x30xbf16, #tpu.memory_space<vmem>>, %arg13: memref<9x144xf32, #tpu.memory_space<vmem>>, %arg14: memref<144x9xf32, #tpu.memory_space<vmem>>, %arg15: memref<144x1xf32, #tpu.memory_space<vmem>>, %arg16: memref<96x720xbf16, #tpu.memory_space<vmem>>, %arg17: memref<5x30x22xbf16, #tpu.memory_space<vmem>>, %arg18: memref<12x96xf32, #tpu.memory_space<vmem>>, %arg19: memref<96x12xf32, #tpu.memory_space<vmem>>, %arg20: memref<96x1xf32, #tpu.memory_space<vmem>>, %arg21: memref<144x480xbf16, #tpu.memory_space<vmem>>, %arg22: memref<5x22x14xbf16, #tpu.memory_space<vmem>>, %arg23: memref<144x14xf32, #tpu.memory_space<vmem>>, %arg24: memref<14x2xf32, #tpu.memory_space<vmem>>, %arg25: memref<1x1xf32, #tpu.memory_space<vmem>>, %arg26: memref<1x2xf32, #tpu.memory_space<vmem>>) attributes {dimension_semantics = [], scalar_prefetch = 0 : i64, scratch_operands = 0 : i64, tpu.core_type = #tpu.core_type<tc>} {
    %c0 = arith.constant 0 : index
    %c0_0 = arith.constant 0 : index
    %0 = vector.load %arg0[%c0, %c0_0] : memref<104x282xf32, #tpu.memory_space<vmem>>, vector<104x282xf32>
    %1 = arith.truncf %0 : vector<104x282xf32> to vector<104x282xbf16>
    %c0_1 = arith.constant 0 : index
    %c0_2 = arith.constant 0 : index
    %c0_3 = arith.constant 0 : index
    %2 = vector.load %arg2[%c0_1, %c0_2, %c0_3] : memref<5x282x138xbf16, #tpu.memory_space<vmem>>, vector<1x282x138xbf16>
    %3 = vector.shape_cast %2 : vector<1x282x138xbf16> to vector<282x138xbf16>
    %cst = arith.constant dense<0.000000e+00> : vector<104x138xf32>
    %4 = tpu.matmul %1, %3, %cst {dimension_numbers = #tpu.dot_dimension_numbers<[1], [0], [0], [1], [0, 0, 1, 1], [], []>} : vector<104x282xbf16>, vector<282x138xbf16>, vector<104x138xf32> -> vector<104x138xf32>
    %c1 = arith.constant 1 : index
    %c0_4 = arith.constant 0 : index
    %c0_5 = arith.constant 0 : index
    %5 = vector.load %arg2[%c1, %c0_4, %c0_5] : memref<5x282x138xbf16, #tpu.memory_space<vmem>>, vector<1x282x138xbf16>
    %6 = vector.shape_cast %5 : vector<1x282x138xbf16> to vector<282x138xbf16>
    %cst_6 = arith.constant dense<0.000000e+00> : vector<104x138xf32>
    %7 = tpu.matmul %1, %6, %cst_6 {dimension_numbers = #tpu.dot_dimension_numbers<[1], [0], [0], [1], [0, 0, 1, 1], [], []>} : vector<104x282xbf16>, vector<282x138xbf16>, vector<104x138xf32> -> vector<104x138xf32>
    %c2 = arith.constant 2 : index
    %c0_7 = arith.constant 0 : index
    %c0_8 = arith.constant 0 : index
    %8 = vector.load %arg2[%c2, %c0_7, %c0_8] : memref<5x282x138xbf16, #tpu.memory_space<vmem>>, vector<1x282x138xbf16>
    %9 = vector.shape_cast %8 : vector<1x282x138xbf16> to vector<282x138xbf16>
    %cst_9 = arith.constant dense<0.000000e+00> : vector<104x138xf32>
    %10 = tpu.matmul %1, %9, %cst_9 {dimension_numbers = #tpu.dot_dimension_numbers<[1], [0], [0], [1], [0, 0, 1, 1], [], []>} : vector<104x282xbf16>, vector<282x138xbf16>, vector<104x138xf32> -> vector<104x138xf32>
    %c3 = arith.constant 3 : index
    %c0_10 = arith.constant 0 : index
    %c0_11 = arith.constant 0 : index
    %11 = vector.load %arg2[%c3, %c0_10, %c0_11] : memref<5x282x138xbf16, #tpu.memory_space<vmem>>, vector<1x282x138xbf16>
    %12 = vector.shape_cast %11 : vector<1x282x138xbf16> to vector<282x138xbf16>
    %cst_12 = arith.constant dense<0.000000e+00> : vector<104x138xf32>
    %13 = tpu.matmul %1, %12, %cst_12 {dimension_numbers = #tpu.dot_dimension_numbers<[1], [0], [0], [1], [0, 0, 1, 1], [], []>} : vector<104x282xbf16>, vector<282x138xbf16>, vector<104x138xf32> -> vector<104x138xf32>
    %c4 = arith.constant 4 : index
    %c0_13 = arith.constant 0 : index
    %c0_14 = arith.constant 0 : index
    %14 = vector.load %arg2[%c4, %c0_13, %c0_14] : memref<5x282x138xbf16, #tpu.memory_space<vmem>>, vector<1x282x138xbf16>
    %15 = vector.shape_cast %14 : vector<1x282x138xbf16> to vector<282x138xbf16>
    %cst_15 = arith.constant dense<0.000000e+00> : vector<104x138xf32>
    %16 = tpu.matmul %1, %15, %cst_15 {dimension_numbers = #tpu.dot_dimension_numbers<[1], [0], [0], [1], [0, 0, 1, 1], [], []>} : vector<104x282xbf16>, vector<282x138xbf16>, vector<104x138xf32> -> vector<104x138xf32>
    %17 = tpu.concatenate %4, %7, %10, %13, %16 in 0 : vector<104x138xf32>, vector<104x138xf32>, vector<104x138xf32>, vector<104x138xf32>, vector<104x138xf32> -> vector<520x138xf32>
    %18 = arith.truncf %17 : vector<520x138xf32> to vector<520x138xbf16>
    %c0_16 = arith.constant 0 : index
    %c0_17 = arith.constant 0 : index
    %19 = vector.load %arg1[%c0_16, %c0_17] : memref<168x520xbf16, #tpu.memory_space<vmem>>, vector<168x520xbf16>
    %cst_18 = arith.constant dense<0.000000e+00> : vector<168x138xf32>
    %20 = tpu.matmul %19, %18, %cst_18 {dimension_numbers = #tpu.dot_dimension_numbers<[1], [0], [0], [1], [0, 0, 1, 1], [], []>} : vector<168x520xbf16>, vector<520x138xbf16>, vector<168x138xf32> -> vector<168x138xf32>
    %cst_19 = arith.constant dense<0.000000e+00> : vector<168xf32>
    %21 = vector.multi_reduction <add>, %20, %cst_19 [1] : vector<168x138xf32> to vector<168xf32>
    %22 = vector.shape_cast %21 : vector<168xf32> to vector<168x1xf32>
    %23 = arith.mulf %20, %20 : vector<168x138xf32>
    %cst_20 = arith.constant dense<0.000000e+00> : vector<168xf32>
    %24 = vector.multi_reduction <add>, %23, %cst_20 [1] : vector<168x138xf32> to vector<168xf32>
    %25 = vector.shape_cast %24 : vector<168xf32> to vector<168x1xf32>
    %c0_21 = arith.constant 0 : index
    %c0_22 = arith.constant 0 : index
    %26 = vector.load %arg3[%c0_21, %c0_22] : memref<3x168xf32, #tpu.memory_space<vmem>>, vector<3x168xf32>
    %cst_23 = arith.constant dense<0.000000e+00> : vector<3x1xf32>
    %27 = tpu.matmul %26, %22, %cst_23 {dimension_numbers = #tpu.dot_dimension_numbers<[1], [0], [0], [1], [0, 0, 1, 1], [], []>} : vector<3x168xf32>, vector<168x1xf32>, vector<3x1xf32> -> vector<3x1xf32>
    %c0_24 = arith.constant 0 : index
    %c0_25 = arith.constant 0 : index
    %28 = vector.load %arg3[%c0_24, %c0_25] : memref<3x168xf32, #tpu.memory_space<vmem>>, vector<3x168xf32>
    %cst_26 = arith.constant dense<0.000000e+00> : vector<3x1xf32>
    %29 = tpu.matmul %28, %25, %cst_26 {dimension_numbers = #tpu.dot_dimension_numbers<[1], [0], [0], [1], [0, 0, 1, 1], [], []>} : vector<3x168xf32>, vector<168x1xf32>, vector<3x1xf32> -> vector<3x1xf32>
    %cst_27 = arith.constant 1.47885235E-4 : f32
    %30 = vector.broadcast %cst_27 : f32 to vector<3x1xf32>
    %31 = arith.mulf %27, %30 : vector<3x1xf32>
    %cst_28 = arith.constant 1.47885235E-4 : f32
    %32 = vector.broadcast %cst_28 : f32 to vector<3x1xf32>
    %33 = arith.mulf %29, %32 : vector<3x1xf32>
    %34 = arith.mulf %31, %31 : vector<3x1xf32>
    %35 = arith.subf %33, %34 : vector<3x1xf32>
    %cst_29 = arith.constant 0.000000e+00 : f32
    %36 = vector.broadcast %cst_29 : f32 to vector<3x1xf32>
    %37 = arith.maximumf %35, %36 : vector<3x1xf32>
    %cst_30 = arith.constant 9.99999974E-6 : f32
    %38 = vector.broadcast %cst_30 : f32 to vector<3x1xf32>
    %39 = arith.addf %37, %38 : vector<3x1xf32>
    %40 = math.rsqrt %39 : vector<3x1xf32>
    %c0_31 = arith.constant 0 : index
    %c0_32 = arith.constant 0 : index
    %41 = vector.load %arg4[%c0_31, %c0_32] : memref<168x3xf32, #tpu.memory_space<vmem>>, vector<168x3xf32>
    %cst_33 = arith.constant dense<0.000000e+00> : vector<168x1xf32>
    %42 = tpu.matmul %41, %40, %cst_33 {dimension_numbers = #tpu.dot_dimension_numbers<[1], [0], [0], [1], [0, 0, 1, 1], [], []>} : vector<168x3xf32>, vector<3x1xf32>, vector<168x1xf32> -> vector<168x1xf32>
    %c0_34 = arith.constant 0 : index
    %c0_35 = arith.constant 0 : index
    %43 = vector.load %arg5[%c0_34, %c0_35] : memref<168x1xf32, #tpu.memory_space<vmem>>, vector<168x1xf32>
    %c0_36 = arith.constant 0 : index
    %c0_37 = arith.constant 0 : index
    %44 = vector.load %arg4[%c0_36, %c0_37] : memref<168x3xf32, #tpu.memory_space<vmem>>, vector<168x3xf32>
    %45 = arith.mulf %31, %40 : vector<3x1xf32>
    %cst_38 = arith.constant dense<0.000000e+00> : vector<168x1xf32>
    %46 = tpu.matmul %44, %45, %cst_38 {dimension_numbers = #tpu.dot_dimension_numbers<[1], [0], [0], [1], [0, 0, 1, 1], [], []>} : vector<168x3xf32>, vector<3x1xf32>, vector<168x1xf32> -> vector<168x1xf32>
    %47 = arith.subf %43, %46 : vector<168x1xf32>
    %48 = vector.broadcast %42 : vector<168x1xf32> to vector<168x138xf32>
    %49 = arith.mulf %20, %48 : vector<168x138xf32>
    %50 = vector.broadcast %47 : vector<168x1xf32> to vector<168x138xf32>
    %51 = arith.addf %49, %50 : vector<168x138xf32>
    %cst_39 = arith.constant 0.000000e+00 : f32
    %52 = vector.broadcast %cst_39 : f32 to vector<168x138xf32>
    %53 = arith.maximumf %51, %52 : vector<168x138xf32>
    %54 = arith.truncf %53 : vector<168x138xf32> to vector<168x138xbf16>
    %c0_40 = arith.constant 0 : index
    %c0_41 = arith.constant 0 : index
    %c0_42 = arith.constant 0 : index
    %55 = vector.load %arg7[%c0_40, %c0_41, %c0_42] : memref<5x138x66xbf16, #tpu.memory_space<vmem>>, vector<1x138x66xbf16>
    %56 = vector.shape_cast %55 : vector<1x138x66xbf16> to vector<138x66xbf16>
    %cst_43 = arith.constant dense<0.000000e+00> : vector<168x66xf32>
    %57 = tpu.matmul %54, %56, %cst_43 {dimension_numbers = #tpu.dot_dimension_numbers<[1], [0], [0], [1], [0, 0, 1, 1], [], []>} : vector<168x138xbf16>, vector<138x66xbf16>, vector<168x66xf32> -> vector<168x66xf32>
    %c1_44 = arith.constant 1 : index
    %c0_45 = arith.constant 0 : index
    %c0_46 = arith.constant 0 : index
    %58 = vector.load %arg7[%c1_44, %c0_45, %c0_46] : memref<5x138x66xbf16, #tpu.memory_space<vmem>>, vector<1x138x66xbf16>
    %59 = vector.shape_cast %58 : vector<1x138x66xbf16> to vector<138x66xbf16>
    %cst_47 = arith.constant dense<0.000000e+00> : vector<168x66xf32>
    %60 = tpu.matmul %54, %59, %cst_47 {dimension_numbers = #tpu.dot_dimension_numbers<[1], [0], [0], [1], [0, 0, 1, 1], [], []>} : vector<168x138xbf16>, vector<138x66xbf16>, vector<168x66xf32> -> vector<168x66xf32>
    %c2_48 = arith.constant 2 : index
    %c0_49 = arith.constant 0 : index
    %c0_50 = arith.constant 0 : index
    %61 = vector.load %arg7[%c2_48, %c0_49, %c0_50] : memref<5x138x66xbf16, #tpu.memory_space<vmem>>, vector<1x138x66xbf16>
    %62 = vector.shape_cast %61 : vector<1x138x66xbf16> to vector<138x66xbf16>
    %cst_51 = arith.constant dense<0.000000e+00> : vector<168x66xf32>
    %63 = tpu.matmul %54, %62, %cst_51 {dimension_numbers = #tpu.dot_dimension_numbers<[1], [0], [0], [1], [0, 0, 1, 1], [], []>} : vector<168x138xbf16>, vector<138x66xbf16>, vector<168x66xf32> -> vector<168x66xf32>
    %c3_52 = arith.constant 3 : index
    %c0_53 = arith.constant 0 : index
    %c0_54 = arith.constant 0 : index
    %64 = vector.load %arg7[%c3_52, %c0_53, %c0_54] : memref<5x138x66xbf16, #tpu.memory_space<vmem>>, vector<1x138x66xbf16>
    %65 = vector.shape_cast %64 : vector<1x138x66xbf16> to vector<138x66xbf16>
    %cst_55 = arith.constant dense<0.000000e+00> : vector<168x66xf32>
    %66 = tpu.matmul %54, %65, %cst_55 {dimension_numbers = #tpu.dot_dimension_numbers<[1], [0], [0], [1], [0, 0, 1, 1], [], []>} : vector<168x138xbf16>, vector<138x66xbf16>, vector<168x66xf32> -> vector<168x66xf32>
    %c4_56 = arith.constant 4 : index
    %c0_57 = arith.constant 0 : index
    %c0_58 = arith.constant 0 : index
    %67 = vector.load %arg7[%c4_56, %c0_57, %c0_58] : memref<5x138x66xbf16, #tpu.memory_space<vmem>>, vector<1x138x66xbf16>
    %68 = vector.shape_cast %67 : vector<1x138x66xbf16> to vector<138x66xbf16>
    %cst_59 = arith.constant dense<0.000000e+00> : vector<168x66xf32>
    %69 = tpu.matmul %54, %68, %cst_59 {dimension_numbers = #tpu.dot_dimension_numbers<[1], [0], [0], [1], [0, 0, 1, 1], [], []>} : vector<168x138xbf16>, vector<138x66xbf16>, vector<168x66xf32> -> vector<168x66xf32>
    %70 = tpu.concatenate %57, %60, %63, %66, %69 in 0 : vector<168x66xf32>, vector<168x66xf32>, vector<168x66xf32>, vector<168x66xf32>, vector<168x66xf32> -> vector<840x66xf32>
    %71 = arith.truncf %70 : vector<840x66xf32> to vector<840x66xbf16>
    %c0_60 = arith.constant 0 : index
    %c0_61 = arith.constant 0 : index
    %72 = vector.load %arg6[%c0_60, %c0_61] : memref<144x840xbf16, #tpu.memory_space<vmem>>, vector<144x840xbf16>
    %cst_62 = arith.constant dense<0.000000e+00> : vector<144x66xf32>
    %73 = tpu.matmul %72, %71, %cst_62 {dimension_numbers = #tpu.dot_dimension_numbers<[1], [0], [0], [1], [0, 0, 1, 1], [], []>} : vector<144x840xbf16>, vector<840x66xbf16>, vector<144x66xf32> -> vector<144x66xf32>
    %cst_63 = arith.constant dense<0.000000e+00> : vector<144xf32>
    %74 = vector.multi_reduction <add>, %73, %cst_63 [1] : vector<144x66xf32> to vector<144xf32>
    %75 = vector.shape_cast %74 : vector<144xf32> to vector<144x1xf32>
    %76 = arith.mulf %73, %73 : vector<144x66xf32>
    %cst_64 = arith.constant dense<0.000000e+00> : vector<144xf32>
    %77 = vector.multi_reduction <add>, %76, %cst_64 [1] : vector<144x66xf32> to vector<144xf32>
    %78 = vector.shape_cast %77 : vector<144xf32> to vector<144x1xf32>
    %c0_65 = arith.constant 0 : index
    %c0_66 = arith.constant 0 : index
    %79 = vector.load %arg8[%c0_65, %c0_66] : memref<6x144xf32, #tpu.memory_space<vmem>>, vector<6x144xf32>
    %cst_67 = arith.constant dense<0.000000e+00> : vector<6x1xf32>
    %80 = tpu.matmul %79, %75, %cst_67 {dimension_numbers = #tpu.dot_dimension_numbers<[1], [0], [0], [1], [0, 0, 1, 1], [], []>} : vector<6x144xf32>, vector<144x1xf32>, vector<6x1xf32> -> vector<6x1xf32>
    %c0_68 = arith.constant 0 : index
    %c0_69 = arith.constant 0 : index
    %81 = vector.load %arg8[%c0_68, %c0_69] : memref<6x144xf32, #tpu.memory_space<vmem>>, vector<6x144xf32>
    %cst_70 = arith.constant dense<0.000000e+00> : vector<6x1xf32>
    %82 = tpu.matmul %81, %78, %cst_70 {dimension_numbers = #tpu.dot_dimension_numbers<[1], [0], [0], [1], [0, 0, 1, 1], [], []>} : vector<6x144xf32>, vector<144x1xf32>, vector<6x1xf32> -> vector<6x1xf32>
    %cst_71 = arith.constant 6.58761535E-4 : f32
    %83 = vector.broadcast %cst_71 : f32 to vector<6x1xf32>
    %84 = arith.mulf %80, %83 : vector<6x1xf32>
    %cst_72 = arith.constant 6.58761535E-4 : f32
    %85 = vector.broadcast %cst_72 : f32 to vector<6x1xf32>
    %86 = arith.mulf %82, %85 : vector<6x1xf32>
    %87 = arith.mulf %84, %84 : vector<6x1xf32>
    %88 = arith.subf %86, %87 : vector<6x1xf32>
    %cst_73 = arith.constant 0.000000e+00 : f32
    %89 = vector.broadcast %cst_73 : f32 to vector<6x1xf32>
    %90 = arith.maximumf %88, %89 : vector<6x1xf32>
    %cst_74 = arith.constant 9.99999974E-6 : f32
    %91 = vector.broadcast %cst_74 : f32 to vector<6x1xf32>
    %92 = arith.addf %90, %91 : vector<6x1xf32>
    %93 = math.rsqrt %92 : vector<6x1xf32>
    %c0_75 = arith.constant 0 : index
    %c0_76 = arith.constant 0 : index
    %94 = vector.load %arg9[%c0_75, %c0_76] : memref<144x6xf32, #tpu.memory_space<vmem>>, vector<144x6xf32>
    %cst_77 = arith.constant dense<0.000000e+00> : vector<144x1xf32>
    %95 = tpu.matmul %94, %93, %cst_77 {dimension_numbers = #tpu.dot_dimension_numbers<[1], [0], [0], [1], [0, 0, 1, 1], [], []>} : vector<144x6xf32>, vector<6x1xf32>, vector<144x1xf32> -> vector<144x1xf32>
    %c0_78 = arith.constant 0 : index
    %c0_79 = arith.constant 0 : index
    %96 = vector.load %arg10[%c0_78, %c0_79] : memref<144x1xf32, #tpu.memory_space<vmem>>, vector<144x1xf32>
    %c0_80 = arith.constant 0 : index
    %c0_81 = arith.constant 0 : index
    %97 = vector.load %arg9[%c0_80, %c0_81] : memref<144x6xf32, #tpu.memory_space<vmem>>, vector<144x6xf32>
    %98 = arith.mulf %84, %93 : vector<6x1xf32>
    %cst_82 = arith.constant dense<0.000000e+00> : vector<144x1xf32>
    %99 = tpu.matmul %97, %98, %cst_82 {dimension_numbers = #tpu.dot_dimension_numbers<[1], [0], [0], [1], [0, 0, 1, 1], [], []>} : vector<144x6xf32>, vector<6x1xf32>, vector<144x1xf32> -> vector<144x1xf32>
    %100 = arith.subf %96, %99 : vector<144x1xf32>
    %101 = vector.broadcast %95 : vector<144x1xf32> to vector<144x66xf32>
    %102 = arith.mulf %73, %101 : vector<144x66xf32>
    %103 = vector.broadcast %100 : vector<144x1xf32> to vector<144x66xf32>
    %104 = arith.addf %102, %103 : vector<144x66xf32>
    %cst_83 = arith.constant 0.000000e+00 : f32
    %105 = vector.broadcast %cst_83 : f32 to vector<144x66xf32>
    %106 = arith.maximumf %104, %105 : vector<144x66xf32>
    %107 = arith.truncf %106 : vector<144x66xf32> to vector<144x66xbf16>
    %c0_84 = arith.constant 0 : index
    %c0_85 = arith.constant 0 : index
    %c0_86 = arith.constant 0 : index
    %108 = vector.load %arg12[%c0_84, %c0_85, %c0_86] : memref<5x66x30xbf16, #tpu.memory_space<vmem>>, vector<1x66x30xbf16>
    %109 = vector.shape_cast %108 : vector<1x66x30xbf16> to vector<66x30xbf16>
    %cst_87 = arith.constant dense<0.000000e+00> : vector<144x30xf32>
    %110 = tpu.matmul %107, %109, %cst_87 {dimension_numbers = #tpu.dot_dimension_numbers<[1], [0], [0], [1], [0, 0, 1, 1], [], []>} : vector<144x66xbf16>, vector<66x30xbf16>, vector<144x30xf32> -> vector<144x30xf32>
    %c1_88 = arith.constant 1 : index
    %c0_89 = arith.constant 0 : index
    %c0_90 = arith.constant 0 : index
    %111 = vector.load %arg12[%c1_88, %c0_89, %c0_90] : memref<5x66x30xbf16, #tpu.memory_space<vmem>>, vector<1x66x30xbf16>
    %112 = vector.shape_cast %111 : vector<1x66x30xbf16> to vector<66x30xbf16>
    %cst_91 = arith.constant dense<0.000000e+00> : vector<144x30xf32>
    %113 = tpu.matmul %107, %112, %cst_91 {dimension_numbers = #tpu.dot_dimension_numbers<[1], [0], [0], [1], [0, 0, 1, 1], [], []>} : vector<144x66xbf16>, vector<66x30xbf16>, vector<144x30xf32> -> vector<144x30xf32>
    %c2_92 = arith.constant 2 : index
    %c0_93 = arith.constant 0 : index
    %c0_94 = arith.constant 0 : index
    %114 = vector.load %arg12[%c2_92, %c0_93, %c0_94] : memref<5x66x30xbf16, #tpu.memory_space<vmem>>, vector<1x66x30xbf16>
    %115 = vector.shape_cast %114 : vector<1x66x30xbf16> to vector<66x30xbf16>
    %cst_95 = arith.constant dense<0.000000e+00> : vector<144x30xf32>
    %116 = tpu.matmul %107, %115, %cst_95 {dimension_numbers = #tpu.dot_dimension_numbers<[1], [0], [0], [1], [0, 0, 1, 1], [], []>} : vector<144x66xbf16>, vector<66x30xbf16>, vector<144x30xf32> -> vector<144x30xf32>
    %c3_96 = arith.constant 3 : index
    %c0_97 = arith.constant 0 : index
    %c0_98 = arith.constant 0 : index
    %117 = vector.load %arg12[%c3_96, %c0_97, %c0_98] : memref<5x66x30xbf16, #tpu.memory_space<vmem>>, vector<1x66x30xbf16>
    %118 = vector.shape_cast %117 : vector<1x66x30xbf16> to vector<66x30xbf16>
    %cst_99 = arith.constant dense<0.000000e+00> : vector<144x30xf32>
    %119 = tpu.matmul %107, %118, %cst_99 {dimension_numbers = #tpu.dot_dimension_numbers<[1], [0], [0], [1], [0, 0, 1, 1], [], []>} : vector<144x66xbf16>, vector<66x30xbf16>, vector<144x30xf32> -> vector<144x30xf32>
    %c4_100 = arith.constant 4 : index
    %c0_101 = arith.constant 0 : index
    %c0_102 = arith.constant 0 : index
    %120 = vector.load %arg12[%c4_100, %c0_101, %c0_102] : memref<5x66x30xbf16, #tpu.memory_space<vmem>>, vector<1x66x30xbf16>
    %121 = vector.shape_cast %120 : vector<1x66x30xbf16> to vector<66x30xbf16>
    %cst_103 = arith.constant dense<0.000000e+00> : vector<144x30xf32>
    %122 = tpu.matmul %107, %121, %cst_103 {dimension_numbers = #tpu.dot_dimension_numbers<[1], [0], [0], [1], [0, 0, 1, 1], [], []>} : vector<144x66xbf16>, vector<66x30xbf16>, vector<144x30xf32> -> vector<144x30xf32>
    %123 = tpu.concatenate %110, %113, %116, %119, %122 in 0 : vector<144x30xf32>, vector<144x30xf32>, vector<144x30xf32>, vector<144x30xf32>, vector<144x30xf32> -> vector<720x30xf32>
    %124 = arith.truncf %123 : vector<720x30xf32> to vector<720x30xbf16>
    %c0_104 = arith.constant 0 : index
    %c0_105 = arith.constant 0 : index
    %125 = vector.load %arg11[%c0_104, %c0_105] : memref<144x720xbf16, #tpu.memory_space<vmem>>, vector<144x720xbf16>
    %cst_106 = arith.constant dense<0.000000e+00> : vector<144x30xf32>
    %126 = tpu.matmul %125, %124, %cst_106 {dimension_numbers = #tpu.dot_dimension_numbers<[1], [0], [0], [1], [0, 0, 1, 1], [], []>} : vector<144x720xbf16>, vector<720x30xbf16>, vector<144x30xf32> -> vector<144x30xf32>
    %cst_107 = arith.constant dense<0.000000e+00> : vector<144xf32>
    %127 = vector.multi_reduction <add>, %126, %cst_107 [1] : vector<144x30xf32> to vector<144xf32>
    %128 = vector.shape_cast %127 : vector<144xf32> to vector<144x1xf32>
    %129 = arith.mulf %126, %126 : vector<144x30xf32>
    %cst_108 = arith.constant dense<0.000000e+00> : vector<144xf32>
    %130 = vector.multi_reduction <add>, %129, %cst_108 [1] : vector<144x30xf32> to vector<144xf32>
    %131 = vector.shape_cast %130 : vector<144xf32> to vector<144x1xf32>
    %c0_109 = arith.constant 0 : index
    %c0_110 = arith.constant 0 : index
    %132 = vector.load %arg13[%c0_109, %c0_110] : memref<9x144xf32, #tpu.memory_space<vmem>>, vector<9x144xf32>
    %cst_111 = arith.constant dense<0.000000e+00> : vector<9x1xf32>
    %133 = tpu.matmul %132, %128, %cst_111 {dimension_numbers = #tpu.dot_dimension_numbers<[1], [0], [0], [1], [0, 0, 1, 1], [], []>} : vector<9x144xf32>, vector<144x1xf32>, vector<9x1xf32> -> vector<9x1xf32>
    %c0_112 = arith.constant 0 : index
    %c0_113 = arith.constant 0 : index
    %134 = vector.load %arg13[%c0_112, %c0_113] : memref<9x144xf32, #tpu.memory_space<vmem>>, vector<9x144xf32>
    %cst_114 = arith.constant dense<0.000000e+00> : vector<9x1xf32>
    %135 = tpu.matmul %134, %131, %cst_114 {dimension_numbers = #tpu.dot_dimension_numbers<[1], [0], [0], [1], [0, 0, 1, 1], [], []>} : vector<9x144xf32>, vector<144x1xf32>, vector<9x1xf32> -> vector<9x1xf32>
    %cst_115 = arith.constant 0.00333333341 : f32
    %136 = vector.broadcast %cst_115 : f32 to vector<9x1xf32>
    %137 = arith.mulf %133, %136 : vector<9x1xf32>
    %cst_116 = arith.constant 0.00333333341 : f32
    %138 = vector.broadcast %cst_116 : f32 to vector<9x1xf32>
    %139 = arith.mulf %135, %138 : vector<9x1xf32>
    %140 = arith.mulf %137, %137 : vector<9x1xf32>
    %141 = arith.subf %139, %140 : vector<9x1xf32>
    %cst_117 = arith.constant 0.000000e+00 : f32
    %142 = vector.broadcast %cst_117 : f32 to vector<9x1xf32>
    %143 = arith.maximumf %141, %142 : vector<9x1xf32>
    %cst_118 = arith.constant 9.99999974E-6 : f32
    %144 = vector.broadcast %cst_118 : f32 to vector<9x1xf32>
    %145 = arith.addf %143, %144 : vector<9x1xf32>
    %146 = math.rsqrt %145 : vector<9x1xf32>
    %c0_119 = arith.constant 0 : index
    %c0_120 = arith.constant 0 : index
    %147 = vector.load %arg14[%c0_119, %c0_120] : memref<144x9xf32, #tpu.memory_space<vmem>>, vector<144x9xf32>
    %cst_121 = arith.constant dense<0.000000e+00> : vector<144x1xf32>
    %148 = tpu.matmul %147, %146, %cst_121 {dimension_numbers = #tpu.dot_dimension_numbers<[1], [0], [0], [1], [0, 0, 1, 1], [], []>} : vector<144x9xf32>, vector<9x1xf32>, vector<144x1xf32> -> vector<144x1xf32>
    %c0_122 = arith.constant 0 : index
    %c0_123 = arith.constant 0 : index
    %149 = vector.load %arg15[%c0_122, %c0_123] : memref<144x1xf32, #tpu.memory_space<vmem>>, vector<144x1xf32>
    %c0_124 = arith.constant 0 : index
    %c0_125 = arith.constant 0 : index
    %150 = vector.load %arg14[%c0_124, %c0_125] : memref<144x9xf32, #tpu.memory_space<vmem>>, vector<144x9xf32>
    %151 = arith.mulf %137, %146 : vector<9x1xf32>
    %cst_126 = arith.constant dense<0.000000e+00> : vector<144x1xf32>
    %152 = tpu.matmul %150, %151, %cst_126 {dimension_numbers = #tpu.dot_dimension_numbers<[1], [0], [0], [1], [0, 0, 1, 1], [], []>} : vector<144x9xf32>, vector<9x1xf32>, vector<144x1xf32> -> vector<144x1xf32>
    %153 = arith.subf %149, %152 : vector<144x1xf32>
    %154 = vector.broadcast %148 : vector<144x1xf32> to vector<144x30xf32>
    %155 = arith.mulf %126, %154 : vector<144x30xf32>
    %156 = vector.broadcast %153 : vector<144x1xf32> to vector<144x30xf32>
    %157 = arith.addf %155, %156 : vector<144x30xf32>
    %cst_127 = arith.constant 0.000000e+00 : f32
    %158 = vector.broadcast %cst_127 : f32 to vector<144x30xf32>
    %159 = arith.maximumf %157, %158 : vector<144x30xf32>
    %160 = arith.truncf %159 : vector<144x30xf32> to vector<144x30xbf16>
    %c0_128 = arith.constant 0 : index
    %c0_129 = arith.constant 0 : index
    %c0_130 = arith.constant 0 : index
    %161 = vector.load %arg17[%c0_128, %c0_129, %c0_130] : memref<5x30x22xbf16, #tpu.memory_space<vmem>>, vector<1x30x22xbf16>
    %162 = vector.shape_cast %161 : vector<1x30x22xbf16> to vector<30x22xbf16>
    %cst_131 = arith.constant dense<0.000000e+00> : vector<144x22xf32>
    %163 = tpu.matmul %160, %162, %cst_131 {dimension_numbers = #tpu.dot_dimension_numbers<[1], [0], [0], [1], [0, 0, 1, 1], [], []>} : vector<144x30xbf16>, vector<30x22xbf16>, vector<144x22xf32> -> vector<144x22xf32>
    %c1_132 = arith.constant 1 : index
    %c0_133 = arith.constant 0 : index
    %c0_134 = arith.constant 0 : index
    %164 = vector.load %arg17[%c1_132, %c0_133, %c0_134] : memref<5x30x22xbf16, #tpu.memory_space<vmem>>, vector<1x30x22xbf16>
    %165 = vector.shape_cast %164 : vector<1x30x22xbf16> to vector<30x22xbf16>
    %cst_135 = arith.constant dense<0.000000e+00> : vector<144x22xf32>
    %166 = tpu.matmul %160, %165, %cst_135 {dimension_numbers = #tpu.dot_dimension_numbers<[1], [0], [0], [1], [0, 0, 1, 1], [], []>} : vector<144x30xbf16>, vector<30x22xbf16>, vector<144x22xf32> -> vector<144x22xf32>
    %c2_136 = arith.constant 2 : index
    %c0_137 = arith.constant 0 : index
    %c0_138 = arith.constant 0 : index
    %167 = vector.load %arg17[%c2_136, %c0_137, %c0_138] : memref<5x30x22xbf16, #tpu.memory_space<vmem>>, vector<1x30x22xbf16>
    %168 = vector.shape_cast %167 : vector<1x30x22xbf16> to vector<30x22xbf16>
    %cst_139 = arith.constant dense<0.000000e+00> : vector<144x22xf32>
    %169 = tpu.matmul %160, %168, %cst_139 {dimension_numbers = #tpu.dot_dimension_numbers<[1], [0], [0], [1], [0, 0, 1, 1], [], []>} : vector<144x30xbf16>, vector<30x22xbf16>, vector<144x22xf32> -> vector<144x22xf32>
    %c3_140 = arith.constant 3 : index
    %c0_141 = arith.constant 0 : index
    %c0_142 = arith.constant 0 : index
    %170 = vector.load %arg17[%c3_140, %c0_141, %c0_142] : memref<5x30x22xbf16, #tpu.memory_space<vmem>>, vector<1x30x22xbf16>
    %171 = vector.shape_cast %170 : vector<1x30x22xbf16> to vector<30x22xbf16>
    %cst_143 = arith.constant dense<0.000000e+00> : vector<144x22xf32>
    %172 = tpu.matmul %160, %171, %cst_143 {dimension_numbers = #tpu.dot_dimension_numbers<[1], [0], [0], [1], [0, 0, 1, 1], [], []>} : vector<144x30xbf16>, vector<30x22xbf16>, vector<144x22xf32> -> vector<144x22xf32>
    %c4_144 = arith.constant 4 : index
    %c0_145 = arith.constant 0 : index
    %c0_146 = arith.constant 0 : index
    %173 = vector.load %arg17[%c4_144, %c0_145, %c0_146] : memref<5x30x22xbf16, #tpu.memory_space<vmem>>, vector<1x30x22xbf16>
    %174 = vector.shape_cast %173 : vector<1x30x22xbf16> to vector<30x22xbf16>
    %cst_147 = arith.constant dense<0.000000e+00> : vector<144x22xf32>
    %175 = tpu.matmul %160, %174, %cst_147 {dimension_numbers = #tpu.dot_dimension_numbers<[1], [0], [0], [1], [0, 0, 1, 1], [], []>} : vector<144x30xbf16>, vector<30x22xbf16>, vector<144x22xf32> -> vector<144x22xf32>
    %176 = tpu.concatenate %163, %166, %169, %172, %175 in 0 : vector<144x22xf32>, vector<144x22xf32>, vector<144x22xf32>, vector<144x22xf32>, vector<144x22xf32> -> vector<720x22xf32>
    %177 = arith.truncf %176 : vector<720x22xf32> to vector<720x22xbf16>
    %c0_148 = arith.constant 0 : index
    %c0_149 = arith.constant 0 : index
    %178 = vector.load %arg16[%c0_148, %c0_149] : memref<96x720xbf16, #tpu.memory_space<vmem>>, vector<96x720xbf16>
    %cst_150 = arith.constant dense<0.000000e+00> : vector<96x22xf32>
    %179 = tpu.matmul %178, %177, %cst_150 {dimension_numbers = #tpu.dot_dimension_numbers<[1], [0], [0], [1], [0, 0, 1, 1], [], []>} : vector<96x720xbf16>, vector<720x22xbf16>, vector<96x22xf32> -> vector<96x22xf32>
    %cst_151 = arith.constant dense<0.000000e+00> : vector<96xf32>
    %180 = vector.multi_reduction <add>, %179, %cst_151 [1] : vector<96x22xf32> to vector<96xf32>
    %181 = vector.shape_cast %180 : vector<96xf32> to vector<96x1xf32>
    %182 = arith.mulf %179, %179 : vector<96x22xf32>
    %cst_152 = arith.constant dense<0.000000e+00> : vector<96xf32>
    %183 = vector.multi_reduction <add>, %182, %cst_152 [1] : vector<96x22xf32> to vector<96xf32>
    %184 = vector.shape_cast %183 : vector<96xf32> to vector<96x1xf32>
    %c0_153 = arith.constant 0 : index
    %c0_154 = arith.constant 0 : index
    %185 = vector.load %arg18[%c0_153, %c0_154] : memref<12x96xf32, #tpu.memory_space<vmem>>, vector<12x96xf32>
    %cst_155 = arith.constant dense<0.000000e+00> : vector<12x1xf32>
    %186 = tpu.matmul %185, %181, %cst_155 {dimension_numbers = #tpu.dot_dimension_numbers<[1], [0], [0], [1], [0, 0, 1, 1], [], []>} : vector<12x96xf32>, vector<96x1xf32>, vector<12x1xf32> -> vector<12x1xf32>
    %c0_156 = arith.constant 0 : index
    %c0_157 = arith.constant 0 : index
    %187 = vector.load %arg18[%c0_156, %c0_157] : memref<12x96xf32, #tpu.memory_space<vmem>>, vector<12x96xf32>
    %cst_158 = arith.constant dense<0.000000e+00> : vector<12x1xf32>
    %188 = tpu.matmul %187, %184, %cst_158 {dimension_numbers = #tpu.dot_dimension_numbers<[1], [0], [0], [1], [0, 0, 1, 1], [], []>} : vector<12x96xf32>, vector<96x1xf32>, vector<12x1xf32> -> vector<12x1xf32>
    %cst_159 = arith.constant 0.0075757578 : f32
    %189 = vector.broadcast %cst_159 : f32 to vector<12x1xf32>
    %190 = arith.mulf %186, %189 : vector<12x1xf32>
    %cst_160 = arith.constant 0.0075757578 : f32
    %191 = vector.broadcast %cst_160 : f32 to vector<12x1xf32>
    %192 = arith.mulf %188, %191 : vector<12x1xf32>
    %193 = arith.mulf %190, %190 : vector<12x1xf32>
    %194 = arith.subf %192, %193 : vector<12x1xf32>
    %cst_161 = arith.constant 0.000000e+00 : f32
    %195 = vector.broadcast %cst_161 : f32 to vector<12x1xf32>
    %196 = arith.maximumf %194, %195 : vector<12x1xf32>
    %cst_162 = arith.constant 9.99999974E-6 : f32
    %197 = vector.broadcast %cst_162 : f32 to vector<12x1xf32>
    %198 = arith.addf %196, %197 : vector<12x1xf32>
    %199 = math.rsqrt %198 : vector<12x1xf32>
    %c0_163 = arith.constant 0 : index
    %c0_164 = arith.constant 0 : index
    %200 = vector.load %arg19[%c0_163, %c0_164] : memref<96x12xf32, #tpu.memory_space<vmem>>, vector<96x12xf32>
    %cst_165 = arith.constant dense<0.000000e+00> : vector<96x1xf32>
    %201 = tpu.matmul %200, %199, %cst_165 {dimension_numbers = #tpu.dot_dimension_numbers<[1], [0], [0], [1], [0, 0, 1, 1], [], []>} : vector<96x12xf32>, vector<12x1xf32>, vector<96x1xf32> -> vector<96x1xf32>
    %c0_166 = arith.constant 0 : index
    %c0_167 = arith.constant 0 : index
    %202 = vector.load %arg20[%c0_166, %c0_167] : memref<96x1xf32, #tpu.memory_space<vmem>>, vector<96x1xf32>
    %c0_168 = arith.constant 0 : index
    %c0_169 = arith.constant 0 : index
    %203 = vector.load %arg19[%c0_168, %c0_169] : memref<96x12xf32, #tpu.memory_space<vmem>>, vector<96x12xf32>
    %204 = arith.mulf %190, %199 : vector<12x1xf32>
    %cst_170 = arith.constant dense<0.000000e+00> : vector<96x1xf32>
    %205 = tpu.matmul %203, %204, %cst_170 {dimension_numbers = #tpu.dot_dimension_numbers<[1], [0], [0], [1], [0, 0, 1, 1], [], []>} : vector<96x12xf32>, vector<12x1xf32>, vector<96x1xf32> -> vector<96x1xf32>
    %206 = arith.subf %202, %205 : vector<96x1xf32>
    %207 = vector.broadcast %201 : vector<96x1xf32> to vector<96x22xf32>
    %208 = arith.mulf %179, %207 : vector<96x22xf32>
    %209 = vector.broadcast %206 : vector<96x1xf32> to vector<96x22xf32>
    %210 = arith.addf %208, %209 : vector<96x22xf32>
    %cst_171 = arith.constant 0.000000e+00 : f32
    %211 = vector.broadcast %cst_171 : f32 to vector<96x22xf32>
    %212 = arith.maximumf %210, %211 : vector<96x22xf32>
    %213 = arith.truncf %212 : vector<96x22xf32> to vector<96x22xbf16>
    %c0_172 = arith.constant 0 : index
    %c0_173 = arith.constant 0 : index
    %c0_174 = arith.constant 0 : index
    %214 = vector.load %arg22[%c0_172, %c0_173, %c0_174] : memref<5x22x14xbf16, #tpu.memory_space<vmem>>, vector<1x22x14xbf16>
    %215 = vector.shape_cast %214 : vector<1x22x14xbf16> to vector<22x14xbf16>
    %cst_175 = arith.constant dense<0.000000e+00> : vector<96x14xf32>
    %216 = tpu.matmul %213, %215, %cst_175 {dimension_numbers = #tpu.dot_dimension_numbers<[1], [0], [0], [1], [0, 0, 1, 1], [], []>} : vector<96x22xbf16>, vector<22x14xbf16>, vector<96x14xf32> -> vector<96x14xf32>
    %c1_176 = arith.constant 1 : index
    %c0_177 = arith.constant 0 : index
    %c0_178 = arith.constant 0 : index
    %217 = vector.load %arg22[%c1_176, %c0_177, %c0_178] : memref<5x22x14xbf16, #tpu.memory_space<vmem>>, vector<1x22x14xbf16>
    %218 = vector.shape_cast %217 : vector<1x22x14xbf16> to vector<22x14xbf16>
    %cst_179 = arith.constant dense<0.000000e+00> : vector<96x14xf32>
    %219 = tpu.matmul %213, %218, %cst_179 {dimension_numbers = #tpu.dot_dimension_numbers<[1], [0], [0], [1], [0, 0, 1, 1], [], []>} : vector<96x22xbf16>, vector<22x14xbf16>, vector<96x14xf32> -> vector<96x14xf32>
    %c2_180 = arith.constant 2 : index
    %c0_181 = arith.constant 0 : index
    %c0_182 = arith.constant 0 : index
    %220 = vector.load %arg22[%c2_180, %c0_181, %c0_182] : memref<5x22x14xbf16, #tpu.memory_space<vmem>>, vector<1x22x14xbf16>
    %221 = vector.shape_cast %220 : vector<1x22x14xbf16> to vector<22x14xbf16>
    %cst_183 = arith.constant dense<0.000000e+00> : vector<96x14xf32>
    %222 = tpu.matmul %213, %221, %cst_183 {dimension_numbers = #tpu.dot_dimension_numbers<[1], [0], [0], [1], [0, 0, 1, 1], [], []>} : vector<96x22xbf16>, vector<22x14xbf16>, vector<96x14xf32> -> vector<96x14xf32>
    %c3_184 = arith.constant 3 : index
    %c0_185 = arith.constant 0 : index
    %c0_186 = arith.constant 0 : index
    %223 = vector.load %arg22[%c3_184, %c0_185, %c0_186] : memref<5x22x14xbf16, #tpu.memory_space<vmem>>, vector<1x22x14xbf16>
    %224 = vector.shape_cast %223 : vector<1x22x14xbf16> to vector<22x14xbf16>
    %cst_187 = arith.constant dense<0.000000e+00> : vector<96x14xf32>
    %225 = tpu.matmul %213, %224, %cst_187 {dimension_numbers = #tpu.dot_dimension_numbers<[1], [0], [0], [1], [0, 0, 1, 1], [], []>} : vector<96x22xbf16>, vector<22x14xbf16>, vector<96x14xf32> -> vector<96x14xf32>
    %c4_188 = arith.constant 4 : index
    %c0_189 = arith.constant 0 : index
    %c0_190 = arith.constant 0 : index
    %226 = vector.load %arg22[%c4_188, %c0_189, %c0_190] : memref<5x22x14xbf16, #tpu.memory_space<vmem>>, vector<1x22x14xbf16>
    %227 = vector.shape_cast %226 : vector<1x22x14xbf16> to vector<22x14xbf16>
    %cst_191 = arith.constant dense<0.000000e+00> : vector<96x14xf32>
    %228 = tpu.matmul %213, %227, %cst_191 {dimension_numbers = #tpu.dot_dimension_numbers<[1], [0], [0], [1], [0, 0, 1, 1], [], []>} : vector<96x22xbf16>, vector<22x14xbf16>, vector<96x14xf32> -> vector<96x14xf32>
    %229 = tpu.concatenate %216, %219, %222, %225, %228 in 0 : vector<96x14xf32>, vector<96x14xf32>, vector<96x14xf32>, vector<96x14xf32>, vector<96x14xf32> -> vector<480x14xf32>
    %230 = arith.truncf %229 : vector<480x14xf32> to vector<480x14xbf16>
    %c0_192 = arith.constant 0 : index
    %c0_193 = arith.constant 0 : index
    %231 = vector.load %arg21[%c0_192, %c0_193] : memref<144x480xbf16, #tpu.memory_space<vmem>>, vector<144x480xbf16>
    %cst_194 = arith.constant dense<0.000000e+00> : vector<144x14xf32>
    %232 = tpu.matmul %231, %230, %cst_194 {dimension_numbers = #tpu.dot_dimension_numbers<[1], [0], [0], [1], [0, 0, 1, 1], [], []>} : vector<144x480xbf16>, vector<480x14xbf16>, vector<144x14xf32> -> vector<144x14xf32>
    %c0_195 = arith.constant 0 : index
    %c0_196 = arith.constant 0 : index
    %233 = vector.load %arg23[%c0_195, %c0_196] : memref<144x14xf32, #tpu.memory_space<vmem>>, vector<144x14xf32>
    %234 = arith.mulf %232, %233 : vector<144x14xf32>
    %c0_197 = arith.constant 0 : index
    %c0_198 = arith.constant 0 : index
    %235 = vector.load %arg24[%c0_197, %c0_198] : memref<14x2xf32, #tpu.memory_space<vmem>>, vector<14x2xf32>
    %cst_199 = arith.constant dense<0.000000e+00> : vector<144x2xf32>
    %236 = tpu.matmul %234, %235, %cst_199 {dimension_numbers = #tpu.dot_dimension_numbers<[1], [0], [0], [1], [0, 0, 1, 1], [], []>} : vector<144x14xf32>, vector<14x2xf32>, vector<144x2xf32> -> vector<144x2xf32>
    %cst_200 = arith.constant dense<0.000000e+00> : vector<2xf32>
    %237 = vector.multi_reduction <add>, %236, %cst_200 [0] : vector<144x2xf32> to vector<2xf32>
    %238 = vector.shape_cast %237 : vector<2xf32> to vector<1x2xf32>
    %c0_201 = arith.constant 0 : index
    %c0_202 = arith.constant 0 : index
    %239 = vector.load %arg25[%c0_201, %c0_202] : memref<1x1xf32, #tpu.memory_space<vmem>>, vector<1x1xf32>
    %240 = vector.broadcast %239 : vector<1x1xf32> to vector<1x2xf32>
    %241 = arith.addf %238, %240 : vector<1x2xf32>
    %242 = arith.negf %241 : vector<1x2xf32>
    %243 = math.exp %242 : vector<1x2xf32>
    %cst_203 = arith.constant 1.000000e+00 : f32
    %244 = vector.broadcast %cst_203 : f32 to vector<1x2xf32>
    %245 = arith.addf %244, %243 : vector<1x2xf32>
    %246 = arith.divf %244, %245 : vector<1x2xf32>
    %c0_204 = arith.constant 0 : index
    %c0_205 = arith.constant 0 : index
    %247 = vector.load %arg26[%c0_204, %c0_205] : memref<1x2xf32, #tpu.memory_space<vmem>>, vector<1x2xf32>
    tpu.vector_store %arg26[%c0_204, %c0_205], %246 {strides = array<i32>} : memref<1x2xf32, #tpu.memory_space<vmem>>, vector<1x2xf32>,
    return
  }
}

</mosaic_0001>

<llo_original>
// kernel: eye_classifier_forward.1
$region0: #{eye_classifier_forward.1}
  #allocation0 [shape = 'u32[]', space=smem, size = 0x4, offset = 0x4, fixed_abs, tag = 'smem constant byte address 0x4 - core index']
  #allocation1 [shape = 'u32[72,128]{1,0:T(1,128)}', space=vmem, size = 0x9000, scoped, tag = 'internal scratch']
  #allocation2 [shape = 'f32[1,1]{1,0:T(1,128)S(1)}', space=vmem, size = 0x200, scoped, tag = 'scoped memory for eye_classifier_forward.1']
  %s0 = inlined_call_operand.vmem [shape: f32[104,282], index: 0, kind: input, shape index: {}]
  %s1 = inlined_call_operand.vmem [shape: bf16[168,520], index: 1, kind: input, shape index: {}]
  %s2 = inlined_call_operand.vmem [shape: bf16[5,282,138], index: 2, kind: input, shape index: {}]
  %s3 = inlined_call_operand.vmem [shape: f32[3,168], index: 3, kind: input, shape index: {}]
  %s4 = inlined_call_operand.vmem [shape: f32[168,3], index: 4, kind: input, shape index: {}]
  %s5 = inlined_call_operand.vmem [shape: f32[168,1], index: 5, kind: input, shape index: {}]
  %s6 = inlined_call_operand.vmem [shape: bf16[144,840], index: 6, kind: input, shape index: {}]
  %s7 = inlined_call_operand.vmem [shape: bf16[5,138,66], index: 7, kind: input, shape index: {}]
  %s8 = inlined_call_operand.vmem [shape: f32[6,144], index: 8, kind: input, shape index: {}]
  %s9 = inlined_call_operand.vmem [shape: f32[144,6], index: 9, kind: input, shape index: {}]
  %s10 = inlined_call_operand.vmem [shape: f32[144,1], index: 10, kind: input, shape index: {}]
  %s11 = inlined_call_operand.vmem [shape: bf16[144,720], index: 11, kind: input, shape index: {}]
  %s12 = inlined_call_operand.vmem [shape: bf16[5,66,30], index: 12, kind: input, shape index: {}]
  %s13 = inlined_call_operand.vmem [shape: f32[9,144], index: 13, kind: input, shape index: {}]
  %s14 = inlined_call_operand.vmem [shape: f32[144,9], index: 14, kind: input, shape index: {}]
  %s15 = inlined_call_operand.vmem [shape: f32[144,1], index: 15, kind: input, shape index: {}]
  %s16 = inlined_call_operand.vmem [shape: bf16[96,720], index: 16, kind: input, shape index: {}]
  %s17 = inlined_call_operand.vmem [shape: bf16[5,30,22], index: 17, kind: input, shape index: {}]
  %s18 = inlined_call_operand.vmem [shape: f32[12,96], index: 18, kind: input, shape index: {}]
  %s19 = inlined_call_operand.vmem [shape: f32[96,12], index: 19, kind: input, shape index: {}]
  %s20 = inlined_call_operand.vmem [shape: f32[96,1], index: 20, kind: input, shape index: {}]
  %s21 = inlined_call_operand.vmem [shape: bf16[144,480], index: 21, kind: input, shape index: {}]
  %s22 = inlined_call_operand.vmem [shape: bf16[5,22,14], index: 22, kind: input, shape index: {}]
  %s23 = inlined_call_operand.vmem [shape: f32[144,14], index: 23, kind: input, shape index: {}]
  %s24 = inlined_call_operand.vmem [shape: f32[14,2], index: 24, kind: input, shape index: {}]
  %s25 = inlined_call_operand.<no memory space> [shape: f32[1,1], index: 25, kind: input, shape index: {}]
  %s26 = inlined_call_operand.hbm [shape: f32[1,2], index: 26, kind: output, shape index: {}]
  %s27 = sld [smem:[#allocation0]]
  $region114: #{eye_classifier_forward.1} parent=0
    _
  %s29 = ssub.s32 1, %s27
  %s30 = scalar_select 0, %s29, %s27
  %v31 = vstv %s25
  %32 = vst [vmem:[#allocation2] sm:$0x1] %v31
  $region1: #{eye_classifier_forward.1} parent=0
    #allocation3 [shape = 'u8[512]{0}', space=vmem, size = 0x400, scoped, tag = 'output window, operand 0, single buffered']
    #allocation4 [shape = 's32[1]{0}', space=sflag, size = 0x4, scoped, tag = 'scoped memory for eye_classifier_forward.1']
    %33 = vsyncpa [#allocation4], 0
    // Predicated region
    $region2: #{eye_classifier_forward.1} parent=1 // pred_check
      _
    $region3: #{eye_classifier_forward.1} parent=1 // pred_check_branch
      %35 = sbr.rel (0) target = $region5
    $region4: #{eye_classifier_forward.1} parent=1 // pred_region
      _
    $region5: #{eye_classifier_forward.1} parent=1 // pred_fallthru
      _
    // Predicated region
    $region6: #{eye_classifier_forward.1} parent=1 // pred_check
      _
    $region7: #{eye_classifier_forward.1} parent=1 // pred_check_branch
      %37 = sbr.rel (0) target = $region9
    $region8: #{eye_classifier_forward.1} parent=1 // pred_region
      _
    $region9: #{eye_classifier_forward.1} parent=1 // pred_fallthru
      _
    // Predicated region
    $region10: #{eye_classifier_forward.1} parent=1 // pred_check
      _
    $region11: #{eye_classifier_forward.1} parent=1 // pred_check_branch
      %39 = sbr.rel (0) target = $region13
    $region12: #{eye_classifier_forward.1} parent=1 // pred_region
      _
    $region13: #{eye_classifier_forward.1} parent=1 // pred_fallthru
      _
    // Predicated region
    $region14: #{eye_classifier_forward.1} parent=1 // pred_check
      _
    $region15: #{eye_classifier_forward.1} parent=1 // pred_check_branch
      %41 = sbr.rel (0) target = $region17
    $region16: #{eye_classifier_forward.1} parent=1 // pred_region
      _
    $region17: #{eye_classifier_forward.1} parent=1 // pred_fallthru
      _
    // Predicated region
    $region18: #{eye_classifier_forward.1} parent=1 // pred_check
      _
    $region19: #{eye_classifier_forward.1} parent=1 // pred_check_branch
      %43 = sbr.rel (0) target = $region21
    $region20: #{eye_classifier_forward.1} parent=1 // pred_region
      _
    $region21: #{eye_classifier_forward.1} parent=1 // pred_fallthru
      _
    // Predicated region
    $region22: #{eye_classifier_forward.1} parent=1 // pred_check
      _
    $region23: #{eye_classifier_forward.1} parent=1 // pred_check_branch
      %45 = sbr.rel (0) target = $region25
    $region24: #{eye_classifier_forward.1} parent=1 // pred_region
      _
    $region25: #{eye_classifier_forward.1} parent=1 // pred_fallthru
      _
    // Predicated region
    $region26: #{eye_classifier_forward.1} parent=1 // pred_check
      _
    $region27: #{eye_classifier_forward.1} parent=1 // pred_check_branch
      %47 = sbr.rel (0) target = $region29
    $region28: #{eye_classifier_forward.1} parent=1 // pred_region
      _
    $region29: #{eye_classifier_forward.1} parent=1 // pred_fallthru
      _
    // Predicated region
    $region30: #{eye_classifier_forward.1} parent=1 // pred_check
      _
    $region31: #{eye_classifier_forward.1} parent=1 // pred_check_branch
      %49 = sbr.rel (0) target = $region33
    $region32: #{eye_classifier_forward.1} parent=1 // pred_region
      _
    $region33: #{eye_classifier_forward.1} parent=1 // pred_fallthru
      _
    // Predicated region
    $region34: #{eye_classifier_forward.1} parent=1 // pred_check
      _
    $region35: #{eye_classifier_forward.1} parent=1 // pred_check_branch
      %51 = sbr.rel (0) target = $region37
    $region36: #{eye_classifier_forward.1} parent=1 // pred_region
      _
    $region37: #{eye_classifier_forward.1} parent=1 // pred_fallthru
      _
    // Predicated region
    $region38: #{eye_classifier_forward.1} parent=1 // pred_check
      _
    $region39: #{eye_classifier_forward.1} parent=1 // pred_check_branch
      %53 = sbr.rel (0) target = $region41
    $region40: #{eye_classifier_forward.1} parent=1 // pred_region
      _
    $region41: #{eye_classifier_forward.1} parent=1 // pred_fallthru
      _
    // Predicated region
    $region42: #{eye_classifier_forward.1} parent=1 // pred_check
      _
    $region43: #{eye_classifier_forward.1} parent=1 // pred_check_branch
      %55 = sbr.rel (0) target = $region45
    $region44: #{eye_classifier_forward.1} parent=1 // pred_region
      _
    $region45: #{eye_classifier_forward.1} parent=1 // pred_fallthru
      _
    // Predicated region
    $region46: #{eye_classifier_forward.1} parent=1 // pred_check
      _
    $region47: #{eye_classifier_forward.1} parent=1 // pred_check_branch
      %57 = sbr.rel (0) target = $region49
    $region48: #{eye_classifier_forward.1} parent=1 // pred_region
      _
    $region49: #{eye_classifier_forward.1} parent=1 // pred_fallthru
      _
    // Predicated region
    $region50: #{eye_classifier_forward.1} parent=1 // pred_check
      _
    $region51: #{eye_classifier_forward.1} parent=1 // pred_check_branch
      %59 = sbr.rel (0) target = $region53
    $region52: #{eye_classifier_forward.1} parent=1 // pred_region
      _
    $region53: #{eye_classifier_forward.1} parent=1 // pred_fallthru
      _
    // Predicated region
    $region54: #{eye_classifier_forward.1} parent=1 // pred_check
      _
    $region55: #{eye_classifier_forward.1} parent=1 // pred_check_branch
      %61 = sbr.rel (0) target = $region57
    $region56: #{eye_classifier_forward.1} parent=1 // pred_region
      _
    $region57: #{eye_classifier_forward.1} parent=1 // pred_fallthru
      _
    // Predicated region
    $region58: #{eye_classifier_forward.1} parent=1 // pred_check
      _
    $region59: #{eye_classifier_forward.1} parent=1 // pred_check_branch
      %63 = sbr.rel (0) target = $region61
    $region60: #{eye_classifier_forward.1} parent=1 // pred_region
      _
    $region61: #{eye_classifier_forward.1} parent=1 // pred_fallthru
      _
    // Predicated region
    $region62: #{eye_classifier_forward.1} parent=1 // pred_check
      _
    $region63: #{eye_classifier_forward.1} parent=1 // pred_check_branch
      %65 = sbr.rel (0) target = $region65
    $region64: #{eye_classifier_forward.1} parent=1 // pred_region
      _
    $region65: #{eye_classifier_forward.1} parent=1 // pred_fallthru
      _
    // Predicated region
    $region66: #{eye_classifier_forward.1} parent=1 // pred_check
      _
    $region67: #{eye_classifier_forward.1} parent=1 // pred_check_branch
      %67 = sbr.rel (0) target = $region69
    $region68: #{eye_classifier_forward.1} parent=1 // pred_region
      _
    $region69: #{eye_classifier_forward.1} parent=1 // pred_fallthru
      _
    // Predicated region
    $region70: #{eye_classifier_forward.1} parent=1 // pred_check
      _
    $region71: #{eye_classifier_forward.1} parent=1 // pred_check_branch
      %69 = sbr.rel (0) target = $region73
    $region72: #{eye_classifier_forward.1} parent=1 // pred_region
      _
    $region73: #{eye_classifier_forward.1} parent=1 // pred_fallthru
      _
    // Predicated region
    $region74: #{eye_classifier_forward.1} parent=1 // pred_check
      _
    $region75: #{eye_classifier_forward.1} parent=1 // pred_check_branch
      %71 = sbr.rel (0) target = $region77
    $region76: #{eye_classifier_forward.1} parent=1 // pred_region
      _
    $region77: #{eye_classifier_forward.1} parent=1 // pred_fallthru
      _
    // Predicated region
    $region78: #{eye_classifier_forward.1} parent=1 // pred_check
      _
    $region79: #{eye_classifier_forward.1} parent=1 // pred_check_branch
      %73 = sbr.rel (0) target = $region81
    $region80: #{eye_classifier_forward.1} parent=1 // pred_region
      _
    $region81: #{eye_classifier_forward.1} parent=1 // pred_fallthru
      _
    // Predicated region
    $region82: #{eye_classifier_forward.1} parent=1 // pred_check
      _
    $region83: #{eye_classifier_forward.1} parent=1 // pred_check_branch
      %75 = sbr.rel (0) target = $region85
    $region84: #{eye_classifier_forward.1} parent=1 // pred_region
      _
    $region85: #{eye_classifier_forward.1} parent=1 // pred_fallthru
      _
    // Predicated region
    $region86: #{eye_classifier_forward.1} parent=1 // pred_check
      _
    $region87: #{eye_classifier_forward.1} parent=1 // pred_check_branch
      %77 = sbr.rel (0) target = $region89
    $region88: #{eye_classifier_forward.1} parent=1 // pred_region
      _
    $region89: #{eye_classifier_forward.1} parent=1 // pred_fallthru
      _
    // Predicated region
    $region90: #{eye_classifier_forward.1} parent=1 // pred_check
      _
    $region91: #{eye_classifier_forward.1} parent=1 // pred_check_branch
      %79 = sbr.rel (0) target = $region93
    $region92: #{eye_classifier_forward.1} parent=1 // pred_region
      _
    $region93: #{eye_classifier_forward.1} parent=1 // pred_fallthru
      _
    // Predicated region
    $region94: #{eye_classifier_forward.1} parent=1 // pred_check
      _
    $region95: #{eye_classifier_forward.1} parent=1 // pred_check_branch
      %81 = sbr.rel (0) target = $region97
    $region96: #{eye_classifier_forward.1} parent=1 // pred_region
      _
    $region97: #{eye_classifier_forward.1} parent=1 // pred_fallthru
      _
    // Predicated region
    $region98: #{eye_classifier_forward.1} parent=1 // pred_check
      _
    $region99: #{eye_classifier_forward.1} parent=1 // pred_check_branch
      %83 = sbr.rel (0) target = $region101
    $region100: #{eye_classifier_forward.1} parent=1 // pred_region
      _
    $region101: #{eye_classifier_forward.1} parent=1 // pred_fallthru
      _
    // Predicated region
    $region102: #{eye_classifier_forward.1} parent=1 // pred_check
      _
    $region103: #{eye_classifier_forward.1} parent=1 // pred_check_branch
      %85 = sbr.rel (0) target = $region105
    $region104: #{eye_classifier_forward.1} parent=1 // pred_region
      _
    $region105: #{eye_classifier_forward.1} parent=1 // pred_fallthru
      _
    %v87 = vld [vmem:[%s0] sm:$0xff]
    %v88 = vld [vmem:[%s0 + $0x8] sm:$0xff]
    %v89 = vld [vmem:[%s0 + $0x10] sm:$0xff]
    %v90 = vld [vmem:[%s0 + $0x18] sm:$0xff]
    %v91 = vld [vmem:[%s0 + $0x20] sm:$0xff]
    %v92 = vld [vmem:[%s0 + $0x28] sm:$0xff]
    %v93 = vld [vmem:[%s0 + $0x30] sm:$0xff]
    %v94 = vld [vmem:[%s0 + $0x38] sm:$0xff]
    %v95 = vld [vmem:[%s0 + $0x40] sm:$0xff]
    %v96 = vld [vmem:[%s0 + $0x48] sm:$0xff]
    %v97 = vld [vmem:[%s0 + $0x50] sm:$0xff]
    %v98 = vld [vmem:[%s0 + $0x58] sm:$0xff]
    %v99 = vld [vmem:[%s0 + $0x60] sm:$0xff]
    %v100 = vld [vmem:[%s0 + $0x68] sm:$0xff]
    %v101 = vld [vmem:[%s0 + $0x70] sm:$0xff]
    %v102 = vld [vmem:[%s0 + $0x78] sm:$0xff]
    %v103 = vld [vmem:[%s0 + $0x80] sm:$0xff]
    %v104 = vld [vmem:[%s0 + $0x88] sm:$0xff]
    %v105 = vld [vmem:[%s0 + $0x90] sm:$0xff]
    %v106 = vld [vmem:[%s0 + $0x98] sm:$0xff]
    %v107 = vld [vmem:[%s0 + $0xa0] sm:$0xff]
    %v108 = vld [vmem:[%s0 + $0xa8] sm:$0xff]
    %v109 = vld [vmem:[%s0 + $0xb0] sm:$0xff]
    %v110 = vld [vmem:[%s0 + $0xb8] sm:$0xff]
    %v111 = vld [vmem:[%s0 + $0xc0] sm:$0xff]
    %v112 = vld [vmem:[%s0 + $0xc8] sm:$0xff]
    %v113 = vld [vmem:[%s0 + $0xd0] sm:$0xff]
    %v114 = vld [vmem:[%s0 + $0xd8] sm:$0xff]
    %v115 = vld [vmem:[%s0 + $0xe0] sm:$0xff]
    %v116 = vld [vmem:[%s0 + $0xe8] sm:$0xff]
    %v117 = vld [vmem:[%s0 + $0xf0] sm:$0xff]
    %v118 = vld [vmem:[%s0 + $0xf8] sm:$0xff]
    %v119 = vld [vmem:[%s0 + $0x100] sm:$0xff]
    %v120 = vld [vmem:[%s0 + $0x108] sm:$0xff]
    %v121 = vld [vmem:[%s0 + $0x110] sm:$0xff]
    %v122 = vld [vmem:[%s0 + $0x118] sm:$0xff]
    %v123 = vld [vmem:[%s0 + $0x120] sm:$0xff]
    %v124 = vld [vmem:[%s0 + $0x128] sm:$0xff]
    %v125 = vld [vmem:[%s0 + $0x130] sm:$0xff]
    %v126 = vpack.c.bf16 %v90, %v87
    %v127 = vpack.c.bf16 %v91, %v88
    %v128 = vpack.c.bf16 %v92, %v89
    %v129 = vpack.c.bf16 %v96, %v93
    %v130 = vpack.c.bf16 %v97, %v94
    %v131 = vpack.c.bf16 %v98, %v95
    %v132 = vpack.c.bf16 %v102, %v99
    %v133 = vpack.c.bf16 %v103, %v100
    %v134 = vpack.c.bf16 %v104, %v101
    %v135 = vpack.c.bf16 %v108, %v105
    %v136 = vpack.c.bf16 %v109, %v106
    %v137 = vpack.c.bf16 %v110, %v107
    %v138 = vpack.c.bf16 %v114, %v111
    %v139 = vpack.c.bf16 %v115, %v112
    %v140 = vpack.c.bf16 %v116, %v113
    %v141 = vpack.c.bf16 %v120, %v117
    %v142 = vpack.c.bf16 %v121, %v118
    %v143 = vpack.c.bf16 %v122, %v119
    %v144 = vpack.c.bf16 %v123, %v123
    %v145 = vpack.c.bf16 %v124, %v124
    %v146 = vpack.c.bf16 %v125, %v125
    %v147 = vld [vmem:[%s2] sm:$0xff]
    %v148 = vld [vmem:[%s2 + $0x8] sm:$0xff]
    %v149 = vld [vmem:[%s2 + $0x10] sm:$0xff]
    %v150 = vld [vmem:[%s2 + $0x18] sm:$0xff]
    %v151 = vld [vmem:[%s2 + $0x20] sm:$0xff]
    %v152 = vld [vmem:[%s2 + $0x28] sm:$0xff]
    %v153 = vld [vmem:[%s2 + $0x30] sm:$0xff]
    %v154 = vld [vmem:[%s2 + $0x38] sm:$0xff]
    %v155 = vld [vmem:[%s2 + $0x40] sm:$0xff]
    %v156 = vld [vmem:[%s2 + $0x48] sm:$0xff]
    %v157 = vld [vmem:[%s2 + $0x50] sm:$0xff]
    %v158 = vld [vmem:[%s2 + $0x58] sm:$0xff]
    %v159 = vld [vmem:[%s2 + $0x60] sm:$0xff]
    %v160 = vld [vmem:[%s2 + $0x68] sm:$0xff]
    %v161 = vld [vmem:[%s2 + $0x70] sm:$0xff]
    %v162 = vld [vmem:[%s2 + $0x78] sm:$0xff]
    %v163 = vld [vmem:[%s2 + $0x80] sm:$0xff]
    %v164 = vld [vmem:[%s2 + $0x88] sm:$0xff]
    %v165 = vld [vmem:[%s2 + $0x90] sm:$0xff]
    %v166 = vld [vmem:[%s2 + $0x98] sm:$0xff]
    %v167 = vld [vmem:[%s2 + $0xa0] sm:$0xff]
    %v168 = vld [vmem:[%s2 + $0xa8] sm:$0xff]
    %v169 = vld [vmem:[%s2 + $0xb0] sm:$0xff]
    %v170 = vld [vmem:[%s2 + $0xb8] sm:$0xff]
    %v171 = vld [vmem:[%s2 + $0xc0] sm:$0xff]
    %v172 = vld [vmem:[%s2 + $0xc8] sm:$0xff]
    %v173 = vld [vmem:[%s2 + $0xd0] sm:$0xff]
    %v174 = vld [vmem:[%s2 + $0xd8] sm:$0xff]
    %v175 = vld [vmem:[%s2 + $0xe0] sm:$0xff]
    %v176 = vld [vmem:[%s2 + $0xe8] sm:$0xff]
    %v177 = vld [vmem:[%s2 + $0xf0] sm:$0xff]
    %v178 = vld [vmem:[%s2 + $0xf8] sm:$0xff]
    %v179 = vld [vmem:[%s2 + $0x100] sm:$0xff]
    %v180 = vld [vmem:[%s2 + $0x108] sm:$0xff]
    %v181 = vld [vmem:[%s2 + $0x110] sm:$0xff]
    %v182 = vld [vmem:[%s2 + $0x118] sm:$0x11]
    %v219 = vunpack.c.l.b16 %v147
    %v220 = vunpack.c.h.b16 %v147
    %v221 = vunpack.c.l.b16 %v148
    %v222 = vunpack.c.h.b16 %v148
    %v223 = vunpack.c.l.b16 %v149
    %v224 = vunpack.c.h.b16 %v149
    %v225 = vunpack.c.l.b16 %v150
    %v226 = vunpack.c.h.b16 %v150
    %v227 = vunpack.c.l.b16 %v151
    %v228 = vunpack.c.h.b16 %v151
    %v229 = vunpack.c.l.b16 %v152
    %v230 = vunpack.c.h.b16 %v152
    %v231 = vunpack.c.l.b16 %v153
    %v232 = vunpack.c.h.b16 %v153
    %v233 = vunpack.c.l.b16 %v154
    %v234 = vunpack.c.h.b16 %v154
    %v235 = vunpack.c.l.b16 %v155
    %v236 = vunpack.c.h.b16 %v155
    %v237 = vunpack.c.l.b16 %v156
    %v238 = vunpack.c.h.b16 %v156
    %v239 = vunpack.c.l.b16 %v157
    %v240 = vunpack.c.h.b16 %v157
    %v241 = vunpack.c.l.b16 %v158
    %v242 = vunpack.c.h.b16 %v158
    %v243 = vunpack.c.l.b16 %v159
    %v244 = vunpack.c.h.b16 %v159
    %v245 = vunpack.c.l.b16 %v160
    %v246 = vunpack.c.h.b16 %v160
    %v247 = vunpack.c.l.b16 %v161
    %v248 = vunpack.c.h.b16 %v161
    %v249 = vunpack.c.l.b16 %v162
    %v250 = vunpack.c.h.b16 %v162
    %v251 = vunpack.c.l.b16 %v163
    %v252 = vunpack.c.h.b16 %v163
    %v253 = vunpack.c.l.b16 %v164
    %v254 = vunpack.c.h.b16 %v164
    %v255 = vunpack.c.l.b16 %v165
    %v256 = vunpack.c.h.b16 %v165
    %v257 = vunpack.c.l.b16 %v166
    %v258 = vunpack.c.h.b16 %v166
    %v259 = vunpack.c.l.b16 %v167
    %v260 = vunpack.c.h.b16 %v167
    %v261 = vunpack.c.l.b16 %v168
    %v262 = vunpack.c.h.b16 %v168
    %v263 = vunpack.c.l.b16 %v169
    %v264 = vunpack.c.h.b16 %v169
    %v265 = vunpack.c.l.b16 %v170
    %v266 = vunpack.c.h.b16 %v170
    %v267 = vunpack.c.l.b16 %v171
    %v268 = vunpack.c.h.b16 %v171
    %v269 = vunpack.c.l.b16 %v172
    %v270 = vunpack.c.h.b16 %v172
    %v271 = vunpack.c.l.b16 %v173
    %v272 = vunpack.c.h.b16 %v173
    %v273 = vunpack.c.l.b16 %v174
    %v274 = vunpack.c.h.b16 %v174
    %v275 = vunpack.c.l.b16 %v175
    %v276 = vunpack.c.h.b16 %v175
    %v277 = vunpack.c.l.b16 %v176
    %v278 = vunpack.c.h.b16 %v176
    %v279 = vunpack.c.l.b16 %v177
    %v280 = vunpack.c.h.b16 %v177
    %v281 = vunpack.c.l.b16 %v178
    %v282 = vunpack.c.h.b16 %v178
    %v283 = vunpack.c.l.b16 %v179
    %v284 = vunpack.c.h.b16 %v179
    %v285 = vunpack.c.l.b16 %v180
    %v286 = vunpack.c.h.b16 %v180
    %v287 = vunpack.c.l.b16 %v181
    %v288 = vunpack.c.h.b16 %v181
    %v289 = vunpack.c.l.b16 %v182
    %v290 = vunpack.c.h.b16 %v182
    %v291 = vpack.c.b16 %v221, %v219
    %v292 = vpack.c.b16 %v222, %v220
    %v293 = vpack.c.b16 %v225, %v223
    %v294 = vpack.c.b16 %v226, %v224
    %v295 = vpack.c.b16 %v229, %v227
    %v296 = vpack.c.b16 %v230, %v228
    %v297 = vpack.c.b16 %v233, %v231
    %v298 = vpack.c.b16 %v234, %v232
    %v299 = vpack.c.b16 %v237, %v235
    %v300 = vpack.c.b16 %v238, %v236
    %v301 = vpack.c.b16 %v241, %v239
    %v302 = vpack.c.b16 %v242, %v240
    %v303 = vpack.c.b16 %v245, %v243
    %v304 = vpack.c.b16 %v246, %v244
    %v305 = vpack.c.b16 %v249, %v247
    %v306 = vpack.c.b16 %v250, %v248
    %v307 = vpack.c.b16 %v253, %v251
    %v308 = vpack.c.b16 %v254, %v252
    %v309 = vpack.c.b16 %v257, %v255
    %v310 = vpack.c.b16 %v258, %v256
    %v311 = vpack.c.b16 %v261, %v259
    %v312 = vpack.c.b16 %v262, %v260
    %v313 = vpack.c.b16 %v265, %v263
    %v314 = vpack.c.b16 %v266, %v264
    %v315 = vpack.c.b16 %v269, %v267
    %v316 = vpack.c.b16 %v270, %v268
    %v317 = vpack.c.b16 %v273, %v271
    %v318 = vpack.c.b16 %v274, %v272
    %v319 = vpack.c.b16 %v277, %v275
    %v320 = vpack.c.b16 %v278, %v276
    %v321 = vpack.c.b16 %v281, %v279
    %v322 = vpack.c.b16 %v282, %v280
    %v323 = vpack.c.b16 %v285, %v283
    %v324 = vpack.c.b16 %v286, %v284
    %v325 = vpack.c.b16 %v289, %v287
    %v326 = vpack.c.b16 %v290, %v288
    %vm361 = vcmask 211968
    %v363 = vsel %vm361, %v128, 0
    %v366 = vsel %vm361, %v131, 0
    %v369 = vsel %vm361, %v134, 0
    %v372 = vsel %vm361, %v137, 0
    %v375 = vsel %vm361, %v140, 0
    %v378 = vsel %vm361, %v143, 0
    %v381 = vsel %vm361, %v146, 0
    %vm383 = vcmask 1044480
    %v385 = vsel %vm383, %v325, 0
    %v388 = vsel %vm383, %v326, 0
    %390 = vmatpush.bf16.msra.mxu0 %v305
    %391 = vmatpush.bf16.msra.mxu0 %v303
    %392 = vmatpush.bf16.msra.mxu0 %v301
    %393 = vmatpush.bf16.msra.mxu0 %v299
    %394 = vmatpush.bf16.msra.mxu0 %v297
    %395 = vmatpush.bf16.msra.mxu0 %v295
    %396 = vmatpush.bf16.msra.mxu0 %v293
    %397 = vmatpush.bf16.msra.mxu0 %v291
    %398 = vmatmul.bf16.gmra.mxu0 %v126
    %v399 = vpop.f32.mrf.mxu0
    %v400 = vadd.f32 0.0, %v399
    %v401 = vpop.f32.mrf.mxu0
    %v402 = vadd.f32 0.0, %v401
    %403 = vmatmul.bf16.gmra.mxu0 %v129
    %v404 = vpop.f32.mrf.mxu0
    %v405 = vadd.f32 0.0, %v404
    %v406 = vpop.f32.mrf.mxu0
    %v407 = vadd.f32 0.0, %v406
    %408 = vmatmul.bf16.gmra.mxu0 %v132
    %v409 = vpop.f32.mrf.mxu0
    %v410 = vadd.f32 0.0, %v409
    %v411 = vpop.f32.mrf.mxu0
    %v412 = vadd.f32 0.0, %v411
    %413 = vmatmul.bf16.gmra.mxu0 %v135
    %v414 = vpop.f32.mrf.mxu0
    %v415 = vadd.f32 0.0, %v414
    %v416 = vpop.f32.mrf.mxu0
    %v417 = vadd.f32 0.0, %v416
    %418 = vmatmul.bf16.gmra.mxu0 %v138
    %v419 = vpop.f32.mrf.mxu0
    %v420 = vadd.f32 0.0, %v419
    %v421 = vpop.f32.mrf.mxu0
    %v422 = vadd.f32 0.0, %v421
    %423 = vmatmul.bf16.gmra.mxu0 %v141
    %v424 = vpop.f32.mrf.mxu0
    %v425 = vadd.f32 0.0, %v424
    %v426 = vpop.f32.mrf.mxu0
    %v427 = vadd.f32 0.0, %v426
    %428 = vmatmul.bf16.gmra.mxu0 %v144
    %v429 = vpop.f32.mrf.mxu0
    %v430 = vadd.f32 0.0, %v429
    %v431 = vpop.f32.mrf.mxu0
    %432 = vdwg.mxu0
    %433 = vmatpush.bf16.msra.mxu0 %v321
    %434 = vmatpush.bf16.msra.mxu0 %v319
    %435 = vmatpush.bf16.msra.mxu0 %v317
    %436 = vmatpush.bf16.msra.mxu0 %v315
    %437 = vmatpush.bf16.msra.mxu0 %v313
    %438 = vmatpush.bf16.msra.mxu0 %v311
    %439 = vmatpush.bf16.msra.mxu0 %v309
    %440 = vmatpush.bf16.msra.mxu0 %v307
    %441 = vmatmul.bf16.gmra.mxu0 %v127
    %v442 = vpop.f32.mrf.mxu0
    %v443 = vadd.f32 %v400, %v442
    %v444 = vpop.f32.mrf.mxu0
    %v445 = vadd.f32 %v402, %v444
    %446 = vmatmul.bf16.gmra.mxu0 %v130
    %v447 = vpop.f32.mrf.mxu0
    %v448 = vadd.f32 %v405, %v447
    %v449 = vpop.f32.mrf.mxu0
    %v450 = vadd.f32 %v407, %v449
    %451 = vmatmul.bf16.gmra.mxu0 %v133
    %v452 = vpop.f32.mrf.mxu0
    %v453 = vadd.f32 %v410, %v452
    %v454 = vpop.f32.mrf.mxu0
    %v455 = vadd.f32 %v412, %v454
    %456 = vmatmul.bf16.gmra.mxu0 %v136
    %v457 = vpop.f32.mrf.mxu0
    %v458 = vadd.f32 %v415, %v457
    %v459 = vpop.f32.mrf.mxu0
    %v460 = vadd.f32 %v417, %v459
    %461 = vmatmul.bf16.gmra.mxu0 %v139
    %v462 = vpop.f32.mrf.mxu0
    %v463 = vadd.f32 %v420, %v462
    %v464 = vpop.f32.mrf.mxu0
    %v465 = vadd.f32 %v422, %v464
    %466 = vmatmul.bf16.gmra.mxu0 %v142
    %v467 = vpop.f32.mrf.mxu0
    %v468 = vadd.f32 %v425, %v467
    %v469 = vpop.f32.mrf.mxu0
    %v470 = vadd.f32 %v427, %v469
    %471 = vmatmul.bf16.gmra.mxu0 %v145
    %v472 = vpop.f32.mrf.mxu0
    %v473 = vadd.f32 %v430, %v472
    %v474 = vpop.f32.mrf.mxu0
    %475 = vdwg.mxu0
    %476 = vmatpush.bf16.msra.mxu0 0
    %477 = vmatpush.bf16.msra.mxu0 0
    %478 = vmatpush.bf16.msra.mxu0 0
    %479 = vmatpush.bf16.msra.mxu0 0
    %480 = vmatpush.bf16.msra.mxu0 0
    %481 = vmatpush.bf16.msra.mxu0 0
    %482 = vmatpush.bf16.msra.mxu0 %v385
    %483 = vmatpush.bf16.msra.mxu0 %v323
    %484 = vmatmul.bf16.gmra.mxu0 %v363
    %v485 = vpop.f32.mrf.mxu0
    %v486 = vadd.f32 %v443, %v485
    %v487 = vpop.f32.mrf.mxu0
    %v488 = vadd.f32 %v445, %v487
    %489 = vmatmul.bf16.gmra.mxu0 %v366
    %v490 = vpop.f32.mrf.mxu0
    %v491 = vadd.f32 %v448, %v490
    %v492 = vpop.f32.mrf.mxu0
    %v493 = vadd.f32 %v450, %v492
    %494 = vmatmul.bf16.gmra.mxu0 %v369
    %v495 = vpop.f32.mrf.mxu0
    %v496 = vadd.f32 %v453, %v495
    %v497 = vpop.f32.mrf.mxu0
    %v498 = vadd.f32 %v455, %v497
    %499 = vmatmul.bf16.gmra.mxu0 %v372
    %v500 = vpop.f32.mrf.mxu0
    %v501 = vadd.f32 %v458, %v500
    %v502 = vpop.f32.mrf.mxu0
    %v503 = vadd.f32 %v460, %v502
    %504 = vmatmul.bf16.gmra.mxu0 %v375
    %v505 = vpop.f32.mrf.mxu0
    %v506 = vadd.f32 %v463, %v505
    %v507 = vpop.f32.mrf.mxu0
    %v508 = vadd.f32 %v465, %v507
    %509 = vmatmul.bf16.gmra.mxu0 %v378
    %v510 = vpop.f32.mrf.mxu0
    %v511 = vadd.f32 %v468, %v510
    %v512 = vpop.f32.mrf.mxu0
    %v513 = vadd.f32 %v470, %v512
    %514 = vmatmul.bf16.gmra.mxu0 %v381
    %v515 = vpop.f32.mrf.mxu0
    %v516 = vadd.f32 %v473, %v515
    %v517 = vpop.f32.mrf.mxu0
    %518 = vdwg.mxu0
    %519 = vmatpush.bf16.msra.mxu0 %v306
    %520 = vmatpush.bf16.msra.mxu0 %v304
    %521 = vmatpush.bf16.msra.mxu0 %v302
    %522 = vmatpush.bf16.msra.mxu0 %v300
    %523 = vmatpush.bf16.msra.mxu0 %v298
    %524 = vmatpush.bf16.msra.mxu0 %v296
    %525 = vmatpush.bf16.msra.mxu0 %v294
    %526 = vmatpush.bf16.msra.mxu0 %v292
    %527 = vmatmul.bf16.gmra.mxu0 %v126
    %v528 = vpop.f32.mrf.mxu0
    %v529 = vadd.f32 0.0, %v528
    %v530 = vpop.f32.mrf.mxu0
    %v531 = vadd.f32 0.0, %v530
    %532 = vmatmul.bf16.gmra.mxu0 %v129
    %v533 = vpop.f32.mrf.mxu0
    %v534 = vadd.f32 0.0, %v533
    %v535 = vpop.f32.mrf.mxu0
    %v536 = vadd.f32 0.0, %v535
    %537 = vmatmul.bf16.gmra.mxu0 %v132
    %v538 = vpop.f32.mrf.mxu0
    %v539 = vadd.f32 0.0, %v538
    %v540 = vpop.f32.mrf.mxu0
    %v541 = vadd.f32 0.0, %v540
    %542 = vmatmul.bf16.gmra.mxu0 %v135
    %v543 = vpop.f32.mrf.mxu0
    %v544 = vadd.f32 0.0, %v543
    %v545 = vpop.f32.mrf.mxu0
    %v546 = vadd.f32 0.0, %v545
    %547 = vmatmul.bf16.gmra.mxu0 %v138
    %v548 = vpop.f32.mrf.mxu0
    %v549 = vadd.f32 0.0, %v548
    %v550 = vpop.f32.mrf.mxu0
    %v551 = vadd.f32 0.0, %v550
    %552 = vmatmul.bf16.gmra.mxu0 %v141
    %v553 = vpop.f32.mrf.mxu0
    %v554 = vadd.f32 0.0, %v553
    %v555 = vpop.f32.mrf.mxu0
    %v556 = vadd.f32 0.0, %v555
    %557 = vmatmul.bf16.gmra.mxu0 %v144
    %v558 = vpop.f32.mrf.mxu0
    %v559 = vadd.f32 0.0, %v558
    %v560 = vpop.f32.mrf.mxu0
    %561 = vdwg.mxu0
    %562 = vmatpush.bf16.msra.mxu0 %v322
    %563 = vmatpush.bf16.msra.mxu0 %v320
    %564 = vmatpush.bf16.msra.mxu0 %v318
    %565 = vmatpush.bf16.msra.mxu0 %v316
    %566 = vmatpush.bf16.msra.mxu0 %v314
    %567 = vmatpush.bf16.msra.mxu0 %v312
    %568 = vmatpush.bf16.msra.mxu0 %v310
    %569 = vmatpush.bf16.msra.mxu0 %v308
    %570 = vmatmul.bf16.gmra.mxu0 %v127
    %v571 = vpop.f32.mrf.mxu0
    %v572 = vadd.f32 %v529, %v571
    %v573 = vpop.f32.mrf.mxu0
    %v574 = vadd.f32 %v531, %v573
    %575 = vmatmul.bf16.gmra.mxu0 %v130
    %v576 = vpop.f32.mrf.mxu0
    %v577 = vadd.f32 %v534, %v576
    %v578 = vpop.f32.mrf.mxu0
    %v579 = vadd.f32 %v536, %v578
    %580 = vmatmul.bf16.gmra.mxu0 %v133
    %v581 = vpop.f32.mrf.mxu0
    %v582 = vadd.f32 %v539, %v581
    %v583 = vpop.f32.mrf.mxu0
    %v584 = vadd.f32 %v541, %v583
    %585 = vmatmul.bf16.gmra.mxu0 %v136
    %v586 = vpop.f32.mrf.mxu0
    %v587 = vadd.f32 %v544, %v586
    %v588 = vpop.f32.mrf.mxu0
    %v589 = vadd.f32 %v546, %v588
    %590 = vmatmul.bf16.gmra.mxu0 %v139
    %v591 = vpop.f32.mrf.mxu0
    %v592 = vadd.f32 %v549, %v591
    %v593 = vpop.f32.mrf.mxu0
    %v594 = vadd.f32 %v551, %v593
    %595 = vmatmul.bf16.gmra.mxu0 %v142
    %v596 = vpop.f32.mrf.mxu0
    %v597 = vadd.f32 %v554, %v596
    %v598 = vpop.f32.mrf.mxu0
    %v599 = vadd.f32 %v556, %v598
    %600 = vmatmul.bf16.gmra.mxu0 %v145
    %v601 = vpop.f32.mrf.mxu0
    %v602 = vadd.f32 %v559, %v601
    %v603 = vpop.f32.mrf.mxu0
    %604 = vdwg.mxu0
    %605 = vmatpush.bf16.msra.mxu0 0
    %606 = vmatpush.bf16.msra.mxu0 0
    %607 = vmatpush.bf16.msra.mxu0 0
    %608 = vmatpush.bf16.msra.mxu0 0
    %609 = vmatpush.bf16.msra.mxu0 0
    %610 = vmatpush.bf16.msra.mxu0 0
    %611 = vmatpush.bf16.msra.mxu0 %v388
    %612 = vmatpush.bf16.msra.mxu0 %v324
    %613 = vmatmul.bf16.gmra.mxu0 %v363
    %v614 = vpop.f32.mrf.mxu0
    %v615 = vadd.f32 %v572, %v614
    %v616 = vpop.f32.mrf.mxu0
    %v617 = vadd.f32 %v574, %v616
    %618 = vmatmul.bf16.gmra.mxu0 %v366
    %v619 = vpop.f32.mrf.mxu0
    %v620 = vadd.f32 %v577, %v619
    %v621 = vpop.f32.mrf.mxu0
    %v622 = vadd.f32 %v579, %v621
    %623 = vmatmul.bf16.gmra.mxu0 %v369
    %v624 = vpop.f32.mrf.mxu0
    %v625 = vadd.f32 %v582, %v624
    %v626 = vpop.f32.mrf.mxu0
    %v627 = vadd.f32 %v584, %v626
    %628 = vmatmul.bf16.gmra.mxu0 %v372
    %v629 = vpop.f32.mrf.mxu0
    %v630 = vadd.f32 %v587, %v629
    %v631 = vpop.f32.mrf.mxu0
    %v632 = vadd.f32 %v589, %v631
    %633 = vmatmul.bf16.gmra.mxu0 %v375
    %v634 = vpop.f32.mrf.mxu0
    %v635 = vadd.f32 %v592, %v634
    %v636 = vpop.f32.mrf.mxu0
    %v637 = vadd.f32 %v594, %v636
    %638 = vmatmul.bf16.gmra.mxu0 %v378
    %v639 = vpop.f32.mrf.mxu0
    %v640 = vadd.f32 %v597, %v639
    %v641 = vpop.f32.mrf.mxu0
    %v642 = vadd.f32 %v599, %v641
    %643 = vmatmul.bf16.gmra.mxu0 %v381
    %v644 = vpop.f32.mrf.mxu0
    %v645 = vadd.f32 %v602, %v644
    %v646 = vpop.f32.mrf.mxu0
    %647 = vdwg.mxu0
    %s648 = scalar_lea.vmem %s2, 288
    %v649 = vld [vmem:[%s648] sm:$0xff]
    %v650 = vld [vmem:[%s648 + $0x8] sm:$0xff]
    %v651 = vld [vmem:[%s648 + $0x10] sm:$0xff]
    %v652 = vld [vmem:[%s648 + $0x18] sm:$0xff]
    %v653 = vld [vmem:[%s648 + $0x20] sm:$0xff]
    %v654 = vld [vmem:[%s648 + $0x28] sm:$0xff]
    %v655 = vld [vmem:[%s648 + $0x30] sm:$0xff]
    %v656 = vld [vmem:[%s648 + $0x38] sm:$0xff]
    %v657 = vld [vmem:[%s648 + $0x40] sm:$0xff]
    %v658 = vld [vmem:[%s648 + $0x48] sm:$0xff]
    %v659 = vld [vmem:[%s648 + $0x50] sm:$0xff]
    %v660 = vld [vmem:[%s648 + $0x58] sm:$0xff]
    %v661 = vld [vmem:[%s648 + $0x60] sm:$0xff]
    %v662 = vld [vmem:[%s648 + $0x68] sm:$0xff]
    %v663 = vld [vmem:[%s648 + $0x70] sm:$0xff]
    %v664 = vld [vmem:[%s648 + $0x78] sm:$0xff]
    %v665 = vld [vmem:[%s648 + $0x80] sm:$0xff]
    %v666 = vld [vmem:[%s648 + $0x88] sm:$0xff]
    %v667 = vld [vmem:[%s648 + $0x90] sm:$0xff]
    %v668 = vld [vmem:[%s648 + $0x98] sm:$0xff]
    %v669 = vld [vmem:[%s648 + $0xa0] sm:$0xff]
    %v670 = vld [vmem:[%s648 + $0xa8] sm:$0xff]
    %v671 = vld [vmem:[%s648 + $0xb0] sm:$0xff]
    %v672 = vld [vmem:[%s648 + $0xb8] sm:$0xff]
    %v673 = vld [vmem:[%s648 + $0xc0] sm:$0xff]
    %v674 = vld [vmem:[%s648 + $0xc8] sm:$0xff]
    %v675 = vld [vmem:[%s648 + $0xd0] sm:$0xff]
    %v676 = vld [vmem:[%s648 + $0xd8] sm:$0xff]
    %v677 = vld [vmem:[%s648 + $0xe0] sm:$0xff]
    %v678 = vld [vmem:[%s648 + $0xe8] sm:$0xff]
    %v679 = vld [vmem:[%s648 + $0xf0] sm:$0xff]
    %v680 = vld [vmem:[%s648 + $0xf8] sm:$0xff]
    %v681 = vld [vmem:[%s648 + $0x100] sm:$0xff]
    %v682 = vld [vmem:[%s648 + $0x108] sm:$0xff]
    %v683 = vld [vmem:[%s648 + $0x110] sm:$0xff]
    %v684 = vld [vmem:[%s648 + $0x118] sm:$0x11]
    %v721 = vunpack.c.l.b16 %v649
    %v722 = vunpack.c.h.b16 %v649
    %v723 = vunpack.c.l.b16 %v650
    %v724 = vunpack.c.h.b16 %v650
    %v725 = vunpack.c.l.b16 %v651
    %v726 = vunpack.c.h.b16 %v651
    %v727 = vunpack.c.l.b16 %v652
    %v728 = vunpack.c.h.b16 %v652
    %v729 = vunpack.c.l.b16 %v653
    %v730 = vunpack.c.h.b16 %v653
    %v731 = vunpack.c.l.b16 %v654
    %v732 = vunpack.c.h.b16 %v654
    %v733 = vunpack.c.l.b16 %v655
    %v734 = vunpack.c.h.b16 %v655
    %v735 = vunpack.c.l.b16 %v656
    %v736 = vunpack.c.h.b16 %v656
    %v737 = vunpack.c.l.b16 %v657
    %v738 = vunpack.c.h.b16 %v657
    %v739 = vunpack.c.l.b16 %v658
    %v740 = vunpack.c.h.b16 %v658
    %v741 = vunpack.c.l.b16 %v659
    %v742 = vunpack.c.h.b16 %v659
    %v743 = vunpack.c.l.b16 %v660
    %v744 = vunpack.c.h.b16 %v660
    %v745 = vunpack.c.l.b16 %v661
    %v746 = vunpack.c.h.b16 %v661
    %v747 = vunpack.c.l.b16 %v662
    %v748 = vunpack.c.h.b16 %v662
    %v749 = vunpack.c.l.b16 %v663
    %v750 = vunpack.c.h.b16 %v663
    %v751 = vunpack.c.l.b16 %v664
    %v752 = vunpack.c.h.b16 %v664
    %v753 = vunpack.c.l.b16 %v665
    %v754 = vunpack.c.h.b16 %v665
    %v755 = vunpack.c.l.b16 %v666
    %v756 = vunpack.c.h.b16 %v666
    %v757 = vunpack.c.l.b16 %v667
    %v758 = vunpack.c.h.b16 %v667
    %v759 = vunpack.c.l.b16 %v668
    %v760 = vunpack.c.h.b16 %v668
    %v761 = vunpack.c.l.b16 %v669
    %v762 = vunpack.c.h.b16 %v669
    %v763 = vunpack.c.l.b16 %v670
    %v764 = vunpack.c.h.b16 %v670
    %v765 = vunpack.c.l.b16 %v671
    %v766 = vunpack.c.h.b16 %v671
    %v767 = vunpack.c.l.b16 %v672
    %v768 = vunpack.c.h.b16 %v672
    %v769 = vunpack.c.l.b16 %v673
    %v770 = vunpack.c.h.b16 %v673
    %v771 = vunpack.c.l.b16 %v674
    %v772 = vunpack.c.h.b16 %v674
    %v773 = vunpack.c.l.b16 %v675
    %v774 = vunpack.c.h.b16 %v675
    %v775 = vunpack.c.l.b16 %v676
    %v776 = vunpack.c.h.b16 %v676
    %v777 = vunpack.c.l.b16 %v677
    %v778 = vunpack.c.h.b16 %v677
    %v779 = vunpack.c.l.b16 %v678
    %v780 = vunpack.c.h.b16 %v678
    %v781 = vunpack.c.l.b16 %v679
    %v782 = vunpack.c.h.b16 %v679
    %v783 = vunpack.c.l.b16 %v680
    %v784 = vunpack.c.h.b16 %v680
    %v785 = vunpack.c.l.b16 %v681
    %v786 = vunpack.c.h.b16 %v681
    %v787 = vunpack.c.l.b16 %v682
    %v788 = vunpack.c.h.b16 %v682
    %v789 = vunpack.c.l.b16 %v683
    %v790 = vunpack.c.h.b16 %v683
    %v791 = vunpack.c.l.b16 %v684
    %v792 = vunpack.c.h.b16 %v684
    %v793 = vpack.c.b16 %v723, %v721
    %v794 = vpack.c.b16 %v724, %v722
    %v795 = vpack.c.b16 %v727, %v725
    %v796 = vpack.c.b16 %v728, %v726
    %v797 = vpack.c.b16 %v731, %v729
    %v798 = vpack.c.b16 %v732, %v730
    %v799 = vpack.c.b16 %v735, %v733
    %v800 = vpack.c.b16 %v736, %v734
    %v801 = vpack.c.b16 %v739, %v737
    %v802 = vpack.c.b16 %v740, %v738
    %v803 = vpack.c.b16 %v743, %v741
    %v804 = vpack.c.b16 %v744, %v742
    %v805 = vpack.c.b16 %v747, %v745
    %v806 = vpack.c.b16 %v748, %v746
    %v807 = vpack.c.b16 %v751, %v749
    %v808 = vpack.c.b16 %v752, %v750
    %v809 = vpack.c.b16 %v755, %v753
    %v810 = vpack.c.b16 %v756, %v754
    %v811 = vpack.c.b16 %v759, %v757
    %v812 = vpack.c.b16 %v760, %v758
    %v813 = vpack.c.b16 %v763, %v761
    %v814 = vpack.c.b16 %v764, %v762
    %v815 = vpack.c.b16 %v767, %v765
    %v816 = vpack.c.b16 %v768, %v766
    %v817 = vpack.c.b16 %v771, %v769
    %v818 = vpack.c.b16 %v772, %v770
    %v819 = vpack.c.b16 %v775, %v773
    %v820 = vpack.c.b16 %v776, %v774
    %v821 = vpack.c.b16 %v779, %v777
    %v822 = vpack.c.b16 %v780, %v778
    %v823 = vpack.c.b16 %v783, %v781
    %v824 = vpack.c.b16 %v784, %v782
    %v825 = vpack.c.b16 %v787, %v785
    %v826 = vpack.c.b16 %v788, %v786
    %v827 = vpack.c.b16 %v791, %v789
    %v828 = vpack.c.b16 %v792, %v790
    %v864 = vsel %vm383, %v827, 0
    %v867 = vsel %vm383, %v828, 0
    %869 = vmatpush.bf16.msra.mxu0 %v807
    %870 = vmatpush.bf16.msra.mxu0 %v805
    %871 = vmatpush.bf16.msra.mxu0 %v803
    %872 = vmatpush.bf16.msra.mxu0 %v801
    %873 = vmatpush.bf16.msra.mxu0 %v799
    %874 = vmatpush.bf16.msra.mxu0 %v797
    %875 = vmatpush.bf16.msra.mxu0 %v795
    %876 = vmatpush.bf16.msra.mxu0 %v793
    %877 = vmatmul.bf16.gmra.mxu0 %v126
    %v878 = vpop.f32.mrf.mxu0
    %v879 = vadd.f32 0.0, %v878
    %v880 = vpop.f32.mrf.mxu0
    %v881 = vadd.f32 0.0, %v880
    %882 = vmatmul.bf16.gmra.mxu0 %v129
    %v883 = vpop.f32.mrf.mxu0
    %v884 = vadd.f32 0.0, %v883
    %v885 = vpop.f32.mrf.mxu0
    %v886 = vadd.f32 0.0, %v885
    %887 = vmatmul.bf16.gmra.mxu0 %v132
    %v888 = vpop.f32.mrf.mxu0
    %v889 = vadd.f32 0.0, %v888
    %v890 = vpop.f32.mrf.mxu0
    %v891 = vadd.f32 0.0, %v890
    %892 = vmatmul.bf16.gmra.mxu0 %v135
    %v893 = vpop.f32.mrf.mxu0
    %v894 = vadd.f32 0.0, %v893
    %v895 = vpop.f32.mrf.mxu0
    %v896 = vadd.f32 0.0, %v895
    %897 = vmatmul.bf16.gmra.mxu0 %v138
    %v898 = vpop.f32.mrf.mxu0
    %v899 = vadd.f32 0.0, %v898
    %v900 = vpop.f32.mrf.mxu0
    %v901 = vadd.f32 0.0, %v900
    %902 = vmatmul.bf16.gmra.mxu0 %v141
    %v903 = vpop.f32.mrf.mxu0
    %v904 = vadd.f32 0.0, %v903
    %v905 = vpop.f32.mrf.mxu0
    %v906 = vadd.f32 0.0, %v905
    %907 = vmatmul.bf16.gmra.mxu0 %v144
    %v908 = vpop.f32.mrf.mxu0
    %v909 = vadd.f32 0.0, %v908
    %v910 = vpop.f32.mrf.mxu0
    %911 = vdwg.mxu0
    %912 = vmatpush.bf16.msra.mxu0 %v823
    %913 = vmatpush.bf16.msra.mxu0 %v821
    %914 = vmatpush.bf16.msra.mxu0 %v819
    %915 = vmatpush.bf16.msra.mxu0 %v817
    %916 = vmatpush.bf16.msra.mxu0 %v815
    %917 = vmatpush.bf16.msra.mxu0 %v813
    %918 = vmatpush.bf16.msra.mxu0 %v811
    %919 = vmatpush.bf16.msra.mxu0 %v809
    %920 = vmatmul.bf16.gmra.mxu0 %v127
    %v921 = vpop.f32.mrf.mxu0
    %v922 = vadd.f32 %v879, %v921
    %v923 = vpop.f32.mrf.mxu0
    %v924 = vadd.f32 %v881, %v923
    %925 = vmatmul.bf16.gmra.mxu0 %v130
    %v926 = vpop.f32.mrf.mxu0
    %v927 = vadd.f32 %v884, %v926
    %v928 = vpop.f32.mrf.mxu0
    %v929 = vadd.f32 %v886, %v928
    %930 = vmatmul.bf16.gmra.mxu0 %v133
    %v931 = vpop.f32.mrf.mxu0
    %v932 = vadd.f32 %v889, %v931
    %v933 = vpop.f32.mrf.mxu0
    %v934 = vadd.f32 %v891, %v933
    %935 = vmatmul.bf16.gmra.mxu0 %v136
    %v936 = vpop.f32.mrf.mxu0
    %v937 = vadd.f32 %v894, %v936
    %v938 = vpop.f32.mrf.mxu0
    %v939 = vadd.f32 %v896, %v938
    %940 = vmatmul.bf16.gmra.mxu0 %v139
    %v941 = vpop.f32.mrf.mxu0
    %v942 = vadd.f32 %v899, %v941
    %v943 = vpop.f32.mrf.mxu0
    %v944 = vadd.f32 %v901, %v943
    %945 = vmatmul.bf16.gmra.mxu0 %v142
    %v946 = vpop.f32.mrf.mxu0
    %v947 = vadd.f32 %v904, %v946
    %v948 = vpop.f32.mrf.mxu0
    %v949 = vadd.f32 %v906, %v948
    %950 = vmatmul.bf16.gmra.mxu0 %v145
    %v951 = vpop.f32.mrf.mxu0
    %v952 = vadd.f32 %v909, %v951
    %v953 = vpop.f32.mrf.mxu0
    %954 = vdwg.mxu0
    %955 = vmatpush.bf16.msra.mxu0 0
    %956 = vmatpush.bf16.msra.mxu0 0
    %957 = vmatpush.bf16.msra.mxu0 0
    %958 = vmatpush.bf16.msra.mxu0 0
    %959 = vmatpush.bf16.msra.mxu0 0
    %960 = vmatpush.bf16.msra.mxu0 0
    %961 = vmatpush.bf16.msra.mxu0 %v864
    %962 = vmatpush.bf16.msra.mxu0 %v825
    %963 = vmatmul.bf16.gmra.mxu0 %v363
    %v964 = vpop.f32.mrf.mxu0
    %v965 = vadd.f32 %v922, %v964
    %v966 = vpop.f32.mrf.mxu0
    %v967 = vadd.f32 %v924, %v966
    %968 = vmatmul.bf16.gmra.mxu0 %v366
    %v969 = vpop.f32.mrf.mxu0
    %v970 = vadd.f32 %v927, %v969
    %v971 = vpop.f32.mrf.mxu0
    %v972 = vadd.f32 %v929, %v971
    %973 = vmatmul.bf16.gmra.mxu0 %v369
    %v974 = vpop.f32.mrf.mxu0
    %v975 = vadd.f32 %v932, %v974
    %v976 = vpop.f32.mrf.mxu0
    %v977 = vadd.f32 %v934, %v976
    %978 = vmatmul.bf16.gmra.mxu0 %v372
    %v979 = vpop.f32.mrf.mxu0
    %v980 = vadd.f32 %v937, %v979
    %v981 = vpop.f32.mrf.mxu0
    %v982 = vadd.f32 %v939, %v981
    %983 = vmatmul.bf16.gmra.mxu0 %v375
    %v984 = vpop.f32.mrf.mxu0
    %v985 = vadd.f32 %v942, %v984
    %v986 = vpop.f32.mrf.mxu0
    %v987 = vadd.f32 %v944, %v986
    %988 = vmatmul.bf16.gmra.mxu0 %v378
    %v989 = vpop.f32.mrf.mxu0
    %v990 = vadd.f32 %v947, %v989
    %v991 = vpop.f32.mrf.mxu0
    %v992 = vadd.f32 %v949, %v991
    %993 = vmatmul.bf16.gmra.mxu0 %v381
    %v994 = vpop.f32.mrf.mxu0
    %v995 = vadd.f32 %v952, %v994
    %v996 = vpop.f32.mrf.mxu0
    %997 = vdwg.mxu0
    %998 = vmatpush.bf16.msra.mxu0 %v808
    %999 = vmatpush.bf16.msra.mxu0 %v806
    %1000 = vmatpush.bf16.msra.mxu0 %v804
    %1001 = vmatpush.bf16.msra.mxu0 %v802
    %1002 = vmatpush.bf16.msra.mxu0 %v800
    %1003 = vmatpush.bf16.msra.mxu0 %v798
    %1004 = vmatpush.bf16.msra.mxu0 %v796
    %1005 = vmatpush.bf16.msra.mxu0 %v794
    %1006 = vmatmul.bf16.gmra.mxu0 %v126
    %v1007 = vpop.f32.mrf.mxu0
    %v1008 = vadd.f32 0.0, %v1007
    %v1009 = vpop.f32.mrf.mxu0
    %v1010 = vadd.f32 0.0, %v1009
    %1011 = vmatmul.bf16.gmra.mxu0 %v129
    %v1012 = vpop.f32.mrf.mxu0
    %v1013 = vadd.f32 0.0, %v1012
    %v1014 = vpop.f32.mrf.mxu0
    %v1015 = vadd.f32 0.0, %v1014
    %1016 = vmatmul.bf16.gmra.mxu0 %v132
    %v1017 = vpop.f32.mrf.mxu0
    %v1018 = vadd.f32 0.0, %v1017
    %v1019 = vpop.f32.mrf.mxu0
    %v1020 = vadd.f32 0.0, %v1019
    %1021 = vmatmul.bf16.gmra.mxu0 %v135
    %v1022 = vpop.f32.mrf.mxu0
    %v1023 = vadd.f32 0.0, %v1022
    %v1024 = vpop.f32.mrf.mxu0
    %v1025 = vadd.f32 0.0, %v1024
    %1026 = vmatmul.bf16.gmra.mxu0 %v138
    %v1027 = vpop.f32.mrf.mxu0
    %v1028 = vadd.f32 0.0, %v1027
    %v1029 = vpop.f32.mrf.mxu0
    %v1030 = vadd.f32 0.0, %v1029
    %1031 = vmatmul.bf16.gmra.mxu0 %v141
    %v1032 = vpop.f32.mrf.mxu0
    %v1033 = vadd.f32 0.0, %v1032
    %v1034 = vpop.f32.mrf.mxu0
    %v1035 = vadd.f32 0.0, %v1034
    %1036 = vmatmul.bf16.gmra.mxu0 %v144
    %v1037 = vpop.f32.mrf.mxu0
    %v1038 = vadd.f32 0.0, %v1037
    %v1039 = vpop.f32.mrf.mxu0
    %1040 = vdwg.mxu0
    %1041 = vmatpush.bf16.msra.mxu0 %v824
    %1042 = vmatpush.bf16.msra.mxu0 %v822
    %1043 = vmatpush.bf16.msra.mxu0 %v820
    %1044 = vmatpush.bf16.msra.mxu0 %v818
    %1045 = vmatpush.bf16.msra.mxu0 %v816
    %1046 = vmatpush.bf16.msra.mxu0 %v814
    %1047 = vmatpush.bf16.msra.mxu0 %v812
    %1048 = vmatpush.bf16.msra.mxu0 %v810
    %1049 = vmatmul.bf16.gmra.mxu0 %v127
    %v1050 = vpop.f32.mrf.mxu0
    %v1051 = vadd.f32 %v1008, %v1050
    %v1052 = vpop.f32.mrf.mxu0
    %v1053 = vadd.f32 %v1010, %v1052
    %1054 = vmatmul.bf16.gmra.mxu0 %v130
    %v1055 = vpop.f32.mrf.mxu0
    %v1056 = vadd.f32 %v1013, %v1055
    %v1057 = vpop.f32.mrf.mxu0
    %v1058 = vadd.f32 %v1015, %v1057
    %1059 = vmatmul.bf16.gmra.mxu0 %v133
    %v1060 = vpop.f32.mrf.mxu0
    %v1061 = vadd.f32 %v1018, %v1060
    %v1062 = vpop.f32.mrf.mxu0
    %v1063 = vadd.f32 %v1020, %v1062
    %1064 = vmatmul.bf16.gmra.mxu0 %v136
    %v1065 = vpop.f32.mrf.mxu0
    %v1066 = vadd.f32 %v1023, %v1065
    %v1067 = vpop.f32.mrf.mxu0
    %v1068 = vadd.f32 %v1025, %v1067
    %1069 = vmatmul.bf16.gmra.mxu0 %v139
    %v1070 = vpop.f32.mrf.mxu0
    %v1071 = vadd.f32 %v1028, %v1070
    %v1072 = vpop.f32.mrf.mxu0
    %v1073 = vadd.f32 %v1030, %v1072
    %1074 = vmatmul.bf16.gmra.mxu0 %v142
    %v1075 = vpop.f32.mrf.mxu0
    %v1076 = vadd.f32 %v1033, %v1075
    %v1077 = vpop.f32.mrf.mxu0
    %v1078 = vadd.f32 %v1035, %v1077
    %1079 = vmatmul.bf16.gmra.mxu0 %v145
    %v1080 = vpop.f32.mrf.mxu0
    %v1081 = vadd.f32 %v1038, %v1080
    %v1082 = vpop.f32.mrf.mxu0
    %1083 = vdwg.mxu0
    %1084 = vmatpush.bf16.msra.mxu0 0
    %1085 = vmatpush.bf16.msra.mxu0 0
    %1086 = vmatpush.bf16.msra.mxu0 0
    %1087 = vmatpush.bf16.msra.mxu0 0
    %1088 = vmatpush.bf16.msra.mxu0 0
    %1089 = vmatpush.bf16.msra.mxu0 0
    %1090 = vmatpush.bf16.msra.mxu0 %v867
    %1091 = vmatpush.bf16.msra.mxu0 %v826
    %1092 = vmatmul.bf16.gmra.mxu0 %v363
    %v1093 = vpop.f32.mrf.mxu0
    %v1094 = vadd.f32 %v1051, %v1093
    %v1095 = vpop.f32.mrf.mxu0
    %v1096 = vadd.f32 %v1053, %v1095
    %1097 = vmatmul.bf16.gmra.mxu0 %v366
    %v1098 = vpop.f32.mrf.mxu0
    %v1099 = vadd.f32 %v1056, %v1098
    %v1100 = vpop.f32.mrf.mxu0
    %v1101 = vadd.f32 %v1058, %v1100
    %1102 = vmatmul.bf16.gmra.mxu0 %v369
    %v1103 = vpop.f32.mrf.mxu0
    %v1104 = vadd.f32 %v1061, %v1103
    %v1105 = vpop.f32.mrf.mxu0
    %v1106 = vadd.f32 %v1063, %v1105
    %1107 = vmatmul.bf16.gmra.mxu0 %v372
    %v1108 = vpop.f32.mrf.mxu0
    %v1109 = vadd.f32 %v1066, %v1108
    %v1110 = vpop.f32.mrf.mxu0
    %v1111 = vadd.f32 %v1068, %v1110
    %1112 = vmatmul.bf16.gmra.mxu0 %v375
    %v1113 = vpop.f32.mrf.mxu0
    %v1114 = vadd.f32 %v1071, %v1113
    %v1115 = vpop.f32.mrf.mxu0
    %v1116 = vadd.f32 %v1073, %v1115
    %1117 = vmatmul.bf16.gmra.mxu0 %v378
    %v1118 = vpop.f32.mrf.mxu0
    %v1119 = vadd.f32 %v1076, %v1118
    %v1120 = vpop.f32.mrf.mxu0
    %v1121 = vadd.f32 %v1078, %v1120
    %1122 = vmatmul.bf16.gmra.mxu0 %v381
    %v1123 = vpop.f32.mrf.mxu0
    %v1124 = vadd.f32 %v1081, %v1123
    %v1125 = vpop.f32.mrf.mxu0
    %1126 = vdwg.mxu0
    %s1127 = scalar_lea.vmem %s2, 576
    %v1128 = vld [vmem:[%s1127] sm:$0xff]
    %v1129 = vld [vmem:[%s1127 + $0x8] sm:$0xff]
    %v1130 = vld [vmem:[%s1127 + $0x10] sm:$0xff]
    %v1131 = vld [vmem:[%s1127 + $0x18] sm:$0xff]
    %v1132 = vld [vmem:[%s1127 + $0x20] sm:$0xff]
    %v1133 = vld [vmem:[%s1127 + $0x28] sm:$0xff]
    %v1134 = vld [vmem:[%s1127 + $0x30] sm:$0xff]
    %v1135 = vld [vmem:[%s1127 + $0x38] sm:$0xff]
    %v1136 = vld [vmem:[%s1127 + $0x40] sm:$0xff]
    %v1137 = vld [vmem:[%s1127 + $0x48] sm:$0xff]
    %v1138 = vld [vmem:[%s1127 + $0x50] sm:$0xff]
    %v1139 = vld [vmem:[%s1127 + $0x58] sm:$0xff]
    %v1140 = vld [vmem:[%s1127 + $0x60] sm:$0xff]
    %v1141 = vld [vmem:[%s1127 + $0x68] sm:$0xff]
    %v1142 = vld [vmem:[%s1127 + $0x70] sm:$0xff]
    %v1143 = vld [vmem:[%s1127 + $0x78] sm:$0xff]
    %v1144 = vld [vmem:[%s1127 + $0x80] sm:$0xff]
    %v1145 = vld [vmem:[%s1127 + $0x88] sm:$0xff]
    %v1146 = vld [vmem:[%s1127 + $0x90] sm:$0xff]
    %v1147 = vld [vmem:[%s1127 + $0x98] sm:$0xff]
    %v1148 = vld [vmem:[%s1127 + $0xa0] sm:$0xff]
    %v1149 = vld [vmem:[%s1127 + $0xa8] sm:$0xff]
    %v1150 = vld [vmem:[%s1127 + $0xb0] sm:$0xff]
    %v1151 = vld [vmem:[%s1127 + $0xb8] sm:$0xff]
    %v1152 = vld [vmem:[%s1127 + $0xc0] sm:$0xff]
    %v1153 = vld [vmem:[%s1127 + $0xc8] sm:$0xff]
    %v1154 = vld [vmem:[%s1127 + $0xd0] sm:$0xff]
    %v1155 = vld [vmem:[%s1127 + $0xd8] sm:$0xff]
    %v1156 = vld [vmem:[%s1127 + $0xe0] sm:$0xff]
    %v1157 = vld [vmem:[%s1127 + $0xe8] sm:$0xff]
    %v1158 = vld [vmem:[%s1127 + $0xf0] sm:$0xff]
    %v1159 = vld [vmem:[%s1127 + $0xf8] sm:$0xff]
    %v1160 = vld [vmem:[%s1127 + $0x100] sm:$0xff]
    %v1161 = vld [vmem:[%s1127 + $0x108] sm:$0xff]
    %v1162 = vld [vmem:[%s1127 + $0x110] sm:$0xff]
    %v1163 = vld [vmem:[%s1127 + $0x118] sm:$0x11]
    %v1200 = vunpack.c.l.b16 %v1128
    %v1201 = vunpack.c.h.b16 %v1128
    %v1202 = vunpack.c.l.b16 %v1129
    %v1203 = vunpack.c.h.b16 %v1129
    %v1204 = vunpack.c.l.b16 %v1130
    %v1205 = vunpack.c.h.b16 %v1130
    %v1206 = vunpack.c.l.b16 %v1131
    %v1207 = vunpack.c.h.b16 %v1131
    %v1208 = vunpack.c.l.b16 %v1132
    %v1209 = vunpack.c.h.b16 %v1132
    %v1210 = vunpack.c.l.b16 %v1133
    %v1211 = vunpack.c.h.b16 %v1133
    %v1212 = vunpack.c.l.b16 %v1134
    %v1213 = vunpack.c.h.b16 %v1134
    %v1214 = vunpack.c.l.b16 %v1135
    %v1215 = vunpack.c.h.b16 %v1135
    %v1216 = vunpack.c.l.b16 %v1136
    %v1217 = vunpack.c.h.b16 %v1136
    %v1218 = vunpack.c.l.b16 %v1137
    %v1219 = vunpack.c.h.b16 %v1137
    %v1220 = vunpack.c.l.b16 %v1138
    %v1221 = vunpack.c.h.b16 %v1138
    %v1222 = vunpack.c.l.b16 %v1139
    %v1223 = vunpack.c.h.b16 %v1139
    %v1224 = vunpack.c.l.b16 %v1140
    %v1225 = vunpack.c.h.b16 %v1140
    %v1226 = vunpack.c.l.b16 %v1141
    %v1227 = vunpack.c.h.b16 %v1141
    %v1228 = vunpack.c.l.b16 %v1142
    %v1229 = vunpack.c.h.b16 %v1142
    %v1230 = vunpack.c.l.b16 %v1143
    %v1231 = vunpack.c.h.b16 %v1143
    %v1232 = vunpack.c.l.b16 %v1144
    %v1233 = vunpack.c.h.b16 %v1144
    %v1234 = vunpack.c.l.b16 %v1145
    %v1235 = vunpack.c.h.b16 %v1145
    %v1236 = vunpack.c.l.b16 %v1146
    %v1237 = vunpack.c.h.b16 %v1146
    %v1238 = vunpack.c.l.b16 %v1147
    %v1239 = vunpack.c.h.b16 %v1147
    %v1240 = vunpack.c.l.b16 %v1148
    %v1241 = vunpack.c.h.b16 %v1148
    %v1242 = vunpack.c.l.b16 %v1149
    %v1243 = vunpack.c.h.b16 %v1149
    %v1244 = vunpack.c.l.b16 %v1150
    %v1245 = vunpack.c.h.b16 %v1150
    %v1246 = vunpack.c.l.b16 %v1151
    %v1247 = vunpack.c.h.b16 %v1151
    %v1248 = vunpack.c.l.b16 %v1152
    %v1249 = vunpack.c.h.b16 %v1152
    %v1250 = vunpack.c.l.b16 %v1153
    %v1251 = vunpack.c.h.b16 %v1153
    %v1252 = vunpack.c.l.b16 %v1154
    %v1253 = vunpack.c.h.b16 %v1154
    %v1254 = vunpack.c.l.b16 %v1155
    %v1255 = vunpack.c.h.b16 %v1155
    %v1256 = vunpack.c.l.b16 %v1156
    %v1257 = vunpack.c.h.b16 %v1156
    %v1258 = vunpack.c.l.b16 %v1157
    %v1259 = vunpack.c.h.b16 %v1157
    %v1260 = vunpack.c.l.b16 %v1158
    %v1261 = vunpack.c.h.b16 %v1158
    %v1262 = vunpack.c.l.b16 %v1159
    %v1263 = vunpack.c.h.b16 %v1159
    %v1264 = vunpack.c.l.b16 %v1160
    %v1265 = vunpack.c.h.b16 %v1160
    %v1266 = vunpack.c.l.b16 %v1161
    %v1267 = vunpack.c.h.b16 %v1161
    %v1268 = vunpack.c.l.b16 %v1162
    %v1269 = vunpack.c.h.b16 %v1162
    %v1270 = vunpack.c.l.b16 %v1163
    %v1271 = vunpack.c.h.b16 %v1163
    %v1272 = vpack.c.b16 %v1202, %v1200
    %v1273 = vpack.c.b16 %v1203, %v1201
    %v1274 = vpack.c.b16 %v1206, %v1204
    %v1275 = vpack.c.b16 %v1207, %v1205
    %v1276 = vpack.c.b16 %v1210, %v1208
    %v1277 = vpack.c.b16 %v1211, %v1209
    %v1278 = vpack.c.b16 %v1214, %v1212
    %v1279 = vpack.c.b16 %v1215, %v1213
    %v1280 = vpack.c.b16 %v1218, %v1216
    %v1281 = vpack.c.b16 %v1219, %v1217
    %v1282 = vpack.c.b16 %v1222, %v1220
    %v1283 = vpack.c.b16 %v1223, %v1221
    %v1284 = vpack.c.b16 %v1226, %v1224
    %v1285 = vpack.c.b16 %v1227, %v1225
    %v1286 = vpack.c.b16 %v1230, %v1228
    %v1287 = vpack.c.b16 %v1231, %v1229
    %v1288 = vpack.c.b16 %v1234, %v1232
    %v1289 = vpack.c.b16 %v1235, %v1233
    %v1290 = vpack.c.b16 %v1238, %v1236
    %v1291 = vpack.c.b16 %v1239, %v1237
    %v1292 = vpack.c.b16 %v1242, %v1240
    %v1293 = vpack.c.b16 %v1243, %v1241
    %v1294 = vpack.c.b16 %v1246, %v1244
    %v1295 = vpack.c.b16 %v1247, %v1245
    %v1296 = vpack.c.b16 %v1250, %v1248
    %v1297 = vpack.c.b16 %v1251, %v1249
    %v1298 = vpack.c.b16 %v1254, %v1252
    %v1299 = vpack.c.b16 %v1255, %v1253
    %v1300 = vpack.c.b16 %v1258, %v1256
    %v1301 = vpack.c.b16 %v1259, %v1257
    %v1302 = vpack.c.b16 %v1262, %v1260
    %v1303 = vpack.c.b16 %v1263, %v1261
    %v1304 = vpack.c.b16 %v1266, %v1264
    %v1305 = vpack.c.b16 %v1267, %v1265
    %v1306 = vpack.c.b16 %v1270, %v1268
    %v1307 = vpack.c.b16 %v1271, %v1269
    %v1343 = vsel %vm383, %v1306, 0
    %v1346 = vsel %vm383, %v1307, 0
    %1348 = vmatpush.bf16.msra.mxu0 %v1286
    %1349 = vmatpush.bf16.msra.mxu0 %v1284
    %1350 = vmatpush.bf16.msra.mxu0 %v1282
    %1351 = vmatpush.bf16.msra.mxu0 %v1280
    %1352 = vmatpush.bf16.msra.mxu0 %v1278
    %1353 = vmatpush.bf16.msra.mxu0 %v1276
    %1354 = vmatpush.bf16.msra.mxu0 %v1274
    %1355 = vmatpush.bf16.msra.mxu0 %v1272
    %1356 = vmatmul.bf16.gmra.mxu0 %v126
    %v1357 = vpop.f32.mrf.mxu0
    %v1358 = vadd.f32 0.0, %v1357
    %v1359 = vpop.f32.mrf.mxu0
    %v1360 = vadd.f32 0.0, %v1359
    %1361 = vmatmul.bf16.gmra.mxu0 %v129
    %v1362 = vpop.f32.mrf.mxu0
    %v1363 = vadd.f32 0.0, %v1362
    %v1364 = vpop.f32.mrf.mxu0
    %v1365 = vadd.f32 0.0, %v1364
    %1366 = vmatmul.bf16.gmra.mxu0 %v132
    %v1367 = vpop.f32.mrf.mxu0
    %v1368 = vadd.f32 0.0, %v1367
    %v1369 = vpop.f32.mrf.mxu0
    %v1370 = vadd.f32 0.0, %v1369
    %1371 = vmatmul.bf16.gmra.mxu0 %v135
    %v1372 = vpop.f32.mrf.mxu0
    %v1373 = vadd.f32 0.0, %v1372
    %v1374 = vpop.f32.mrf.mxu0
    %v1375 = vadd.f32 0.0, %v1374
    %1376 = vmatmul.bf16.gmra.mxu0 %v138
    %v1377 = vpop.f32.mrf.mxu0
    %v1378 = vadd.f32 0.0, %v1377
    %v1379 = vpop.f32.mrf.mxu0
    %v1380 = vadd.f32 0.0, %v1379
    %1381 = vmatmul.bf16.gmra.mxu0 %v141
    %v1382 = vpop.f32.mrf.mxu0
    %v1383 = vadd.f32 0.0, %v1382
    %v1384 = vpop.f32.mrf.mxu0
    %v1385 = vadd.f32 0.0, %v1384
    %1386 = vmatmul.bf16.gmra.mxu0 %v144
    %v1387 = vpop.f32.mrf.mxu0
    %v1388 = vadd.f32 0.0, %v1387
    %v1389 = vpop.f32.mrf.mxu0
    %1390 = vdwg.mxu0
    %1391 = vmatpush.bf16.msra.mxu0 %v1302
    %1392 = vmatpush.bf16.msra.mxu0 %v1300
    %1393 = vmatpush.bf16.msra.mxu0 %v1298
    %1394 = vmatpush.bf16.msra.mxu0 %v1296
    %1395 = vmatpush.bf16.msra.mxu0 %v1294
    %1396 = vmatpush.bf16.msra.mxu0 %v1292
    %1397 = vmatpush.bf16.msra.mxu0 %v1290
    %1398 = vmatpush.bf16.msra.mxu0 %v1288
    %1399 = vmatmul.bf16.gmra.mxu0 %v127
    %v1400 = vpop.f32.mrf.mxu0
    %v1401 = vadd.f32 %v1358, %v1400
    %v1402 = vpop.f32.mrf.mxu0
    %v1403 = vadd.f32 %v1360, %v1402
    %1404 = vmatmul.bf16.gmra.mxu0 %v130
    %v1405 = vpop.f32.mrf.mxu0
    %v1406 = vadd.f32 %v1363, %v1405
    %v1407 = vpop.f32.mrf.mxu0
    %v1408 = vadd.f32 %v1365, %v1407
    %1409 = vmatmul.bf16.gmra.mxu0 %v133
    %v1410 = vpop.f32.mrf.mxu0
    %v1411 = vadd.f32 %v1368, %v1410
    %v1412 = vpop.f32.mrf.mxu0
    %v1413 = vadd.f32 %v1370, %v1412
    %1414 = vmatmul.bf16.gmra.mxu0 %v136
    %v1415 = vpop.f32.mrf.mxu0
    %v1416 = vadd.f32 %v1373, %v1415
    %v1417 = vpop.f32.mrf.mxu0
    %v1418 = vadd.f32 %v1375, %v1417
    %1419 = vmatmul.bf16.gmra.mxu0 %v139
    %v1420 = vpop.f32.mrf.mxu0
    %v1421 = vadd.f32 %v1378, %v1420
    %v1422 = vpop.f32.mrf.mxu0
    %v1423 = vadd.f32 %v1380, %v1422
    %1424 = vmatmul.bf16.gmra.mxu0 %v142
    %v1425 = vpop.f32.mrf.mxu0
    %v1426 = vadd.f32 %v1383, %v1425
    %v1427 = vpop.f32.mrf.mxu0
    %v1428 = vadd.f32 %v1385, %v1427
    %1429 = vmatmul.bf16.gmra.mxu0 %v145
    %v1430 = vpop.f32.mrf.mxu0
    %v1431 = vadd.f32 %v1388, %v1430
    %v1432 = vpop.f32.mrf.mxu0
    %1433 = vdwg.mxu0
    %1434 = vmatpush.bf16.msra.mxu0 0
    %1435 = vmatpush.bf16.msra.mxu0 0
    %1436 = vmatpush.bf16.msra.mxu0 0
    %1437 = vmatpush.bf16.msra.mxu0 0
    %1438 = vmatpush.bf16.msra.mxu0 0
    %1439 = vmatpush.bf16.msra.mxu0 0
    %1440 = vmatpush.bf16.msra.mxu0 %v1343
    %1441 = vmatpush.bf16.msra.mxu0 %v1304
    %1442 = vmatmul.bf16.gmra.mxu0 %v363
    %v1443 = vpop.f32.mrf.mxu0
    %v1444 = vadd.f32 %v1401, %v1443
    %v1445 = vpop.f32.mrf.mxu0
    %v1446 = vadd.f32 %v1403, %v1445
    %1447 = vmatmul.bf16.gmra.mxu0 %v366
    %v1448 = vpop.f32.mrf.mxu0
    %v1449 = vadd.f32 %v1406, %v1448
    %v1450 = vpop.f32.mrf.mxu0
    %v1451 = vadd.f32 %v1408, %v1450
    %1452 = vmatmul.bf16.gmra.mxu0 %v369
    %v1453 = vpop.f32.mrf.mxu0
    %v1454 = vadd.f32 %v1411, %v1453
    %v1455 = vpop.f32.mrf.mxu0
    %v1456 = vadd.f32 %v1413, %v1455
    %1457 = vmatmul.bf16.gmra.mxu0 %v372
    %v1458 = vpop.f32.mrf.mxu0
    %v1459 = vadd.f32 %v1416, %v1458
    %v1460 = vpop.f32.mrf.mxu0
    %v1461 = vadd.f32 %v1418, %v1460
    %1462 = vmatmul.bf16.gmra.mxu0 %v375
    %v1463 = vpop.f32.mrf.mxu0
    %v1464 = vadd.f32 %v1421, %v1463
    %v1465 = vpop.f32.mrf.mxu0
    %v1466 = vadd.f32 %v1423, %v1465
    %1467 = vmatmul.bf16.gmra.mxu0 %v378
    %v1468 = vpop.f32.mrf.mxu0
    %v1469 = vadd.f32 %v1426, %v1468
    %v1470 = vpop.f32.mrf.mxu0
    %v1471 = vadd.f32 %v1428, %v1470
    %1472 = vmatmul.bf16.gmra.mxu0 %v381
    %v1473 = vpop.f32.mrf.mxu0
    %v1474 = vadd.f32 %v1431, %v1473
    %v1475 = vpop.f32.mrf.mxu0
    %1476 = vdwg.mxu0
    %1477 = vmatpush.bf16.msra.mxu0 %v1287
    %1478 = vmatpush.bf16.msra.mxu0 %v1285
    %1479 = vmatpush.bf16.msra.mxu0 %v1283
    %1480 = vmatpush.bf16.msra.mxu0 %v1281
    %1481 = vmatpush.bf16.msra.mxu0 %v1279
    %1482 = vmatpush.bf16.msra.mxu0 %v1277
    %1483 = vmatpush.bf16.msra.mxu0 %v1275
    %1484 = vmatpush.bf16.msra.mxu0 %v1273
    %1485 = vmatmul.bf16.gmra.mxu0 %v126
    %v1486 = vpop.f32.mrf.mxu0
    %v1487 = vadd.f32 0.0, %v1486
    %v1488 = vpop.f32.mrf.mxu0
    %v1489 = vadd.f32 0.0, %v1488
    %1490 = vmatmul.bf16.gmra.mxu0 %v129
    %v1491 = vpop.f32.mrf.mxu0
    %v1492 = vadd.f32 0.0, %v1491
    %v1493 = vpop.f32.mrf.mxu0
    %v1494 = vadd.f32 0.0, %v1493
    %1495 = vmatmul.bf16.gmra.mxu0 %v132
    %v1496 = vpop.f32.mrf.mxu0
    %v1497 = vadd.f32 0.0, %v1496
    %v1498 = vpop.f32.mrf.mxu0
    %v1499 = vadd.f32 0.0, %v1498
    %1500 = vmatmul.bf16.gmra.mxu0 %v135
    %v1501 = vpop.f32.mrf.mxu0
    %v1502 = vadd.f32 0.0, %v1501
    %v1503 = vpop.f32.mrf.mxu0
    %v1504 = vadd.f32 0.0, %v1503
    %1505 = vmatmul.bf16.gmra.mxu0 %v138
    %v1506 = vpop.f32.mrf.mxu0
    %v1507 = vadd.f32 0.0, %v1506
    %v1508 = vpop.f32.mrf.mxu0
    %v1509 = vadd.f32 0.0, %v1508
    %1510 = vmatmul.bf16.gmra.mxu0 %v141
    %v1511 = vpop.f32.mrf.mxu0
    %v1512 = vadd.f32 0.0, %v1511
    %v1513 = vpop.f32.mrf.mxu0
    %v1514 = vadd.f32 0.0, %v1513
    %1515 = vmatmul.bf16.gmra.mxu0 %v144
    %v1516 = vpop.f32.mrf.mxu0
    %v1517 = vadd.f32 0.0, %v1516
    %v1518 = vpop.f32.mrf.mxu0
    %1519 = vdwg.mxu0
    %1520 = vmatpush.bf16.msra.mxu0 %v1303
    %1521 = vmatpush.bf16.msra.mxu0 %v1301
    %1522 = vmatpush.bf16.msra.mxu0 %v1299
    %1523 = vmatpush.bf16.msra.mxu0 %v1297
    %1524 = vmatpush.bf16.msra.mxu0 %v1295
    %1525 = vmatpush.bf16.msra.mxu0 %v1293
    %1526 = vmatpush.bf16.msra.mxu0 %v1291
    %1527 = vmatpush.bf16.msra.mxu0 %v1289
    %1528 = vmatmul.bf16.gmra.mxu0 %v127
    %v1529 = vpop.f32.mrf.mxu0
    %v1530 = vadd.f32 %v1487, %v1529
    %v1531 = vpop.f32.mrf.mxu0
    %v1532 = vadd.f32 %v1489, %v1531
    %1533 = vmatmul.bf16.gmra.mxu0 %v130
    %v1534 = vpop.f32.mrf.mxu0
    %v1535 = vadd.f32 %v1492, %v1534
    %v1536 = vpop.f32.mrf.mxu0
    %v1537 = vadd.f32 %v1494, %v1536
    %1538 = vmatmul.bf16.gmra.mxu0 %v133
    %v1539 = vpop.f32.mrf.mxu0
    %v1540 = vadd.f32 %v1497, %v1539
    %v1541 = vpop.f32.mrf.mxu0
    %v1542 = vadd.f32 %v1499, %v1541
    %1543 = vmatmul.bf16.gmra.mxu0 %v136
    %v1544 = vpop.f32.mrf.mxu0
    %v1545 = vadd.f32 %v1502, %v1544
    %v1546 = vpop.f32.mrf.mxu0
    %v1547 = vadd.f32 %v1504, %v1546
    %1548 = vmatmul.bf16.gmra.mxu0 %v139
    %v1549 = vpop.f32.mrf.mxu0
    %v1550 = vadd.f32 %v1507, %v1549
    %v1551 = vpop.f32.mrf.mxu0
    %v1552 = vadd.f32 %v1509, %v1551
    %1553 = vmatmul.bf16.gmra.mxu0 %v142
    %v1554 = vpop.f32.mrf.mxu0
    %v1555 = vadd.f32 %v1512, %v1554
    %v1556 = vpop.f32.mrf.mxu0
    %v1557 = vadd.f32 %v1514, %v1556
    %1558 = vmatmul.bf16.gmra.mxu0 %v145
    %v1559 = vpop.f32.mrf.mxu0
    %v1560 = vadd.f32 %v1517, %v1559
    %v1561 = vpop.f32.mrf.mxu0
    %1562 = vdwg.mxu0
    %1563 = vmatpush.bf16.msra.mxu0 0
    %1564 = vmatpush.bf16.msra.mxu0 0
    %1565 = vmatpush.bf16.msra.mxu0 0
    %1566 = vmatpush.bf16.msra.mxu0 0
    %1567 = vmatpush.bf16.msra.mxu0 0
    %1568 = vmatpush.bf16.msra.mxu0 0
    %1569 = vmatpush.bf16.msra.mxu0 %v1346
    %1570 = vmatpush.bf16.msra.mxu0 %v1305
    %1571 = vmatmul.bf16.gmra.mxu0 %v363
    %v1572 = vpop.f32.mrf.mxu0
    %v1573 = vadd.f32 %v1530, %v1572
    %v1574 = vpop.f32.mrf.mxu0
    %v1575 = vadd.f32 %v1532, %v1574
    %1576 = vmatmul.bf16.gmra.mxu0 %v366
    %v1577 = vpop.f32.mrf.mxu0
    %v1578 = vadd.f32 %v1535, %v1577
    %v1579 = vpop.f32.mrf.mxu0
    %v1580 = vadd.f32 %v1537, %v1579
    %1581 = vmatmul.bf16.gmra.mxu0 %v369
    %v1582 = vpop.f32.mrf.mxu0
    %v1583 = vadd.f32 %v1540, %v1582
    %v1584 = vpop.f32.mrf.mxu0
    %v1585 = vadd.f32 %v1542, %v1584
    %1586 = vmatmul.bf16.gmra.mxu0 %v372
    %v1587 = vpop.f32.mrf.mxu0
    %v1588 = vadd.f32 %v1545, %v1587
    %v1589 = vpop.f32.mrf.mxu0
    %v1590 = vadd.f32 %v1547, %v1589
    %1591 = vmatmul.bf16.gmra.mxu0 %v375
    %v1592 = vpop.f32.mrf.mxu0
    %v1593 = vadd.f32 %v1550, %v1592
    %v1594 = vpop.f32.mrf.mxu0
    %v1595 = vadd.f32 %v1552, %v1594
    %1596 = vmatmul.bf16.gmra.mxu0 %v378
    %v1597 = vpop.f32.mrf.mxu0
    %v1598 = vadd.f32 %v1555, %v1597
    %v1599 = vpop.f32.mrf.mxu0
    %v1600 = vadd.f32 %v1557, %v1599
    %1601 = vmatmul.bf16.gmra.mxu0 %v381
    %v1602 = vpop.f32.mrf.mxu0
    %v1603 = vadd.f32 %v1560, %v1602
    %v1604 = vpop.f32.mrf.mxu0
    %1605 = vdwg.mxu0
    %s1606 = scalar_lea.vmem %s2, 864
    %v1607 = vld [vmem:[%s1606] sm:$0xff]
    %v1608 = vld [vmem:[%s1606 + $0x8] sm:$0xff]
    %v1609 = vld [vmem:[%s1606 + $0x10] sm:$0xff]
    %v1610 = vld [vmem:[%s1606 + $0x18] sm:$0xff]
    %v1611 = vld [vmem:[%s1606 + $0x20] sm:$0xff]
    %v1612 = vld [vmem:[%s1606 + $0x28] sm:$0xff]
    %v1613 = vld [vmem:[%s1606 + $0x30] sm:$0xff]
    %v1614 = vld [vmem:[%s1606 + $0x38] sm:$0xff]
    %v1615 = vld [vmem:[%s1606 + $0x40] sm:$0xff]
    %v1616 = vld [vmem:[%s1606 + $0x48] sm:$0xff]
    %v1617 = vld [vmem:[%s1606 + $0x50] sm:$0xff]
    %v1618 = vld [vmem:[%s1606 + $0x58] sm:$0xff]
    %v1619 = vld [vmem:[%s1606 + $0x60] sm:$0xff]
    %v1620 = vld [vmem:[%s1606 + $0x68] sm:$0xff]
    %v1621 = vld [vmem:[%s1606 + $0x70] sm:$0xff]
    %v1622 = vld [vmem:[%s1606 + $0x78] sm:$0xff]
    %v1623 = vld [vmem:[%s1606 + $0x80] sm:$0xff]
    %v1624 = vld [vmem:[%s1606 + $0x88] sm:$0xff]
    %v1625 = vld [vmem:[%s1606 + $0x90] sm:$0xff]
    %v1626 = vld [vmem:[%s1606 + $0x98] sm:$0xff]
    %v1627 = vld [vmem:[%s1606 + $0xa0] sm:$0xff]
    %v1628 = vld [vmem:[%s1606 + $0xa8] sm:$0xff]
    %v1629 = vld [vmem:[%s1606 + $0xb0] sm:$0xff]
    %v1630 = vld [vmem:[%s1606 + $0xb8] sm:$0xff]
    %v1631 = vld [vmem:[%s1606 + $0xc0] sm:$0xff]
    %v1632 = vld [vmem:[%s1606 + $0xc8] sm:$0xff]
    %v1633 = vld [vmem:[%s1606 + $0xd0] sm:$0xff]
    %v1634 = vld [vmem:[%s1606 + $0xd8] sm:$0xff]
    %v1635 = vld [vmem:[%s1606 + $0xe0] sm:$0xff]
    %v1636 = vld [vmem:[%s1606 + $0xe8] sm:$0xff]
    %v1637 = vld [vmem:[%s1606 + $0xf0] sm:$0xff]
    %v1638 = vld [vmem:[%s1606 + $0xf8] sm:$0xff]
    %v1639 = vld [vmem:[%s1606 + $0x100] sm:$0xff]
    %v1640 = vld [vmem:[%s1606 + $0x108] sm:$0xff]
    %v1641 = vld [vmem:[%s1606 + $0x110] sm:$0xff]
    %v1642 = vld [vmem:[%s1606 + $0x118] sm:$0x11]
    %v1679 = vunpack.c.l.b16 %v1607
    %v1680 = vunpack.c.h.b16 %v1607
    %v1681 = vunpack.c.l.b16 %v1608
    %v1682 = vunpack.c.h.b16 %v1608
    %v1683 = vunpack.c.l.b16 %v1609
    %v1684 = vunpack.c.h.b16 %v1609
    %v1685 = vunpack.c.l.b16 %v1610
    %v1686 = vunpack.c.h.b16 %v1610
    %v1687 = vunpack.c.l.b16 %v1611
    %v1688 = vunpack.c.h.b16 %v1611
    %v1689 = vunpack.c.l.b16 %v1612
    %v1690 = vunpack.c.h.b16 %v1612
    %v1691 = vunpack.c.l.b16 %v1613
    %v1692 = vunpack.c.h.b16 %v1613
    %v1693 = vunpack.c.l.b16 %v1614
    %v1694 = vunpack.c.h.b16 %v1614
    %v1695 = vunpack.c.l.b16 %v1615
    %v1696 = vunpack.c.h.b16 %v1615
    %v1697 = vunpack.c.l.b16 %v1616
    %v1698 = vunpack.c.h.b16 %v1616
    %v1699 = vunpack.c.l.b16 %v1617
    %v1700 = vunpack.c.h.b16 %v1617
    %v1701 = vunpack.c.l.b16 %v1618
    %v1702 = vunpack.c.h.b16 %v1618
    %v1703 = vunpack.c.l.b16 %v1619
    %v1704 = vunpack.c.h.b16 %v1619
    %v1705 = vunpack.c.l.b16 %v1620
    %v1706 = vunpack.c.h.b16 %v1620
    %v1707 = vunpack.c.l.b16 %v1621
    %v1708 = vunpack.c.h.b16 %v1621
    %v1709 = vunpack.c.l.b16 %v1622
    %v1710 = vunpack.c.h.b16 %v1622
    %v1711 = vunpack.c.l.b16 %v1623
    %v1712 = vunpack.c.h.b16 %v1623
    %v1713 = vunpack.c.l.b16 %v1624
    %v1714 = vunpack.c.h.b16 %v1624
    %v1715 = vunpack.c.l.b16 %v1625
    %v1716 = vunpack.c.h.b16 %v1625
    %v1717 = vunpack.c.l.b16 %v1626
    %v1718 = vunpack.c.h.b16 %v1626
    %v1719 = vunpack.c.l.b16 %v1627
    %v1720 = vunpack.c.h.b16 %v1627
    %v1721 = vunpack.c.l.b16 %v1628
    %v1722 = vunpack.c.h.b16 %v1628
    %v1723 = vunpack.c.l.b16 %v1629
    %v1724 = vunpack.c.h.b16 %v1629
    %v1725 = vunpack.c.l.b16 %v1630
    %v1726 = vunpack.c.h.b16 %v1630
    %v1727 = vunpack.c.l.b16 %v1631
    %v1728 = vunpack.c.h.b16 %v1631
    %v1729 = vunpack.c.l.b16 %v1632
    %v1730 = vunpack.c.h.b16 %v1632
    %v1731 = vunpack.c.l.b16 %v1633
    %v1732 = vunpack.c.h.b16 %v1633
    %v1733 = vunpack.c.l.b16 %v1634
    %v1734 = vunpack.c.h.b16 %v1634
    %v1735 = vunpack.c.l.b16 %v1635
    %v1736 = vunpack.c.h.b16 %v1635
    %v1737 = vunpack.c.l.b16 %v1636
    %v1738 = vunpack.c.h.b16 %v1636
    %v1739 = vunpack.c.l.b16 %v1637
    %v1740 = vunpack.c.h.b16 %v1637
    %v1741 = vunpack.c.l.b16 %v1638
    %v1742 = vunpack.c.h.b16 %v1638
    %v1743 = vunpack.c.l.b16 %v1639
    %v1744 = vunpack.c.h.b16 %v1639
    %v1745 = vunpack.c.l.b16 %v1640
    %v1746 = vunpack.c.h.b16 %v1640
    %v1747 = vunpack.c.l.b16 %v1641
    %v1748 = vunpack.c.h.b16 %v1641
    %v1749 = vunpack.c.l.b16 %v1642
    %v1750 = vunpack.c.h.b16 %v1642
    %v1751 = vpack.c.b16 %v1681, %v1679
    %v1752 = vpack.c.b16 %v1682, %v1680
    %v1753 = vpack.c.b16 %v1685, %v1683
    %v1754 = vpack.c.b16 %v1686, %v1684
    %v1755 = vpack.c.b16 %v1689, %v1687
    %v1756 = vpack.c.b16 %v1690, %v1688
    %v1757 = vpack.c.b16 %v1693, %v1691
    %v1758 = vpack.c.b16 %v1694, %v1692
    %v1759 = vpack.c.b16 %v1697, %v1695
    %v1760 = vpack.c.b16 %v1698, %v1696
    %v1761 = vpack.c.b16 %v1701, %v1699
    %v1762 = vpack.c.b16 %v1702, %v1700
    %v1763 = vpack.c.b16 %v1705, %v1703
    %v1764 = vpack.c.b16 %v1706, %v1704
    %v1765 = vpack.c.b16 %v1709, %v1707
    %v1766 = vpack.c.b16 %v1710, %v1708
    %v1767 = vpack.c.b16 %v1713, %v1711
    %v1768 = vpack.c.b16 %v1714, %v1712
    %v1769 = vpack.c.b16 %v1717, %v1715
    %v1770 = vpack.c.b16 %v1718, %v1716
    %v1771 = vpack.c.b16 %v1721, %v1719
    %v1772 = vpack.c.b16 %v1722, %v1720
    %v1773 = vpack.c.b16 %v1725, %v1723
    %v1774 = vpack.c.b16 %v1726, %v1724
    %v1775 = vpack.c.b16 %v1729, %v1727
    %v1776 = vpack.c.b16 %v1730, %v1728
    %v1777 = vpack.c.b16 %v1733, %v1731
    %v1778 = vpack.c.b16 %v1734, %v1732
    %v1779 = vpack.c.b16 %v1737, %v1735
    %v1780 = vpack.c.b16 %v1738, %v1736
    %v1781 = vpack.c.b16 %v1741, %v1739
    %v1782 = vpack.c.b16 %v1742, %v1740
    %v1783 = vpack.c.b16 %v1745, %v1743
    %v1784 = vpack.c.b16 %v1746, %v1744
    %v1785 = vpack.c.b16 %v1749, %v1747
    %v1786 = vpack.c.b16 %v1750, %v1748
    %v1822 = vsel %vm383, %v1785, 0
    %v1825 = vsel %vm383, %v1786, 0
    %1827 = vmatpush.bf16.msra.mxu0 %v1765
    %1828 = vmatpush.bf16.msra.mxu0 %v1763
    %1829 = vmatpush.bf16.msra.mxu0 %v1761
    %1830 = vmatpush.bf16.msra.mxu0 %v1759
    %1831 = vmatpush.bf16.msra.mxu0 %v1757
    %1832 = vmatpush.bf16.msra.mxu0 %v1755
    %1833 = vmatpush.bf16.msra.mxu0 %v1753
    %1834 = vmatpush.bf16.msra.mxu0 %v1751
    %1835 = vmatmul.bf16.gmra.mxu0 %v126
    %v1836 = vpop.f32.mrf.mxu0
    %v1837 = vadd.f32 0.0, %v1836
    %v1838 = vpop.f32.mrf.mxu0
    %v1839 = vadd.f32 0.0, %v1838
    %1840 = vmatmul.bf16.gmra.mxu0 %v129
    %v1841 = vpop.f32.mrf.mxu0
    %v1842 = vadd.f32 0.0, %v1841
    %v1843 = vpop.f32.mrf.mxu0
    %v1844 = vadd.f32 0.0, %v1843
    %1845 = vmatmul.bf16.gmra.mxu0 %v132
    %v1846 = vpop.f32.mrf.mxu0
    %v1847 = vadd.f32 0.0, %v1846
    %v1848 = vpop.f32.mrf.mxu0
    %v1849 = vadd.f32 0.0, %v1848
    %1850 = vmatmul.bf16.gmra.mxu0 %v135
    %v1851 = vpop.f32.mrf.mxu0
    %v1852 = vadd.f32 0.0, %v1851
    %v1853 = vpop.f32.mrf.mxu0
    %v1854 = vadd.f32 0.0, %v1853
    %1855 = vmatmul.bf16.gmra.mxu0 %v138
    %v1856 = vpop.f32.mrf.mxu0
    %v1857 = vadd.f32 0.0, %v1856
    %v1858 = vpop.f32.mrf.mxu0
    %v1859 = vadd.f32 0.0, %v1858
    %1860 = vmatmul.bf16.gmra.mxu0 %v141
    %v1861 = vpop.f32.mrf.mxu0
    %v1862 = vadd.f32 0.0, %v1861
    %v1863 = vpop.f32.mrf.mxu0
    %v1864 = vadd.f32 0.0, %v1863
    %1865 = vmatmul.bf16.gmra.mxu0 %v144
    %v1866 = vpop.f32.mrf.mxu0
    %v1867 = vadd.f32 0.0, %v1866
    %v1868 = vpop.f32.mrf.mxu0
    %1869 = vdwg.mxu0
    %1870 = vmatpush.bf16.msra.mxu0 %v1781
    %1871 = vmatpush.bf16.msra.mxu0 %v1779
    %1872 = vmatpush.bf16.msra.mxu0 %v1777
    %1873 = vmatpush.bf16.msra.mxu0 %v1775
    %1874 = vmatpush.bf16.msra.mxu0 %v1773
    %1875 = vmatpush.bf16.msra.mxu0 %v1771
    %1876 = vmatpush.bf16.msra.mxu0 %v1769
    %1877 = vmatpush.bf16.msra.mxu0 %v1767
    %1878 = vmatmul.bf16.gmra.mxu0 %v127
    %v1879 = vpop.f32.mrf.mxu0
    %v1880 = vadd.f32 %v1837, %v1879
    %v1881 = vpop.f32.mrf.mxu0
    %v1882 = vadd.f32 %v1839, %v1881
    %1883 = vmatmul.bf16.gmra.mxu0 %v130
    %v1884 = vpop.f32.mrf.mxu0
    %v1885 = vadd.f32 %v1842, %v1884
    %v1886 = vpop.f32.mrf.mxu0
    %v1887 = vadd.f32 %v1844, %v1886
    %1888 = vmatmul.bf16.gmra.mxu0 %v133
    %v1889 = vpop.f32.mrf.mxu0
    %v1890 = vadd.f32 %v1847, %v1889
    %v1891 = vpop.f32.mrf.mxu0
    %v1892 = vadd.f32 %v1849, %v1891
    %1893 = vmatmul.bf16.gmra.mxu0 %v136
    %v1894 = vpop.f32.mrf.mxu0
    %v1895 = vadd.f32 %v1852, %v1894
    %v1896 = vpop.f32.mrf.mxu0
    %v1897 = vadd.f32 %v1854, %v1896
    %1898 = vmatmul.bf16.gmra.mxu0 %v139
    %v1899 = vpop.f32.mrf.mxu0
    %v1900 = vadd.f32 %v1857, %v1899
    %v1901 = vpop.f32.mrf.mxu0
    %v1902 = vadd.f32 %v1859, %v1901
    %1903 = vmatmul.bf16.gmra.mxu0 %v142
    %v1904 = vpop.f32.mrf.mxu0
    %v1905 = vadd.f32 %v1862, %v1904
    %v1906 = vpop.f32.mrf.mxu0
    %v1907 = vadd.f32 %v1864, %v1906
    %1908 = vmatmul.bf16.gmra.mxu0 %v145
    %v1909 = vpop.f32.mrf.mxu0
    %v1910 = vadd.f32 %v1867, %v1909
    %v1911 = vpop.f32.mrf.mxu0
    %1912 = vdwg.mxu0
    %1913 = vmatpush.bf16.msra.mxu0 0
    %1914 = vmatpush.bf16.msra.mxu0 0
    %1915 = vmatpush.bf16.msra.mxu0 0
    %1916 = vmatpush.bf16.msra.mxu0 0
    %1917 = vmatpush.bf16.msra.mxu0 0
    %1918 = vmatpush.bf16.msra.mxu0 0
    %1919 = vmatpush.bf16.msra.mxu0 %v1822
    %1920 = vmatpush.bf16.msra.mxu0 %v1783
    %1921 = vmatmul.bf16.gmra.mxu0 %v363
    %v1922 = vpop.f32.mrf.mxu0
    %v1923 = vadd.f32 %v1880, %v1922
    %v1924 = vpop.f32.mrf.mxu0
    %v1925 = vadd.f32 %v1882, %v1924
    %1926 = vmatmul.bf16.gmra.mxu0 %v366
    %v1927 = vpop.f32.mrf.mxu0
    %v1928 = vadd.f32 %v1885, %v1927
    %v1929 = vpop.f32.mrf.mxu0
    %v1930 = vadd.f32 %v1887, %v1929
    %1931 = vmatmul.bf16.gmra.mxu0 %v369
    %v1932 = vpop.f32.mrf.mxu0
    %v1933 = vadd.f32 %v1890, %v1932
    %v1934 = vpop.f32.mrf.mxu0
    %v1935 = vadd.f32 %v1892, %v1934
    %1936 = vmatmul.bf16.gmra.mxu0 %v372
    %v1937 = vpop.f32.mrf.mxu0
    %v1938 = vadd.f32 %v1895, %v1937
    %v1939 = vpop.f32.mrf.mxu0
    %v1940 = vadd.f32 %v1897, %v1939
    %1941 = vmatmul.bf16.gmra.mxu0 %v375
    %v1942 = vpop.f32.mrf.mxu0
    %v1943 = vadd.f32 %v1900, %v1942
    %v1944 = vpop.f32.mrf.mxu0
    %v1945 = vadd.f32 %v1902, %v1944
    %1946 = vmatmul.bf16.gmra.mxu0 %v378
    %v1947 = vpop.f32.mrf.mxu0
    %v1948 = vadd.f32 %v1905, %v1947
    %v1949 = vpop.f32.mrf.mxu0
    %v1950 = vadd.f32 %v1907, %v1949
    %1951 = vmatmul.bf16.gmra.mxu0 %v381
    %v1952 = vpop.f32.mrf.mxu0
    %v1953 = vadd.f32 %v1910, %v1952
    %v1954 = vpop.f32.mrf.mxu0
    %1955 = vdwg.mxu0
    %1956 = vmatpush.bf16.msra.mxu0 %v1766
    %1957 = vmatpush.bf16.msra.mxu0 %v1764
    %1958 = vmatpush.bf16.msra.mxu0 %v1762
    %1959 = vmatpush.bf16.msra.mxu0 %v1760
    %1960 = vmatpush.bf16.msra.mxu0 %v1758
    %1961 = vmatpush.bf16.msra.mxu0 %v1756
    %1962 = vmatpush.bf16.msra.mxu0 %v1754
    %1963 = vmatpush.bf16.msra.mxu0 %v1752
    %1964 = vmatmul.bf16.gmra.mxu0 %v126
    %v1965 = vpop.f32.mrf.mxu0
    %v1966 = vadd.f32 0.0, %v1965
    %v1967 = vpop.f32.mrf.mxu0
    %v1968 = vadd.f32 0.0, %v1967
    %1969 = vmatmul.bf16.gmra.mxu0 %v129
    %v1970 = vpop.f32.mrf.mxu0
    %v1971 = vadd.f32 0.0, %v1970
    %v1972 = vpop.f32.mrf.mxu0
    %v1973 = vadd.f32 0.0, %v1972
    %1974 = vmatmul.bf16.gmra.mxu0 %v132
    %v1975 = vpop.f32.mrf.mxu0
    %v1976 = vadd.f32 0.0, %v1975
    %v1977 = vpop.f32.mrf.mxu0
    %v1978 = vadd.f32 0.0, %v1977
    %1979 = vmatmul.bf16.gmra.mxu0 %v135
    %v1980 = vpop.f32.mrf.mxu0
    %v1981 = vadd.f32 0.0, %v1980
    %v1982 = vpop.f32.mrf.mxu0
    %v1983 = vadd.f32 0.0, %v1982
    %1984 = vmatmul.bf16.gmra.mxu0 %v138
    %v1985 = vpop.f32.mrf.mxu0
    %v1986 = vadd.f32 0.0, %v1985
    %v1987 = vpop.f32.mrf.mxu0
    %v1988 = vadd.f32 0.0, %v1987
    %1989 = vmatmul.bf16.gmra.mxu0 %v141
    %v1990 = vpop.f32.mrf.mxu0
    %v1991 = vadd.f32 0.0, %v1990
    %v1992 = vpop.f32.mrf.mxu0
    %v1993 = vadd.f32 0.0, %v1992
    %1994 = vmatmul.bf16.gmra.mxu0 %v144
    %v1995 = vpop.f32.mrf.mxu0
    %v1996 = vadd.f32 0.0, %v1995
    %v1997 = vpop.f32.mrf.mxu0
    %1998 = vdwg.mxu0
    %1999 = vmatpush.bf16.msra.mxu0 %v1782
    %2000 = vmatpush.bf16.msra.mxu0 %v1780
    %2001 = vmatpush.bf16.msra.mxu0 %v1778
    %2002 = vmatpush.bf16.msra.mxu0 %v1776
    %2003 = vmatpush.bf16.msra.mxu0 %v1774
    %2004 = vmatpush.bf16.msra.mxu0 %v1772
    %2005 = vmatpush.bf16.msra.mxu0 %v1770
    %2006 = vmatpush.bf16.msra.mxu0 %v1768
    %2007 = vmatmul.bf16.gmra.mxu0 %v127
    %v2008 = vpop.f32.mrf.mxu0
    %v2009 = vadd.f32 %v1966, %v2008
    %v2010 = vpop.f32.mrf.mxu0
    %v2011 = vadd.f32 %v1968, %v2010
    %2012 = vmatmul.bf16.gmra.mxu0 %v130
    %v2013 = vpop.f32.mrf.mxu0
    %v2014 = vadd.f32 %v1971, %v2013
    %v2015 = vpop.f32.mrf.mxu0
    %v2016 = vadd.f32 %v1973, %v2015
    %2017 = vmatmul.bf16.gmra.mxu0 %v133
    %v2018 = vpop.f32.mrf.mxu0
    %v2019 = vadd.f32 %v1976, %v2018
    %v2020 = vpop.f32.mrf.mxu0
    %v2021 = vadd.f32 %v1978, %v2020
    %2022 = vmatmul.bf16.gmra.mxu0 %v136
    %v2023 = vpop.f32.mrf.mxu0
    %v2024 = vadd.f32 %v1981, %v2023
    %v2025 = vpop.f32.mrf.mxu0
    %v2026 = vadd.f32 %v1983, %v2025
    %2027 = vmatmul.bf16.gmra.mxu0 %v139
    %v2028 = vpop.f32.mrf.mxu0
    %v2029 = vadd.f32 %v1986, %v2028
    %v2030 = vpop.f32.mrf.mxu0
    %v2031 = vadd.f32 %v1988, %v2030
    %2032 = vmatmul.bf16.gmra.mxu0 %v142
    %v2033 = vpop.f32.mrf.mxu0
    %v2034 = vadd.f32 %v1991, %v2033
    %v2035 = vpop.f32.mrf.mxu0
    %v2036 = vadd.f32 %v1993, %v2035
    %2037 = vmatmul.bf16.gmra.mxu0 %v145
    %v2038 = vpop.f32.mrf.mxu0
    %v2039 = vadd.f32 %v1996, %v2038
    %v2040 = vpop.f32.mrf.mxu0
    %2041 = vdwg.mxu0
    %2042 = vmatpush.bf16.msra.mxu0 0
    %2043 = vmatpush.bf16.msra.mxu0 0
    %2044 = vmatpush.bf16.msra.mxu0 0
    %2045 = vmatpush.bf16.msra.mxu0 0
    %2046 = vmatpush.bf16.msra.mxu0 0
    %2047 = vmatpush.bf16.msra.mxu0 0
    %2048 = vmatpush.bf16.msra.mxu0 %v1825
    %2049 = vmatpush.bf16.msra.mxu0 %v1784
    %2050 = vmatmul.bf16.gmra.mxu0 %v363
    %v2051 = vpop.f32.mrf.mxu0
    %v2052 = vadd.f32 %v2009, %v2051
    %v2053 = vpop.f32.mrf.mxu0
    %v2054 = vadd.f32 %v2011, %v2053
    %2055 = vmatmul.bf16.gmra.mxu0 %v366
    %v2056 = vpop.f32.mrf.mxu0
    %v2057 = vadd.f32 %v2014, %v2056
    %v2058 = vpop.f32.mrf.mxu0
    %v2059 = vadd.f32 %v2016, %v2058
    %2060 = vmatmul.bf16.gmra.mxu0 %v369
    %v2061 = vpop.f32.mrf.mxu0
    %v2062 = vadd.f32 %v2019, %v2061
    %v2063 = vpop.f32.mrf.mxu0
    %v2064 = vadd.f32 %v2021, %v2063
    %2065 = vmatmul.bf16.gmra.mxu0 %v372
    %v2066 = vpop.f32.mrf.mxu0
    %v2067 = vadd.f32 %v2024, %v2066
    %v2068 = vpop.f32.mrf.mxu0
    %v2069 = vadd.f32 %v2026, %v2068
    %2070 = vmatmul.bf16.gmra.mxu0 %v375
    %v2071 = vpop.f32.mrf.mxu0
    %v2072 = vadd.f32 %v2029, %v2071
    %v2073 = vpop.f32.mrf.mxu0
    %v2074 = vadd.f32 %v2031, %v2073
    %2075 = vmatmul.bf16.gmra.mxu0 %v378
    %v2076 = vpop.f32.mrf.mxu0
    %v2077 = vadd.f32 %v2034, %v2076
    %v2078 = vpop.f32.mrf.mxu0
    %v2079 = vadd.f32 %v2036, %v2078
    %2080 = vmatmul.bf16.gmra.mxu0 %v381
    %v2081 = vpop.f32.mrf.mxu0
    %v2082 = vadd.f32 %v2039, %v2081
    %v2083 = vpop.f32.mrf.mxu0
    %2084 = vdwg.mxu0
    %s2085 = scalar_lea.vmem %s2, 1152
    %v2086 = vld [vmem:[%s2085] sm:$0xff]
    %v2087 = vld [vmem:[%s2085 + $0x8] sm:$0xff]
    %v2088 = vld [vmem:[%s2085 + $0x10] sm:$0xff]
    %v2089 = vld [vmem:[%s2085 + $0x18] sm:$0xff]
    %v2090 = vld [vmem:[%s2085 + $0x20] sm:$0xff]
    %v2091 = vld [vmem:[%s2085 + $0x28] sm:$0xff]
    %v2092 = vld [vmem:[%s2085 + $0x30] sm:$0xff]
    %v2093 = vld [vmem:[%s2085 + $0x38] sm:$0xff]
    %v2094 = vld [vmem:[%s2085 + $0x40] sm:$0xff]
    %v2095 = vld [vmem:[%s2085 + $0x48] sm:$0xff]
    %v2096 = vld [vmem:[%s2085 + $0x50] sm:$0xff]
    %v2097 = vld [vmem:[%s2085 + $0x58] sm:$0xff]
    %v2098 = vld [vmem:[%s2085 + $0x60] sm:$0xff]
    %v2099 = vld [vmem:[%s2085 + $0x68] sm:$0xff]
    %v2100 = vld [vmem:[%s2085 + $0x70] sm:$0xff]
    %v2101 = vld [vmem:[%s2085 + $0x78] sm:$0xff]
    %v2102 = vld [vmem:[%s2085 + $0x80] sm:$0xff]
    %v2103 = vld [vmem:[%s2085 + $0x88] sm:$0xff]
    %v2104 = vld [vmem:[%s2085 + $0x90] sm:$0xff]
    %v2105 = vld [vmem:[%s2085 + $0x98] sm:$0xff]
    %v2106 = vld [vmem:[%s2085 + $0xa0] sm:$0xff]
    %v2107 = vld [vmem:[%s2085 + $0xa8] sm:$0xff]
    %v2108 = vld [vmem:[%s2085 + $0xb0] sm:$0xff]
    %v2109 = vld [vmem:[%s2085 + $0xb8] sm:$0xff]
    %v2110 = vld [vmem:[%s2085 + $0xc0] sm:$0xff]
    %v2111 = vld [vmem:[%s2085 + $0xc8] sm:$0xff]
    %v2112 = vld [vmem:[%s2085 + $0xd0] sm:$0xff]
    %v2113 = vld [vmem:[%s2085 + $0xd8] sm:$0xff]
    %v2114 = vld [vmem:[%s2085 + $0xe0] sm:$0xff]
    %v2115 = vld [vmem:[%s2085 + $0xe8] sm:$0xff]
    %v2116 = vld [vmem:[%s2085 + $0xf0] sm:$0xff]
    %v2117 = vld [vmem:[%s2085 + $0xf8] sm:$0xff]
    %v2118 = vld [vmem:[%s2085 + $0x100] sm:$0xff]
    %v2119 = vld [vmem:[%s2085 + $0x108] sm:$0xff]
    %v2120 = vld [vmem:[%s2085 + $0x110] sm:$0xff]
    %v2121 = vld [vmem:[%s2085 + $0x118] sm:$0x11]
    %v2158 = vunpack.c.l.b16 %v2086
    %v2159 = vunpack.c.h.b16 %v2086
    %v2160 = vunpack.c.l.b16 %v2087
    %v2161 = vunpack.c.h.b16 %v2087
    %v2162 = vunpack.c.l.b16 %v2088
    %v2163 = vunpack.c.h.b16 %v2088
    %v2164 = vunpack.c.l.b16 %v2089
    %v2165 = vunpack.c.h.b16 %v2089
    %v2166 = vunpack.c.l.b16 %v2090
    %v2167 = vunpack.c.h.b16 %v2090
    %v2168 = vunpack.c.l.b16 %v2091
    %v2169 = vunpack.c.h.b16 %v2091
    %v2170 = vunpack.c.l.b16 %v2092
    %v2171 = vunpack.c.h.b16 %v2092
    %v2172 = vunpack.c.l.b16 %v2093
    %v2173 = vunpack.c.h.b16 %v2093
    %v2174 = vunpack.c.l.b16 %v2094
    %v2175 = vunpack.c.h.b16 %v2094
    %v2176 = vunpack.c.l.b16 %v2095
    %v2177 = vunpack.c.h.b16 %v2095
    %v2178 = vunpack.c.l.b16 %v2096
    %v2179 = vunpack.c.h.b16 %v2096
    %v2180 = vunpack.c.l.b16 %v2097
    %v2181 = vunpack.c.h.b16 %v2097
    %v2182 = vunpack.c.l.b16 %v2098
    %v2183 = vunpack.c.h.b16 %v2098
    %v2184 = vunpack.c.l.b16 %v2099
    %v2185 = vunpack.c.h.b16 %v2099
    %v2186 = vunpack.c.l.b16 %v2100
    %v2187 = vunpack.c.h.b16 %v2100
    %v2188 = vunpack.c.l.b16 %v2101
    %v2189 = vunpack.c.h.b16 %v2101
    %v2190 = vunpack.c.l.b16 %v2102
    %v2191 = vunpack.c.h.b16 %v2102
    %v2192 = vunpack.c.l.b16 %v2103
    %v2193 = vunpack.c.h.b16 %v2103
    %v2194 = vunpack.c.l.b16 %v2104
    %v2195 = vunpack.c.h.b16 %v2104
    %v2196 = vunpack.c.l.b16 %v2105
    %v2197 = vunpack.c.h.b16 %v2105
    %v2198 = vunpack.c.l.b16 %v2106
    %v2199 = vunpack.c.h.b16 %v2106
    %v2200 = vunpack.c.l.b16 %v2107
    %v2201 = vunpack.c.h.b16 %v2107
    %v2202 = vunpack.c.l.b16 %v2108
    %v2203 = vunpack.c.h.b16 %v2108
    %v2204 = vunpack.c.l.b16 %v2109
    %v2205 = vunpack.c.h.b16 %v2109
    %v2206 = vunpack.c.l.b16 %v2110
    %v2207 = vunpack.c.h.b16 %v2110
    %v2208 = vunpack.c.l.b16 %v2111
    %v2209 = vunpack.c.h.b16 %v2111
    %v2210 = vunpack.c.l.b16 %v2112
    %v2211 = vunpack.c.h.b16 %v2112
    %v2212 = vunpack.c.l.b16 %v2113
    %v2213 = vunpack.c.h.b16 %v2113
    %v2214 = vunpack.c.l.b16 %v2114
    %v2215 = vunpack.c.h.b16 %v2114
    %v2216 = vunpack.c.l.b16 %v2115
    %v2217 = vunpack.c.h.b16 %v2115
    %v2218 = vunpack.c.l.b16 %v2116
    %v2219 = vunpack.c.h.b16 %v2116
    %v2220 = vunpack.c.l.b16 %v2117
    %v2221 = vunpack.c.h.b16 %v2117
    %v2222 = vunpack.c.l.b16 %v2118
    %v2223 = vunpack.c.h.b16 %v2118
    %v2224 = vunpack.c.l.b16 %v2119
    %v2225 = vunpack.c.h.b16 %v2119
    %v2226 = vunpack.c.l.b16 %v2120
    %v2227 = vunpack.c.h.b16 %v2120
    %v2228 = vunpack.c.l.b16 %v2121
    %v2229 = vunpack.c.h.b16 %v2121
    %v2230 = vpack.c.b16 %v2160, %v2158
    %v2231 = vpack.c.b16 %v2161, %v2159
    %v2232 = vpack.c.b16 %v2164, %v2162
    %v2233 = vpack.c.b16 %v2165, %v2163
    %v2234 = vpack.c.b16 %v2168, %v2166
    %v2235 = vpack.c.b16 %v2169, %v2167
    %v2236 = vpack.c.b16 %v2172, %v2170
    %v2237 = vpack.c.b16 %v2173, %v2171
    %v2238 = vpack.c.b16 %v2176, %v2174
    %v2239 = vpack.c.b16 %v2177, %v2175
    %v2240 = vpack.c.b16 %v2180, %v2178
    %v2241 = vpack.c.b16 %v2181, %v2179
    %v2242 = vpack.c.b16 %v2184, %v2182
    %v2243 = vpack.c.b16 %v2185, %v2183
    %v2244 = vpack.c.b16 %v2188, %v2186
    %v2245 = vpack.c.b16 %v2189, %v2187
    %v2246 = vpack.c.b16 %v2192, %v2190
    %v2247 = vpack.c.b16 %v2193, %v2191
    %v2248 = vpack.c.b16 %v2196, %v2194
    %v2249 = vpack.c.b16 %v2197, %v2195
    %v2250 = vpack.c.b16 %v2200, %v2198
    %v2251 = vpack.c.b16 %v2201, %v2199
    %v2252 = vpack.c.b16 %v2204, %v2202
    %v2253 = vpack.c.b16 %v2205, %v2203
    %v2254 = vpack.c.b16 %v2208, %v2206
    %v2255 = vpack.c.b16 %v2209, %v2207
    %v2256 = vpack.c.b16 %v2212, %v2210
    %v2257 = vpack.c.b16 %v2213, %v2211
    %v2258 = vpack.c.b16 %v2216, %v2214
    %v2259 = vpack.c.b16 %v2217, %v2215
    %v2260 = vpack.c.b16 %v2220, %v2218
    %v2261 = vpack.c.b16 %v2221, %v2219
    %v2262 = vpack.c.b16 %v2224, %v2222
    %v2263 = vpack.c.b16 %v2225, %v2223
    %v2264 = vpack.c.b16 %v2228, %v2226
    %v2265 = vpack.c.b16 %v2229, %v2227
    %v2301 = vsel %vm383, %v2264, 0
    %v2304 = vsel %vm383, %v2265, 0
    %2306 = vmatpush.bf16.msra.mxu0 %v2244
    %2307 = vmatpush.bf16.msra.mxu0 %v2242
    %2308 = vmatpush.bf16.msra.mxu0 %v2240
    %2309 = vmatpush.bf16.msra.mxu0 %v2238
    %2310 = vmatpush.bf16.msra.mxu0 %v2236
    %2311 = vmatpush.bf16.msra.mxu0 %v2234
    %2312 = vmatpush.bf16.msra.mxu0 %v2232
    %2313 = vmatpush.bf16.msra.mxu0 %v2230
    %2314 = vmatmul.bf16.gmra.mxu0 %v126
    %v2315 = vpop.f32.mrf.mxu0
    %v2316 = vadd.f32 0.0, %v2315
    %v2317 = vpop.f32.mrf.mxu0
    %v2318 = vadd.f32 0.0, %v2317
    %2319 = vmatmul.bf16.gmra.mxu0 %v129
    %v2320 = vpop.f32.mrf.mxu0
    %v2321 = vadd.f32 0.0, %v2320
    %v2322 = vpop.f32.mrf.mxu0
    %v2323 = vadd.f32 0.0, %v2322
    %2324 = vmatmul.bf16.gmra.mxu0 %v132
    %v2325 = vpop.f32.mrf.mxu0
    %v2326 = vadd.f32 0.0, %v2325
    %v2327 = vpop.f32.mrf.mxu0
    %v2328 = vadd.f32 0.0, %v2327
    %2329 = vmatmul.bf16.gmra.mxu0 %v135
    %v2330 = vpop.f32.mrf.mxu0
    %v2331 = vadd.f32 0.0, %v2330
    %v2332 = vpop.f32.mrf.mxu0
    %v2333 = vadd.f32 0.0, %v2332
    %2334 = vmatmul.bf16.gmra.mxu0 %v138
    %v2335 = vpop.f32.mrf.mxu0
    %v2336 = vadd.f32 0.0, %v2335
    %v2337 = vpop.f32.mrf.mxu0
    %v2338 = vadd.f32 0.0, %v2337
    %2339 = vmatmul.bf16.gmra.mxu0 %v141
    %v2340 = vpop.f32.mrf.mxu0
    %v2341 = vadd.f32 0.0, %v2340
    %v2342 = vpop.f32.mrf.mxu0
    %v2343 = vadd.f32 0.0, %v2342
    %2344 = vmatmul.bf16.gmra.mxu0 %v144
    %v2345 = vpop.f32.mrf.mxu0
    %v2346 = vadd.f32 0.0, %v2345
    %v2347 = vpop.f32.mrf.mxu0
    %2348 = vdwg.mxu0
    %2349 = vmatpush.bf16.msra.mxu0 %v2260
    %2350 = vmatpush.bf16.msra.mxu0 %v2258
    %2351 = vmatpush.bf16.msra.mxu0 %v2256
    %2352 = vmatpush.bf16.msra.mxu0 %v2254
    %2353 = vmatpush.bf16.msra.mxu0 %v2252
    %2354 = vmatpush.bf16.msra.mxu0 %v2250
    %2355 = vmatpush.bf16.msra.mxu0 %v2248
    %2356 = vmatpush.bf16.msra.mxu0 %v2246
    %2357 = vmatmul.bf16.gmra.mxu0 %v127
    %v2358 = vpop.f32.mrf.mxu0
    %v2359 = vadd.f32 %v2316, %v2358
    %v2360 = vpop.f32.mrf.mxu0
    %v2361 = vadd.f32 %v2318, %v2360
    %2362 = vmatmul.bf16.gmra.mxu0 %v130
    %v2363 = vpop.f32.mrf.mxu0
    %v2364 = vadd.f32 %v2321, %v2363
    %v2365 = vpop.f32.mrf.mxu0
    %v2366 = vadd.f32 %v2323, %v2365
    %2367 = vmatmul.bf16.gmra.mxu0 %v133
    %v2368 = vpop.f32.mrf.mxu0
    %v2369 = vadd.f32 %v2326, %v2368
    %v2370 = vpop.f32.mrf.mxu0
    %v2371 = vadd.f32 %v2328, %v2370
    %2372 = vmatmul.bf16.gmra.mxu0 %v136
    %v2373 = vpop.f32.mrf.mxu0
    %v2374 = vadd.f32 %v2331, %v2373
    %v2375 = vpop.f32.mrf.mxu0
    %v2376 = vadd.f32 %v2333, %v2375
    %2377 = vmatmul.bf16.gmra.mxu0 %v139
    %v2378 = vpop.f32.mrf.mxu0
    %v2379 = vadd.f32 %v2336, %v2378
    %v2380 = vpop.f32.mrf.mxu0
    %v2381 = vadd.f32 %v2338, %v2380
    %2382 = vmatmul.bf16.gmra.mxu0 %v142
    %v2383 = vpop.f32.mrf.mxu0
    %v2384 = vadd.f32 %v2341, %v2383
    %v2385 = vpop.f32.mrf.mxu0
    %v2386 = vadd.f32 %v2343, %v2385
    %2387 = vmatmul.bf16.gmra.mxu0 %v145
    %v2388 = vpop.f32.mrf.mxu0
    %v2389 = vadd.f32 %v2346, %v2388
    %v2390 = vpop.f32.mrf.mxu0
    %2391 = vdwg.mxu0
    %2392 = vmatpush.bf16.msra.mxu0 0
    %2393 = vmatpush.bf16.msra.mxu0 0
    %2394 = vmatpush.bf16.msra.mxu0 0
    %2395 = vmatpush.bf16.msra.mxu0 0
    %2396 = vmatpush.bf16.msra.mxu0 0
    %2397 = vmatpush.bf16.msra.mxu0 0
    %2398 = vmatpush.bf16.msra.mxu0 %v2301
    %2399 = vmatpush.bf16.msra.mxu0 %v2262
    %2400 = vmatmul.bf16.gmra.mxu0 %v363
    %v2401 = vpop.f32.mrf.mxu0
    %v2402 = vadd.f32 %v2359, %v2401
    %v2403 = vpop.f32.mrf.mxu0
    %v2404 = vadd.f32 %v2361, %v2403
    %2405 = vmatmul.bf16.gmra.mxu0 %v366
    %v2406 = vpop.f32.mrf.mxu0
    %v2407 = vadd.f32 %v2364, %v2406
    %v2408 = vpop.f32.mrf.mxu0
    %v2409 = vadd.f32 %v2366, %v2408
    %2410 = vmatmul.bf16.gmra.mxu0 %v369
    %v2411 = vpop.f32.mrf.mxu0
    %v2412 = vadd.f32 %v2369, %v2411
    %v2413 = vpop.f32.mrf.mxu0
    %v2414 = vadd.f32 %v2371, %v2413
    %2415 = vmatmul.bf16.gmra.mxu0 %v372
    %v2416 = vpop.f32.mrf.mxu0
    %v2417 = vadd.f32 %v2374, %v2416
    %v2418 = vpop.f32.mrf.mxu0
    %v2419 = vadd.f32 %v2376, %v2418
    %2420 = vmatmul.bf16.gmra.mxu0 %v375
    %v2421 = vpop.f32.mrf.mxu0
    %v2422 = vadd.f32 %v2379, %v2421
    %v2423 = vpop.f32.mrf.mxu0
    %v2424 = vadd.f32 %v2381, %v2423
    %2425 = vmatmul.bf16.gmra.mxu0 %v378
    %v2426 = vpop.f32.mrf.mxu0
    %v2427 = vadd.f32 %v2384, %v2426
    %v2428 = vpop.f32.mrf.mxu0
    %v2429 = vadd.f32 %v2386, %v2428
    %2430 = vmatmul.bf16.gmra.mxu0 %v381
    %v2431 = vpop.f32.mrf.mxu0
    %v2432 = vadd.f32 %v2389, %v2431
    %v2433 = vpop.f32.mrf.mxu0
    %2434 = vdwg.mxu0
    %2435 = vmatpush.bf16.msra.mxu0 %v2245
    %2436 = vmatpush.bf16.msra.mxu0 %v2243
    %2437 = vmatpush.bf16.msra.mxu0 %v2241
    %2438 = vmatpush.bf16.msra.mxu0 %v2239
    %2439 = vmatpush.bf16.msra.mxu0 %v2237
    %2440 = vmatpush.bf16.msra.mxu0 %v2235
    %2441 = vmatpush.bf16.msra.mxu0 %v2233
    %2442 = vmatpush.bf16.msra.mxu0 %v2231
    %2443 = vmatmul.bf16.gmra.mxu0 %v126
    %v2444 = vpop.f32.mrf.mxu0
    %v2445 = vadd.f32 0.0, %v2444
    %v2446 = vpop.f32.mrf.mxu0
    %v2447 = vadd.f32 0.0, %v2446
    %2448 = vmatmul.bf16.gmra.mxu0 %v129
    %v2449 = vpop.f32.mrf.mxu0
    %v2450 = vadd.f32 0.0, %v2449
    %v2451 = vpop.f32.mrf.mxu0
    %v2452 = vadd.f32 0.0, %v2451
    %2453 = vmatmul.bf16.gmra.mxu0 %v132
    %v2454 = vpop.f32.mrf.mxu0
    %v2455 = vadd.f32 0.0, %v2454
    %v2456 = vpop.f32.mrf.mxu0
    %v2457 = vadd.f32 0.0, %v2456
    %2458 = vmatmul.bf16.gmra.mxu0 %v135
    %v2459 = vpop.f32.mrf.mxu0
    %v2460 = vadd.f32 0.0, %v2459
    %v2461 = vpop.f32.mrf.mxu0
    %v2462 = vadd.f32 0.0, %v2461
    %2463 = vmatmul.bf16.gmra.mxu0 %v138
    %v2464 = vpop.f32.mrf.mxu0
    %v2465 = vadd.f32 0.0, %v2464
    %v2466 = vpop.f32.mrf.mxu0
    %v2467 = vadd.f32 0.0, %v2466
    %2468 = vmatmul.bf16.gmra.mxu0 %v141
    %v2469 = vpop.f32.mrf.mxu0
    %v2470 = vadd.f32 0.0, %v2469
    %v2471 = vpop.f32.mrf.mxu0
    %v2472 = vadd.f32 0.0, %v2471
    %2473 = vmatmul.bf16.gmra.mxu0 %v144
    %v2474 = vpop.f32.mrf.mxu0
    %v2475 = vadd.f32 0.0, %v2474
    %v2476 = vpop.f32.mrf.mxu0
    %2477 = vdwg.mxu0
    %2478 = vmatpush.bf16.msra.mxu0 %v2261
    %2479 = vmatpush.bf16.msra.mxu0 %v2259
    %2480 = vmatpush.bf16.msra.mxu0 %v2257
    %2481 = vmatpush.bf16.msra.mxu0 %v2255
    %2482 = vmatpush.bf16.msra.mxu0 %v2253
    %2483 = vmatpush.bf16.msra.mxu0 %v2251
    %2484 = vmatpush.bf16.msra.mxu0 %v2249
    %2485 = vmatpush.bf16.msra.mxu0 %v2247
    %2486 = vmatmul.bf16.gmra.mxu0 %v127
    %v2487 = vpop.f32.mrf.mxu0
    %v2488 = vadd.f32 %v2445, %v2487
    %v2489 = vpop.f32.mrf.mxu0
    %v2490 = vadd.f32 %v2447, %v2489
    %2491 = vmatmul.bf16.gmra.mxu0 %v130
    %v2492 = vpop.f32.mrf.mxu0
    %v2493 = vadd.f32 %v2450, %v2492
    %v2494 = vpop.f32.mrf.mxu0
    %v2495 = vadd.f32 %v2452, %v2494
    %2496 = vmatmul.bf16.gmra.mxu0 %v133
    %v2497 = vpop.f32.mrf.mxu0
    %v2498 = vadd.f32 %v2455, %v2497
    %v2499 = vpop.f32.mrf.mxu0
    %v2500 = vadd.f32 %v2457, %v2499
    %2501 = vmatmul.bf16.gmra.mxu0 %v136
    %v2502 = vpop.f32.mrf.mxu0
    %v2503 = vadd.f32 %v2460, %v2502
    %v2504 = vpop.f32.mrf.mxu0
    %v2505 = vadd.f32 %v2462, %v2504
    %2506 = vmatmul.bf16.gmra.mxu0 %v139
    %v2507 = vpop.f32.mrf.mxu0
    %v2508 = vadd.f32 %v2465, %v2507
    %v2509 = vpop.f32.mrf.mxu0
    %v2510 = vadd.f32 %v2467, %v2509
    %2511 = vmatmul.bf16.gmra.mxu0 %v142
    %v2512 = vpop.f32.mrf.mxu0
    %v2513 = vadd.f32 %v2470, %v2512
    %v2514 = vpop.f32.mrf.mxu0
    %v2515 = vadd.f32 %v2472, %v2514
    %2516 = vmatmul.bf16.gmra.mxu0 %v145
    %v2517 = vpop.f32.mrf.mxu0
    %v2518 = vadd.f32 %v2475, %v2517
    %v2519 = vpop.f32.mrf.mxu0
    %2520 = vdwg.mxu0
    %2521 = vmatpush.bf16.msra.mxu0 0
    %2522 = vmatpush.bf16.msra.mxu0 0
    %2523 = vmatpush.bf16.msra.mxu0 0
    %2524 = vmatpush.bf16.msra.mxu0 0
    %2525 = vmatpush.bf16.msra.mxu0 0
    %2526 = vmatpush.bf16.msra.mxu0 0
    %2527 = vmatpush.bf16.msra.mxu0 %v2304
    %2528 = vmatpush.bf16.msra.mxu0 %v2263
    %2529 = vmatmul.bf16.gmra.mxu0 %v363
    %v2530 = vpop.f32.mrf.mxu0
    %v2531 = vadd.f32 %v2488, %v2530
    %v2532 = vpop.f32.mrf.mxu0
    %v2533 = vadd.f32 %v2490, %v2532
    %2534 = vmatmul.bf16.gmra.mxu0 %v366
    %v2535 = vpop.f32.mrf.mxu0
    %v2536 = vadd.f32 %v2493, %v2535
    %v2537 = vpop.f32.mrf.mxu0
    %v2538 = vadd.f32 %v2495, %v2537
    %2539 = vmatmul.bf16.gmra.mxu0 %v369
    %v2540 = vpop.f32.mrf.mxu0
    %v2541 = vadd.f32 %v2498, %v2540
    %v2542 = vpop.f32.mrf.mxu0
    %v2543 = vadd.f32 %v2500, %v2542
    %2544 = vmatmul.bf16.gmra.mxu0 %v372
    %v2545 = vpop.f32.mrf.mxu0
    %v2546 = vadd.f32 %v2503, %v2545
    %v2547 = vpop.f32.mrf.mxu0
    %v2548 = vadd.f32 %v2505, %v2547
    %2549 = vmatmul.bf16.gmra.mxu0 %v375
    %v2550 = vpop.f32.mrf.mxu0
    %v2551 = vadd.f32 %v2508, %v2550
    %v2552 = vpop.f32.mrf.mxu0
    %v2553 = vadd.f32 %v2510, %v2552
    %2554 = vmatmul.bf16.gmra.mxu0 %v378
    %v2555 = vpop.f32.mrf.mxu0
    %v2556 = vadd.f32 %v2513, %v2555
    %v2557 = vpop.f32.mrf.mxu0
    %v2558 = vadd.f32 %v2515, %v2557
    %2559 = vmatmul.bf16.gmra.mxu0 %v381
    %v2560 = vpop.f32.mrf.mxu0
    %v2561 = vadd.f32 %v2518, %v2560
    %v2562 = vpop.f32.mrf.mxu0
    %2563 = vdwg.mxu0
    %v2564 = vpack.c.bf16 %v488, %v486
    %v2565 = vpack.c.bf16 %v617, %v615
    %v2566 = vpack.c.bf16 %v493, %v491
    %v2567 = vpack.c.bf16 %v622, %v620
    %v2568 = vpack.c.bf16 %v498, %v496
    %v2569 = vpack.c.bf16 %v627, %v625
    %v2570 = vpack.c.bf16 %v503, %v501
    %v2571 = vpack.c.bf16 %v632, %v630
    %v2572 = vpack.c.bf16 %v508, %v506
    %v2573 = vpack.c.bf16 %v637, %v635
    %v2574 = vpack.c.bf16 %v513, %v511
    %v2575 = vpack.c.bf16 %v642, %v640
    %v2576 = vpack.c.bf16 %v965, %v516
    %v2577 = vpack.c.bf16 %v1094, %v645
    %v2578 = vpack.c.bf16 %v970, %v967
    %v2579 = vpack.c.bf16 %v1099, %v1096
    %v2580 = vpack.c.bf16 %v975, %v972
    %v2581 = vpack.c.bf16 %v1104, %v1101
    %v2582 = vpack.c.bf16 %v980, %v977
    %v2583 = vpack.c.bf16 %v1109, %v1106
    %v2584 = vpack.c.bf16 %v985, %v982
    %v2585 = vpack.c.bf16 %v1114, %v1111
    %v2586 = vpack.c.bf16 %v990, %v987
    %v2587 = vpack.c.bf16 %v1119, %v1116
    %v2588 = vpack.c.bf16 %v995, %v992
    %v2589 = vpack.c.bf16 %v1124, %v1121
    %v2590 = vpack.c.bf16 %v1446, %v1444
    %v2591 = vpack.c.bf16 %v1575, %v1573
    %v2592 = vpack.c.bf16 %v1451, %v1449
    %v2593 = vpack.c.bf16 %v1580, %v1578
    %v2594 = vpack.c.bf16 %v1456, %v1454
    %v2595 = vpack.c.bf16 %v1585, %v1583
    %v2596 = vpack.c.bf16 %v1461, %v1459
    %v2597 = vpack.c.bf16 %v1590, %v1588
    %v2598 = vpack.c.bf16 %v1466, %v1464
    %v2599 = vpack.c.bf16 %v1595, %v1593
    %v2600 = vpack.c.bf16 %v1471, %v1469
    %v2601 = vpack.c.bf16 %v1600, %v1598
    %v2602 = vpack.c.bf16 %v1923, %v1474
    %v2603 = vpack.c.bf16 %v2052, %v1603
    %v2604 = vpack.c.bf16 %v1928, %v1925
    %v2605 = vpack.c.bf16 %v2057, %v2054
    %v2606 = vpack.c.bf16 %v1933, %v1930
    %v2607 = vpack.c.bf16 %v2062, %v2059
    %v2608 = vpack.c.bf16 %v1938, %v1935
    %v2609 = vpack.c.bf16 %v2067, %v2064
    %v2610 = vpack.c.bf16 %v1943, %v1940
    %v2611 = vpack.c.bf16 %v2072, %v2069
    %v2612 = vpack.c.bf16 %v1948, %v1945
    %v2613 = vpack.c.bf16 %v2077, %v2074
    %v2614 = vpack.c.bf16 %v1953, %v1950
    %v2615 = vpack.c.bf16 %v2082, %v2079
    %v2616 = vpack.c.bf16 %v2404, %v2402
    %v2617 = vpack.c.bf16 %v2533, %v2531
    %v2618 = vpack.c.bf16 %v2409, %v2407
    %v2619 = vpack.c.bf16 %v2538, %v2536
    %v2620 = vpack.c.bf16 %v2414, %v2412
    %v2621 = vpack.c.bf16 %v2543, %v2541
    %v2622 = vpack.c.bf16 %v2419, %v2417
    %v2623 = vpack.c.bf16 %v2548, %v2546
    %v2624 = vpack.c.bf16 %v2424, %v2422
    %v2625 = vpack.c.bf16 %v2553, %v2551
    %v2626 = vpack.c.bf16 %v2429, %v2427
    %v2627 = vpack.c.bf16 %v2558, %v2556
    %v2628 = vpack.c.bf16 %v2432, %v2432
    %v2629 = vpack.c.bf16 %v2561, %v2561
    %v2630 = vld [vmem:[%s1] sm:$0xff]
    %v2631 = vld [vmem:[%s1 + $0x8] sm:$0xff]
    %v2632 = vld [vmem:[%s1 + $0x10] sm:$0xf]
    %v2633 = vld [vmem:[%s1 + $0x14] sm:$0xff]
    %v2634 = vld [vmem:[%s1 + $0x1c] sm:$0xff]
    %v2635 = vld [vmem:[%s1 + $0x24] sm:$0xf]
    %v2636 = vld [vmem:[%s1 + $0x28] sm:$0xff]
    %v2637 = vld [vmem:[%s1 + $0x30] sm:$0xff]
    %v2638 = vld [vmem:[%s1 + $0x38] sm:$0xf]
    %v2639 = vld [vmem:[%s1 + $0x3c] sm:$0xff]
    %v2640 = vld [vmem:[%s1 + $0x44] sm:$0xff]
    %v2641 = vld [vmem:[%s1 + $0x4c] sm:$0xf]
    %v2642 = vld [vmem:[%s1 + $0x50] sm:$0xff]
    %v2643 = vld [vmem:[%s1 + $0x58] sm:$0xff]
    %v2644 = vld [vmem:[%s1 + $0x60] sm:$0xf]
    %v2645 = vld [vmem:[%s1 + $0x64] sm:$0xff]
    %v2646 = vld [vmem:[%s1 + $0x6c] sm:$0xff]
    %v2647 = vld [vmem:[%s1 + $0x74] sm:$0xf]
    %v2648 = vld [vmem:[%s1 + $0x78] sm:$0xff]
    %v2649 = vld [vmem:[%s1 + $0x80] sm:$0xff]
    %v2650 = vld [vmem:[%s1 + $0x88] sm:$0xf]
    %v2651 = vld [vmem:[%s1 + $0x8c] sm:$0xff]
    %v2652 = vld [vmem:[%s1 + $0x94] sm:$0xff]
    %v2653 = vld [vmem:[%s1 + $0x9c] sm:$0xf]
    %v2654 = vld [vmem:[%s1 + $0xa0] sm:$0xff]
    %v2655 = vld [vmem:[%s1 + $0xa8] sm:$0xff]
    %v2656 = vld [vmem:[%s1 + $0xb0] sm:$0xf]
    %v2657 = vld [vmem:[%s1 + $0xb4] sm:$0xff]
    %v2658 = vld [vmem:[%s1 + $0xbc] sm:$0xff]
    %v2659 = vld [vmem:[%s1 + $0xc4] sm:$0xf]
    %v2660 = vld [vmem:[%s1 + $0xc8] sm:$0xff]
    %v2661 = vld [vmem:[%s1 + $0xd0] sm:$0xff]
    %v2662 = vld [vmem:[%s1 + $0xd8] sm:$0xf]
    %v2663 = vld [vmem:[%s1 + $0xdc] sm:$0xff]
    %v2664 = vld [vmem:[%s1 + $0xe4] sm:$0xff]
    %v2665 = vld [vmem:[%s1 + $0xec] sm:$0xf]
    %v2666 = vld [vmem:[%s1 + $0xf0] sm:$0xff]
    %v2667 = vld [vmem:[%s1 + $0xf8] sm:$0xff]
    %v2668 = vld [vmem:[%s1 + $0x100] sm:$0xf]
    %v2669 = vld [vmem:[%s1 + $0x104] sm:$0xff]
    %v2670 = vld [vmem:[%s1 + $0x10c] sm:$0xff]
    %v2671 = vld [vmem:[%s1 + $0x114] sm:$0xf]
    %v2672 = vld [vmem:[%s1 + $0x118] sm:$0xff]
    %v2673 = vld [vmem:[%s1 + $0x120] sm:$0xff]
    %v2674 = vld [vmem:[%s1 + $0x128] sm:$0xf]
    %v2675 = vld [vmem:[%s1 + $0x12c] sm:$0xff]
    %v2676 = vld [vmem:[%s1 + $0x134] sm:$0xff]
    %v2677 = vld [vmem:[%s1 + $0x13c] sm:$0xf]
    %v2678 = vld [vmem:[%s1 + $0x140] sm:$0xff]
    %v2679 = vld [vmem:[%s1 + $0x148] sm:$0xff]
    %v2680 = vld [vmem:[%s1 + $0x150] sm:$0xf]
    %v2681 = vld [vmem:[%s1 + $0x154] sm:$0xff]
    %v2682 = vld [vmem:[%s1 + $0x15c] sm:$0xff]
    %v2683 = vld [vmem:[%s1 + $0x164] sm:$0xf]
    %v2684 = vld [vmem:[%s1 + $0x168] sm:$0xff]
    %v2685 = vld [vmem:[%s1 + $0x170] sm:$0xff]
    %v2686 = vld [vmem:[%s1 + $0x178] sm:$0xf]
    %v2687 = vld [vmem:[%s1 + $0x17c] sm:$0xff]
    %v2688 = vld [vmem:[%s1 + $0x184] sm:$0xff]
    %v2689 = vld [vmem:[%s1 + $0x18c] sm:$0xf]
    %v2690 = vld [vmem:[%s1 + $0x190] sm:$0xff]
    %v2691 = vld [vmem:[%s1 + $0x198] sm:$0xff]
    %v2692 = vld [vmem:[%s1 + $0x1a0] sm:$0xf]
    %v2756 = vunpack.c.l.b16 %v2630
    %v2757 = vunpack.c.h.b16 %v2630
    %v2758 = vunpack.c.l.b16 %v2631
    %v2759 = vunpack.c.h.b16 %v2631
    %v2760 = vunpack.c.l.b16 %v2632
    %v2761 = vunpack.c.l.b16 %v2633
    %v2762 = vunpack.c.h.b16 %v2633
    %v2763 = vunpack.c.l.b16 %v2634
    %v2764 = vunpack.c.h.b16 %v2634
    %v2765 = vunpack.c.l.b16 %v2635
    %v2766 = vunpack.c.l.b16 %v2636
    %v2767 = vunpack.c.h.b16 %v2636
    %v2768 = vunpack.c.l.b16 %v2637
    %v2769 = vunpack.c.h.b16 %v2637
    %v2770 = vunpack.c.l.b16 %v2638
    %v2771 = vunpack.c.l.b16 %v2639
    %v2772 = vunpack.c.h.b16 %v2639
    %v2773 = vunpack.c.l.b16 %v2640
    %v2774 = vunpack.c.h.b16 %v2640
    %v2775 = vunpack.c.l.b16 %v2641
    %v2776 = vunpack.c.l.b16 %v2642
    %v2777 = vunpack.c.h.b16 %v2642
    %v2778 = vunpack.c.l.b16 %v2643
    %v2779 = vunpack.c.h.b16 %v2643
    %v2780 = vunpack.c.l.b16 %v2644
    %v2781 = vunpack.c.l.b16 %v2645
    %v2782 = vunpack.c.h.b16 %v2645
    %v2783 = vunpack.c.l.b16 %v2646
    %v2784 = vunpack.c.h.b16 %v2646
    %v2785 = vunpack.c.l.b16 %v2647
    %v2786 = vunpack.c.l.b16 %v2648
    %v2787 = vunpack.c.h.b16 %v2648
    %v2788 = vunpack.c.l.b16 %v2649
    %v2789 = vunpack.c.h.b16 %v2649
    %v2790 = vunpack.c.l.b16 %v2650
    %v2791 = vunpack.c.l.b16 %v2651
    %v2792 = vunpack.c.h.b16 %v2651
    %v2793 = vunpack.c.l.b16 %v2652
    %v2794 = vunpack.c.h.b16 %v2652
    %v2795 = vunpack.c.l.b16 %v2653
    %v2796 = vunpack.c.l.b16 %v2654
    %v2797 = vunpack.c.h.b16 %v2654
    %v2798 = vunpack.c.l.b16 %v2655
    %v2799 = vunpack.c.h.b16 %v2655
    %v2800 = vunpack.c.l.b16 %v2656
    %v2801 = vunpack.c.l.b16 %v2657
    %v2802 = vunpack.c.h.b16 %v2657
    %v2803 = vunpack.c.l.b16 %v2658
    %v2804 = vunpack.c.h.b16 %v2658
    %v2805 = vunpack.c.l.b16 %v2659
    %v2806 = vunpack.c.l.b16 %v2660
    %v2807 = vunpack.c.h.b16 %v2660
    %v2808 = vunpack.c.l.b16 %v2661
    %v2809 = vunpack.c.h.b16 %v2661
    %v2810 = vunpack.c.l.b16 %v2662
    %v2811 = vunpack.c.l.b16 %v2663
    %v2812 = vunpack.c.h.b16 %v2663
    %v2813 = vunpack.c.l.b16 %v2664
    %v2814 = vunpack.c.h.b16 %v2664
    %v2815 = vunpack.c.l.b16 %v2665
    %v2816 = vunpack.c.l.b16 %v2666
    %v2817 = vunpack.c.h.b16 %v2666
    %v2818 = vunpack.c.l.b16 %v2667
    %v2819 = vunpack.c.h.b16 %v2667
    %v2820 = vunpack.c.l.b16 %v2668
    %v2821 = vunpack.c.l.b16 %v2669
    %v2822 = vunpack.c.h.b16 %v2669
    %v2823 = vunpack.c.l.b16 %v2670
    %v2824 = vunpack.c.h.b16 %v2670
    %v2825 = vunpack.c.l.b16 %v2671
    %v2826 = vunpack.c.l.b16 %v2672
    %v2827 = vunpack.c.h.b16 %v2672
    %v2828 = vunpack.c.l.b16 %v2673
    %v2829 = vunpack.c.h.b16 %v2673
    %v2830 = vunpack.c.l.b16 %v2674
    %v2831 = vunpack.c.l.b16 %v2675
    %v2832 = vunpack.c.h.b16 %v2675
    %v2833 = vunpack.c.l.b16 %v2676
    %v2834 = vunpack.c.h.b16 %v2676
    %v2835 = vunpack.c.l.b16 %v2677
    %v2836 = vunpack.c.l.b16 %v2678
    %v2837 = vunpack.c.h.b16 %v2678
    %v2838 = vunpack.c.l.b16 %v2679
    %v2839 = vunpack.c.h.b16 %v2679
    %v2840 = vunpack.c.l.b16 %v2680
    %v2841 = vunpack.c.l.b16 %v2681
    %v2842 = vunpack.c.h.b16 %v2681
    %v2843 = vunpack.c.l.b16 %v2682
    %v2844 = vunpack.c.h.b16 %v2682
    %v2845 = vunpack.c.l.b16 %v2683
    %v2846 = vunpack.c.l.b16 %v2684
    %v2847 = vunpack.c.h.b16 %v2684
    %v2848 = vunpack.c.l.b16 %v2685
    %v2849 = vunpack.c.h.b16 %v2685
    %v2850 = vunpack.c.l.b16 %v2686
    %v2851 = vunpack.c.l.b16 %v2687
    %v2852 = vunpack.c.h.b16 %v2687
    %v2853 = vunpack.c.l.b16 %v2688
    %v2854 = vunpack.c.h.b16 %v2688
    %v2855 = vunpack.c.l.b16 %v2689
    %v2856 = vunpack.c.l.b16 %v2690
    %v2857 = vunpack.c.h.b16 %v2690
    %v2858 = vunpack.c.l.b16 %v2691
    %v2859 = vunpack.c.h.b16 %v2691
    %v2860 = vunpack.c.l.b16 %v2692
    %v2861 = vpack.c.b16 %v2761, %v2756
    %v2862 = vpack.c.b16 %v2762, %v2757
    %v2863 = vpack.c.b16 %v2763, %v2758
    %v2864 = vpack.c.b16 %v2764, %v2759
    %v2865 = vpack.c.b16 %v2765, %v2760
    %v2866 = vpack.c.b16 %v2771, %v2766
    %v2867 = vpack.c.b16 %v2772, %v2767
    %v2868 = vpack.c.b16 %v2773, %v2768
    %v2869 = vpack.c.b16 %v2774, %v2769
    %v2870 = vpack.c.b16 %v2775, %v2770
    %v2871 = vpack.c.b16 %v2781, %v2776
    %v2872 = vpack.c.b16 %v2782, %v2777
    %v2873 = vpack.c.b16 %v2783, %v2778
    %v2874 = vpack.c.b16 %v2784, %v2779
    %v2875 = vpack.c.b16 %v2785, %v2780
    %v2876 = vpack.c.b16 %v2791, %v2786
    %v2877 = vpack.c.b16 %v2792, %v2787
    %v2878 = vpack.c.b16 %v2793, %v2788
    %v2879 = vpack.c.b16 %v2794, %v2789
    %v2880 = vpack.c.b16 %v2795, %v2790
    %v2881 = vpack.c.b16 %v2801, %v2796
    %v2882 = vpack.c.b16 %v2802, %v2797
    %v2883 = vpack.c.b16 %v2803, %v2798
    %v2884 = vpack.c.b16 %v2804, %v2799
    %v2885 = vpack.c.b16 %v2805, %v2800
    %v2886 = vpack.c.b16 %v2811, %v2806
    %v2887 = vpack.c.b16 %v2812, %v2807
    %v2888 = vpack.c.b16 %v2813, %v2808
    %v2889 = vpack.c.b16 %v2814, %v2809
    %v2890 = vpack.c.b16 %v2815, %v2810
    %v2891 = vpack.c.b16 %v2821, %v2816
    %v2892 = vpack.c.b16 %v2822, %v2817
    %v2893 = vpack.c.b16 %v2823, %v2818
    %v2894 = vpack.c.b16 %v2824, %v2819
    %v2895 = vpack.c.b16 %v2825, %v2820
    %v2896 = vpack.c.b16 %v2831, %v2826
    %v2897 = vpack.c.b16 %v2832, %v2827
    %v2898 = vpack.c.b16 %v2833, %v2828
    %v2899 = vpack.c.b16 %v2834, %v2829
    %v2900 = vpack.c.b16 %v2835, %v2830
    %v2901 = vpack.c.b16 %v2841, %v2836
    %v2902 = vpack.c.b16 %v2842, %v2837
    %v2903 = vpack.c.b16 %v2843, %v2838
    %v2904 = vpack.c.b16 %v2844, %v2839
    %v2905 = vpack.c.b16 %v2845, %v2840
    %v2906 = vpack.c.b16 %v2851, %v2846
    %v2907 = vpack.c.b16 %v2852, %v2847
    %v2908 = vpack.c.b16 %v2853, %v2848
    %v2909 = vpack.c.b16 %v2854, %v2849
    %v2910 = vpack.c.b16 %v2855, %v2850
    %v2911 = vpack.c.b16 %v2856, %v2856
    %v2912 = vpack.c.b16 %v2857, %v2857
    %v2913 = vpack.c.b16 %v2858, %v2858
    %v2914 = vpack.c.b16 %v2859, %v2859
    %v2915 = vpack.c.b16 %v2860, %v2860
    %vm2960 = vcmask 64512
    %v2962 = vsel %vm2960, %v2865, 0
    %v2965 = vsel %vm2960, %v2870, 0
    %v2968 = vsel %vm2960, %v2875, 0
    %v2971 = vsel %vm2960, %v2880, 0
    %v2974 = vsel %vm2960, %v2885, 0
    %v2977 = vsel %vm2960, %v2890, 0
    %v2980 = vsel %vm2960, %v2895, 0
    %v2983 = vsel %vm2960, %v2900, 0
    %v2986 = vsel %vm2960, %v2905, 0
    %v2989 = vsel %vm2960, %v2910, 0
    %v2992 = vsel %vm2960, %v2915, 0
    %vm2994 = vcmask 1043456
    %v2996 = vsel %vm2994, %v2628, 0
    %v2999 = vsel %vm2994, %v2629, 0
    %3001 = vmatpush.bf16.msra.mxu0 %v2578
    %3002 = vmatpush.bf16.msra.mxu0 %v2576
    %3003 = vmatpush.bf16.msra.mxu0 %v2574
    %3004 = vmatpush.bf16.msra.mxu0 %v2572
    %3005 = vmatpush.bf16.msra.mxu0 %v2570
    %3006 = vmatpush.bf16.msra.mxu0 %v2568
    %3007 = vmatpush.bf16.msra.mxu0 %v2566
    %3008 = vmatpush.bf16.msra.mxu0 %v2564
    %3009 = vmatmul.bf16.gmra.mxu0 %v2861
    %v3010 = vpop.f32.mrf.mxu0
    %v3011 = vadd.f32 0.0, %v3010
    %v3012 = vpop.f32.mrf.mxu0
    %v3013 = vadd.f32 0.0, %v3012
    %3014 = vmatmul.bf16.gmra.mxu0 %v2866
    %v3015 = vpop.f32.mrf.mxu0
    %v3016 = vadd.f32 0.0, %v3015
    %v3017 = vpop.f32.mrf.mxu0
    %v3018 = vadd.f32 0.0, %v3017
    %3019 = vmatmul.bf16.gmra.mxu0 %v2871
    %v3020 = vpop.f32.mrf.mxu0
    %v3021 = vadd.f32 0.0, %v3020
    %v3022 = vpop.f32.mrf.mxu0
    %v3023 = vadd.f32 0.0, %v3022
    %3024 = vmatmul.bf16.gmra.mxu0 %v2876
    %v3025 = vpop.f32.mrf.mxu0
    %v3026 = vadd.f32 0.0, %v3025
    %v3027 = vpop.f32.mrf.mxu0
    %v3028 = vadd.f32 0.0, %v3027
    %3029 = vmatmul.bf16.gmra.mxu0 %v2881
    %v3030 = vpop.f32.mrf.mxu0
    %v3031 = vadd.f32 0.0, %v3030
    %v3032 = vpop.f32.mrf.mxu0
    %v3033 = vadd.f32 0.0, %v3032
    %3034 = vmatmul.bf16.gmra.mxu0 %v2886
    %v3035 = vpop.f32.mrf.mxu0
    %v3036 = vadd.f32 0.0, %v3035
    %v3037 = vpop.f32.mrf.mxu0
    %v3038 = vadd.f32 0.0, %v3037
    %3039 = vmatmul.bf16.gmra.mxu0 %v2891
    %v3040 = vpop.f32.mrf.mxu0
    %v3041 = vadd.f32 0.0, %v3040
    %v3042 = vpop.f32.mrf.mxu0
    %v3043 = vadd.f32 0.0, %v3042
    %3044 = vmatmul.bf16.gmra.mxu0 %v2896
    %v3045 = vpop.f32.mrf.mxu0
    %v3046 = vadd.f32 0.0, %v3045
    %v3047 = vpop.f32.mrf.mxu0
    %v3048 = vadd.f32 0.0, %v3047
    %3049 = vmatmul.bf16.gmra.mxu0 %v2901
    %v3050 = vpop.f32.mrf.mxu0
    %v3051 = vadd.f32 0.0, %v3050
    %v3052 = vpop.f32.mrf.mxu0
    %v3053 = vadd.f32 0.0, %v3052
    %3054 = vmatmul.bf16.gmra.mxu0 %v2906
    %v3055 = vpop.f32.mrf.mxu0
    %v3056 = vadd.f32 0.0, %v3055
    %v3057 = vpop.f32.mrf.mxu0
    %v3058 = vadd.f32 0.0, %v3057
    %3059 = vmatmul.bf16.gmra.mxu0 %v2911
    %v3060 = vpop.f32.mrf.mxu0
    %v3061 = vadd.f32 0.0, %v3060
    %v3062 = vpop.f32.mrf.mxu0
    %3063 = vdwg.mxu0
    %3064 = vmatpush.bf16.msra.mxu0 %v2594
    %3065 = vmatpush.bf16.msra.mxu0 %v2592
    %3066 = vmatpush.bf16.msra.mxu0 %v2590
    %3067 = vmatpush.bf16.msra.mxu0 %v2588
    %3068 = vmatpush.bf16.msra.mxu0 %v2586
    %3069 = vmatpush.bf16.msra.mxu0 %v2584
    %3070 = vmatpush.bf16.msra.mxu0 %v2582
    %3071 = vmatpush.bf16.msra.mxu0 %v2580
    %3072 = vmatmul.bf16.gmra.mxu0 %v2862
    %v3073 = vpop.f32.mrf.mxu0
    %v3074 = vadd.f32 %v3011, %v3073
    %v3075 = vpop.f32.mrf.mxu0
    %v3076 = vadd.f32 %v3013, %v3075
    %3077 = vmatmul.bf16.gmra.mxu0 %v2867
    %v3078 = vpop.f32.mrf.mxu0
    %v3079 = vadd.f32 %v3016, %v3078
    %v3080 = vpop.f32.mrf.mxu0
    %v3081 = vadd.f32 %v3018, %v3080
    %3082 = vmatmul.bf16.gmra.mxu0 %v2872
    %v3083 = vpop.f32.mrf.mxu0
    %v3084 = vadd.f32 %v3021, %v3083
    %v3085 = vpop.f32.mrf.mxu0
    %v3086 = vadd.f32 %v3023, %v3085
    %3087 = vmatmul.bf16.gmra.mxu0 %v2877
    %v3088 = vpop.f32.mrf.mxu0
    %v3089 = vadd.f32 %v3026, %v3088
    %v3090 = vpop.f32.mrf.mxu0
    %v3091 = vadd.f32 %v3028, %v3090
    %3092 = vmatmul.bf16.gmra.mxu0 %v2882
    %v3093 = vpop.f32.mrf.mxu0
    %v3094 = vadd.f32 %v3031, %v3093
    %v3095 = vpop.f32.mrf.mxu0
    %v3096 = vadd.f32 %v3033, %v3095
    %3097 = vmatmul.bf16.gmra.mxu0 %v2887
    %v3098 = vpop.f32.mrf.mxu0
    %v3099 = vadd.f32 %v3036, %v3098
    %v3100 = vpop.f32.mrf.mxu0
    %v3101 = vadd.f32 %v3038, %v3100
    %3102 = vmatmul.bf16.gmra.mxu0 %v2892
    %v3103 = vpop.f32.mrf.mxu0
    %v3104 = vadd.f32 %v3041, %v3103
    %v3105 = vpop.f32.mrf.mxu0
    %v3106 = vadd.f32 %v3043, %v3105
    %3107 = vmatmul.bf16.gmra.mxu0 %v2897
    %v3108 = vpop.f32.mrf.mxu0
    %v3109 = vadd.f32 %v3046, %v3108
    %v3110 = vpop.f32.mrf.mxu0
    %v3111 = vadd.f32 %v3048, %v3110
    %3112 = vmatmul.bf16.gmra.mxu0 %v2902
    %v3113 = vpop.f32.mrf.mxu0
    %v3114 = vadd.f32 %v3051, %v3113
    %v3115 = vpop.f32.mrf.mxu0
    %v3116 = vadd.f32 %v3053, %v3115
    %3117 = vmatmul.bf16.gmra.mxu0 %v2907
    %v3118 = vpop.f32.mrf.mxu0
    %v3119 = vadd.f32 %v3056, %v3118
    %v3120 = vpop.f32.mrf.mxu0
    %v3121 = vadd.f32 %v3058, %v3120
    %3122 = vmatmul.bf16.gmra.mxu0 %v2912
    %v3123 = vpop.f32.mrf.mxu0
    %v3124 = vadd.f32 %v3061, %v3123
    %v3125 = vpop.f32.mrf.mxu0
    %3126 = vdwg.mxu0
    %3127 = vmatpush.bf16.msra.mxu0 %v2610
    %3128 = vmatpush.bf16.msra.mxu0 %v2608
    %3129 = vmatpush.bf16.msra.mxu0 %v2606
    %3130 = vmatpush.bf16.msra.mxu0 %v2604
    %3131 = vmatpush.bf16.msra.mxu0 %v2602
    %3132 = vmatpush.bf16.msra.mxu0 %v2600
    %3133 = vmatpush.bf16.msra.mxu0 %v2598
    %3134 = vmatpush.bf16.msra.mxu0 %v2596
    %3135 = vmatmul.bf16.gmra.mxu0 %v2863
    %v3136 = vpop.f32.mrf.mxu0
    %v3137 = vadd.f32 %v3074, %v3136
    %v3138 = vpop.f32.mrf.mxu0
    %v3139 = vadd.f32 %v3076, %v3138
    %3140 = vmatmul.bf16.gmra.mxu0 %v2868
    %v3141 = vpop.f32.mrf.mxu0
    %v3142 = vadd.f32 %v3079, %v3141
    %v3143 = vpop.f32.mrf.mxu0
    %v3144 = vadd.f32 %v3081, %v3143
    %3145 = vmatmul.bf16.gmra.mxu0 %v2873
    %v3146 = vpop.f32.mrf.mxu0
    %v3147 = vadd.f32 %v3084, %v3146
    %v3148 = vpop.f32.mrf.mxu0
    %v3149 = vadd.f32 %v3086, %v3148
    %3150 = vmatmul.bf16.gmra.mxu0 %v2878
    %v3151 = vpop.f32.mrf.mxu0
    %v3152 = vadd.f32 %v3089, %v3151
    %v3153 = vpop.f32.mrf.mxu0
    %v3154 = vadd.f32 %v3091, %v3153
    %3155 = vmatmul.bf16.gmra.mxu0 %v2883
    %v3156 = vpop.f32.mrf.mxu0
    %v3157 = vadd.f32 %v3094, %v3156
    %v3158 = vpop.f32.mrf.mxu0
    %v3159 = vadd.f32 %v3096, %v3158
    %3160 = vmatmul.bf16.gmra.mxu0 %v2888
    %v3161 = vpop.f32.mrf.mxu0
    %v3162 = vadd.f32 %v3099, %v3161
    %v3163 = vpop.f32.mrf.mxu0
    %v3164 = vadd.f32 %v3101, %v3163
    %3165 = vmatmul.bf16.gmra.mxu0 %v2893
    %v3166 = vpop.f32.mrf.mxu0
    %v3167 = vadd.f32 %v3104, %v3166
    %v3168 = vpop.f32.mrf.mxu0
    %v3169 = vadd.f32 %v3106, %v3168
    %3170 = vmatmul.bf16.gmra.mxu0 %v2898
    %v3171 = vpop.f32.mrf.mxu0
    %v3172 = vadd.f32 %v3109, %v3171
    %v3173 = vpop.f32.mrf.mxu0
    %v3174 = vadd.f32 %v3111, %v3173
    %3175 = vmatmul.bf16.gmra.mxu0 %v2903
    %v3176 = vpop.f32.mrf.mxu0
    %v3177 = vadd.f32 %v3114, %v3176
    %v3178 = vpop.f32.mrf.mxu0
    %v3179 = vadd.f32 %v3116, %v3178
    %3180 = vmatmul.bf16.gmra.mxu0 %v2908
    %v3181 = vpop.f32.mrf.mxu0
    %v3182 = vadd.f32 %v3119, %v3181
    %v3183 = vpop.f32.mrf.mxu0
    %v3184 = vadd.f32 %v3121, %v3183
    %3185 = vmatmul.bf16.gmra.mxu0 %v2913
    %v3186 = vpop.f32.mrf.mxu0
    %v3187 = vadd.f32 %v3124, %v3186
    %v3188 = vpop.f32.mrf.mxu0
    %3189 = vdwg.mxu0
    %3190 = vmatpush.bf16.msra.mxu0 %v2626
    %3191 = vmatpush.bf16.msra.mxu0 %v2624
    %3192 = vmatpush.bf16.msra.mxu0 %v2622
    %3193 = vmatpush.bf16.msra.mxu0 %v2620
    %3194 = vmatpush.bf16.msra.mxu0 %v2618
    %3195 = vmatpush.bf16.msra.mxu0 %v2616
    %3196 = vmatpush.bf16.msra.mxu0 %v2614
    %3197 = vmatpush.bf16.msra.mxu0 %v2612
    %3198 = vmatmul.bf16.gmra.mxu0 %v2864
    %v3199 = vpop.f32.mrf.mxu0
    %v3200 = vadd.f32 %v3137, %v3199
    %v3201 = vpop.f32.mrf.mxu0
    %v3202 = vadd.f32 %v3139, %v3201
    %3203 = vmatmul.bf16.gmra.mxu0 %v2869
    %v3204 = vpop.f32.mrf.mxu0
    %v3205 = vadd.f32 %v3142, %v3204
    %v3206 = vpop.f32.mrf.mxu0
    %v3207 = vadd.f32 %v3144, %v3206
    %3208 = vmatmul.bf16.gmra.mxu0 %v2874
    %v3209 = vpop.f32.mrf.mxu0
    %v3210 = vadd.f32 %v3147, %v3209
    %v3211 = vpop.f32.mrf.mxu0
    %v3212 = vadd.f32 %v3149, %v3211
    %3213 = vmatmul.bf16.gmra.mxu0 %v2879
    %v3214 = vpop.f32.mrf.mxu0
    %v3215 = vadd.f32 %v3152, %v3214
    %v3216 = vpop.f32.mrf.mxu0
    %v3217 = vadd.f32 %v3154, %v3216
    %3218 = vmatmul.bf16.gmra.mxu0 %v2884
    %v3219 = vpop.f32.mrf.mxu0
    %v3220 = vadd.f32 %v3157, %v3219
    %v3221 = vpop.f32.mrf.mxu0
    %v3222 = vadd.f32 %v3159, %v3221
    %3223 = vmatmul.bf16.gmra.mxu0 %v2889
    %v3224 = vpop.f32.mrf.mxu0
    %v3225 = vadd.f32 %v3162, %v3224
    %v3226 = vpop.f32.mrf.mxu0
    %v3227 = vadd.f32 %v3164, %v3226
    %3228 = vmatmul.bf16.gmra.mxu0 %v2894
    %v3229 = vpop.f32.mrf.mxu0
    %v3230 = vadd.f32 %v3167, %v3229
    %v3231 = vpop.f32.mrf.mxu0
    %v3232 = vadd.f32 %v3169, %v3231
    %3233 = vmatmul.bf16.gmra.mxu0 %v2899
    %v3234 = vpop.f32.mrf.mxu0
    %v3235 = vadd.f32 %v3172, %v3234
    %v3236 = vpop.f32.mrf.mxu0
    %v3237 = vadd.f32 %v3174, %v3236
    %3238 = vmatmul.bf16.gmra.mxu0 %v2904
    %v3239 = vpop.f32.mrf.mxu0
    %v3240 = vadd.f32 %v3177, %v3239
    %v3241 = vpop.f32.mrf.mxu0
    %v3242 = vadd.f32 %v3179, %v3241
    %3243 = vmatmul.bf16.gmra.mxu0 %v2909
    %v3244 = vpop.f32.mrf.mxu0
    %v3245 = vadd.f32 %v3182, %v3244
    %v3246 = vpop.f32.mrf.mxu0
    %v3247 = vadd.f32 %v3184, %v3246
    %3248 = vmatmul.bf16.gmra.mxu0 %v2914
    %v3249 = vpop.f32.mrf.mxu0
    %v3250 = vadd.f32 %v3187, %v3249
    %v3251 = vpop.f32.mrf.mxu0
    %3252 = vdwg.mxu0
    %3253 = vmatpush.bf16.msra.mxu0 0
    %3254 = vmatpush.bf16.msra.mxu0 0
    %3255 = vmatpush.bf16.msra.mxu0 0
    %3256 = vmatpush.bf16.msra.mxu0 0
    %3257 = vmatpush.bf16.msra.mxu0 0
    %3258 = vmatpush.bf16.msra.mxu0 0
    %3259 = vmatpush.bf16.msra.mxu0 0
    %3260 = vmatpush.bf16.msra.mxu0 %v2996
    %3261 = vmatmul.bf16.gmra.mxu0 %v2962
    %v3262 = vpop.f32.mrf.mxu0
    %v3263 = vadd.f32 %v3200, %v3262
    %v3264 = vpop.f32.mrf.mxu0
    %v3265 = vadd.f32 %v3202, %v3264
    %3266 = vmatmul.bf16.gmra.mxu0 %v2965
    %v3267 = vpop.f32.mrf.mxu0
    %v3268 = vadd.f32 %v3205, %v3267
    %v3269 = vpop.f32.mrf.mxu0
    %v3270 = vadd.f32 %v3207, %v3269
    %3271 = vmatmul.bf16.gmra.mxu0 %v2968
    %v3272 = vpop.f32.mrf.mxu0
    %v3273 = vadd.f32 %v3210, %v3272
    %v3274 = vpop.f32.mrf.mxu0
    %v3275 = vadd.f32 %v3212, %v3274
    %3276 = vmatmul.bf16.gmra.mxu0 %v2971
    %v3277 = vpop.f32.mrf.mxu0
    %v3278 = vadd.f32 %v3215, %v3277
    %v3279 = vpop.f32.mrf.mxu0
    %v3280 = vadd.f32 %v3217, %v3279
    %3281 = vmatmul.bf16.gmra.mxu0 %v2974
    %v3282 = vpop.f32.mrf.mxu0
    %v3283 = vadd.f32 %v3220, %v3282
    %v3284 = vpop.f32.mrf.mxu0
    %v3285 = vadd.f32 %v3222, %v3284
    %3286 = vmatmul.bf16.gmra.mxu0 %v2977
    %v3287 = vpop.f32.mrf.mxu0
    %v3288 = vadd.f32 %v3225, %v3287
    %v3289 = vpop.f32.mrf.mxu0
    %v3290 = vadd.f32 %v3227, %v3289
    %3291 = vmatmul.bf16.gmra.mxu0 %v2980
    %v3292 = vpop.f32.mrf.mxu0
    %v3293 = vadd.f32 %v3230, %v3292
    %v3294 = vpop.f32.mrf.mxu0
    %v3295 = vadd.f32 %v3232, %v3294
    %3296 = vmatmul.bf16.gmra.mxu0 %v2983
    %v3297 = vpop.f32.mrf.mxu0
    %v3298 = vadd.f32 %v3235, %v3297
    %v3299 = vpop.f32.mrf.mxu0
    %v3300 = vadd.f32 %v3237, %v3299
    %3301 = vmatmul.bf16.gmra.mxu0 %v2986
    %v3302 = vpop.f32.mrf.mxu0
    %v3303 = vadd.f32 %v3240, %v3302
    %v3304 = vpop.f32.mrf.mxu0
    %v3305 = vadd.f32 %v3242, %v3304
    %3306 = vmatmul.bf16.gmra.mxu0 %v2989
    %v3307 = vpop.f32.mrf.mxu0
    %v3308 = vadd.f32 %v3245, %v3307
    %v3309 = vpop.f32.mrf.mxu0
    %v3310 = vadd.f32 %v3247, %v3309
    %3311 = vmatmul.bf16.gmra.mxu0 %v2992
    %v3312 = vpop.f32.mrf.mxu0
    %v3313 = vadd.f32 %v3250, %v3312
    %v3314 = vpop.f32.mrf.mxu0
    %3315 = vdwg.mxu0
    %3316 = vmatpush.bf16.msra.mxu0 %v2579
    %3317 = vmatpush.bf16.msra.mxu0 %v2577
    %3318 = vmatpush.bf16.msra.mxu0 %v2575
    %3319 = vmatpush.bf16.msra.mxu0 %v2573
    %3320 = vmatpush.bf16.msra.mxu0 %v2571
    %3321 = vmatpush.bf16.msra.mxu0 %v2569
    %3322 = vmatpush.bf16.msra.mxu0 %v2567
    %3323 = vmatpush.bf16.msra.mxu0 %v2565
    %3324 = vmatmul.bf16.gmra.mxu0 %v2861
    %v3325 = vpop.f32.mrf.mxu0
    %v3326 = vadd.f32 0.0, %v3325
    %v3327 = vpop.f32.mrf.mxu0
    %v3328 = vadd.f32 0.0, %v3327
    %3329 = vmatmul.bf16.gmra.mxu0 %v2866
    %v3330 = vpop.f32.mrf.mxu0
    %v3331 = vadd.f32 0.0, %v3330
    %v3332 = vpop.f32.mrf.mxu0
    %v3333 = vadd.f32 0.0, %v3332
    %3334 = vmatmul.bf16.gmra.mxu0 %v2871
    %v3335 = vpop.f32.mrf.mxu0
    %v3336 = vadd.f32 0.0, %v3335
    %v3337 = vpop.f32.mrf.mxu0
    %v3338 = vadd.f32 0.0, %v3337
    %3339 = vmatmul.bf16.gmra.mxu0 %v2876
    %v3340 = vpop.f32.mrf.mxu0
    %v3341 = vadd.f32 0.0, %v3340
    %v3342 = vpop.f32.mrf.mxu0
    %v3343 = vadd.f32 0.0, %v3342
    %3344 = vmatmul.bf16.gmra.mxu0 %v2881
    %v3345 = vpop.f32.mrf.mxu0
    %v3346 = vadd.f32 0.0, %v3345
    %v3347 = vpop.f32.mrf.mxu0
    %v3348 = vadd.f32 0.0, %v3347
    %3349 = vmatmul.bf16.gmra.mxu0 %v2886
    %v3350 = vpop.f32.mrf.mxu0
    %v3351 = vadd.f32 0.0, %v3350
    %v3352 = vpop.f32.mrf.mxu0
    %v3353 = vadd.f32 0.0, %v3352
    %3354 = vmatmul.bf16.gmra.mxu0 %v2891
    %v3355 = vpop.f32.mrf.mxu0
    %v3356 = vadd.f32 0.0, %v3355
    %v3357 = vpop.f32.mrf.mxu0
    %v3358 = vadd.f32 0.0, %v3357
    %3359 = vmatmul.bf16.gmra.mxu0 %v2896
    %v3360 = vpop.f32.mrf.mxu0
    %v3361 = vadd.f32 0.0, %v3360
    %v3362 = vpop.f32.mrf.mxu0
    %v3363 = vadd.f32 0.0, %v3362
    %3364 = vmatmul.bf16.gmra.mxu0 %v2901
    %v3365 = vpop.f32.mrf.mxu0
    %v3366 = vadd.f32 0.0, %v3365
    %v3367 = vpop.f32.mrf.mxu0
    %v3368 = vadd.f32 0.0, %v3367
    %3369 = vmatmul.bf16.gmra.mxu0 %v2906
    %v3370 = vpop.f32.mrf.mxu0
    %v3371 = vadd.f32 0.0, %v3370
    %v3372 = vpop.f32.mrf.mxu0
    %v3373 = vadd.f32 0.0, %v3372
    %3374 = vmatmul.bf16.gmra.mxu0 %v2911
    %v3375 = vpop.f32.mrf.mxu0
    %v3376 = vadd.f32 0.0, %v3375
    %v3377 = vpop.f32.mrf.mxu0
    %3378 = vdwg.mxu0
    %3379 = vmatpush.bf16.msra.mxu0 %v2595
    %3380 = vmatpush.bf16.msra.mxu0 %v2593
    %3381 = vmatpush.bf16.msra.mxu0 %v2591
    %3382 = vmatpush.bf16.msra.mxu0 %v2589
    %3383 = vmatpush.bf16.msra.mxu0 %v2587
    %3384 = vmatpush.bf16.msra.mxu0 %v2585
    %3385 = vmatpush.bf16.msra.mxu0 %v2583
    %3386 = vmatpush.bf16.msra.mxu0 %v2581
    %3387 = vmatmul.bf16.gmra.mxu0 %v2862
    %v3388 = vpop.f32.mrf.mxu0
    %v3389 = vadd.f32 %v3326, %v3388
    %v3390 = vpop.f32.mrf.mxu0
    %v3391 = vadd.f32 %v3328, %v3390
    %3392 = vmatmul.bf16.gmra.mxu0 %v2867
    %v3393 = vpop.f32.mrf.mxu0
    %v3394 = vadd.f32 %v3331, %v3393
    %v3395 = vpop.f32.mrf.mxu0
    %v3396 = vadd.f32 %v3333, %v3395
    %3397 = vmatmul.bf16.gmra.mxu0 %v2872
    %v3398 = vpop.f32.mrf.mxu0
    %v3399 = vadd.f32 %v3336, %v3398
    %v3400 = vpop.f32.mrf.mxu0
    %v3401 = vadd.f32 %v3338, %v3400
    %3402 = vmatmul.bf16.gmra.mxu0 %v2877
    %v3403 = vpop.f32.mrf.mxu0
    %v3404 = vadd.f32 %v3341, %v3403
    %v3405 = vpop.f32.mrf.mxu0
    %v3406 = vadd.f32 %v3343, %v3405
    %3407 = vmatmul.bf16.gmra.mxu0 %v2882
    %v3408 = vpop.f32.mrf.mxu0
    %v3409 = vadd.f32 %v3346, %v3408
    %v3410 = vpop.f32.mrf.mxu0
    %v3411 = vadd.f32 %v3348, %v3410
    %3412 = vmatmul.bf16.gmra.mxu0 %v2887
    %v3413 = vpop.f32.mrf.mxu0
    %v3414 = vadd.f32 %v3351, %v3413
    %v3415 = vpop.f32.mrf.mxu0
    %v3416 = vadd.f32 %v3353, %v3415
    %3417 = vmatmul.bf16.gmra.mxu0 %v2892
    %v3418 = vpop.f32.mrf.mxu0
    %v3419 = vadd.f32 %v3356, %v3418
    %v3420 = vpop.f32.mrf.mxu0
    %v3421 = vadd.f32 %v3358, %v3420
    %3422 = vmatmul.bf16.gmra.mxu0 %v2897
    %v3423 = vpop.f32.mrf.mxu0
    %v3424 = vadd.f32 %v3361, %v3423
    %v3425 = vpop.f32.mrf.mxu0
    %v3426 = vadd.f32 %v3363, %v3425
    %3427 = vmatmul.bf16.gmra.mxu0 %v2902
    %v3428 = vpop.f32.mrf.mxu0
    %v3429 = vadd.f32 %v3366, %v3428
    %v3430 = vpop.f32.mrf.mxu0
    %v3431 = vadd.f32 %v3368, %v3430
    %3432 = vmatmul.bf16.gmra.mxu0 %v2907
    %v3433 = vpop.f32.mrf.mxu0
    %v3434 = vadd.f32 %v3371, %v3433
    %v3435 = vpop.f32.mrf.mxu0
    %v3436 = vadd.f32 %v3373, %v3435
    %3437 = vmatmul.bf16.gmra.mxu0 %v2912
    %v3438 = vpop.f32.mrf.mxu0
    %v3439 = vadd.f32 %v3376, %v3438
    %v3440 = vpop.f32.mrf.mxu0
    %3441 = vdwg.mxu0
    %3442 = vmatpush.bf16.msra.mxu0 %v2611
    %3443 = vmatpush.bf16.msra.mxu0 %v2609
    %3444 = vmatpush.bf16.msra.mxu0 %v2607
    %3445 = vmatpush.bf16.msra.mxu0 %v2605
    %3446 = vmatpush.bf16.msra.mxu0 %v2603
    %3447 = vmatpush.bf16.msra.mxu0 %v2601
    %3448 = vmatpush.bf16.msra.mxu0 %v2599
    %3449 = vmatpush.bf16.msra.mxu0 %v2597
    %3450 = vmatmul.bf16.gmra.mxu0 %v2863
    %v3451 = vpop.f32.mrf.mxu0
    %v3452 = vadd.f32 %v3389, %v3451
    %v3453 = vpop.f32.mrf.mxu0
    %v3454 = vadd.f32 %v3391, %v3453
    %3455 = vmatmul.bf16.gmra.mxu0 %v2868
    %v3456 = vpop.f32.mrf.mxu0
    %v3457 = vadd.f32 %v3394, %v3456
    %v3458 = vpop.f32.mrf.mxu0
    %v3459 = vadd.f32 %v3396, %v3458
    %3460 = vmatmul.bf16.gmra.mxu0 %v2873
    %v3461 = vpop.f32.mrf.mxu0
    %v3462 = vadd.f32 %v3399, %v3461
    %v3463 = vpop.f32.mrf.mxu0
    %v3464 = vadd.f32 %v3401, %v3463
    %3465 = vmatmul.bf16.gmra.mxu0 %v2878
    %v3466 = vpop.f32.mrf.mxu0
    %v3467 = vadd.f32 %v3404, %v3466
    %v3468 = vpop.f32.mrf.mxu0
    %v3469 = vadd.f32 %v3406, %v3468
    %3470 = vmatmul.bf16.gmra.mxu0 %v2883
    %v3471 = vpop.f32.mrf.mxu0
    %v3472 = vadd.f32 %v3409, %v3471
    %v3473 = vpop.f32.mrf.mxu0
    %v3474 = vadd.f32 %v3411, %v3473
    %3475 = vmatmul.bf16.gmra.mxu0 %v2888
    %v3476 = vpop.f32.mrf.mxu0
    %v3477 = vadd.f32 %v3414, %v3476
    %v3478 = vpop.f32.mrf.mxu0
    %v3479 = vadd.f32 %v3416, %v3478
    %3480 = vmatmul.bf16.gmra.mxu0 %v2893
    %v3481 = vpop.f32.mrf.mxu0
    %v3482 = vadd.f32 %v3419, %v3481
    %v3483 = vpop.f32.mrf.mxu0
    %v3484 = vadd.f32 %v3421, %v3483
    %3485 = vmatmul.bf16.gmra.mxu0 %v2898
    %v3486 = vpop.f32.mrf.mxu0
    %v3487 = vadd.f32 %v3424, %v3486
    %v3488 = vpop.f32.mrf.mxu0
    %v3489 = vadd.f32 %v3426, %v3488
    %3490 = vmatmul.bf16.gmra.mxu0 %v2903
    %v3491 = vpop.f32.mrf.mxu0
    %v3492 = vadd.f32 %v3429, %v3491
    %v3493 = vpop.f32.mrf.mxu0
    %v3494 = vadd.f32 %v3431, %v3493
    %3495 = vmatmul.bf16.gmra.mxu0 %v2908
    %v3496 = vpop.f32.mrf.mxu0
    %v3497 = vadd.f32 %v3434, %v3496
    %v3498 = vpop.f32.mrf.mxu0
    %v3499 = vadd.f32 %v3436, %v3498
    %3500 = vmatmul.bf16.gmra.mxu0 %v2913
    %v3501 = vpop.f32.mrf.mxu0
    %v3502 = vadd.f32 %v3439, %v3501
    %v3503 = vpop.f32.mrf.mxu0
    %3504 = vdwg.mxu0
    %3505 = vmatpush.bf16.msra.mxu0 %v2627
    %3506 = vmatpush.bf16.msra.mxu0 %v2625
    %3507 = vmatpush.bf16.msra.mxu0 %v2623
    %3508 = vmatpush.bf16.msra.mxu0 %v2621
    %3509 = vmatpush.bf16.msra.mxu0 %v2619
    %3510 = vmatpush.bf16.msra.mxu0 %v2617
    %3511 = vmatpush.bf16.msra.mxu0 %v2615
    %3512 = vmatpush.bf16.msra.mxu0 %v2613
    %3513 = vmatmul.bf16.gmra.mxu0 %v2864
    %v3514 = vpop.f32.mrf.mxu0
    %v3515 = vadd.f32 %v3452, %v3514
    %v3516 = vpop.f32.mrf.mxu0
    %v3517 = vadd.f32 %v3454, %v3516
    %3518 = vmatmul.bf16.gmra.mxu0 %v2869
    %v3519 = vpop.f32.mrf.mxu0
    %v3520 = vadd.f32 %v3457, %v3519
    %v3521 = vpop.f32.mrf.mxu0
    %v3522 = vadd.f32 %v3459, %v3521
    %3523 = vmatmul.bf16.gmra.mxu0 %v2874
    %v3524 = vpop.f32.mrf.mxu0
    %v3525 = vadd.f32 %v3462, %v3524
    %v3526 = vpop.f32.mrf.mxu0
    %v3527 = vadd.f32 %v3464, %v3526
    %3528 = vmatmul.bf16.gmra.mxu0 %v2879
    %v3529 = vpop.f32.mrf.mxu0
    %v3530 = vadd.f32 %v3467, %v3529
    %v3531 = vpop.f32.mrf.mxu0
    %v3532 = vadd.f32 %v3469, %v3531
    %3533 = vmatmul.bf16.gmra.mxu0 %v2884
    %v3534 = vpop.f32.mrf.mxu0
    %v3535 = vadd.f32 %v3472, %v3534
    %v3536 = vpop.f32.mrf.mxu0
    %v3537 = vadd.f32 %v3474, %v3536
    %3538 = vmatmul.bf16.gmra.mxu0 %v2889
    %v3539 = vpop.f32.mrf.mxu0
    %v3540 = vadd.f32 %v3477, %v3539
    %v3541 = vpop.f32.mrf.mxu0
    %v3542 = vadd.f32 %v3479, %v3541
    %3543 = vmatmul.bf16.gmra.mxu0 %v2894
    %v3544 = vpop.f32.mrf.mxu0
    %v3545 = vadd.f32 %v3482, %v3544
    %v3546 = vpop.f32.mrf.mxu0
    %v3547 = vadd.f32 %v3484, %v3546
    %3548 = vmatmul.bf16.gmra.mxu0 %v2899
    %v3549 = vpop.f32.mrf.mxu0
    %v3550 = vadd.f32 %v3487, %v3549
    %v3551 = vpop.f32.mrf.mxu0
    %v3552 = vadd.f32 %v3489, %v3551
    %3553 = vmatmul.bf16.gmra.mxu0 %v2904
    %v3554 = vpop.f32.mrf.mxu0
    %v3555 = vadd.f32 %v3492, %v3554
    %v3556 = vpop.f32.mrf.mxu0
    %v3557 = vadd.f32 %v3494, %v3556
    %3558 = vmatmul.bf16.gmra.mxu0 %v2909
    %v3559 = vpop.f32.mrf.mxu0
    %v3560 = vadd.f32 %v3497, %v3559
    %v3561 = vpop.f32.mrf.mxu0
    %v3562 = vadd.f32 %v3499, %v3561
    %3563 = vmatmul.bf16.gmra.mxu0 %v2914
    %v3564 = vpop.f32.mrf.mxu0
    %v3565 = vadd.f32 %v3502, %v3564
    %v3566 = vpop.f32.mrf.mxu0
    %3567 = vdwg.mxu0
    %3568 = vmatpush.bf16.msra.mxu0 0
    %3569 = vmatpush.bf16.msra.mxu0 0
    %3570 = vmatpush.bf16.msra.mxu0 0
    %3571 = vmatpush.bf16.msra.mxu0 0
    %3572 = vmatpush.bf16.msra.mxu0 0
    %3573 = vmatpush.bf16.msra.mxu0 0
    %3574 = vmatpush.bf16.msra.mxu0 0
    %3575 = vmatpush.bf16.msra.mxu0 %v2999
    %3576 = vmatmul.bf16.gmra.mxu0 %v2962
    %v3577 = vpop.f32.mrf.mxu0
    %v3578 = vadd.f32 %v3515, %v3577
    %v3579 = vpop.f32.mrf.mxu0
    %v3580 = vadd.f32 %v3517, %v3579
    %3581 = vmatmul.bf16.gmra.mxu0 %v2965
    %v3582 = vpop.f32.mrf.mxu0
    %v3583 = vadd.f32 %v3520, %v3582
    %v3584 = vpop.f32.mrf.mxu0
    %v3585 = vadd.f32 %v3522, %v3584
    %3586 = vmatmul.bf16.gmra.mxu0 %v2968
    %v3587 = vpop.f32.mrf.mxu0
    %v3588 = vadd.f32 %v3525, %v3587
    %v3589 = vpop.f32.mrf.mxu0
    %v3590 = vadd.f32 %v3527, %v3589
    %3591 = vmatmul.bf16.gmra.mxu0 %v2971
    %v3592 = vpop.f32.mrf.mxu0
    %v3593 = vadd.f32 %v3530, %v3592
    %v3594 = vpop.f32.mrf.mxu0
    %v3595 = vadd.f32 %v3532, %v3594
    %3596 = vmatmul.bf16.gmra.mxu0 %v2974
    %v3597 = vpop.f32.mrf.mxu0
    %v3598 = vadd.f32 %v3535, %v3597
    %v3599 = vpop.f32.mrf.mxu0
    %v3600 = vadd.f32 %v3537, %v3599
    %3601 = vmatmul.bf16.gmra.mxu0 %v2977
    %v3602 = vpop.f32.mrf.mxu0
    %v3603 = vadd.f32 %v3540, %v3602
    %v3604 = vpop.f32.mrf.mxu0
    %v3605 = vadd.f32 %v3542, %v3604
    %3606 = vmatmul.bf16.gmra.mxu0 %v2980
    %v3607 = vpop.f32.mrf.mxu0
    %v3608 = vadd.f32 %v3545, %v3607
    %v3609 = vpop.f32.mrf.mxu0
    %v3610 = vadd.f32 %v3547, %v3609
    %3611 = vmatmul.bf16.gmra.mxu0 %v2983
    %v3612 = vpop.f32.mrf.mxu0
    %v3613 = vadd.f32 %v3550, %v3612
    %v3614 = vpop.f32.mrf.mxu0
    %v3615 = vadd.f32 %v3552, %v3614
    %3616 = vmatmul.bf16.gmra.mxu0 %v2986
    %v3617 = vpop.f32.mrf.mxu0
    %v3618 = vadd.f32 %v3555, %v3617
    %v3619 = vpop.f32.mrf.mxu0
    %v3620 = vadd.f32 %v3557, %v3619
    %3621 = vmatmul.bf16.gmra.mxu0 %v2989
    %v3622 = vpop.f32.mrf.mxu0
    %v3623 = vadd.f32 %v3560, %v3622
    %v3624 = vpop.f32.mrf.mxu0
    %v3625 = vadd.f32 %v3562, %v3624
    %3626 = vmatmul.bf16.gmra.mxu0 %v2992
    %v3627 = vpop.f32.mrf.mxu0
    %v3628 = vadd.f32 %v3565, %v3627
    %v3629 = vpop.f32.mrf.mxu0
    %3630 = vdwg.mxu0
    %vm3631 = vcmask 80896
    %v3632 = vsel %vm3631, %v3578, 0.0
    %v3633 = vadd.f32 %v3263, %v3632
    %3634 = vadd.xlane.f32.xlu0 %v3633
    %v3635 = vpop.xlane.xlu0 %3634
    %v3636 = vsel %vm3631, %v3580, 0.0
    %v3637 = vadd.f32 %v3265, %v3636
    %3638 = vadd.xlane.f32.xlu0 %v3637
    %v3639 = vpop.xlane.xlu0 %3638
    %v3640 = vsel %vm3631, %v3583, 0.0
    %v3641 = vadd.f32 %v3268, %v3640
    %3642 = vadd.xlane.f32.xlu0 %v3641
    %v3643 = vpop.xlane.xlu0 %3642
    %v3644 = vsel %vm3631, %v3585, 0.0
    %v3645 = vadd.f32 %v3270, %v3644
    %3646 = vadd.xlane.f32.xlu0 %v3645
    %v3647 = vpop.xlane.xlu0 %3646
    %v3648 = vsel %vm3631, %v3588, 0.0
    %v3649 = vadd.f32 %v3273, %v3648
    %3650 = vadd.xlane.f32.xlu0 %v3649
    %v3651 = vpop.xlane.xlu0 %3650
    %v3652 = vsel %vm3631, %v3590, 0.0
    %v3653 = vadd.f32 %v3275, %v3652
    %3654 = vadd.xlane.f32.xlu0 %v3653
    %v3655 = vpop.xlane.xlu0 %3654
    %v3656 = vsel %vm3631, %v3593, 0.0
    %v3657 = vadd.f32 %v3278, %v3656
    %3658 = vadd.xlane.f32.xlu0 %v3657
    %v3659 = vpop.xlane.xlu0 %3658
    %v3660 = vsel %vm3631, %v3595, 0.0
    %v3661 = vadd.f32 %v3280, %v3660
    %3662 = vadd.xlane.f32.xlu0 %v3661
    %v3663 = vpop.xlane.xlu0 %3662
    %v3664 = vsel %vm3631, %v3598, 0.0
    %v3665 = vadd.f32 %v3283, %v3664
    %3666 = vadd.xlane.f32.xlu0 %v3665
    %v3667 = vpop.xlane.xlu0 %3666
    %v3668 = vsel %vm3631, %v3600, 0.0
    %v3669 = vadd.f32 %v3285, %v3668
    %3670 = vadd.xlane.f32.xlu0 %v3669
    %v3671 = vpop.xlane.xlu0 %3670
    %v3672 = vsel %vm3631, %v3603, 0.0
    %v3673 = vadd.f32 %v3288, %v3672
    %3674 = vadd.xlane.f32.xlu0 %v3673
    %v3675 = vpop.xlane.xlu0 %3674
    %v3676 = vsel %vm3631, %v3605, 0.0
    %v3677 = vadd.f32 %v3290, %v3676
    %3678 = vadd.xlane.f32.xlu0 %v3677
    %v3679 = vpop.xlane.xlu0 %3678
    %v3680 = vsel %vm3631, %v3608, 0.0
    %v3681 = vadd.f32 %v3293, %v3680
    %3682 = vadd.xlane.f32.xlu0 %v3681
    %v3683 = vpop.xlane.xlu0 %3682
    %v3684 = vsel %vm3631, %v3610, 0.0
    %v3685 = vadd.f32 %v3295, %v3684
    %3686 = vadd.xlane.f32.xlu0 %v3685
    %v3687 = vpop.xlane.xlu0 %3686
    %v3688 = vsel %vm3631, %v3613, 0.0
    %v3689 = vadd.f32 %v3298, %v3688
    %3690 = vadd.xlane.f32.xlu0 %v3689
    %v3691 = vpop.xlane.xlu0 %3690
    %v3692 = vsel %vm3631, %v3615, 0.0
    %v3693 = vadd.f32 %v3300, %v3692
    %3694 = vadd.xlane.f32.xlu0 %v3693
    %v3695 = vpop.xlane.xlu0 %3694
    %v3696 = vsel %vm3631, %v3618, 0.0
    %v3697 = vadd.f32 %v3303, %v3696
    %3698 = vadd.xlane.f32.xlu0 %v3697
    %v3699 = vpop.xlane.xlu0 %3698
    %v3700 = vsel %vm3631, %v3620, 0.0
    %v3701 = vadd.f32 %v3305, %v3700
    %3702 = vadd.xlane.f32.xlu0 %v3701
    %v3703 = vpop.xlane.xlu0 %3702
    %v3704 = vsel %vm3631, %v3623, 0.0
    %v3705 = vadd.f32 %v3308, %v3704
    %3706 = vadd.xlane.f32.xlu0 %v3705
    %v3707 = vpop.xlane.xlu0 %3706
    %v3708 = vsel %vm3631, %v3625, 0.0
    %v3709 = vadd.f32 %v3310, %v3708
    %3710 = vadd.xlane.f32.xlu0 %v3709
    %v3711 = vpop.xlane.xlu0 %3710
    %v3712 = vsel %vm3631, %v3628, 0.0
    %v3713 = vadd.f32 %v3313, %v3712
    %3714 = vadd.xlane.f32.xlu0 %v3713
    %v3715 = vpop.xlane.xlu0 %3714
    %v3716 = vmul.f32 %v3263, %v3263
    %v3717 = vmul.f32 %v3578, %v3578
    %v3718 = vmul.f32 %v3265, %v3265
    %v3719 = vmul.f32 %v3580, %v3580
    %v3720 = vmul.f32 %v3268, %v3268
    %v3721 = vmul.f32 %v3583, %v3583
    %v3722 = vmul.f32 %v3270, %v3270
    %v3723 = vmul.f32 %v3585, %v3585
    %v3724 = vmul.f32 %v3273, %v3273
    %v3725 = vmul.f32 %v3588, %v3588
    %v3726 = vmul.f32 %v3275, %v3275
    %v3727 = vmul.f32 %v3590, %v3590
    %v3728 = vmul.f32 %v3278, %v3278
    %v3729 = vmul.f32 %v3593, %v3593
    %v3730 = vmul.f32 %v3280, %v3280
    %v3731 = vmul.f32 %v3595, %v3595
    %v3732 = vmul.f32 %v3283, %v3283
    %v3733 = vmul.f32 %v3598, %v3598
    %v3734 = vmul.f32 %v3285, %v3285
    %v3735 = vmul.f32 %v3600, %v3600
    %v3736 = vmul.f32 %v3288, %v3288
    %v3737 = vmul.f32 %v3603, %v3603
    %v3738 = vmul.f32 %v3290, %v3290
    %v3739 = vmul.f32 %v3605, %v3605
    %v3740 = vmul.f32 %v3293, %v3293
    %v3741 = vmul.f32 %v3608, %v3608
    %v3742 = vmul.f32 %v3295, %v3295
    %v3743 = vmul.f32 %v3610, %v3610
    %v3744 = vmul.f32 %v3298, %v3298
    %v3745 = vmul.f32 %v3613, %v3613
    %v3746 = vmul.f32 %v3300, %v3300
    %v3747 = vmul.f32 %v3615, %v3615
    %v3748 = vmul.f32 %v3303, %v3303
    %v3749 = vmul.f32 %v3618, %v3618
    %v3750 = vmul.f32 %v3305, %v3305
    %v3751 = vmul.f32 %v3620, %v3620
    %v3752 = vmul.f32 %v3308, %v3308
    %v3753 = vmul.f32 %v3623, %v3623
    %v3754 = vmul.f32 %v3310, %v3310
    %v3755 = vmul.f32 %v3625, %v3625
    %v3756 = vmul.f32 %v3313, %v3313
    %v3757 = vmul.f32 %v3628, %v3628
    %v3758 = vsel %vm3631, %v3717, 0.0
    %v3759 = vadd.f32 %v3716, %v3758
    %3760 = vadd.xlane.f32.xlu0 %v3759
    %v3761 = vpop.xlane.xlu0 %3760
    %v3762 = vsel %vm3631, %v3719, 0.0
    %v3763 = vadd.f32 %v3718, %v3762
    %3764 = vadd.xlane.f32.xlu0 %v3763
    %v3765 = vpop.xlane.xlu0 %3764
    %v3766 = vsel %vm3631, %v3721, 0.0
    %v3767 = vadd.f32 %v3720, %v3766
    %3768 = vadd.xlane.f32.xlu0 %v3767
    %v3769 = vpop.xlane.xlu0 %3768
    %v3770 = vsel %vm3631, %v3723, 0.0
    %v3771 = vadd.f32 %v3722, %v3770
    %3772 = vadd.xlane.f32.xlu0 %v3771
    %v3773 = vpop.xlane.xlu0 %3772
    %v3774 = vsel %vm3631, %v3725, 0.0
    %v3775 = vadd.f32 %v3724, %v3774
    %3776 = vadd.xlane.f32.xlu0 %v3775
    %v3777 = vpop.xlane.xlu0 %3776
    %v3778 = vsel %vm3631, %v3727, 0.0
    %v3779 = vadd.f32 %v3726, %v3778
    %3780 = vadd.xlane.f32.xlu0 %v3779
    %v3781 = vpop.xlane.xlu0 %3780
    %v3782 = vsel %vm3631, %v3729, 0.0
    %v3783 = vadd.f32 %v3728, %v3782
    %3784 = vadd.xlane.f32.xlu0 %v3783
    %v3785 = vpop.xlane.xlu0 %3784
    %v3786 = vsel %vm3631, %v3731, 0.0
    %v3787 = vadd.f32 %v3730, %v3786
    %3788 = vadd.xlane.f32.xlu0 %v3787
    %v3789 = vpop.xlane.xlu0 %3788
    %v3790 = vsel %vm3631, %v3733, 0.0
    %v3791 = vadd.f32 %v3732, %v3790
    %3792 = vadd.xlane.f32.xlu0 %v3791
    %v3793 = vpop.xlane.xlu0 %3792
    %v3794 = vsel %vm3631, %v3735, 0.0
    %v3795 = vadd.f32 %v3734, %v3794
    %3796 = vadd.xlane.f32.xlu0 %v3795
    %v3797 = vpop.xlane.xlu0 %3796
    %v3798 = vsel %vm3631, %v3737, 0.0
    %v3799 = vadd.f32 %v3736, %v3798
    %3800 = vadd.xlane.f32.xlu0 %v3799
    %v3801 = vpop.xlane.xlu0 %3800
    %v3802 = vsel %vm3631, %v3739, 0.0
    %v3803 = vadd.f32 %v3738, %v3802
    %3804 = vadd.xlane.f32.xlu0 %v3803
    %v3805 = vpop.xlane.xlu0 %3804
    %v3806 = vsel %vm3631, %v3741, 0.0
    %v3807 = vadd.f32 %v3740, %v3806
    %3808 = vadd.xlane.f32.xlu0 %v3807
    %v3809 = vpop.xlane.xlu0 %3808
    %v3810 = vsel %vm3631, %v3743, 0.0
    %v3811 = vadd.f32 %v3742, %v3810
    %3812 = vadd.xlane.f32.xlu0 %v3811
    %v3813 = vpop.xlane.xlu0 %3812
    %v3814 = vsel %vm3631, %v3745, 0.0
    %v3815 = vadd.f32 %v3744, %v3814
    %3816 = vadd.xlane.f32.xlu0 %v3815
    %v3817 = vpop.xlane.xlu0 %3816
    %v3818 = vsel %vm3631, %v3747, 0.0
    %v3819 = vadd.f32 %v3746, %v3818
    %3820 = vadd.xlane.f32.xlu0 %v3819
    %v3821 = vpop.xlane.xlu0 %3820
    %v3822 = vsel %vm3631, %v3749, 0.0
    %v3823 = vadd.f32 %v3748, %v3822
    %3824 = vadd.xlane.f32.xlu0 %v3823
    %v3825 = vpop.xlane.xlu0 %3824
    %v3826 = vsel %vm3631, %v3751, 0.0
    %v3827 = vadd.f32 %v3750, %v3826
    %3828 = vadd.xlane.f32.xlu0 %v3827
    %v3829 = vpop.xlane.xlu0 %3828
    %v3830 = vsel %vm3631, %v3753, 0.0
    %v3831 = vadd.f32 %v3752, %v3830
    %3832 = vadd.xlane.f32.xlu0 %v3831
    %v3833 = vpop.xlane.xlu0 %3832
    %v3834 = vsel %vm3631, %v3755, 0.0
    %v3835 = vadd.f32 %v3754, %v3834
    %3836 = vadd.xlane.f32.xlu0 %v3835
    %v3837 = vpop.xlane.xlu0 %3836
    %v3838 = vsel %vm3631, %v3757, 0.0
    %v3839 = vadd.f32 %v3756, %v3838
    %3840 = vadd.xlane.f32.xlu0 %v3839
    %v3841 = vpop.xlane.xlu0 %3840
    %v3842 = vld [vmem:[%s3] sm:$0x77]
    %3844 = vst [vmem:[#allocation1] ss:$2 sm:$0xff] %v3842
    %v3845 = vld.sshfl [vmem:[#allocation1] sm:$0xff pattern:$0x75316420]
    %v3846 = vld.sshfl [vmem:[#allocation1 + $0x8] sm:$0xff pattern:$0x75316420]
    %vm3848 = vcmask 326656
    %v3849 = vsel %vm3848, %v3846, 0
    %3851 = vmatpush.msra.mxu0 %v3695
    %3852 = vmatpush.msra.mxu0 %v3691
    %3853 = vmatpush.msra.mxu0 %v3687
    %3854 = vmatpush.msra.mxu0 %v3683
    %3855 = vmatpush.msra.mxu0 %v3679
    %3856 = vmatpush.msra.mxu0 %v3675
    %3857 = vmatpush.msra.mxu0 %v3671
    %3858 = vmatpush.msra.mxu0 %v3667
    %3859 = vmatpush.msra.mxu0 %v3663
    %3860 = vmatpush.msra.mxu0 %v3659
    %3861 = vmatpush.msra.mxu0 %v3655
    %3862 = vmatpush.msra.mxu0 %v3651
    %3863 = vmatpush.msra.mxu0 %v3647
    %3864 = vmatpush.msra.mxu0 %v3643
    %3865 = vmatpush.msra.mxu0 %v3639
    %3866 = vmatpush.msra.mxu0 %v3635
    %3867 = vmatmul.f32.gmra.mxu0 %v3845
    %v3868 = vpop.f32.mrf.mxu0
    %v3869 = vadd.f32 0.0, %v3868
    %3870 = vdwg.mxu0
    %3871 = vmatpush.msra.mxu0 0.0
    %3872 = vmatpush.msra.mxu0 0.0
    %3873 = vmatpush.msra.mxu0 0.0
    %3874 = vmatpush.msra.mxu0 0.0
    %3875 = vmatpush.msra.mxu0 0.0
    %3876 = vmatpush.msra.mxu0 0.0
    %3877 = vmatpush.msra.mxu0 0.0
    %3878 = vmatpush.msra.mxu0 0.0
    %3879 = vmatpush.msra.mxu0 0.0
    %3880 = vmatpush.msra.mxu0 0.0
    %3881 = vmatpush.msra.mxu0 0.0
    %3882 = vmatpush.msra.mxu0 %v3715
    %3883 = vmatpush.msra.mxu0 %v3711
    %3884 = vmatpush.msra.mxu0 %v3707
    %3885 = vmatpush.msra.mxu0 %v3703
    %3886 = vmatpush.msra.mxu0 %v3699
    %3887 = vmatmul.f32.gmra.mxu0 %v3849
    %v3888 = vpop.f32.mrf.mxu0
    %v3889 = vadd.f32 %v3869, %v3888
    %3890 = vdwg.mxu0
    %3891 = vst [vmem:[#allocation1] ss:$2 sm:$0xff] %v3842
    %v3892 = vld.sshfl [vmem:[#allocation1] sm:$0xff pattern:$0x75316420]
    %v3893 = vld.sshfl [vmem:[#allocation1 + $0x8] sm:$0xff pattern:$0x75316420]
    %v3895 = vsel %vm3848, %v3893, 0
    %3897 = vmatpush.msra.mxu0 %v3821
    %3898 = vmatpush.msra.mxu0 %v3817
    %3899 = vmatpush.msra.mxu0 %v3813
    %3900 = vmatpush.msra.mxu0 %v3809
    %3901 = vmatpush.msra.mxu0 %v3805
    %3902 = vmatpush.msra.mxu0 %v3801
    %3903 = vmatpush.msra.mxu0 %v3797
    %3904 = vmatpush.msra.mxu0 %v3793
    %3905 = vmatpush.msra.mxu0 %v3789
    %3906 = vmatpush.msra.mxu0 %v3785
    %3907 = vmatpush.msra.mxu0 %v3781
    %3908 = vmatpush.msra.mxu0 %v3777
    %3909 = vmatpush.msra.mxu0 %v3773
    %3910 = vmatpush.msra.mxu0 %v3769
    %3911 = vmatpush.msra.mxu0 %v3765
    %3912 = vmatpush.msra.mxu0 %v3761
    %3913 = vmatmul.f32.gmra.mxu0 %v3892
    %v3914 = vpop.f32.mrf.mxu0
    %v3915 = vadd.f32 0.0, %v3914
    %3916 = vdwg.mxu0
    %3917 = vmatpush.msra.mxu0 0.0
    %3918 = vmatpush.msra.mxu0 0.0
    %3919 = vmatpush.msra.mxu0 0.0
    %3920 = vmatpush.msra.mxu0 0.0
    %3921 = vmatpush.msra.mxu0 0.0
    %3922 = vmatpush.msra.mxu0 0.0
    %3923 = vmatpush.msra.mxu0 0.0
    %3924 = vmatpush.msra.mxu0 0.0
    %3925 = vmatpush.msra.mxu0 0.0
    %3926 = vmatpush.msra.mxu0 0.0
    %3927 = vmatpush.msra.mxu0 0.0
    %3928 = vmatpush.msra.mxu0 %v3841
    %3929 = vmatpush.msra.mxu0 %v3837
    %3930 = vmatpush.msra.mxu0 %v3833
    %3931 = vmatpush.msra.mxu0 %v3829
    %3932 = vmatpush.msra.mxu0 %v3825
    %3933 = vmatmul.f32.gmra.mxu0 %v3895
    %v3934 = vpop.f32.mrf.mxu0
    %v3935 = vadd.f32 %v3915, %v3934
    %3936 = vdwg.mxu0
    %v3937 = vmul.f32 %v3889, 0.00014788524
    %v3938 = vmul.f32 %v3935, 0.00014788524
    %v3939 = vmul.f32 %v3937, %v3937
    %v3940 = vsub.f32 %v3938, %v3939
    %v3941 = vmax.f32 %v3940, 0.0
    %v3942 = vadd.f32 %v3941, 1e-05
    %v3943 = vrsqrt.pop %v3942
    %v3944 = vmul.f32 %v3943, %v3942
    %v3945 = vmul.f32 %v3944, %v3943
    %v3946 = vmul.f32 0.5, %v3945
    %v3947 = vsub.f32 1.5, %v3946
    %v3948 = vmul.f32 %v3943, %v3947
    %vm3949 = vweird.f32 %v3942
    %vm3950 = vweird.f32 %v3943
    %vm3951 = vmor %vm3949, %vm3950
    %v3952 = vsel %vm3951, %v3943, %v3948
    %v3953 = vld [vmem:[%s4] sm:$0xff]
    %v3954 = vld [vmem:[%s4 + $0x8] sm:$0xff]
    %v3955 = vld [vmem:[%s4 + $0x10] sm:$0xff]
    %v3956 = vld [vmem:[%s4 + $0x18] sm:$0xff]
    %v3957 = vld [vmem:[%s4 + $0x20] sm:$0xff]
    %v3958 = vld [vmem:[%s4 + $0x28] sm:$0xff]
    %v3959 = vld [vmem:[%s4 + $0x30] sm:$0xff]
    %v3960 = vld [vmem:[%s4 + $0x38] sm:$0xff]
    %v3961 = vld [vmem:[%s4 + $0x40] sm:$0xff]
    %v3962 = vld [vmem:[%s4 + $0x48] sm:$0xff]
    %v3963 = vld [vmem:[%s4 + $0x50] sm:$0xff]
    %v3964 = vld [vmem:[%s4 + $0x58] sm:$0xff]
    %v3965 = vld [vmem:[%s4 + $0x60] sm:$0xff]
    %v3966 = vld [vmem:[%s4 + $0x68] sm:$0xff]
    %v3967 = vld [vmem:[%s4 + $0x70] sm:$0xff]
    %v3968 = vld [vmem:[%s4 + $0x78] sm:$0xff]
    %v3969 = vld [vmem:[%s4 + $0x80] sm:$0xff]
    %v3970 = vld [vmem:[%s4 + $0x88] sm:$0xff]
    %v3971 = vld [vmem:[%s4 + $0x90] sm:$0xff]
    %v3972 = vld [vmem:[%s4 + $0x98] sm:$0xff]
    %v3973 = vld [vmem:[%s4 + $0xa0] sm:$0xff]
    %vm3974 = vcmask 23552
    %v3976 = vsel %vm3974, %v3953, 0
    %v3979 = vsel %vm3974, %v3954, 0
    %v3982 = vsel %vm3974, %v3955, 0
    %v3985 = vsel %vm3974, %v3956, 0
    %v3988 = vsel %vm3974, %v3957, 0
    %v3991 = vsel %vm3974, %v3958, 0
    %v3994 = vsel %vm3974, %v3959, 0
    %v3997 = vsel %vm3974, %v3960, 0
    %v4000 = vsel %vm3974, %v3961, 0
    %v4003 = vsel %vm3974, %v3962, 0
    %v4006 = vsel %vm3974, %v3963, 0
    %v4009 = vsel %vm3974, %v3964, 0
    %v4012 = vsel %vm3974, %v3965, 0
    %v4015 = vsel %vm3974, %v3966, 0
    %v4018 = vsel %vm3974, %v3967, 0
    %v4021 = vsel %vm3974, %v3968, 0
    %v4024 = vsel %vm3974, %v3969, 0
    %v4027 = vsel %vm3974, %v3970, 0
    %v4030 = vsel %vm3974, %v3971, 0
    %v4033 = vsel %vm3974, %v3972, 0
    %v4036 = vsel %vm3974, %v3973, 0
    %vm4038 = vcmask 1042432
    %v4040 = vsel %vm4038, %v3952, 0
    %4042 = vmatpush.msra.mxu0 0.0
    %4043 = vmatpush.msra.mxu0 0.0
    %4044 = vmatpush.msra.mxu0 0.0
    %4045 = vmatpush.msra.mxu0 0.0
    %4046 = vmatpush.msra.mxu0 0.0
    %4047 = vmatpush.msra.mxu0 0.0
    %4048 = vmatpush.msra.mxu0 0.0
    %4049 = vmatpush.msra.mxu0 0.0
    %4050 = vmatpush.msra.mxu0 0.0
    %4051 = vmatpush.msra.mxu0 0.0
    %4052 = vmatpush.msra.mxu0 0.0
    %4053 = vmatpush.msra.mxu0 0.0
    %4054 = vmatpush.msra.mxu0 0.0
    %4055 = vmatpush.msra.mxu0 0.0
    %4056 = vmatpush.msra.mxu0 0.0
    %4057 = vmatpush.msra.mxu0 %v4040
    %4058 = vmatmul.f32.gmra.mxu0 %v3976
    %v4059 = vpop.f32.mrf.mxu0
    %v4060 = vadd.f32 0.0, %v4059
    %4061 = vmatmul.f32.gmra.mxu0 %v3979
    %v4062 = vpop.f32.mrf.mxu0
    %v4063 = vadd.f32 0.0, %v4062
    %4064 = vmatmul.f32.gmra.mxu0 %v3982
    %v4065 = vpop.f32.mrf.mxu0
    %v4066 = vadd.f32 0.0, %v4065
    %4067 = vmatmul.f32.gmra.mxu0 %v3985
    %v4068 = vpop.f32.mrf.mxu0
    %v4069 = vadd.f32 0.0, %v4068
    %4070 = vmatmul.f32.gmra.mxu0 %v3988
    %v4071 = vpop.f32.mrf.mxu0
    %v4072 = vadd.f32 0.0, %v4071
    %4073 = vmatmul.f32.gmra.mxu0 %v3991
    %v4074 = vpop.f32.mrf.mxu0
    %v4075 = vadd.f32 0.0, %v4074
    %4076 = vmatmul.f32.gmra.mxu0 %v3994
    %v4077 = vpop.f32.mrf.mxu0
    %v4078 = vadd.f32 0.0, %v4077
    %4079 = vmatmul.f32.gmra.mxu0 %v3997
    %v4080 = vpop.f32.mrf.mxu0
    %v4081 = vadd.f32 0.0, %v4080
    %4082 = vmatmul.f32.gmra.mxu0 %v4000
    %v4083 = vpop.f32.mrf.mxu0
    %v4084 = vadd.f32 0.0, %v4083
    %4085 = vmatmul.f32.gmra.mxu0 %v4003
    %v4086 = vpop.f32.mrf.mxu0
    %v4087 = vadd.f32 0.0, %v4086
    %4088 = vmatmul.f32.gmra.mxu0 %v4006
    %v4089 = vpop.f32.mrf.mxu0
    %v4090 = vadd.f32 0.0, %v4089
    %4091 = vmatmul.f32.gmra.mxu0 %v4009
    %v4092 = vpop.f32.mrf.mxu0
    %v4093 = vadd.f32 0.0, %v4092
    %4094 = vmatmul.f32.gmra.mxu0 %v4012
    %v4095 = vpop.f32.mrf.mxu0
    %v4096 = vadd.f32 0.0, %v4095
    %4097 = vmatmul.f32.gmra.mxu0 %v4015
    %v4098 = vpop.f32.mrf.mxu0
    %v4099 = vadd.f32 0.0, %v4098
    %4100 = vmatmul.f32.gmra.mxu0 %v4018
    %v4101 = vpop.f32.mrf.mxu0
    %v4102 = vadd.f32 0.0, %v4101
    %4103 = vmatmul.f32.gmra.mxu0 %v4021
    %v4104 = vpop.f32.mrf.mxu0
    %v4105 = vadd.f32 0.0, %v4104
    %4106 = vmatmul.f32.gmra.mxu0 %v4024
    %v4107 = vpop.f32.mrf.mxu0
    %v4108 = vadd.f32 0.0, %v4107
    %4109 = vmatmul.f32.gmra.mxu0 %v4027
    %v4110 = vpop.f32.mrf.mxu0
    %v4111 = vadd.f32 0.0, %v4110
    %4112 = vmatmul.f32.gmra.mxu0 %v4030
    %v4113 = vpop.f32.mrf.mxu0
    %v4114 = vadd.f32 0.0, %v4113
    %4115 = vmatmul.f32.gmra.mxu0 %v4033
    %v4116 = vpop.f32.mrf.mxu0
    %v4117 = vadd.f32 0.0, %v4116
    %4118 = vmatmul.f32.gmra.mxu0 %v4036
    %v4119 = vpop.f32.mrf.mxu0
    %v4120 = vadd.f32 0.0, %v4119
    %4121 = vdwg.mxu0
    %v4122 = vld [vmem:[%s5] sm:$0xff]
    %v4123 = vld [vmem:[%s5 + $0x8] sm:$0xff]
    %v4124 = vld [vmem:[%s5 + $0x10] sm:$0xff]
    %v4125 = vld [vmem:[%s5 + $0x18] sm:$0xff]
    %v4126 = vld [vmem:[%s5 + $0x20] sm:$0xff]
    %v4127 = vld [vmem:[%s5 + $0x28] sm:$0xff]
    %v4128 = vld [vmem:[%s5 + $0x30] sm:$0xff]
    %v4129 = vld [vmem:[%s5 + $0x38] sm:$0xff]
    %v4130 = vld [vmem:[%s5 + $0x40] sm:$0xff]
    %v4131 = vld [vmem:[%s5 + $0x48] sm:$0xff]
    %v4132 = vld [vmem:[%s5 + $0x50] sm:$0xff]
    %v4133 = vld [vmem:[%s5 + $0x58] sm:$0xff]
    %v4134 = vld [vmem:[%s5 + $0x60] sm:$0xff]
    %v4135 = vld [vmem:[%s5 + $0x68] sm:$0xff]
    %v4136 = vld [vmem:[%s5 + $0x70] sm:$0xff]
    %v4137 = vld [vmem:[%s5 + $0x78] sm:$0xff]
    %v4138 = vld [vmem:[%s5 + $0x80] sm:$0xff]
    %v4139 = vld [vmem:[%s5 + $0x88] sm:$0xff]
    %v4140 = vld [vmem:[%s5 + $0x90] sm:$0xff]
    %v4141 = vld [vmem:[%s5 + $0x98] sm:$0xff]
    %v4142 = vld [vmem:[%s5 + $0xa0] sm:$0xff]
    %v4143 = vmul.f32 %v3937, %v3952
    %v4145 = vsel %vm4038, %v4143, 0
    %4147 = vmatpush.msra.mxu0 0.0
    %4148 = vmatpush.msra.mxu0 0.0
    %4149 = vmatpush.msra.mxu0 0.0
    %4150 = vmatpush.msra.mxu0 0.0
    %4151 = vmatpush.msra.mxu0 0.0
    %4152 = vmatpush.msra.mxu0 0.0
    %4153 = vmatpush.msra.mxu0 0.0
    %4154 = vmatpush.msra.mxu0 0.0
    %4155 = vmatpush.msra.mxu0 0.0
    %4156 = vmatpush.msra.mxu0 0.0
    %4157 = vmatpush.msra.mxu0 0.0
    %4158 = vmatpush.msra.mxu0 0.0
    %4159 = vmatpush.msra.mxu0 0.0
    %4160 = vmatpush.msra.mxu0 0.0
    %4161 = vmatpush.msra.mxu0 0.0
    %4162 = vmatpush.msra.mxu0 %v4145
    %4163 = vmatmul.f32.gmra.mxu0 %v3976
    %v4164 = vpop.f32.mrf.mxu0
    %v4165 = vadd.f32 0.0, %v4164
    %4166 = vmatmul.f32.gmra.mxu0 %v3979
    %v4167 = vpop.f32.mrf.mxu0
    %v4168 = vadd.f32 0.0, %v4167
    %4169 = vmatmul.f32.gmra.mxu0 %v3982
    %v4170 = vpop.f32.mrf.mxu0
    %v4171 = vadd.f32 0.0, %v4170
    %4172 = vmatmul.f32.gmra.mxu0 %v3985
    %v4173 = vpop.f32.mrf.mxu0
    %v4174 = vadd.f32 0.0, %v4173
    %4175 = vmatmul.f32.gmra.mxu0 %v3988
    %v4176 = vpop.f32.mrf.mxu0
    %v4177 = vadd.f32 0.0, %v4176
    %4178 = vmatmul.f32.gmra.mxu0 %v3991
    %v4179 = vpop.f32.mrf.mxu0
    %v4180 = vadd.f32 0.0, %v4179
    %4181 = vmatmul.f32.gmra.mxu0 %v3994
    %v4182 = vpop.f32.mrf.mxu0
    %v4183 = vadd.f32 0.0, %v4182
    %4184 = vmatmul.f32.gmra.mxu0 %v3997
    %v4185 = vpop.f32.mrf.mxu0
    %v4186 = vadd.f32 0.0, %v4185
    %4187 = vmatmul.f32.gmra.mxu0 %v4000
    %v4188 = vpop.f32.mrf.mxu0
    %v4189 = vadd.f32 0.0, %v4188
    %4190 = vmatmul.f32.gmra.mxu0 %v4003
    %v4191 = vpop.f32.mrf.mxu0
    %v4192 = vadd.f32 0.0, %v4191
    %4193 = vmatmul.f32.gmra.mxu0 %v4006
    %v4194 = vpop.f32.mrf.mxu0
    %v4195 = vadd.f32 0.0, %v4194
    %4196 = vmatmul.f32.gmra.mxu0 %v4009
    %v4197 = vpop.f32.mrf.mxu0
    %v4198 = vadd.f32 0.0, %v4197
    %4199 = vmatmul.f32.gmra.mxu0 %v4012
    %v4200 = vpop.f32.mrf.mxu0
    %v4201 = vadd.f32 0.0, %v4200
    %4202 = vmatmul.f32.gmra.mxu0 %v4015
    %v4203 = vpop.f32.mrf.mxu0
    %v4204 = vadd.f32 0.0, %v4203
    %4205 = vmatmul.f32.gmra.mxu0 %v4018
    %v4206 = vpop.f32.mrf.mxu0
    %v4207 = vadd.f32 0.0, %v4206
    %4208 = vmatmul.f32.gmra.mxu0 %v4021
    %v4209 = vpop.f32.mrf.mxu0
    %v4210 = vadd.f32 0.0, %v4209
    %4211 = vmatmul.f32.gmra.mxu0 %v4024
    %v4212 = vpop.f32.mrf.mxu0
    %v4213 = vadd.f32 0.0, %v4212
    %4214 = vmatmul.f32.gmra.mxu0 %v4027
    %v4215 = vpop.f32.mrf.mxu0
    %v4216 = vadd.f32 0.0, %v4215
    %4217 = vmatmul.f32.gmra.mxu0 %v4030
    %v4218 = vpop.f32.mrf.mxu0
    %v4219 = vadd.f32 0.0, %v4218
    %4220 = vmatmul.f32.gmra.mxu0 %v4033
    %v4221 = vpop.f32.mrf.mxu0
    %v4222 = vadd.f32 0.0, %v4221
    %4223 = vmatmul.f32.gmra.mxu0 %v4036
    %v4224 = vpop.f32.mrf.mxu0
    %v4225 = vadd.f32 0.0, %v4224
    %4226 = vdwg.mxu0
    %v4227 = vsub.f32 %v4122, %v4165
    %v4228 = vsub.f32 %v4123, %v4168
    %v4229 = vsub.f32 %v4124, %v4171
    %v4230 = vsub.f32 %v4125, %v4174
    %v4231 = vsub.f32 %v4126, %v4177
    %v4232 = vsub.f32 %v4127, %v4180
    %v4233 = vsub.f32 %v4128, %v4183
    %v4234 = vsub.f32 %v4129, %v4186
    %v4235 = vsub.f32 %v4130, %v4189
    %v4236 = vsub.f32 %v4131, %v4192
    %v4237 = vsub.f32 %v4132, %v4195
    %v4238 = vsub.f32 %v4133, %v4198
    %v4239 = vsub.f32 %v4134, %v4201
    %v4240 = vsub.f32 %v4135, %v4204
    %v4241 = vsub.f32 %v4136, %v4207
    %v4242 = vsub.f32 %v4137, %v4210
    %v4243 = vsub.f32 %v4138, %v4213
    %v4244 = vsub.f32 %v4139, %v4216
    %v4245 = vsub.f32 %v4140, %v4219
    %v4246 = vsub.f32 %v4141, %v4222
    %v4247 = vsub.f32 %v4142, %v4225
    %4249 = vset.pattern.permute.xlu0 0
    %4250 = vperm.xlu0 %4249, %v4060
    %v4251 = vpop.permute.xlu0 %4250
    %4254 = vset.pattern.permute.xlu0 0
    %4255 = vperm.xlu0 %4254, %v4063
    %v4256 = vpop.permute.xlu0 %4255
    %4259 = vset.pattern.permute.xlu0 0
    %4260 = vperm.xlu0 %4259, %v4066
    %v4261 = vpop.permute.xlu0 %4260
    %4264 = vset.pattern.permute.xlu0 0
    %4265 = vperm.xlu0 %4264, %v4069
    %v4266 = vpop.permute.xlu0 %4265
    %4269 = vset.pattern.permute.xlu0 0
    %4270 = vperm.xlu0 %4269, %v4072
    %v4271 = vpop.permute.xlu0 %4270
    %4274 = vset.pattern.permute.xlu0 0
    %4275 = vperm.xlu0 %4274, %v4075
    %v4276 = vpop.permute.xlu0 %4275
    %4279 = vset.pattern.permute.xlu0 0
    %4280 = vperm.xlu0 %4279, %v4078
    %v4281 = vpop.permute.xlu0 %4280
    %4284 = vset.pattern.permute.xlu0 0
    %4285 = vperm.xlu0 %4284, %v4081
    %v4286 = vpop.permute.xlu0 %4285
    %4289 = vset.pattern.permute.xlu0 0
    %4290 = vperm.xlu0 %4289, %v4084
    %v4291 = vpop.permute.xlu0 %4290
    %4294 = vset.pattern.permute.xlu0 0
    %4295 = vperm.xlu0 %4294, %v4087
    %v4296 = vpop.permute.xlu0 %4295
    %4299 = vset.pattern.permute.xlu0 0
    %4300 = vperm.xlu0 %4299, %v4090
    %v4301 = vpop.permute.xlu0 %4300
    %4304 = vset.pattern.permute.xlu0 0
    %4305 = vperm.xlu0 %4304, %v4093
    %v4306 = vpop.permute.xlu0 %4305
    %4309 = vset.pattern.permute.xlu0 0
    %4310 = vperm.xlu0 %4309, %v4096
    %v4311 = vpop.permute.xlu0 %4310
    %4314 = vset.pattern.permute.xlu0 0
    %4315 = vperm.xlu0 %4314, %v4099
    %v4316 = vpop.permute.xlu0 %4315
    %4319 = vset.pattern.permute.xlu0 0
    %4320 = vperm.xlu0 %4319, %v4102
    %v4321 = vpop.permute.xlu0 %4320
    %4324 = vset.pattern.permute.xlu0 0
    %4325 = vperm.xlu0 %4324, %v4105
    %v4326 = vpop.permute.xlu0 %4325
    %4329 = vset.pattern.permute.xlu0 0
    %4330 = vperm.xlu0 %4329, %v4108
    %v4331 = vpop.permute.xlu0 %4330
    %4334 = vset.pattern.permute.xlu0 0
    %4335 = vperm.xlu0 %4334, %v4111
    %v4336 = vpop.permute.xlu0 %4335
    %4339 = vset.pattern.permute.xlu0 0
    %4340 = vperm.xlu0 %4339, %v4114
    %v4341 = vpop.permute.xlu0 %4340
    %4344 = vset.pattern.permute.xlu0 0
    %4345 = vperm.xlu0 %4344, %v4117
    %v4346 = vpop.permute.xlu0 %4345
    %4349 = vset.pattern.permute.xlu0 0
    %4350 = vperm.xlu0 %4349, %v4120
    %v4351 = vpop.permute.xlu0 %4350
    %v4353 = vmul.f32 %v3263, %v4251
    %v4354 = vmul.f32 %v3578, %v4251
    %v4355 = vmul.f32 %v3265, %v4256
    %v4356 = vmul.f32 %v3580, %v4256
    %v4357 = vmul.f32 %v3268, %v4261
    %v4358 = vmul.f32 %v3583, %v4261
    %v4359 = vmul.f32 %v3270, %v4266
    %v4360 = vmul.f32 %v3585, %v4266
    %v4361 = vmul.f32 %v3273, %v4271
    %v4362 = vmul.f32 %v3588, %v4271
    %v4363 = vmul.f32 %v3275, %v4276
    %v4364 = vmul.f32 %v3590, %v4276
    %v4365 = vmul.f32 %v3278, %v4281
    %v4366 = vmul.f32 %v3593, %v4281
    %v4367 = vmul.f32 %v3280, %v4286
    %v4368 = vmul.f32 %v3595, %v4286
    %v4369 = vmul.f32 %v3283, %v4291
    %v4370 = vmul.f32 %v3598, %v4291
    %v4371 = vmul.f32 %v3285, %v4296
    %v4372 = vmul.f32 %v3600, %v4296
    %v4373 = vmul.f32 %v3288, %v4301
    %v4374 = vmul.f32 %v3603, %v4301
    %v4375 = vmul.f32 %v3290, %v4306
    %v4376 = vmul.f32 %v3605, %v4306
    %v4377 = vmul.f32 %v3293, %v4311
    %v4378 = vmul.f32 %v3608, %v4311
    %v4379 = vmul.f32 %v3295, %v4316
    %v4380 = vmul.f32 %v3610, %v4316
    %v4381 = vmul.f32 %v3298, %v4321
    %v4382 = vmul.f32 %v3613, %v4321
    %v4383 = vmul.f32 %v3300, %v4326
    %v4384 = vmul.f32 %v3615, %v4326
    %v4385 = vmul.f32 %v3303, %v4331
    %v4386 = vmul.f32 %v3618, %v4331
    %v4387 = vmul.f32 %v3305, %v4336
    %v4388 = vmul.f32 %v3620, %v4336
    %v4389 = vmul.f32 %v3308, %v4341
    %v4390 = vmul.f32 %v3623, %v4341
    %v4391 = vmul.f32 %v3310, %v4346
    %v4392 = vmul.f32 %v3625, %v4346
    %v4393 = vmul.f32 %v3313, %v4351
    %v4394 = vmul.f32 %v3628, %v4351
    %4396 = vset.pattern.permute.xlu0 0
    %4397 = vperm.xlu0 %4396, %v4227
    %v4398 = vpop.permute.xlu0 %4397
    %4401 = vset.pattern.permute.xlu0 0
    %4402 = vperm.xlu0 %4401, %v4228
    %v4403 = vpop.permute.xlu0 %4402
    %4406 = vset.pattern.permute.xlu0 0
    %4407 = vperm.xlu0 %4406, %v4229
    %v4408 = vpop.permute.xlu0 %4407
    %4411 = vset.pattern.permute.xlu0 0
    %4412 = vperm.xlu0 %4411, %v4230
    %v4413 = vpop.permute.xlu0 %4412
    %4416 = vset.pattern.permute.xlu0 0
    %4417 = vperm.xlu0 %4416, %v4231
    %v4418 = vpop.permute.xlu0 %4417
    %4421 = vset.pattern.permute.xlu0 0
    %4422 = vperm.xlu0 %4421, %v4232
    %v4423 = vpop.permute.xlu0 %4422
    %4426 = vset.pattern.permute.xlu0 0
    %4427 = vperm.xlu0 %4426, %v4233
    %v4428 = vpop.permute.xlu0 %4427
    %4431 = vset.pattern.permute.xlu0 0
    %4432 = vperm.xlu0 %4431, %v4234
    %v4433 = vpop.permute.xlu0 %4432
    %4436 = vset.pattern.permute.xlu0 0
    %4437 = vperm.xlu0 %4436, %v4235
    %v4438 = vpop.permute.xlu0 %4437
    %4441 = vset.pattern.permute.xlu0 0
    %4442 = vperm.xlu0 %4441, %v4236
    %v4443 = vpop.permute.xlu0 %4442
    %4446 = vset.pattern.permute.xlu0 0
    %4447 = vperm.xlu0 %4446, %v4237
    %v4448 = vpop.permute.xlu0 %4447
    %4451 = vset.pattern.permute.xlu0 0
    %4452 = vperm.xlu0 %4451, %v4238
    %v4453 = vpop.permute.xlu0 %4452
    %4456 = vset.pattern.permute.xlu0 0
    %4457 = vperm.xlu0 %4456, %v4239
    %v4458 = vpop.permute.xlu0 %4457
    %4461 = vset.pattern.permute.xlu0 0
    %4462 = vperm.xlu0 %4461, %v4240
    %v4463 = vpop.permute.xlu0 %4462
    %4466 = vset.pattern.permute.xlu0 0
    %4467 = vperm.xlu0 %4466, %v4241
    %v4468 = vpop.permute.xlu0 %4467
    %4471 = vset.pattern.permute.xlu0 0
    %4472 = vperm.xlu0 %4471, %v4242
    %v4473 = vpop.permute.xlu0 %4472
    %4476 = vset.pattern.permute.xlu0 0
    %4477 = vperm.xlu0 %4476, %v4243
    %v4478 = vpop.permute.xlu0 %4477
    %4481 = vset.pattern.permute.xlu0 0
    %4482 = vperm.xlu0 %4481, %v4244
    %v4483 = vpop.permute.xlu0 %4482
    %4486 = vset.pattern.permute.xlu0 0
    %4487 = vperm.xlu0 %4486, %v4245
    %v4488 = vpop.permute.xlu0 %4487
    %4491 = vset.pattern.permute.xlu0 0
    %4492 = vperm.xlu0 %4491, %v4246
    %v4493 = vpop.permute.xlu0 %4492
    %4496 = vset.pattern.permute.xlu0 0
    %4497 = vperm.xlu0 %4496, %v4247
    %v4498 = vpop.permute.xlu0 %4497
    %v4500 = vadd.f32 %v4353, %v4398
    %v4501 = vadd.f32 %v4354, %v4398
    %v4502 = vadd.f32 %v4355, %v4403
    %v4503 = vadd.f32 %v4356, %v4403
    %v4504 = vadd.f32 %v4357, %v4408
    %v4505 = vadd.f32 %v4358, %v4408
    %v4506 = vadd.f32 %v4359, %v4413
    %v4507 = vadd.f32 %v4360, %v4413
    %v4508 = vadd.f32 %v4361, %v4418
    %v4509 = vadd.f32 %v4362, %v4418
    %v4510 = vadd.f32 %v4363, %v4423
    %v4511 = vadd.f32 %v4364, %v4423
    %v4512 = vadd.f32 %v4365, %v4428
    %v4513 = vadd.f32 %v4366, %v4428
    %v4514 = vadd.f32 %v4367, %v4433
    %v4515 = vadd.f32 %v4368, %v4433
    %v4516 = vadd.f32 %v4369, %v4438
    %v4517 = vadd.f32 %v4370, %v4438
    %v4518 = vadd.f32 %v4371, %v4443
    %v4519 = vadd.f32 %v4372, %v4443
    %v4520 = vadd.f32 %v4373, %v4448
    %v4521 = vadd.f32 %v4374, %v4448
    %v4522 = vadd.f32 %v4375, %v4453
    %v4523 = vadd.f32 %v4376, %v4453
    %v4524 = vadd.f32 %v4377, %v4458
    %v4525 = vadd.f32 %v4378, %v4458
    %v4526 = vadd.f32 %v4379, %v4463
    %v4527 = vadd.f32 %v4380, %v4463
    %v4528 = vadd.f32 %v4381, %v4468
    %v4529 = vadd.f32 %v4382, %v4468
    %v4530 = vadd.f32 %v4383, %v4473
    %v4531 = vadd.f32 %v4384, %v4473
    %v4532 = vadd.f32 %v4385, %v4478
    %v4533 = vadd.f32 %v4386, %v4478
    %v4534 = vadd.f32 %v4387, %v4483
    %v4535 = vadd.f32 %v4388, %v4483
    %v4536 = vadd.f32 %v4389, %v4488
    %v4537 = vadd.f32 %v4390, %v4488
    %v4538 = vadd.f32 %v4391, %v4493
    %v4539 = vadd.f32 %v4392, %v4493
    %v4540 = vadd.f32 %v4393, %v4498
    %v4541 = vadd.f32 %v4394, %v4498
    %v4542 = vmax.f32 %v4500, 0.0
    %v4543 = vmax.f32 %v4501, 0.0
    %v4544 = vmax.f32 %v4502, 0.0
    %v4545 = vmax.f32 %v4503, 0.0
    %v4546 = vmax.f32 %v4504, 0.0
    %v4547 = vmax.f32 %v4505, 0.0
    %v4548 = vmax.f32 %v4506, 0.0
    %v4549 = vmax.f32 %v4507, 0.0
    %v4550 = vmax.f32 %v4508, 0.0
    %v4551 = vmax.f32 %v4509, 0.0
    %v4552 = vmax.f32 %v4510, 0.0
    %v4553 = vmax.f32 %v4511, 0.0
    %v4554 = vmax.f32 %v4512, 0.0
    %v4555 = vmax.f32 %v4513, 0.0
    %v4556 = vmax.f32 %v4514, 0.0
    %v4557 = vmax.f32 %v4515, 0.0
    %v4558 = vmax.f32 %v4516, 0.0
    %v4559 = vmax.f32 %v4517, 0.0
    %v4560 = vmax.f32 %v4518, 0.0
    %v4561 = vmax.f32 %v4519, 0.0
    %v4562 = vmax.f32 %v4520, 0.0
    %v4563 = vmax.f32 %v4521, 0.0
    %v4564 = vmax.f32 %v4522, 0.0
    %v4565 = vmax.f32 %v4523, 0.0
    %v4566 = vmax.f32 %v4524, 0.0
    %v4567 = vmax.f32 %v4525, 0.0
    %v4568 = vmax.f32 %v4526, 0.0
    %v4569 = vmax.f32 %v4527, 0.0
    %v4570 = vmax.f32 %v4528, 0.0
    %v4571 = vmax.f32 %v4529, 0.0
    %v4572 = vmax.f32 %v4530, 0.0
    %v4573 = vmax.f32 %v4531, 0.0
    %v4574 = vmax.f32 %v4532, 0.0
    %v4575 = vmax.f32 %v4533, 0.0
    %v4576 = vmax.f32 %v4534, 0.0
    %v4577 = vmax.f32 %v4535, 0.0
    %v4578 = vmax.f32 %v4536, 0.0
    %v4579 = vmax.f32 %v4537, 0.0
    %v4580 = vmax.f32 %v4538, 0.0
    %v4581 = vmax.f32 %v4539, 0.0
    %v4582 = vmax.f32 %v4540, 0.0
    %v4583 = vmax.f32 %v4541, 0.0
    %v4584 = vpack.c.bf16 %v4544, %v4542
    %v4585 = vpack.c.bf16 %v4545, %v4543
    %v4586 = vpack.c.bf16 %v4548, %v4546
    %v4587 = vpack.c.bf16 %v4549, %v4547
    %v4588 = vpack.c.bf16 %v4552, %v4550
    %v4589 = vpack.c.bf16 %v4553, %v4551
    %v4590 = vpack.c.bf16 %v4556, %v4554
    %v4591 = vpack.c.bf16 %v4557, %v4555
    %v4592 = vpack.c.bf16 %v4560, %v4558
    %v4593 = vpack.c.bf16 %v4561, %v4559
    %v4594 = vpack.c.bf16 %v4564, %v4562
    %v4595 = vpack.c.bf16 %v4565, %v4563
    %v4596 = vpack.c.bf16 %v4568, %v4566
    %v4597 = vpack.c.bf16 %v4569, %v4567
    %v4598 = vpack.c.bf16 %v4572, %v4570
    %v4599 = vpack.c.bf16 %v4573, %v4571
    %v4600 = vpack.c.bf16 %v4576, %v4574
    %v4601 = vpack.c.bf16 %v4577, %v4575
    %v4602 = vpack.c.bf16 %v4580, %v4578
    %v4603 = vpack.c.bf16 %v4581, %v4579
    %v4604 = vpack.c.bf16 %v4582, %v4582
    %v4605 = vpack.c.bf16 %v4583, %v4583
    %v4606 = vld [vmem:[%s7] sm:$0xf]
    %v4607 = vld [vmem:[%s7 + $0x4] sm:$0xf]
    %v4608 = vld [vmem:[%s7 + $0x8] sm:$0xf]
    %v4609 = vld [vmem:[%s7 + $0xc] sm:$0xf]
    %v4610 = vld [vmem:[%s7 + $0x10] sm:$0xf]
    %v4611 = vld [vmem:[%s7 + $0x14] sm:$0xf]
    %v4612 = vld [vmem:[%s7 + $0x18] sm:$0xf]
    %v4613 = vld [vmem:[%s7 + $0x1c] sm:$0xf]
    %v4614 = vld [vmem:[%s7 + $0x20] sm:$0xf]
    %v4615 = vld [vmem:[%s7 + $0x24] sm:$0xf]
    %v4616 = vld [vmem:[%s7 + $0x28] sm:$0xf]
    %v4617 = vld [vmem:[%s7 + $0x2c] sm:$0xf]
    %v4618 = vld [vmem:[%s7 + $0x30] sm:$0xf]
    %v4619 = vld [vmem:[%s7 + $0x34] sm:$0xf]
    %v4620 = vld [vmem:[%s7 + $0x38] sm:$0xf]
    %v4621 = vld [vmem:[%s7 + $0x3c] sm:$0xf]
    %v4622 = vld [vmem:[%s7 + $0x40] sm:$0xf]
    %v4623 = vld [vmem:[%s7 + $0x44] sm:$0x1]
    %v4642 = vunpack.c.l.b16 %v4606
    %v4643 = vunpack.c.l.b16 %v4607
    %v4644 = vunpack.c.l.b16 %v4608
    %v4645 = vunpack.c.l.b16 %v4609
    %v4646 = vunpack.c.l.b16 %v4610
    %v4647 = vunpack.c.l.b16 %v4611
    %v4648 = vunpack.c.l.b16 %v4612
    %v4649 = vunpack.c.l.b16 %v4613
    %v4650 = vunpack.c.l.b16 %v4614
    %v4651 = vunpack.c.l.b16 %v4615
    %v4652 = vunpack.c.l.b16 %v4616
    %v4653 = vunpack.c.l.b16 %v4617
    %v4654 = vunpack.c.l.b16 %v4618
    %v4655 = vunpack.c.l.b16 %v4619
    %v4656 = vunpack.c.l.b16 %v4620
    %v4657 = vunpack.c.l.b16 %v4621
    %v4658 = vunpack.c.l.b16 %v4622
    %v4659 = vunpack.c.l.b16 %v4623
    %v4660 = vpack.c.b16 %v4643, %v4642
    %v4661 = vpack.c.b16 %v4645, %v4644
    %v4662 = vpack.c.b16 %v4647, %v4646
    %v4663 = vpack.c.b16 %v4649, %v4648
    %v4664 = vpack.c.b16 %v4651, %v4650
    %v4665 = vpack.c.b16 %v4653, %v4652
    %v4666 = vpack.c.b16 %v4655, %v4654
    %v4667 = vpack.c.b16 %v4657, %v4656
    %v4668 = vpack.c.b16 %v4659, %v4658
    %v4678 = vsel %vm3631, %v4585, 0
    %v4681 = vsel %vm3631, %v4587, 0
    %v4684 = vsel %vm3631, %v4589, 0
    %v4687 = vsel %vm3631, %v4591, 0
    %v4690 = vsel %vm3631, %v4593, 0
    %v4693 = vsel %vm3631, %v4595, 0
    %v4696 = vsel %vm3631, %v4597, 0
    %v4699 = vsel %vm3631, %v4599, 0
    %v4702 = vsel %vm3631, %v4601, 0
    %v4705 = vsel %vm3631, %v4603, 0
    %v4708 = vsel %vm3631, %v4605, 0
    %v4711 = vsel %vm383, %v4668, 0
    %4713 = vmatpush.bf16.msra.mxu0 %v4667
    %4714 = vmatpush.bf16.msra.mxu0 %v4666
    %4715 = vmatpush.bf16.msra.mxu0 %v4665
    %4716 = vmatpush.bf16.msra.mxu0 %v4664
    %4717 = vmatpush.bf16.msra.mxu0 %v4663
    %4718 = vmatpush.bf16.msra.mxu0 %v4662
    %4719 = vmatpush.bf16.msra.mxu0 %v4661
    %4720 = vmatpush.bf16.msra.mxu0 %v4660
    %4721 = vmatmul.bf16.gmra.mxu0 %v4584
    %v4722 = vpop.f32.mrf.mxu0
    %v4723 = vadd.f32 0.0, %v4722
    %v4724 = vpop.f32.mrf.mxu0
    %v4725 = vadd.f32 0.0, %v4724
    %4726 = vmatmul.bf16.gmra.mxu0 %v4586
    %v4727 = vpop.f32.mrf.mxu0
    %v4728 = vadd.f32 0.0, %v4727
    %v4729 = vpop.f32.mrf.mxu0
    %v4730 = vadd.f32 0.0, %v4729
    %4731 = vmatmul.bf16.gmra.mxu0 %v4588
    %v4732 = vpop.f32.mrf.mxu0
    %v4733 = vadd.f32 0.0, %v4732
    %v4734 = vpop.f32.mrf.mxu0
    %v4735 = vadd.f32 0.0, %v4734
    %4736 = vmatmul.bf16.gmra.mxu0 %v4590
    %v4737 = vpop.f32.mrf.mxu0
    %v4738 = vadd.f32 0.0, %v4737
    %v4739 = vpop.f32.mrf.mxu0
    %v4740 = vadd.f32 0.0, %v4739
    %4741 = vmatmul.bf16.gmra.mxu0 %v4592
    %v4742 = vpop.f32.mrf.mxu0
    %v4743 = vadd.f32 0.0, %v4742
    %v4744 = vpop.f32.mrf.mxu0
    %v4745 = vadd.f32 0.0, %v4744
    %4746 = vmatmul.bf16.gmra.mxu0 %v4594
    %v4747 = vpop.f32.mrf.mxu0
    %v4748 = vadd.f32 0.0, %v4747
    %v4749 = vpop.f32.mrf.mxu0
    %v4750 = vadd.f32 0.0, %v4749
    %4751 = vmatmul.bf16.gmra.mxu0 %v4596
    %v4752 = vpop.f32.mrf.mxu0
    %v4753 = vadd.f32 0.0, %v4752
    %v4754 = vpop.f32.mrf.mxu0
    %v4755 = vadd.f32 0.0, %v4754
    %4756 = vmatmul.bf16.gmra.mxu0 %v4598
    %v4757 = vpop.f32.mrf.mxu0
    %v4758 = vadd.f32 0.0, %v4757
    %v4759 = vpop.f32.mrf.mxu0
    %v4760 = vadd.f32 0.0, %v4759
    %4761 = vmatmul.bf16.gmra.mxu0 %v4600
    %v4762 = vpop.f32.mrf.mxu0
    %v4763 = vadd.f32 0.0, %v4762
    %v4764 = vpop.f32.mrf.mxu0
    %v4765 = vadd.f32 0.0, %v4764
    %4766 = vmatmul.bf16.gmra.mxu0 %v4602
    %v4767 = vpop.f32.mrf.mxu0
    %v4768 = vadd.f32 0.0, %v4767
    %v4769 = vpop.f32.mrf.mxu0
    %v4770 = vadd.f32 0.0, %v4769
    %4771 = vmatmul.bf16.gmra.mxu0 %v4604
    %v4772 = vpop.f32.mrf.mxu0
    %v4773 = vadd.f32 0.0, %v4772
    %v4774 = vpop.f32.mrf.mxu0
    %4775 = vdwg.mxu0
    %4776 = vmatpush.bf16.msra.mxu0 0
    %4777 = vmatpush.bf16.msra.mxu0 0
    %4778 = vmatpush.bf16.msra.mxu0 0
    %4779 = vmatpush.bf16.msra.mxu0 0
    %4780 = vmatpush.bf16.msra.mxu0 0
    %4781 = vmatpush.bf16.msra.mxu0 0
    %4782 = vmatpush.bf16.msra.mxu0 0
    %4783 = vmatpush.bf16.msra.mxu0 %v4711
    %4784 = vmatmul.bf16.gmra.mxu0 %v4678
    %v4785 = vpop.f32.mrf.mxu0
    %v4786 = vadd.f32 %v4723, %v4785
    %v4787 = vpop.f32.mrf.mxu0
    %v4788 = vadd.f32 %v4725, %v4787
    %4789 = vmatmul.bf16.gmra.mxu0 %v4681
    %v4790 = vpop.f32.mrf.mxu0
    %v4791 = vadd.f32 %v4728, %v4790
    %v4792 = vpop.f32.mrf.mxu0
    %v4793 = vadd.f32 %v4730, %v4792
    %4794 = vmatmul.bf16.gmra.mxu0 %v4684
    %v4795 = vpop.f32.mrf.mxu0
    %v4796 = vadd.f32 %v4733, %v4795
    %v4797 = vpop.f32.mrf.mxu0
    %v4798 = vadd.f32 %v4735, %v4797
    %4799 = vmatmul.bf16.gmra.mxu0 %v4687
    %v4800 = vpop.f32.mrf.mxu0
    %v4801 = vadd.f32 %v4738, %v4800
    %v4802 = vpop.f32.mrf.mxu0
    %v4803 = vadd.f32 %v4740, %v4802
    %4804 = vmatmul.bf16.gmra.mxu0 %v4690
    %v4805 = vpop.f32.mrf.mxu0
    %v4806 = vadd.f32 %v4743, %v4805
    %v4807 = vpop.f32.mrf.mxu0
    %v4808 = vadd.f32 %v4745, %v4807
    %4809 = vmatmul.bf16.gmra.mxu0 %v4693
    %v4810 = vpop.f32.mrf.mxu0
    %v4811 = vadd.f32 %v4748, %v4810
    %v4812 = vpop.f32.mrf.mxu0
    %v4813 = vadd.f32 %v4750, %v4812
    %4814 = vmatmul.bf16.gmra.mxu0 %v4696
    %v4815 = vpop.f32.mrf.mxu0
    %v4816 = vadd.f32 %v4753, %v4815
    %v4817 = vpop.f32.mrf.mxu0
    %v4818 = vadd.f32 %v4755, %v4817
    %4819 = vmatmul.bf16.gmra.mxu0 %v4699
    %v4820 = vpop.f32.mrf.mxu0
    %v4821 = vadd.f32 %v4758, %v4820
    %v4822 = vpop.f32.mrf.mxu0
    %v4823 = vadd.f32 %v4760, %v4822
    %4824 = vmatmul.bf16.gmra.mxu0 %v4702
    %v4825 = vpop.f32.mrf.mxu0
    %v4826 = vadd.f32 %v4763, %v4825
    %v4827 = vpop.f32.mrf.mxu0
    %v4828 = vadd.f32 %v4765, %v4827
    %4829 = vmatmul.bf16.gmra.mxu0 %v4705
    %v4830 = vpop.f32.mrf.mxu0
    %v4831 = vadd.f32 %v4768, %v4830
    %v4832 = vpop.f32.mrf.mxu0
    %v4833 = vadd.f32 %v4770, %v4832
    %4834 = vmatmul.bf16.gmra.mxu0 %v4708
    %v4835 = vpop.f32.mrf.mxu0
    %v4836 = vadd.f32 %v4773, %v4835
    %v4837 = vpop.f32.mrf.mxu0
    %4838 = vdwg.mxu0
    %s4839 = scalar_lea.vmem %s7, 72
    %v4840 = vld [vmem:[%s4839] sm:$0xf]
    %v4841 = vld [vmem:[%s4839 + $0x4] sm:$0xf]
    %v4842 = vld [vmem:[%s4839 + $0x8] sm:$0xf]
    %v4843 = vld [vmem:[%s4839 + $0xc] sm:$0xf]
    %v4844 = vld [vmem:[%s4839 + $0x10] sm:$0xf]
    %v4845 = vld [vmem:[%s4839 + $0x14] sm:$0xf]
    %v4846 = vld [vmem:[%s4839 + $0x18] sm:$0xf]
    %v4847 = vld [vmem:[%s4839 + $0x1c] sm:$0xf]
    %v4848 = vld [vmem:[%s4839 + $0x20] sm:$0xf]
    %v4849 = vld [vmem:[%s4839 + $0x24] sm:$0xf]
    %v4850 = vld [vmem:[%s4839 + $0x28] sm:$0xf]
    %v4851 = vld [vmem:[%s4839 + $0x2c] sm:$0xf]
    %v4852 = vld [vmem:[%s4839 + $0x30] sm:$0xf]
    %v4853 = vld [vmem:[%s4839 + $0x34] sm:$0xf]
    %v4854 = vld [vmem:[%s4839 + $0x38] sm:$0xf]
    %v4855 = vld [vmem:[%s4839 + $0x3c] sm:$0xf]
    %v4856 = vld [vmem:[%s4839 + $0x40] sm:$0xf]
    %v4857 = vld [vmem:[%s4839 + $0x44] sm:$0x1]
    %v4876 = vunpack.c.l.b16 %v4840
    %v4877 = vunpack.c.l.b16 %v4841
    %v4878 = vunpack.c.l.b16 %v4842
    %v4879 = vunpack.c.l.b16 %v4843
    %v4880 = vunpack.c.l.b16 %v4844
    %v4881 = vunpack.c.l.b16 %v4845
    %v4882 = vunpack.c.l.b16 %v4846
    %v4883 = vunpack.c.l.b16 %v4847
    %v4884 = vunpack.c.l.b16 %v4848
    %v4885 = vunpack.c.l.b16 %v4849
    %v4886 = vunpack.c.l.b16 %v4850
    %v4887 = vunpack.c.l.b16 %v4851
    %v4888 = vunpack.c.l.b16 %v4852
    %v4889 = vunpack.c.l.b16 %v4853
    %v4890 = vunpack.c.l.b16 %v4854
    %v4891 = vunpack.c.l.b16 %v4855
    %v4892 = vunpack.c.l.b16 %v4856
    %v4893 = vunpack.c.l.b16 %v4857
    %v4894 = vpack.c.b16 %v4877, %v4876
    %v4895 = vpack.c.b16 %v4879, %v4878
    %v4896 = vpack.c.b16 %v4881, %v4880
    %v4897 = vpack.c.b16 %v4883, %v4882
    %v4898 = vpack.c.b16 %v4885, %v4884
    %v4899 = vpack.c.b16 %v4887, %v4886
    %v4900 = vpack.c.b16 %v4889, %v4888
    %v4901 = vpack.c.b16 %v4891, %v4890
    %v4902 = vpack.c.b16 %v4893, %v4892
    %v4912 = vsel %vm383, %v4902, 0
    %4914 = vmatpush.bf16.msra.mxu0 %v4901
    %4915 = vmatpush.bf16.msra.mxu0 %v4900
    %4916 = vmatpush.bf16.msra.mxu0 %v4899
    %4917 = vmatpush.bf16.msra.mxu0 %v4898
    %4918 = vmatpush.bf16.msra.mxu0 %v4897
    %4919 = vmatpush.bf16.msra.mxu0 %v4896
    %4920 = vmatpush.bf16.msra.mxu0 %v4895
    %4921 = vmatpush.bf16.msra.mxu0 %v4894
    %4922 = vmatmul.bf16.gmra.mxu0 %v4584
    %v4923 = vpop.f32.mrf.mxu0
    %v4924 = vadd.f32 0.0, %v4923
    %v4925 = vpop.f32.mrf.mxu0
    %v4926 = vadd.f32 0.0, %v4925
    %4927 = vmatmul.bf16.gmra.mxu0 %v4586
    %v4928 = vpop.f32.mrf.mxu0
    %v4929 = vadd.f32 0.0, %v4928
    %v4930 = vpop.f32.mrf.mxu0
    %v4931 = vadd.f32 0.0, %v4930
    %4932 = vmatmul.bf16.gmra.mxu0 %v4588
    %v4933 = vpop.f32.mrf.mxu0
    %v4934 = vadd.f32 0.0, %v4933
    %v4935 = vpop.f32.mrf.mxu0
    %v4936 = vadd.f32 0.0, %v4935
    %4937 = vmatmul.bf16.gmra.mxu0 %v4590
    %v4938 = vpop.f32.mrf.mxu0
    %v4939 = vadd.f32 0.0, %v4938
    %v4940 = vpop.f32.mrf.mxu0
    %v4941 = vadd.f32 0.0, %v4940
    %4942 = vmatmul.bf16.gmra.mxu0 %v4592
    %v4943 = vpop.f32.mrf.mxu0
    %v4944 = vadd.f32 0.0, %v4943
    %v4945 = vpop.f32.mrf.mxu0
    %v4946 = vadd.f32 0.0, %v4945
    %4947 = vmatmul.bf16.gmra.mxu0 %v4594
    %v4948 = vpop.f32.mrf.mxu0
    %v4949 = vadd.f32 0.0, %v4948
    %v4950 = vpop.f32.mrf.mxu0
    %v4951 = vadd.f32 0.0, %v4950
    %4952 = vmatmul.bf16.gmra.mxu0 %v4596
    %v4953 = vpop.f32.mrf.mxu0
    %v4954 = vadd.f32 0.0, %v4953
    %v4955 = vpop.f32.mrf.mxu0
    %v4956 = vadd.f32 0.0, %v4955
    %4957 = vmatmul.bf16.gmra.mxu0 %v4598
    %v4958 = vpop.f32.mrf.mxu0
    %v4959 = vadd.f32 0.0, %v4958
    %v4960 = vpop.f32.mrf.mxu0
    %v4961 = vadd.f32 0.0, %v4960
    %4962 = vmatmul.bf16.gmra.mxu0 %v4600
    %v4963 = vpop.f32.mrf.mxu0
    %v4964 = vadd.f32 0.0, %v4963
    %v4965 = vpop.f32.mrf.mxu0
    %v4966 = vadd.f32 0.0, %v4965
    %4967 = vmatmul.bf16.gmra.mxu0 %v4602
    %v4968 = vpop.f32.mrf.mxu0
    %v4969 = vadd.f32 0.0, %v4968
    %v4970 = vpop.f32.mrf.mxu0
    %v4971 = vadd.f32 0.0, %v4970
    %4972 = vmatmul.bf16.gmra.mxu0 %v4604
    %v4973 = vpop.f32.mrf.mxu0
    %v4974 = vadd.f32 0.0, %v4973
    %v4975 = vpop.f32.mrf.mxu0
    %4976 = vdwg.mxu0
    %4977 = vmatpush.bf16.msra.mxu0 0
    %4978 = vmatpush.bf16.msra.mxu0 0
    %4979 = vmatpush.bf16.msra.mxu0 0
    %4980 = vmatpush.bf16.msra.mxu0 0
    %4981 = vmatpush.bf16.msra.mxu0 0
    %4982 = vmatpush.bf16.msra.mxu0 0
    %4983 = vmatpush.bf16.msra.mxu0 0
    %4984 = vmatpush.bf16.msra.mxu0 %v4912
    %4985 = vmatmul.bf16.gmra.mxu0 %v4678
    %v4986 = vpop.f32.mrf.mxu0
    %v4987 = vadd.f32 %v4924, %v4986
    %v4988 = vpop.f32.mrf.mxu0
    %v4989 = vadd.f32 %v4926, %v4988
    %4990 = vmatmul.bf16.gmra.mxu0 %v4681
    %v4991 = vpop.f32.mrf.mxu0
    %v4992 = vadd.f32 %v4929, %v4991
    %v4993 = vpop.f32.mrf.mxu0
    %v4994 = vadd.f32 %v4931, %v4993
    %4995 = vmatmul.bf16.gmra.mxu0 %v4684
    %v4996 = vpop.f32.mrf.mxu0
    %v4997 = vadd.f32 %v4934, %v4996
    %v4998 = vpop.f32.mrf.mxu0
    %v4999 = vadd.f32 %v4936, %v4998
    %5000 = vmatmul.bf16.gmra.mxu0 %v4687
    %v5001 = vpop.f32.mrf.mxu0
    %v5002 = vadd.f32 %v4939, %v5001
    %v5003 = vpop.f32.mrf.mxu0
    %v5004 = vadd.f32 %v4941, %v5003
    %5005 = vmatmul.bf16.gmra.mxu0 %v4690
    %v5006 = vpop.f32.mrf.mxu0
    %v5007 = vadd.f32 %v4944, %v5006
    %v5008 = vpop.f32.mrf.mxu0
    %v5009 = vadd.f32 %v4946, %v5008
    %5010 = vmatmul.bf16.gmra.mxu0 %v4693
    %v5011 = vpop.f32.mrf.mxu0
    %v5012 = vadd.f32 %v4949, %v5011
    %v5013 = vpop.f32.mrf.mxu0
    %v5014 = vadd.f32 %v4951, %v5013
    %5015 = vmatmul.bf16.gmra.mxu0 %v4696
    %v5016 = vpop.f32.mrf.mxu0
    %v5017 = vadd.f32 %v4954, %v5016
    %v5018 = vpop.f32.mrf.mxu0
    %v5019 = vadd.f32 %v4956, %v5018
    %5020 = vmatmul.bf16.gmra.mxu0 %v4699
    %v5021 = vpop.f32.mrf.mxu0
    %v5022 = vadd.f32 %v4959, %v5021
    %v5023 = vpop.f32.mrf.mxu0
    %v5024 = vadd.f32 %v4961, %v5023
    %5025 = vmatmul.bf16.gmra.mxu0 %v4702
    %v5026 = vpop.f32.mrf.mxu0
    %v5027 = vadd.f32 %v4964, %v5026
    %v5028 = vpop.f32.mrf.mxu0
    %v5029 = vadd.f32 %v4966, %v5028
    %5030 = vmatmul.bf16.gmra.mxu0 %v4705
    %v5031 = vpop.f32.mrf.mxu0
    %v5032 = vadd.f32 %v4969, %v5031
    %v5033 = vpop.f32.mrf.mxu0
    %v5034 = vadd.f32 %v4971, %v5033
    %5035 = vmatmul.bf16.gmra.mxu0 %v4708
    %v5036 = vpop.f32.mrf.mxu0
    %v5037 = vadd.f32 %v4974, %v5036
    %v5038 = vpop.f32.mrf.mxu0
    %5039 = vdwg.mxu0
    %s5040 = scalar_lea.vmem %s7, 144
    %v5041 = vld [vmem:[%s5040] sm:$0xf]
    %v5042 = vld [vmem:[%s5040 + $0x4] sm:$0xf]
    %v5043 = vld [vmem:[%s5040 + $0x8] sm:$0xf]
    %v5044 = vld [vmem:[%s5040 + $0xc] sm:$0xf]
    %v5045 = vld [vmem:[%s5040 + $0x10] sm:$0xf]
    %v5046 = vld [vmem:[%s5040 + $0x14] sm:$0xf]
    %v5047 = vld [vmem:[%s5040 + $0x18] sm:$0xf]
    %v5048 = vld [vmem:[%s5040 + $0x1c] sm:$0xf]
    %v5049 = vld [vmem:[%s5040 + $0x20] sm:$0xf]
    %v5050 = vld [vmem:[%s5040 + $0x24] sm:$0xf]
    %v5051 = vld [vmem:[%s5040 + $0x28] sm:$0xf]
    %v5052 = vld [vmem:[%s5040 + $0x2c] sm:$0xf]
    %v5053 = vld [vmem:[%s5040 + $0x30] sm:$0xf]
    %v5054 = vld [vmem:[%s5040 + $0x34] sm:$0xf]
    %v5055 = vld [vmem:[%s5040 + $0x38] sm:$0xf]
    %v5056 = vld [vmem:[%s5040 + $0x3c] sm:$0xf]
    %v5057 = vld [vmem:[%s5040 + $0x40] sm:$0xf]
    %v5058 = vld [vmem:[%s5040 + $0x44] sm:$0x1]
    %v5077 = vunpack.c.l.b16 %v5041
    %v5078 = vunpack.c.l.b16 %v5042
    %v5079 = vunpack.c.l.b16 %v5043
    %v5080 = vunpack.c.l.b16 %v5044
    %v5081 = vunpack.c.l.b16 %v5045
    %v5082 = vunpack.c.l.b16 %v5046
    %v5083 = vunpack.c.l.b16 %v5047
    %v5084 = vunpack.c.l.b16 %v5048
    %v5085 = vunpack.c.l.b16 %v5049
    %v5086 = vunpack.c.l.b16 %v5050
    %v5087 = vunpack.c.l.b16 %v5051
    %v5088 = vunpack.c.l.b16 %v5052
    %v5089 = vunpack.c.l.b16 %v5053
    %v5090 = vunpack.c.l.b16 %v5054
    %v5091 = vunpack.c.l.b16 %v5055
    %v5092 = vunpack.c.l.b16 %v5056
    %v5093 = vunpack.c.l.b16 %v5057
    %v5094 = vunpack.c.l.b16 %v5058
    %v5095 = vpack.c.b16 %v5078, %v5077
    %v5096 = vpack.c.b16 %v5080, %v5079
    %v5097 = vpack.c.b16 %v5082, %v5081
    %v5098 = vpack.c.b16 %v5084, %v5083
    %v5099 = vpack.c.b16 %v5086, %v5085
    %v5100 = vpack.c.b16 %v5088, %v5087
    %v5101 = vpack.c.b16 %v5090, %v5089
    %v5102 = vpack.c.b16 %v5092, %v5091
    %v5103 = vpack.c.b16 %v5094, %v5093
    %v5113 = vsel %vm383, %v5103, 0
    %5115 = vmatpush.bf16.msra.mxu0 %v5102
    %5116 = vmatpush.bf16.msra.mxu0 %v5101
    %5117 = vmatpush.bf16.msra.mxu0 %v5100
    %5118 = vmatpush.bf16.msra.mxu0 %v5099
    %5119 = vmatpush.bf16.msra.mxu0 %v5098
    %5120 = vmatpush.bf16.msra.mxu0 %v5097
    %5121 = vmatpush.bf16.msra.mxu0 %v5096
    %5122 = vmatpush.bf16.msra.mxu0 %v5095
    %5123 = vmatmul.bf16.gmra.mxu0 %v4584
    %v5124 = vpop.f32.mrf.mxu0
    %v5125 = vadd.f32 0.0, %v5124
    %v5126 = vpop.f32.mrf.mxu0
    %v5127 = vadd.f32 0.0, %v5126
    %5128 = vmatmul.bf16.gmra.mxu0 %v4586
    %v5129 = vpop.f32.mrf.mxu0
    %v5130 = vadd.f32 0.0, %v5129
    %v5131 = vpop.f32.mrf.mxu0
    %v5132 = vadd.f32 0.0, %v5131
    %5133 = vmatmul.bf16.gmra.mxu0 %v4588
    %v5134 = vpop.f32.mrf.mxu0
    %v5135 = vadd.f32 0.0, %v5134
    %v5136 = vpop.f32.mrf.mxu0
    %v5137 = vadd.f32 0.0, %v5136
    %5138 = vmatmul.bf16.gmra.mxu0 %v4590
    %v5139 = vpop.f32.mrf.mxu0
    %v5140 = vadd.f32 0.0, %v5139
    %v5141 = vpop.f32.mrf.mxu0
    %v5142 = vadd.f32 0.0, %v5141
    %5143 = vmatmul.bf16.gmra.mxu0 %v4592
    %v5144 = vpop.f32.mrf.mxu0
    %v5145 = vadd.f32 0.0, %v5144
    %v5146 = vpop.f32.mrf.mxu0
    %v5147 = vadd.f32 0.0, %v5146
    %5148 = vmatmul.bf16.gmra.mxu0 %v4594
    %v5149 = vpop.f32.mrf.mxu0
    %v5150 = vadd.f32 0.0, %v5149
    %v5151 = vpop.f32.mrf.mxu0
    %v5152 = vadd.f32 0.0, %v5151
    %5153 = vmatmul.bf16.gmra.mxu0 %v4596
    %v5154 = vpop.f32.mrf.mxu0
    %v5155 = vadd.f32 0.0, %v5154
    %v5156 = vpop.f32.mrf.mxu0
    %v5157 = vadd.f32 0.0, %v5156
    %5158 = vmatmul.bf16.gmra.mxu0 %v4598
    %v5159 = vpop.f32.mrf.mxu0
    %v5160 = vadd.f32 0.0, %v5159
    %v5161 = vpop.f32.mrf.mxu0
    %v5162 = vadd.f32 0.0, %v5161
    %5163 = vmatmul.bf16.gmra.mxu0 %v4600
    %v5164 = vpop.f32.mrf.mxu0
    %v5165 = vadd.f32 0.0, %v5164
    %v5166 = vpop.f32.mrf.mxu0
    %v5167 = vadd.f32 0.0, %v5166
    %5168 = vmatmul.bf16.gmra.mxu0 %v4602
    %v5169 = vpop.f32.mrf.mxu0
    %v5170 = vadd.f32 0.0, %v5169
    %v5171 = vpop.f32.mrf.mxu0
    %v5172 = vadd.f32 0.0, %v5171
    %5173 = vmatmul.bf16.gmra.mxu0 %v4604
    %v5174 = vpop.f32.mrf.mxu0
    %v5175 = vadd.f32 0.0, %v5174
    %v5176 = vpop.f32.mrf.mxu0
    %5177 = vdwg.mxu0
    %5178 = vmatpush.bf16.msra.mxu0 0
    %5179 = vmatpush.bf16.msra.mxu0 0
    %5180 = vmatpush.bf16.msra.mxu0 0
    %5181 = vmatpush.bf16.msra.mxu0 0
    %5182 = vmatpush.bf16.msra.mxu0 0
    %5183 = vmatpush.bf16.msra.mxu0 0
    %5184 = vmatpush.bf16.msra.mxu0 0
    %5185 = vmatpush.bf16.msra.mxu0 %v5113
    %5186 = vmatmul.bf16.gmra.mxu0 %v4678
    %v5187 = vpop.f32.mrf.mxu0
    %v5188 = vadd.f32 %v5125, %v5187
    %v5189 = vpop.f32.mrf.mxu0
    %v5190 = vadd.f32 %v5127, %v5189
    %5191 = vmatmul.bf16.gmra.mxu0 %v4681
    %v5192 = vpop.f32.mrf.mxu0
    %v5193 = vadd.f32 %v5130, %v5192
    %v5194 = vpop.f32.mrf.mxu0
    %v5195 = vadd.f32 %v5132, %v5194
    %5196 = vmatmul.bf16.gmra.mxu0 %v4684
    %v5197 = vpop.f32.mrf.mxu0
    %v5198 = vadd.f32 %v5135, %v5197
    %v5199 = vpop.f32.mrf.mxu0
    %v5200 = vadd.f32 %v5137, %v5199
    %5201 = vmatmul.bf16.gmra.mxu0 %v4687
    %v5202 = vpop.f32.mrf.mxu0
    %v5203 = vadd.f32 %v5140, %v5202
    %v5204 = vpop.f32.mrf.mxu0
    %v5205 = vadd.f32 %v5142, %v5204
    %5206 = vmatmul.bf16.gmra.mxu0 %v4690
    %v5207 = vpop.f32.mrf.mxu0
    %v5208 = vadd.f32 %v5145, %v5207
    %v5209 = vpop.f32.mrf.mxu0
    %v5210 = vadd.f32 %v5147, %v5209
    %5211 = vmatmul.bf16.gmra.mxu0 %v4693
    %v5212 = vpop.f32.mrf.mxu0
    %v5213 = vadd.f32 %v5150, %v5212
    %v5214 = vpop.f32.mrf.mxu0
    %v5215 = vadd.f32 %v5152, %v5214
    %5216 = vmatmul.bf16.gmra.mxu0 %v4696
    %v5217 = vpop.f32.mrf.mxu0
    %v5218 = vadd.f32 %v5155, %v5217
    %v5219 = vpop.f32.mrf.mxu0
    %v5220 = vadd.f32 %v5157, %v5219
    %5221 = vmatmul.bf16.gmra.mxu0 %v4699
    %v5222 = vpop.f32.mrf.mxu0
    %v5223 = vadd.f32 %v5160, %v5222
    %v5224 = vpop.f32.mrf.mxu0
    %v5225 = vadd.f32 %v5162, %v5224
    %5226 = vmatmul.bf16.gmra.mxu0 %v4702
    %v5227 = vpop.f32.mrf.mxu0
    %v5228 = vadd.f32 %v5165, %v5227
    %v5229 = vpop.f32.mrf.mxu0
    %v5230 = vadd.f32 %v5167, %v5229
    %5231 = vmatmul.bf16.gmra.mxu0 %v4705
    %v5232 = vpop.f32.mrf.mxu0
    %v5233 = vadd.f32 %v5170, %v5232
    %v5234 = vpop.f32.mrf.mxu0
    %v5235 = vadd.f32 %v5172, %v5234
    %5236 = vmatmul.bf16.gmra.mxu0 %v4708
    %v5237 = vpop.f32.mrf.mxu0
    %v5238 = vadd.f32 %v5175, %v5237
    %v5239 = vpop.f32.mrf.mxu0
    %5240 = vdwg.mxu0
    %s5241 = scalar_lea.vmem %s7, 216
    %v5242 = vld [vmem:[%s5241] sm:$0xf]
    %v5243 = vld [vmem:[%s5241 + $0x4] sm:$0xf]
    %v5244 = vld [vmem:[%s5241 + $0x8] sm:$0xf]
    %v5245 = vld [vmem:[%s5241 + $0xc] sm:$0xf]
    %v5246 = vld [vmem:[%s5241 + $0x10] sm:$0xf]
    %v5247 = vld [vmem:[%s5241 + $0x14] sm:$0xf]
    %v5248 = vld [vmem:[%s5241 + $0x18] sm:$0xf]
    %v5249 = vld [vmem:[%s5241 + $0x1c] sm:$0xf]
    %v5250 = vld [vmem:[%s5241 + $0x20] sm:$0xf]
    %v5251 = vld [vmem:[%s5241 + $0x24] sm:$0xf]
    %v5252 = vld [vmem:[%s5241 + $0x28] sm:$0xf]
    %v5253 = vld [vmem:[%s5241 + $0x2c] sm:$0xf]
    %v5254 = vld [vmem:[%s5241 + $0x30] sm:$0xf]
    %v5255 = vld [vmem:[%s5241 + $0x34] sm:$0xf]
    %v5256 = vld [vmem:[%s5241 + $0x38] sm:$0xf]
    %v5257 = vld [vmem:[%s5241 + $0x3c] sm:$0xf]
    %v5258 = vld [vmem:[%s5241 + $0x40] sm:$0xf]
    %v5259 = vld [vmem:[%s5241 + $0x44] sm:$0x1]
    %v5278 = vunpack.c.l.b16 %v5242
    %v5279 = vunpack.c.l.b16 %v5243
    %v5280 = vunpack.c.l.b16 %v5244
    %v5281 = vunpack.c.l.b16 %v5245
    %v5282 = vunpack.c.l.b16 %v5246
    %v5283 = vunpack.c.l.b16 %v5247
    %v5284 = vunpack.c.l.b16 %v5248
    %v5285 = vunpack.c.l.b16 %v5249
    %v5286 = vunpack.c.l.b16 %v5250
    %v5287 = vunpack.c.l.b16 %v5251
    %v5288 = vunpack.c.l.b16 %v5252
    %v5289 = vunpack.c.l.b16 %v5253
    %v5290 = vunpack.c.l.b16 %v5254
    %v5291 = vunpack.c.l.b16 %v5255
    %v5292 = vunpack.c.l.b16 %v5256
    %v5293 = vunpack.c.l.b16 %v5257
    %v5294 = vunpack.c.l.b16 %v5258
    %v5295 = vunpack.c.l.b16 %v5259
    %v5296 = vpack.c.b16 %v5279, %v5278
    %v5297 = vpack.c.b16 %v5281, %v5280
    %v5298 = vpack.c.b16 %v5283, %v5282
    %v5299 = vpack.c.b16 %v5285, %v5284
    %v5300 = vpack.c.b16 %v5287, %v5286
    %v5301 = vpack.c.b16 %v5289, %v5288
    %v5302 = vpack.c.b16 %v5291, %v5290
    %v5303 = vpack.c.b16 %v5293, %v5292
    %v5304 = vpack.c.b16 %v5295, %v5294
    %v5314 = vsel %vm383, %v5304, 0
    %5316 = vmatpush.bf16.msra.mxu0 %v5303
    %5317 = vmatpush.bf16.msra.mxu0 %v5302
    %5318 = vmatpush.bf16.msra.mxu0 %v5301
    %5319 = vmatpush.bf16.msra.mxu0 %v5300
    %5320 = vmatpush.bf16.msra.mxu0 %v5299
    %5321 = vmatpush.bf16.msra.mxu0 %v5298
    %5322 = vmatpush.bf16.msra.mxu0 %v5297
    %5323 = vmatpush.bf16.msra.mxu0 %v5296
    %5324 = vmatmul.bf16.gmra.mxu0 %v4584
    %v5325 = vpop.f32.mrf.mxu0
    %v5326 = vadd.f32 0.0, %v5325
    %v5327 = vpop.f32.mrf.mxu0
    %v5328 = vadd.f32 0.0, %v5327
    %5329 = vmatmul.bf16.gmra.mxu0 %v4586
    %v5330 = vpop.f32.mrf.mxu0
    %v5331 = vadd.f32 0.0, %v5330
    %v5332 = vpop.f32.mrf.mxu0
    %v5333 = vadd.f32 0.0, %v5332
    %5334 = vmatmul.bf16.gmra.mxu0 %v4588
    %v5335 = vpop.f32.mrf.mxu0
    %v5336 = vadd.f32 0.0, %v5335
    %v5337 = vpop.f32.mrf.mxu0
    %v5338 = vadd.f32 0.0, %v5337
    %5339 = vmatmul.bf16.gmra.mxu0 %v4590
    %v5340 = vpop.f32.mrf.mxu0
    %v5341 = vadd.f32 0.0, %v5340
    %v5342 = vpop.f32.mrf.mxu0
    %v5343 = vadd.f32 0.0, %v5342
    %5344 = vmatmul.bf16.gmra.mxu0 %v4592
    %v5345 = vpop.f32.mrf.mxu0
    %v5346 = vadd.f32 0.0, %v5345
    %v5347 = vpop.f32.mrf.mxu0
    %v5348 = vadd.f32 0.0, %v5347
    %5349 = vmatmul.bf16.gmra.mxu0 %v4594
    %v5350 = vpop.f32.mrf.mxu0
    %v5351 = vadd.f32 0.0, %v5350
    %v5352 = vpop.f32.mrf.mxu0
    %v5353 = vadd.f32 0.0, %v5352
    %5354 = vmatmul.bf16.gmra.mxu0 %v4596
    %v5355 = vpop.f32.mrf.mxu0
    %v5356 = vadd.f32 0.0, %v5355
    %v5357 = vpop.f32.mrf.mxu0
    %v5358 = vadd.f32 0.0, %v5357
    %5359 = vmatmul.bf16.gmra.mxu0 %v4598
    %v5360 = vpop.f32.mrf.mxu0
    %v5361 = vadd.f32 0.0, %v5360
    %v5362 = vpop.f32.mrf.mxu0
    %v5363 = vadd.f32 0.0, %v5362
    %5364 = vmatmul.bf16.gmra.mxu0 %v4600
    %v5365 = vpop.f32.mrf.mxu0
    %v5366 = vadd.f32 0.0, %v5365
    %v5367 = vpop.f32.mrf.mxu0
    %v5368 = vadd.f32 0.0, %v5367
    %5369 = vmatmul.bf16.gmra.mxu0 %v4602
    %v5370 = vpop.f32.mrf.mxu0
    %v5371 = vadd.f32 0.0, %v5370
    %v5372 = vpop.f32.mrf.mxu0
    %v5373 = vadd.f32 0.0, %v5372
    %5374 = vmatmul.bf16.gmra.mxu0 %v4604
    %v5375 = vpop.f32.mrf.mxu0
    %v5376 = vadd.f32 0.0, %v5375
    %v5377 = vpop.f32.mrf.mxu0
    %5378 = vdwg.mxu0
    %5379 = vmatpush.bf16.msra.mxu0 0
    %5380 = vmatpush.bf16.msra.mxu0 0
    %5381 = vmatpush.bf16.msra.mxu0 0
    %5382 = vmatpush.bf16.msra.mxu0 0
    %5383 = vmatpush.bf16.msra.mxu0 0
    %5384 = vmatpush.bf16.msra.mxu0 0
    %5385 = vmatpush.bf16.msra.mxu0 0
    %5386 = vmatpush.bf16.msra.mxu0 %v5314
    %5387 = vmatmul.bf16.gmra.mxu0 %v4678
    %v5388 = vpop.f32.mrf.mxu0
    %v5389 = vadd.f32 %v5326, %v5388
    %v5390 = vpop.f32.mrf.mxu0
    %v5391 = vadd.f32 %v5328, %v5390
    %5392 = vmatmul.bf16.gmra.mxu0 %v4681
    %v5393 = vpop.f32.mrf.mxu0
    %v5394 = vadd.f32 %v5331, %v5393
    %v5395 = vpop.f32.mrf.mxu0
    %v5396 = vadd.f32 %v5333, %v5395
    %5397 = vmatmul.bf16.gmra.mxu0 %v4684
    %v5398 = vpop.f32.mrf.mxu0
    %v5399 = vadd.f32 %v5336, %v5398
    %v5400 = vpop.f32.mrf.mxu0
    %v5401 = vadd.f32 %v5338, %v5400
    %5402 = vmatmul.bf16.gmra.mxu0 %v4687
    %v5403 = vpop.f32.mrf.mxu0
    %v5404 = vadd.f32 %v5341, %v5403
    %v5405 = vpop.f32.mrf.mxu0
    %v5406 = vadd.f32 %v5343, %v5405
    %5407 = vmatmul.bf16.gmra.mxu0 %v4690
    %v5408 = vpop.f32.mrf.mxu0
    %v5409 = vadd.f32 %v5346, %v5408
    %v5410 = vpop.f32.mrf.mxu0
    %v5411 = vadd.f32 %v5348, %v5410
    %5412 = vmatmul.bf16.gmra.mxu0 %v4693
    %v5413 = vpop.f32.mrf.mxu0
    %v5414 = vadd.f32 %v5351, %v5413
    %v5415 = vpop.f32.mrf.mxu0
    %v5416 = vadd.f32 %v5353, %v5415
    %5417 = vmatmul.bf16.gmra.mxu0 %v4696
    %v5418 = vpop.f32.mrf.mxu0
    %v5419 = vadd.f32 %v5356, %v5418
    %v5420 = vpop.f32.mrf.mxu0
    %v5421 = vadd.f32 %v5358, %v5420
    %5422 = vmatmul.bf16.gmra.mxu0 %v4699
    %v5423 = vpop.f32.mrf.mxu0
    %v5424 = vadd.f32 %v5361, %v5423
    %v5425 = vpop.f32.mrf.mxu0
    %v5426 = vadd.f32 %v5363, %v5425
    %5427 = vmatmul.bf16.gmra.mxu0 %v4702
    %v5428 = vpop.f32.mrf.mxu0
    %v5429 = vadd.f32 %v5366, %v5428
    %v5430 = vpop.f32.mrf.mxu0
    %v5431 = vadd.f32 %v5368, %v5430
    %5432 = vmatmul.bf16.gmra.mxu0 %v4705
    %v5433 = vpop.f32.mrf.mxu0
    %v5434 = vadd.f32 %v5371, %v5433
    %v5435 = vpop.f32.mrf.mxu0
    %v5436 = vadd.f32 %v5373, %v5435
    %5437 = vmatmul.bf16.gmra.mxu0 %v4708
    %v5438 = vpop.f32.mrf.mxu0
    %v5439 = vadd.f32 %v5376, %v5438
    %v5440 = vpop.f32.mrf.mxu0
    %5441 = vdwg.mxu0
    %s5442 = scalar_lea.vmem %s7, 288
    %v5443 = vld [vmem:[%s5442] sm:$0xf]
    %v5444 = vld [vmem:[%s5442 + $0x4] sm:$0xf]
    %v5445 = vld [vmem:[%s5442 + $0x8] sm:$0xf]
    %v5446 = vld [vmem:[%s5442 + $0xc] sm:$0xf]
    %v5447 = vld [vmem:[%s5442 + $0x10] sm:$0xf]
    %v5448 = vld [vmem:[%s5442 + $0x14] sm:$0xf]
    %v5449 = vld [vmem:[%s5442 + $0x18] sm:$0xf]
    %v5450 = vld [vmem:[%s5442 + $0x1c] sm:$0xf]
    %v5451 = vld [vmem:[%s5442 + $0x20] sm:$0xf]
    %v5452 = vld [vmem:[%s5442 + $0x24] sm:$0xf]
    %v5453 = vld [vmem:[%s5442 + $0x28] sm:$0xf]
    %v5454 = vld [vmem:[%s5442 + $0x2c] sm:$0xf]
    %v5455 = vld [vmem:[%s5442 + $0x30] sm:$0xf]
    %v5456 = vld [vmem:[%s5442 + $0x34] sm:$0xf]
    %v5457 = vld [vmem:[%s5442 + $0x38] sm:$0xf]
    %v5458 = vld [vmem:[%s5442 + $0x3c] sm:$0xf]
    %v5459 = vld [vmem:[%s5442 + $0x40] sm:$0xf]
    %v5460 = vld [vmem:[%s5442 + $0x44] sm:$0x1]
    %v5479 = vunpack.c.l.b16 %v5443
    %v5480 = vunpack.c.l.b16 %v5444
    %v5481 = vunpack.c.l.b16 %v5445
    %v5482 = vunpack.c.l.b16 %v5446
    %v5483 = vunpack.c.l.b16 %v5447
    %v5484 = vunpack.c.l.b16 %v5448
    %v5485 = vunpack.c.l.b16 %v5449
    %v5486 = vunpack.c.l.b16 %v5450
    %v5487 = vunpack.c.l.b16 %v5451
    %v5488 = vunpack.c.l.b16 %v5452
    %v5489 = vunpack.c.l.b16 %v5453
    %v5490 = vunpack.c.l.b16 %v5454
    %v5491 = vunpack.c.l.b16 %v5455
    %v5492 = vunpack.c.l.b16 %v5456
    %v5493 = vunpack.c.l.b16 %v5457
    %v5494 = vunpack.c.l.b16 %v5458
    %v5495 = vunpack.c.l.b16 %v5459
    %v5496 = vunpack.c.l.b16 %v5460
    %v5497 = vpack.c.b16 %v5480, %v5479
    %v5498 = vpack.c.b16 %v5482, %v5481
    %v5499 = vpack.c.b16 %v5484, %v5483
    %v5500 = vpack.c.b16 %v5486, %v5485
    %v5501 = vpack.c.b16 %v5488, %v5487
    %v5502 = vpack.c.b16 %v5490, %v5489
    %v5503 = vpack.c.b16 %v5492, %v5491
    %v5504 = vpack.c.b16 %v5494, %v5493
    %v5505 = vpack.c.b16 %v5496, %v5495
    %v5515 = vsel %vm383, %v5505, 0
    %5517 = vmatpush.bf16.msra.mxu0 %v5504
    %5518 = vmatpush.bf16.msra.mxu0 %v5503
    %5519 = vmatpush.bf16.msra.mxu0 %v5502
    %5520 = vmatpush.bf16.msra.mxu0 %v5501
    %5521 = vmatpush.bf16.msra.mxu0 %v5500
    %5522 = vmatpush.bf16.msra.mxu0 %v5499
    %5523 = vmatpush.bf16.msra.mxu0 %v5498
    %5524 = vmatpush.bf16.msra.mxu0 %v5497
    %5525 = vmatmul.bf16.gmra.mxu0 %v4584
    %v5526 = vpop.f32.mrf.mxu0
    %v5527 = vadd.f32 0.0, %v5526
    %v5528 = vpop.f32.mrf.mxu0
    %v5529 = vadd.f32 0.0, %v5528
    %5530 = vmatmul.bf16.gmra.mxu0 %v4586
    %v5531 = vpop.f32.mrf.mxu0
    %v5532 = vadd.f32 0.0, %v5531
    %v5533 = vpop.f32.mrf.mxu0
    %v5534 = vadd.f32 0.0, %v5533
    %5535 = vmatmul.bf16.gmra.mxu0 %v4588
    %v5536 = vpop.f32.mrf.mxu0
    %v5537 = vadd.f32 0.0, %v5536
    %v5538 = vpop.f32.mrf.mxu0
    %v5539 = vadd.f32 0.0, %v5538
    %5540 = vmatmul.bf16.gmra.mxu0 %v4590
    %v5541 = vpop.f32.mrf.mxu0
    %v5542 = vadd.f32 0.0, %v5541
    %v5543 = vpop.f32.mrf.mxu0
    %v5544 = vadd.f32 0.0, %v5543
    %5545 = vmatmul.bf16.gmra.mxu0 %v4592
    %v5546 = vpop.f32.mrf.mxu0
    %v5547 = vadd.f32 0.0, %v5546
    %v5548 = vpop.f32.mrf.mxu0
    %v5549 = vadd.f32 0.0, %v5548
    %5550 = vmatmul.bf16.gmra.mxu0 %v4594
    %v5551 = vpop.f32.mrf.mxu0
    %v5552 = vadd.f32 0.0, %v5551
    %v5553 = vpop.f32.mrf.mxu0
    %v5554 = vadd.f32 0.0, %v5553
    %5555 = vmatmul.bf16.gmra.mxu0 %v4596
    %v5556 = vpop.f32.mrf.mxu0
    %v5557 = vadd.f32 0.0, %v5556
    %v5558 = vpop.f32.mrf.mxu0
    %v5559 = vadd.f32 0.0, %v5558
    %5560 = vmatmul.bf16.gmra.mxu0 %v4598
    %v5561 = vpop.f32.mrf.mxu0
    %v5562 = vadd.f32 0.0, %v5561
    %v5563 = vpop.f32.mrf.mxu0
    %v5564 = vadd.f32 0.0, %v5563
    %5565 = vmatmul.bf16.gmra.mxu0 %v4600
    %v5566 = vpop.f32.mrf.mxu0
    %v5567 = vadd.f32 0.0, %v5566
    %v5568 = vpop.f32.mrf.mxu0
    %v5569 = vadd.f32 0.0, %v5568
    %5570 = vmatmul.bf16.gmra.mxu0 %v4602
    %v5571 = vpop.f32.mrf.mxu0
    %v5572 = vadd.f32 0.0, %v5571
    %v5573 = vpop.f32.mrf.mxu0
    %v5574 = vadd.f32 0.0, %v5573
    %5575 = vmatmul.bf16.gmra.mxu0 %v4604
    %v5576 = vpop.f32.mrf.mxu0
    %v5577 = vadd.f32 0.0, %v5576
    %v5578 = vpop.f32.mrf.mxu0
    %5579 = vdwg.mxu0
    %5580 = vmatpush.bf16.msra.mxu0 0
    %5581 = vmatpush.bf16.msra.mxu0 0
    %5582 = vmatpush.bf16.msra.mxu0 0
    %5583 = vmatpush.bf16.msra.mxu0 0
    %5584 = vmatpush.bf16.msra.mxu0 0
    %5585 = vmatpush.bf16.msra.mxu0 0
    %5586 = vmatpush.bf16.msra.mxu0 0
    %5587 = vmatpush.bf16.msra.mxu0 %v5515
    %5588 = vmatmul.bf16.gmra.mxu0 %v4678
    %v5589 = vpop.f32.mrf.mxu0
    %v5590 = vadd.f32 %v5527, %v5589
    %v5591 = vpop.f32.mrf.mxu0
    %v5592 = vadd.f32 %v5529, %v5591
    %5593 = vmatmul.bf16.gmra.mxu0 %v4681
    %v5594 = vpop.f32.mrf.mxu0
    %v5595 = vadd.f32 %v5532, %v5594
    %v5596 = vpop.f32.mrf.mxu0
    %v5597 = vadd.f32 %v5534, %v5596
    %5598 = vmatmul.bf16.gmra.mxu0 %v4684
    %v5599 = vpop.f32.mrf.mxu0
    %v5600 = vadd.f32 %v5537, %v5599
    %v5601 = vpop.f32.mrf.mxu0
    %v5602 = vadd.f32 %v5539, %v5601
    %5603 = vmatmul.bf16.gmra.mxu0 %v4687
    %v5604 = vpop.f32.mrf.mxu0
    %v5605 = vadd.f32 %v5542, %v5604
    %v5606 = vpop.f32.mrf.mxu0
    %v5607 = vadd.f32 %v5544, %v5606
    %5608 = vmatmul.bf16.gmra.mxu0 %v4690
    %v5609 = vpop.f32.mrf.mxu0
    %v5610 = vadd.f32 %v5547, %v5609
    %v5611 = vpop.f32.mrf.mxu0
    %v5612 = vadd.f32 %v5549, %v5611
    %5613 = vmatmul.bf16.gmra.mxu0 %v4693
    %v5614 = vpop.f32.mrf.mxu0
    %v5615 = vadd.f32 %v5552, %v5614
    %v5616 = vpop.f32.mrf.mxu0
    %v5617 = vadd.f32 %v5554, %v5616
    %5618 = vmatmul.bf16.gmra.mxu0 %v4696
    %v5619 = vpop.f32.mrf.mxu0
    %v5620 = vadd.f32 %v5557, %v5619
    %v5621 = vpop.f32.mrf.mxu0
    %v5622 = vadd.f32 %v5559, %v5621
    %5623 = vmatmul.bf16.gmra.mxu0 %v4699
    %v5624 = vpop.f32.mrf.mxu0
    %v5625 = vadd.f32 %v5562, %v5624
    %v5626 = vpop.f32.mrf.mxu0
    %v5627 = vadd.f32 %v5564, %v5626
    %5628 = vmatmul.bf16.gmra.mxu0 %v4702
    %v5629 = vpop.f32.mrf.mxu0
    %v5630 = vadd.f32 %v5567, %v5629
    %v5631 = vpop.f32.mrf.mxu0
    %v5632 = vadd.f32 %v5569, %v5631
    %5633 = vmatmul.bf16.gmra.mxu0 %v4705
    %v5634 = vpop.f32.mrf.mxu0
    %v5635 = vadd.f32 %v5572, %v5634
    %v5636 = vpop.f32.mrf.mxu0
    %v5637 = vadd.f32 %v5574, %v5636
    %5638 = vmatmul.bf16.gmra.mxu0 %v4708
    %v5639 = vpop.f32.mrf.mxu0
    %v5640 = vadd.f32 %v5577, %v5639
    %v5641 = vpop.f32.mrf.mxu0
    %5642 = vdwg.mxu0
    %v5643 = vpack.c.bf16 %v4788, %v4786
    %v5644 = vpack.c.bf16 %v4793, %v4791
    %v5645 = vpack.c.bf16 %v4798, %v4796
    %v5646 = vpack.c.bf16 %v4803, %v4801
    %v5647 = vpack.c.bf16 %v4808, %v4806
    %v5648 = vpack.c.bf16 %v4813, %v4811
    %v5649 = vpack.c.bf16 %v4818, %v4816
    %v5650 = vpack.c.bf16 %v4823, %v4821
    %v5651 = vpack.c.bf16 %v4828, %v4826
    %v5652 = vpack.c.bf16 %v4833, %v4831
    %v5653 = vpack.c.bf16 %v4987, %v4836
    %v5654 = vpack.c.bf16 %v4992, %v4989
    %v5655 = vpack.c.bf16 %v4997, %v4994
    %v5656 = vpack.c.bf16 %v5002, %v4999
    %v5657 = vpack.c.bf16 %v5007, %v5004
    %v5658 = vpack.c.bf16 %v5012, %v5009
    %v5659 = vpack.c.bf16 %v5017, %v5014
    %v5660 = vpack.c.bf16 %v5022, %v5019
    %v5661 = vpack.c.bf16 %v5027, %v5024
    %v5662 = vpack.c.bf16 %v5032, %v5029
    %v5663 = vpack.c.bf16 %v5037, %v5034
    %v5664 = vpack.c.bf16 %v5190, %v5188
    %v5665 = vpack.c.bf16 %v5195, %v5193
    %v5666 = vpack.c.bf16 %v5200, %v5198
    %v5667 = vpack.c.bf16 %v5205, %v5203
    %v5668 = vpack.c.bf16 %v5210, %v5208
    %v5669 = vpack.c.bf16 %v5215, %v5213
    %v5670 = vpack.c.bf16 %v5220, %v5218
    %v5671 = vpack.c.bf16 %v5225, %v5223
    %v5672 = vpack.c.bf16 %v5230, %v5228
    %v5673 = vpack.c.bf16 %v5235, %v5233
    %v5674 = vpack.c.bf16 %v5389, %v5238
    %v5675 = vpack.c.bf16 %v5394, %v5391
    %v5676 = vpack.c.bf16 %v5399, %v5396
    %v5677 = vpack.c.bf16 %v5404, %v5401
    %v5678 = vpack.c.bf16 %v5409, %v5406
    %v5679 = vpack.c.bf16 %v5414, %v5411
    %v5680 = vpack.c.bf16 %v5419, %v5416
    %v5681 = vpack.c.bf16 %v5424, %v5421
    %v5682 = vpack.c.bf16 %v5429, %v5426
    %v5683 = vpack.c.bf16 %v5434, %v5431
    %v5684 = vpack.c.bf16 %v5439, %v5436
    %v5685 = vpack.c.bf16 %v5592, %v5590
    %v5686 = vpack.c.bf16 %v5597, %v5595
    %v5687 = vpack.c.bf16 %v5602, %v5600
    %v5688 = vpack.c.bf16 %v5607, %v5605
    %v5689 = vpack.c.bf16 %v5612, %v5610
    %v5690 = vpack.c.bf16 %v5617, %v5615
    %v5691 = vpack.c.bf16 %v5622, %v5620
    %v5692 = vpack.c.bf16 %v5627, %v5625
    %v5693 = vpack.c.bf16 %v5632, %v5630
    %v5694 = vpack.c.bf16 %v5637, %v5635
    %v5695 = vpack.c.bf16 %v5640, %v5640
    %v5696 = vld [vmem:[%s6] sm:$0xff]
    %v5697 = vld [vmem:[%s6 + $0x8] sm:$0xff]
    %v5698 = vld [vmem:[%s6 + $0x10] sm:$0xff]
    %v5699 = vld [vmem:[%s6 + $0x18] sm:$0xf]
    %v5700 = vld [vmem:[%s6 + $0x1c] sm:$0xff]
    %v5701 = vld [vmem:[%s6 + $0x24] sm:$0xff]
    %v5702 = vld [vmem:[%s6 + $0x2c] sm:$0xff]
    %v5703 = vld [vmem:[%s6 + $0x34] sm:$0xf]
    %v5704 = vld [vmem:[%s6 + $0x38] sm:$0xff]
    %v5705 = vld [vmem:[%s6 + $0x40] sm:$0xff]
    %v5706 = vld [vmem:[%s6 + $0x48] sm:$0xff]
    %v5707 = vld [vmem:[%s6 + $0x50] sm:$0xf]
    %v5708 = vld [vmem:[%s6 + $0x54] sm:$0xff]
    %v5709 = vld [vmem:[%s6 + $0x5c] sm:$0xff]
    %v5710 = vld [vmem:[%s6 + $0x64] sm:$0xff]
    %v5711 = vld [vmem:[%s6 + $0x6c] sm:$0xf]
    %v5712 = vld [vmem:[%s6 + $0x70] sm:$0xff]
    %v5713 = vld [vmem:[%s6 + $0x78] sm:$0xff]
    %v5714 = vld [vmem:[%s6 + $0x80] sm:$0xff]
    %v5715 = vld [vmem:[%s6 + $0x88] sm:$0xf]
    %v5716 = vld [vmem:[%s6 + $0x8c] sm:$0xff]
    %v5717 = vld [vmem:[%s6 + $0x94] sm:$0xff]
    %v5718 = vld [vmem:[%s6 + $0x9c] sm:$0xff]
    %v5719 = vld [vmem:[%s6 + $0xa4] sm:$0xf]
    %v5720 = vld [vmem:[%s6 + $0xa8] sm:$0xff]
    %v5721 = vld [vmem:[%s6 + $0xb0] sm:$0xff]
    %v5722 = vld [vmem:[%s6 + $0xb8] sm:$0xff]
    %v5723 = vld [vmem:[%s6 + $0xc0] sm:$0xf]
    %v5724 = vld [vmem:[%s6 + $0xc4] sm:$0xff]
    %v5725 = vld [vmem:[%s6 + $0xcc] sm:$0xff]
    %v5726 = vld [vmem:[%s6 + $0xd4] sm:$0xff]
    %v5727 = vld [vmem:[%s6 + $0xdc] sm:$0xf]
    %v5728 = vld [vmem:[%s6 + $0xe0] sm:$0xff]
    %v5729 = vld [vmem:[%s6 + $0xe8] sm:$0xff]
    %v5730 = vld [vmem:[%s6 + $0xf0] sm:$0xff]
    %v5731 = vld [vmem:[%s6 + $0xf8] sm:$0xf]
    %v5732 = vld [vmem:[%s6 + $0xfc] sm:$0xff]
    %v5733 = vld [vmem:[%s6 + $0x104] sm:$0xff]
    %v5734 = vld [vmem:[%s6 + $0x10c] sm:$0xff]
    %v5735 = vld [vmem:[%s6 + $0x114] sm:$0xf]
    %v5736 = vld [vmem:[%s6 + $0x118] sm:$0xff]
    %v5737 = vld [vmem:[%s6 + $0x120] sm:$0xff]
    %v5738 = vld [vmem:[%s6 + $0x128] sm:$0xff]
    %v5739 = vld [vmem:[%s6 + $0x130] sm:$0xf]
    %v5740 = vld [vmem:[%s6 + $0x134] sm:$0xff]
    %v5741 = vld [vmem:[%s6 + $0x13c] sm:$0xff]
    %v5742 = vld [vmem:[%s6 + $0x144] sm:$0xff]
    %v5743 = vld [vmem:[%s6 + $0x14c] sm:$0xf]
    %v5744 = vld [vmem:[%s6 + $0x150] sm:$0xff]
    %v5745 = vld [vmem:[%s6 + $0x158] sm:$0xff]
    %v5746 = vld [vmem:[%s6 + $0x160] sm:$0xff]
    %v5747 = vld [vmem:[%s6 + $0x168] sm:$0xf]
    %v5748 = vld [vmem:[%s6 + $0x16c] sm:$0xff]
    %v5749 = vld [vmem:[%s6 + $0x174] sm:$0xff]
    %v5750 = vld [vmem:[%s6 + $0x17c] sm:$0xff]
    %v5751 = vld [vmem:[%s6 + $0x184] sm:$0xf]
    %v5752 = vld [vmem:[%s6 + $0x188] sm:$0xff]
    %v5753 = vld [vmem:[%s6 + $0x190] sm:$0xff]
    %v5754 = vld [vmem:[%s6 + $0x198] sm:$0xff]
    %v5755 = vld [vmem:[%s6 + $0x1a0] sm:$0xf]
    %v5756 = vld [vmem:[%s6 + $0x1a4] sm:$0xff]
    %v5757 = vld [vmem:[%s6 + $0x1ac] sm:$0xff]
    %v5758 = vld [vmem:[%s6 + $0x1b4] sm:$0xff]
    %v5759 = vld [vmem:[%s6 + $0x1bc] sm:$0xf]
    %v5760 = vld [vmem:[%s6 + $0x1c0] sm:$0xff]
    %v5761 = vld [vmem:[%s6 + $0x1c8] sm:$0xff]
    %v5762 = vld [vmem:[%s6 + $0x1d0] sm:$0xff]
    %v5763 = vld [vmem:[%s6 + $0x1d8] sm:$0xf]
    %v5764 = vld [vmem:[%s6 + $0x1dc] sm:$0xff]
    %v5765 = vld [vmem:[%s6 + $0x1e4] sm:$0xff]
    %v5766 = vld [vmem:[%s6 + $0x1ec] sm:$0xff]
    %v5767 = vld [vmem:[%s6 + $0x1f4] sm:$0xf]
    %v5840 = vunpack.c.l.b16 %v5696
    %v5841 = vunpack.c.h.b16 %v5696
    %v5842 = vunpack.c.l.b16 %v5697
    %v5843 = vunpack.c.h.b16 %v5697
    %v5844 = vunpack.c.l.b16 %v5698
    %v5845 = vunpack.c.h.b16 %v5698
    %v5846 = vunpack.c.l.b16 %v5699
    %v5847 = vunpack.c.l.b16 %v5700
    %v5848 = vunpack.c.h.b16 %v5700
    %v5849 = vunpack.c.l.b16 %v5701
    %v5850 = vunpack.c.h.b16 %v5701
    %v5851 = vunpack.c.l.b16 %v5702
    %v5852 = vunpack.c.h.b16 %v5702
    %v5853 = vunpack.c.l.b16 %v5703
    %v5854 = vunpack.c.l.b16 %v5704
    %v5855 = vunpack.c.h.b16 %v5704
    %v5856 = vunpack.c.l.b16 %v5705
    %v5857 = vunpack.c.h.b16 %v5705
    %v5858 = vunpack.c.l.b16 %v5706
    %v5859 = vunpack.c.h.b16 %v5706
    %v5860 = vunpack.c.l.b16 %v5707
    %v5861 = vunpack.c.l.b16 %v5708
    %v5862 = vunpack.c.h.b16 %v5708
    %v5863 = vunpack.c.l.b16 %v5709
    %v5864 = vunpack.c.h.b16 %v5709
    %v5865 = vunpack.c.l.b16 %v5710
    %v5866 = vunpack.c.h.b16 %v5710
    %v5867 = vunpack.c.l.b16 %v5711
    %v5868 = vunpack.c.l.b16 %v5712
    %v5869 = vunpack.c.h.b16 %v5712
    %v5870 = vunpack.c.l.b16 %v5713
    %v5871 = vunpack.c.h.b16 %v5713
    %v5872 = vunpack.c.l.b16 %v5714
    %v5873 = vunpack.c.h.b16 %v5714
    %v5874 = vunpack.c.l.b16 %v5715
    %v5875 = vunpack.c.l.b16 %v5716
    %v5876 = vunpack.c.h.b16 %v5716
    %v5877 = vunpack.c.l.b16 %v5717
    %v5878 = vunpack.c.h.b16 %v5717
    %v5879 = vunpack.c.l.b16 %v5718
    %v5880 = vunpack.c.h.b16 %v5718
    %v5881 = vunpack.c.l.b16 %v5719
    %v5882 = vunpack.c.l.b16 %v5720
    %v5883 = vunpack.c.h.b16 %v5720
    %v5884 = vunpack.c.l.b16 %v5721
    %v5885 = vunpack.c.h.b16 %v5721
    %v5886 = vunpack.c.l.b16 %v5722
    %v5887 = vunpack.c.h.b16 %v5722
    %v5888 = vunpack.c.l.b16 %v5723
    %v5889 = vunpack.c.l.b16 %v5724
    %v5890 = vunpack.c.h.b16 %v5724
    %v5891 = vunpack.c.l.b16 %v5725
    %v5892 = vunpack.c.h.b16 %v5725
    %v5893 = vunpack.c.l.b16 %v5726
    %v5894 = vunpack.c.h.b16 %v5726
    %v5895 = vunpack.c.l.b16 %v5727
    %v5896 = vunpack.c.l.b16 %v5728
    %v5897 = vunpack.c.h.b16 %v5728
    %v5898 = vunpack.c.l.b16 %v5729
    %v5899 = vunpack.c.h.b16 %v5729
    %v5900 = vunpack.c.l.b16 %v5730
    %v5901 = vunpack.c.h.b16 %v5730
    %v5902 = vunpack.c.l.b16 %v5731
    %v5903 = vunpack.c.l.b16 %v5732
    %v5904 = vunpack.c.h.b16 %v5732
    %v5905 = vunpack.c.l.b16 %v5733
    %v5906 = vunpack.c.h.b16 %v5733
    %v5907 = vunpack.c.l.b16 %v5734
    %v5908 = vunpack.c.h.b16 %v5734
    %v5909 = vunpack.c.l.b16 %v5735
    %v5910 = vunpack.c.l.b16 %v5736
    %v5911 = vunpack.c.h.b16 %v5736
    %v5912 = vunpack.c.l.b16 %v5737
    %v5913 = vunpack.c.h.b16 %v5737
    %v5914 = vunpack.c.l.b16 %v5738
    %v5915 = vunpack.c.h.b16 %v5738
    %v5916 = vunpack.c.l.b16 %v5739
    %v5917 = vunpack.c.l.b16 %v5740
    %v5918 = vunpack.c.h.b16 %v5740
    %v5919 = vunpack.c.l.b16 %v5741
    %v5920 = vunpack.c.h.b16 %v5741
    %v5921 = vunpack.c.l.b16 %v5742
    %v5922 = vunpack.c.h.b16 %v5742
    %v5923 = vunpack.c.l.b16 %v5743
    %v5924 = vunpack.c.l.b16 %v5744
    %v5925 = vunpack.c.h.b16 %v5744
    %v5926 = vunpack.c.l.b16 %v5745
    %v5927 = vunpack.c.h.b16 %v5745
    %v5928 = vunpack.c.l.b16 %v5746
    %v5929 = vunpack.c.h.b16 %v5746
    %v5930 = vunpack.c.l.b16 %v5747
    %v5931 = vunpack.c.l.b16 %v5748
    %v5932 = vunpack.c.h.b16 %v5748
    %v5933 = vunpack.c.l.b16 %v5749
    %v5934 = vunpack.c.h.b16 %v5749
    %v5935 = vunpack.c.l.b16 %v5750
    %v5936 = vunpack.c.h.b16 %v5750
    %v5937 = vunpack.c.l.b16 %v5751
    %v5938 = vunpack.c.l.b16 %v5752
    %v5939 = vunpack.c.h.b16 %v5752
    %v5940 = vunpack.c.l.b16 %v5753
    %v5941 = vunpack.c.h.b16 %v5753
    %v5942 = vunpack.c.l.b16 %v5754
    %v5943 = vunpack.c.h.b16 %v5754
    %v5944 = vunpack.c.l.b16 %v5755
    %v5945 = vunpack.c.l.b16 %v5756
    %v5946 = vunpack.c.h.b16 %v5756
    %v5947 = vunpack.c.l.b16 %v5757
    %v5948 = vunpack.c.h.b16 %v5757
    %v5949 = vunpack.c.l.b16 %v5758
    %v5950 = vunpack.c.h.b16 %v5758
    %v5951 = vunpack.c.l.b16 %v5759
    %v5952 = vunpack.c.l.b16 %v5760
    %v5953 = vunpack.c.h.b16 %v5760
    %v5954 = vunpack.c.l.b16 %v5761
    %v5955 = vunpack.c.h.b16 %v5761
    %v5956 = vunpack.c.l.b16 %v5762
    %v5957 = vunpack.c.h.b16 %v5762
    %v5958 = vunpack.c.l.b16 %v5763
    %v5959 = vunpack.c.l.b16 %v5764
    %v5960 = vunpack.c.h.b16 %v5764
    %v5961 = vunpack.c.l.b16 %v5765
    %v5962 = vunpack.c.h.b16 %v5765
    %v5963 = vunpack.c.l.b16 %v5766
    %v5964 = vunpack.c.h.b16 %v5766
    %v5965 = vunpack.c.l.b16 %v5767
    %v5966 = vpack.c.b16 %v5847, %v5840
    %v5967 = vpack.c.b16 %v5848, %v5841
    %v5968 = vpack.c.b16 %v5849, %v5842
    %v5969 = vpack.c.b16 %v5850, %v5843
    %v5970 = vpack.c.b16 %v5851, %v5844
    %v5971 = vpack.c.b16 %v5852, %v5845
    %v5972 = vpack.c.b16 %v5853, %v5846
    %v5973 = vpack.c.b16 %v5861, %v5854
    %v5974 = vpack.c.b16 %v5862, %v5855
    %v5975 = vpack.c.b16 %v5863, %v5856
    %v5976 = vpack.c.b16 %v5864, %v5857
    %v5977 = vpack.c.b16 %v5865, %v5858
    %v5978 = vpack.c.b16 %v5866, %v5859
    %v5979 = vpack.c.b16 %v5867, %v5860
    %v5980 = vpack.c.b16 %v5875, %v5868
    %v5981 = vpack.c.b16 %v5876, %v5869
    %v5982 = vpack.c.b16 %v5877, %v5870
    %v5983 = vpack.c.b16 %v5878, %v5871
    %v5984 = vpack.c.b16 %v5879, %v5872
    %v5985 = vpack.c.b16 %v5880, %v5873
    %v5986 = vpack.c.b16 %v5881, %v5874
    %v5987 = vpack.c.b16 %v5889, %v5882
    %v5988 = vpack.c.b16 %v5890, %v5883
    %v5989 = vpack.c.b16 %v5891, %v5884
    %v5990 = vpack.c.b16 %v5892, %v5885
    %v5991 = vpack.c.b16 %v5893, %v5886
    %v5992 = vpack.c.b16 %v5894, %v5887
    %v5993 = vpack.c.b16 %v5895, %v5888
    %v5994 = vpack.c.b16 %v5903, %v5896
    %v5995 = vpack.c.b16 %v5904, %v5897
    %v5996 = vpack.c.b16 %v5905, %v5898
    %v5997 = vpack.c.b16 %v5906, %v5899
    %v5998 = vpack.c.b16 %v5907, %v5900
    %v5999 = vpack.c.b16 %v5908, %v5901
    %v6000 = vpack.c.b16 %v5909, %v5902
    %v6001 = vpack.c.b16 %v5917, %v5910
    %v6002 = vpack.c.b16 %v5918, %v5911
    %v6003 = vpack.c.b16 %v5919, %v5912
    %v6004 = vpack.c.b16 %v5920, %v5913
    %v6005 = vpack.c.b16 %v5921, %v5914
    %v6006 = vpack.c.b16 %v5922, %v5915
    %v6007 = vpack.c.b16 %v5923, %v5916
    %v6008 = vpack.c.b16 %v5931, %v5924
    %v6009 = vpack.c.b16 %v5932, %v5925
    %v6010 = vpack.c.b16 %v5933, %v5926
    %v6011 = vpack.c.b16 %v5934, %v5927
    %v6012 = vpack.c.b16 %v5935, %v5928
    %v6013 = vpack.c.b16 %v5936, %v5929
    %v6014 = vpack.c.b16 %v5937, %v5930
    %v6015 = vpack.c.b16 %v5945, %v5938
    %v6016 = vpack.c.b16 %v5946, %v5939
    %v6017 = vpack.c.b16 %v5947, %v5940
    %v6018 = vpack.c.b16 %v5948, %v5941
    %v6019 = vpack.c.b16 %v5949, %v5942
    %v6020 = vpack.c.b16 %v5950, %v5943
    %v6021 = vpack.c.b16 %v5951, %v5944
    %v6022 = vpack.c.b16 %v5959, %v5952
    %v6023 = vpack.c.b16 %v5960, %v5953
    %v6024 = vpack.c.b16 %v5961, %v5954
    %v6025 = vpack.c.b16 %v5962, %v5955
    %v6026 = vpack.c.b16 %v5963, %v5956
    %v6027 = vpack.c.b16 %v5964, %v5957
    %v6028 = vpack.c.b16 %v5965, %v5958
    %vm6083 = vcmask 588800
    %v6085 = vsel %vm6083, %v5972, 0
    %v6088 = vsel %vm6083, %v5979, 0
    %v6091 = vsel %vm6083, %v5986, 0
    %v6094 = vsel %vm6083, %v5993, 0
    %v6097 = vsel %vm6083, %v6000, 0
    %v6100 = vsel %vm6083, %v6007, 0
    %v6103 = vsel %vm6083, %v6014, 0
    %v6106 = vsel %vm6083, %v6021, 0
    %v6109 = vsel %vm6083, %v6028, 0
    %v6112 = vsel %vm2994, %v5695, 0
    %6114 = vmatpush.bf16.msra.mxu0 %v5650
    %6115 = vmatpush.bf16.msra.mxu0 %v5649
    %6116 = vmatpush.bf16.msra.mxu0 %v5648
    %6117 = vmatpush.bf16.msra.mxu0 %v5647
    %6118 = vmatpush.bf16.msra.mxu0 %v5646
    %6119 = vmatpush.bf16.msra.mxu0 %v5645
    %6120 = vmatpush.bf16.msra.mxu0 %v5644
    %6121 = vmatpush.bf16.msra.mxu0 %v5643
    %6122 = vmatmul.bf16.gmra.mxu0 %v5966
    %v6123 = vpop.f32.mrf.mxu0
    %v6124 = vadd.f32 0.0, %v6123
    %v6125 = vpop.f32.mrf.mxu0
    %v6126 = vadd.f32 0.0, %v6125
    %6127 = vmatmul.bf16.gmra.mxu0 %v5973
    %v6128 = vpop.f32.mrf.mxu0
    %v6129 = vadd.f32 0.0, %v6128
    %v6130 = vpop.f32.mrf.mxu0
    %v6131 = vadd.f32 0.0, %v6130
    %6132 = vmatmul.bf16.gmra.mxu0 %v5980
    %v6133 = vpop.f32.mrf.mxu0
    %v6134 = vadd.f32 0.0, %v6133
    %v6135 = vpop.f32.mrf.mxu0
    %v6136 = vadd.f32 0.0, %v6135
    %6137 = vmatmul.bf16.gmra.mxu0 %v5987
    %v6138 = vpop.f32.mrf.mxu0
    %v6139 = vadd.f32 0.0, %v6138
    %v6140 = vpop.f32.mrf.mxu0
    %v6141 = vadd.f32 0.0, %v6140
    %6142 = vmatmul.bf16.gmra.mxu0 %v5994
    %v6143 = vpop.f32.mrf.mxu0
    %v6144 = vadd.f32 0.0, %v6143
    %v6145 = vpop.f32.mrf.mxu0
    %v6146 = vadd.f32 0.0, %v6145
    %6147 = vmatmul.bf16.gmra.mxu0 %v6001
    %v6148 = vpop.f32.mrf.mxu0
    %v6149 = vadd.f32 0.0, %v6148
    %v6150 = vpop.f32.mrf.mxu0
    %v6151 = vadd.f32 0.0, %v6150
    %6152 = vmatmul.bf16.gmra.mxu0 %v6008
    %v6153 = vpop.f32.mrf.mxu0
    %v6154 = vadd.f32 0.0, %v6153
    %v6155 = vpop.f32.mrf.mxu0
    %v6156 = vadd.f32 0.0, %v6155
    %6157 = vmatmul.bf16.gmra.mxu0 %v6015
    %v6158 = vpop.f32.mrf.mxu0
    %v6159 = vadd.f32 0.0, %v6158
    %v6160 = vpop.f32.mrf.mxu0
    %v6161 = vadd.f32 0.0, %v6160
    %6162 = vmatmul.bf16.gmra.mxu0 %v6022
    %v6163 = vpop.f32.mrf.mxu0
    %v6164 = vadd.f32 0.0, %v6163
    %v6165 = vpop.f32.mrf.mxu0
    %v6166 = vadd.f32 0.0, %v6165
    %6167 = vdwg.mxu0
    %6168 = vmatpush.bf16.msra.mxu0 %v5658
    %6169 = vmatpush.bf16.msra.mxu0 %v5657
    %6170 = vmatpush.bf16.msra.mxu0 %v5656
    %6171 = vmatpush.bf16.msra.mxu0 %v5655
    %6172 = vmatpush.bf16.msra.mxu0 %v5654
    %6173 = vmatpush.bf16.msra.mxu0 %v5653
    %6174 = vmatpush.bf16.msra.mxu0 %v5652
    %6175 = vmatpush.bf16.msra.mxu0 %v5651
    %6176 = vmatmul.bf16.gmra.mxu0 %v5967
    %v6177 = vpop.f32.mrf.mxu0
    %v6178 = vadd.f32 %v6124, %v6177
    %v6179 = vpop.f32.mrf.mxu0
    %v6180 = vadd.f32 %v6126, %v6179
    %6181 = vmatmul.bf16.gmra.mxu0 %v5974
    %v6182 = vpop.f32.mrf.mxu0
    %v6183 = vadd.f32 %v6129, %v6182
    %v6184 = vpop.f32.mrf.mxu0
    %v6185 = vadd.f32 %v6131, %v6184
    %6186 = vmatmul.bf16.gmra.mxu0 %v5981
    %v6187 = vpop.f32.mrf.mxu0
    %v6188 = vadd.f32 %v6134, %v6187
    %v6189 = vpop.f32.mrf.mxu0
    %v6190 = vadd.f32 %v6136, %v6189
    %6191 = vmatmul.bf16.gmra.mxu0 %v5988
    %v6192 = vpop.f32.mrf.mxu0
    %v6193 = vadd.f32 %v6139, %v6192
    %v6194 = vpop.f32.mrf.mxu0
    %v6195 = vadd.f32 %v6141, %v6194
    %6196 = vmatmul.bf16.gmra.mxu0 %v5995
    %v6197 = vpop.f32.mrf.mxu0
    %v6198 = vadd.f32 %v6144, %v6197
    %v6199 = vpop.f32.mrf.mxu0
    %v6200 = vadd.f32 %v6146, %v6199
    %6201 = vmatmul.bf16.gmra.mxu0 %v6002
    %v6202 = vpop.f32.mrf.mxu0
    %v6203 = vadd.f32 %v6149, %v6202
    %v6204 = vpop.f32.mrf.mxu0
    %v6205 = vadd.f32 %v6151, %v6204
    %6206 = vmatmul.bf16.gmra.mxu0 %v6009
    %v6207 = vpop.f32.mrf.mxu0
    %v6208 = vadd.f32 %v6154, %v6207
    %v6209 = vpop.f32.mrf.mxu0
    %v6210 = vadd.f32 %v6156, %v6209
    %6211 = vmatmul.bf16.gmra.mxu0 %v6016
    %v6212 = vpop.f32.mrf.mxu0
    %v6213 = vadd.f32 %v6159, %v6212
    %v6214 = vpop.f32.mrf.mxu0
    %v6215 = vadd.f32 %v6161, %v6214
    %6216 = vmatmul.bf16.gmra.mxu0 %v6023
    %v6217 = vpop.f32.mrf.mxu0
    %v6218 = vadd.f32 %v6164, %v6217
    %v6219 = vpop.f32.mrf.mxu0
    %v6220 = vadd.f32 %v6166, %v6219
    %6221 = vdwg.mxu0
    %6222 = vmatpush.bf16.msra.mxu0 %v5666
    %6223 = vmatpush.bf16.msra.mxu0 %v5665
    %6224 = vmatpush.bf16.msra.mxu0 %v5664
    %6225 = vmatpush.bf16.msra.mxu0 %v5663
    %6226 = vmatpush.bf16.msra.mxu0 %v5662
    %6227 = vmatpush.bf16.msra.mxu0 %v5661
    %6228 = vmatpush.bf16.msra.mxu0 %v5660
    %6229 = vmatpush.bf16.msra.mxu0 %v5659
    %6230 = vmatmul.bf16.gmra.mxu0 %v5968
    %v6231 = vpop.f32.mrf.mxu0
    %v6232 = vadd.f32 %v6178, %v6231
    %v6233 = vpop.f32.mrf.mxu0
    %v6234 = vadd.f32 %v6180, %v6233
    %6235 = vmatmul.bf16.gmra.mxu0 %v5975
    %v6236 = vpop.f32.mrf.mxu0
    %v6237 = vadd.f32 %v6183, %v6236
    %v6238 = vpop.f32.mrf.mxu0
    %v6239 = vadd.f32 %v6185, %v6238
    %6240 = vmatmul.bf16.gmra.mxu0 %v5982
    %v6241 = vpop.f32.mrf.mxu0
    %v6242 = vadd.f32 %v6188, %v6241
    %v6243 = vpop.f32.mrf.mxu0
    %v6244 = vadd.f32 %v6190, %v6243
    %6245 = vmatmul.bf16.gmra.mxu0 %v5989
    %v6246 = vpop.f32.mrf.mxu0
    %v6247 = vadd.f32 %v6193, %v6246
    %v6248 = vpop.f32.mrf.mxu0
    %v6249 = vadd.f32 %v6195, %v6248
    %6250 = vmatmul.bf16.gmra.mxu0 %v5996
    %v6251 = vpop.f32.mrf.mxu0
    %v6252 = vadd.f32 %v6198, %v6251
    %v6253 = vpop.f32.mrf.mxu0
    %v6254 = vadd.f32 %v6200, %v6253
    %6255 = vmatmul.bf16.gmra.mxu0 %v6003
    %v6256 = vpop.f32.mrf.mxu0
    %v6257 = vadd.f32 %v6203, %v6256
    %v6258 = vpop.f32.mrf.mxu0
    %v6259 = vadd.f32 %v6205, %v6258
    %6260 = vmatmul.bf16.gmra.mxu0 %v6010
    %v6261 = vpop.f32.mrf.mxu0
    %v6262 = vadd.f32 %v6208, %v6261
    %v6263 = vpop.f32.mrf.mxu0
    %v6264 = vadd.f32 %v6210, %v6263
    %6265 = vmatmul.bf16.gmra.mxu0 %v6017
    %v6266 = vpop.f32.mrf.mxu0
    %v6267 = vadd.f32 %v6213, %v6266
    %v6268 = vpop.f32.mrf.mxu0
    %v6269 = vadd.f32 %v6215, %v6268
    %6270 = vmatmul.bf16.gmra.mxu0 %v6024
    %v6271 = vpop.f32.mrf.mxu0
    %v6272 = vadd.f32 %v6218, %v6271
    %v6273 = vpop.f32.mrf.mxu0
    %v6274 = vadd.f32 %v6220, %v6273
    %6275 = vdwg.mxu0
    %6276 = vmatpush.bf16.msra.mxu0 %v5674
    %6277 = vmatpush.bf16.msra.mxu0 %v5673
    %6278 = vmatpush.bf16.msra.mxu0 %v5672
    %6279 = vmatpush.bf16.msra.mxu0 %v5671
    %6280 = vmatpush.bf16.msra.mxu0 %v5670
    %6281 = vmatpush.bf16.msra.mxu0 %v5669
    %6282 = vmatpush.bf16.msra.mxu0 %v5668
    %6283 = vmatpush.bf16.msra.mxu0 %v5667
    %6284 = vmatmul.bf16.gmra.mxu0 %v5969
    %v6285 = vpop.f32.mrf.mxu0
    %v6286 = vadd.f32 %v6232, %v6285
    %v6287 = vpop.f32.mrf.mxu0
    %v6288 = vadd.f32 %v6234, %v6287
    %6289 = vmatmul.bf16.gmra.mxu0 %v5976
    %v6290 = vpop.f32.mrf.mxu0
    %v6291 = vadd.f32 %v6237, %v6290
    %v6292 = vpop.f32.mrf.mxu0
    %v6293 = vadd.f32 %v6239, %v6292
    %6294 = vmatmul.bf16.gmra.mxu0 %v5983
    %v6295 = vpop.f32.mrf.mxu0
    %v6296 = vadd.f32 %v6242, %v6295
    %v6297 = vpop.f32.mrf.mxu0
    %v6298 = vadd.f32 %v6244, %v6297
    %6299 = vmatmul.bf16.gmra.mxu0 %v5990
    %v6300 = vpop.f32.mrf.mxu0
    %v6301 = vadd.f32 %v6247, %v6300
    %v6302 = vpop.f32.mrf.mxu0
    %v6303 = vadd.f32 %v6249, %v6302
    %6304 = vmatmul.bf16.gmra.mxu0 %v5997
    %v6305 = vpop.f32.mrf.mxu0
    %v6306 = vadd.f32 %v6252, %v6305
    %v6307 = vpop.f32.mrf.mxu0
    %v6308 = vadd.f32 %v6254, %v6307
    %6309 = vmatmul.bf16.gmra.mxu0 %v6004
    %v6310 = vpop.f32.mrf.mxu0
    %v6311 = vadd.f32 %v6257, %v6310
    %v6312 = vpop.f32.mrf.mxu0
    %v6313 = vadd.f32 %v6259, %v6312
    %6314 = vmatmul.bf16.gmra.mxu0 %v6011
    %v6315 = vpop.f32.mrf.mxu0
    %v6316 = vadd.f32 %v6262, %v6315
    %v6317 = vpop.f32.mrf.mxu0
    %v6318 = vadd.f32 %v6264, %v6317
    %6319 = vmatmul.bf16.gmra.mxu0 %v6018
    %v6320 = vpop.f32.mrf.mxu0
    %v6321 = vadd.f32 %v6267, %v6320
    %v6322 = vpop.f32.mrf.mxu0
    %v6323 = vadd.f32 %v6269, %v6322
    %6324 = vmatmul.bf16.gmra.mxu0 %v6025
    %v6325 = vpop.f32.mrf.mxu0
    %v6326 = vadd.f32 %v6272, %v6325
    %v6327 = vpop.f32.mrf.mxu0
    %v6328 = vadd.f32 %v6274, %v6327
    %6329 = vdwg.mxu0
    %6330 = vmatpush.bf16.msra.mxu0 %v5682
    %6331 = vmatpush.bf16.msra.mxu0 %v5681
    %6332 = vmatpush.bf16.msra.mxu0 %v5680
    %6333 = vmatpush.bf16.msra.mxu0 %v5679
    %6334 = vmatpush.bf16.msra.mxu0 %v5678
    %6335 = vmatpush.bf16.msra.mxu0 %v5677
    %6336 = vmatpush.bf16.msra.mxu0 %v5676
    %6337 = vmatpush.bf16.msra.mxu0 %v5675
    %6338 = vmatmul.bf16.gmra.mxu0 %v5970
    %v6339 = vpop.f32.mrf.mxu0
    %v6340 = vadd.f32 %v6286, %v6339
    %v6341 = vpop.f32.mrf.mxu0
    %v6342 = vadd.f32 %v6288, %v6341
    %6343 = vmatmul.bf16.gmra.mxu0 %v5977
    %v6344 = vpop.f32.mrf.mxu0
    %v6345 = vadd.f32 %v6291, %v6344
    %v6346 = vpop.f32.mrf.mxu0
    %v6347 = vadd.f32 %v6293, %v6346
    %6348 = vmatmul.bf16.gmra.mxu0 %v5984
    %v6349 = vpop.f32.mrf.mxu0
    %v6350 = vadd.f32 %v6296, %v6349
    %v6351 = vpop.f32.mrf.mxu0
    %v6352 = vadd.f32 %v6298, %v6351
    %6353 = vmatmul.bf16.gmra.mxu0 %v5991
    %v6354 = vpop.f32.mrf.mxu0
    %v6355 = vadd.f32 %v6301, %v6354
    %v6356 = vpop.f32.mrf.mxu0
    %v6357 = vadd.f32 %v6303, %v6356
    %6358 = vmatmul.bf16.gmra.mxu0 %v5998
    %v6359 = vpop.f32.mrf.mxu0
    %v6360 = vadd.f32 %v6306, %v6359
    %v6361 = vpop.f32.mrf.mxu0
    %v6362 = vadd.f32 %v6308, %v6361
    %6363 = vmatmul.bf16.gmra.mxu0 %v6005
    %v6364 = vpop.f32.mrf.mxu0
    %v6365 = vadd.f32 %v6311, %v6364
    %v6366 = vpop.f32.mrf.mxu0
    %v6367 = vadd.f32 %v6313, %v6366
    %6368 = vmatmul.bf16.gmra.mxu0 %v6012
    %v6369 = vpop.f32.mrf.mxu0
    %v6370 = vadd.f32 %v6316, %v6369
    %v6371 = vpop.f32.mrf.mxu0
    %v6372 = vadd.f32 %v6318, %v6371
    %6373 = vmatmul.bf16.gmra.mxu0 %v6019
    %v6374 = vpop.f32.mrf.mxu0
    %v6375 = vadd.f32 %v6321, %v6374
    %v6376 = vpop.f32.mrf.mxu0
    %v6377 = vadd.f32 %v6323, %v6376
    %6378 = vmatmul.bf16.gmra.mxu0 %v6026
    %v6379 = vpop.f32.mrf.mxu0
    %v6380 = vadd.f32 %v6326, %v6379
    %v6381 = vpop.f32.mrf.mxu0
    %v6382 = vadd.f32 %v6328, %v6381
    %6383 = vdwg.mxu0
    %6384 = vmatpush.bf16.msra.mxu0 %v5690
    %6385 = vmatpush.bf16.msra.mxu0 %v5689
    %6386 = vmatpush.bf16.msra.mxu0 %v5688
    %6387 = vmatpush.bf16.msra.mxu0 %v5687
    %6388 = vmatpush.bf16.msra.mxu0 %v5686
    %6389 = vmatpush.bf16.msra.mxu0 %v5685
    %6390 = vmatpush.bf16.msra.mxu0 %v5684
    %6391 = vmatpush.bf16.msra.mxu0 %v5683
    %6392 = vmatmul.bf16.gmra.mxu0 %v5971
    %v6393 = vpop.f32.mrf.mxu0
    %v6394 = vadd.f32 %v6340, %v6393
    %v6395 = vpop.f32.mrf.mxu0
    %v6396 = vadd.f32 %v6342, %v6395
    %6397 = vmatmul.bf16.gmra.mxu0 %v5978
    %v6398 = vpop.f32.mrf.mxu0
    %v6399 = vadd.f32 %v6345, %v6398
    %v6400 = vpop.f32.mrf.mxu0
    %v6401 = vadd.f32 %v6347, %v6400
    %6402 = vmatmul.bf16.gmra.mxu0 %v5985
    %v6403 = vpop.f32.mrf.mxu0
    %v6404 = vadd.f32 %v6350, %v6403
    %v6405 = vpop.f32.mrf.mxu0
    %v6406 = vadd.f32 %v6352, %v6405
    %6407 = vmatmul.bf16.gmra.mxu0 %v5992
    %v6408 = vpop.f32.mrf.mxu0
    %v6409 = vadd.f32 %v6355, %v6408
    %v6410 = vpop.f32.mrf.mxu0
    %v6411 = vadd.f32 %v6357, %v6410
    %6412 = vmatmul.bf16.gmra.mxu0 %v5999
    %v6413 = vpop.f32.mrf.mxu0
    %v6414 = vadd.f32 %v6360, %v6413
    %v6415 = vpop.f32.mrf.mxu0
    %v6416 = vadd.f32 %v6362, %v6415
    %6417 = vmatmul.bf16.gmra.mxu0 %v6006
    %v6418 = vpop.f32.mrf.mxu0
    %v6419 = vadd.f32 %v6365, %v6418
    %v6420 = vpop.f32.mrf.mxu0
    %v6421 = vadd.f32 %v6367, %v6420
    %6422 = vmatmul.bf16.gmra.mxu0 %v6013
    %v6423 = vpop.f32.mrf.mxu0
    %v6424 = vadd.f32 %v6370, %v6423
    %v6425 = vpop.f32.mrf.mxu0
    %v6426 = vadd.f32 %v6372, %v6425
    %6427 = vmatmul.bf16.gmra.mxu0 %v6020
    %v6428 = vpop.f32.mrf.mxu0
    %v6429 = vadd.f32 %v6375, %v6428
    %v6430 = vpop.f32.mrf.mxu0
    %v6431 = vadd.f32 %v6377, %v6430
    %6432 = vmatmul.bf16.gmra.mxu0 %v6027
    %v6433 = vpop.f32.mrf.mxu0
    %v6434 = vadd.f32 %v6380, %v6433
    %v6435 = vpop.f32.mrf.mxu0
    %v6436 = vadd.f32 %v6382, %v6435
    %6437 = vdwg.mxu0
    %6438 = vmatpush.bf16.msra.mxu0 0
    %6439 = vmatpush.bf16.msra.mxu0 0
    %6440 = vmatpush.bf16.msra.mxu0 0
    %6441 = vmatpush.bf16.msra.mxu0 %v6112
    %6442 = vmatpush.bf16.msra.mxu0 %v5694
    %6443 = vmatpush.bf16.msra.mxu0 %v5693
    %6444 = vmatpush.bf16.msra.mxu0 %v5692
    %6445 = vmatpush.bf16.msra.mxu0 %v5691
    %6446 = vmatmul.bf16.gmra.mxu0 %v6085
    %v6447 = vpop.f32.mrf.mxu0
    %v6448 = vadd.f32 %v6394, %v6447
    %v6449 = vpop.f32.mrf.mxu0
    %v6450 = vadd.f32 %v6396, %v6449
    %6451 = vmatmul.bf16.gmra.mxu0 %v6088
    %v6452 = vpop.f32.mrf.mxu0
    %v6453 = vadd.f32 %v6399, %v6452
    %v6454 = vpop.f32.mrf.mxu0
    %v6455 = vadd.f32 %v6401, %v6454
    %6456 = vmatmul.bf16.gmra.mxu0 %v6091
    %v6457 = vpop.f32.mrf.mxu0
    %v6458 = vadd.f32 %v6404, %v6457
    %v6459 = vpop.f32.mrf.mxu0
    %v6460 = vadd.f32 %v6406, %v6459
    %6461 = vmatmul.bf16.gmra.mxu0 %v6094
    %v6462 = vpop.f32.mrf.mxu0
    %v6463 = vadd.f32 %v6409, %v6462
    %v6464 = vpop.f32.mrf.mxu0
    %v6465 = vadd.f32 %v6411, %v6464
    %6466 = vmatmul.bf16.gmra.mxu0 %v6097
    %v6467 = vpop.f32.mrf.mxu0
    %v6468 = vadd.f32 %v6414, %v6467
    %v6469 = vpop.f32.mrf.mxu0
    %v6470 = vadd.f32 %v6416, %v6469
    %6471 = vmatmul.bf16.gmra.mxu0 %v6100
    %v6472 = vpop.f32.mrf.mxu0
    %v6473 = vadd.f32 %v6419, %v6472
    %v6474 = vpop.f32.mrf.mxu0
    %v6475 = vadd.f32 %v6421, %v6474
    %6476 = vmatmul.bf16.gmra.mxu0 %v6103
    %v6477 = vpop.f32.mrf.mxu0
    %v6478 = vadd.f32 %v6424, %v6477
    %v6479 = vpop.f32.mrf.mxu0
    %v6480 = vadd.f32 %v6426, %v6479
    %6481 = vmatmul.bf16.gmra.mxu0 %v6106
    %v6482 = vpop.f32.mrf.mxu0
    %v6483 = vadd.f32 %v6429, %v6482
    %v6484 = vpop.f32.mrf.mxu0
    %v6485 = vadd.f32 %v6431, %v6484
    %6486 = vmatmul.bf16.gmra.mxu0 %v6109
    %v6487 = vpop.f32.mrf.mxu0
    %v6488 = vadd.f32 %v6434, %v6487
    %v6489 = vpop.f32.mrf.mxu0
    %v6490 = vadd.f32 %v6436, %v6489
    %6491 = vdwg.mxu0
    %vm6492 = vcmask 539648
    %v6493 = vsel %vm6492, %v6448, 0.0
    %6494 = vadd.xlane.f32.xlu0 %v6493
    %v6495 = vpop.xlane.xlu0 %6494
    %v6496 = vsel %vm6492, %v6450, 0.0
    %6497 = vadd.xlane.f32.xlu0 %v6496
    %v6498 = vpop.xlane.xlu0 %6497
    %v6499 = vsel %vm6492, %v6453, 0.0
    %6500 = vadd.xlane.f32.xlu0 %v6499
    %v6501 = vpop.xlane.xlu0 %6500
    %v6502 = vsel %vm6492, %v6455, 0.0
    %6503 = vadd.xlane.f32.xlu0 %v6502
    %v6504 = vpop.xlane.xlu0 %6503
    %v6505 = vsel %vm6492, %v6458, 0.0
    %6506 = vadd.xlane.f32.xlu0 %v6505
    %v6507 = vpop.xlane.xlu0 %6506
    %v6508 = vsel %vm6492, %v6460, 0.0
    %6509 = vadd.xlane.f32.xlu0 %v6508
    %v6510 = vpop.xlane.xlu0 %6509
    %v6511 = vsel %vm6492, %v6463, 0.0
    %6512 = vadd.xlane.f32.xlu0 %v6511
    %v6513 = vpop.xlane.xlu0 %6512
    %v6514 = vsel %vm6492, %v6465, 0.0
    %6515 = vadd.xlane.f32.xlu0 %v6514
    %v6516 = vpop.xlane.xlu0 %6515
    %v6517 = vsel %vm6492, %v6468, 0.0
    %6518 = vadd.xlane.f32.xlu0 %v6517
    %v6519 = vpop.xlane.xlu0 %6518
    %v6520 = vsel %vm6492, %v6470, 0.0
    %6521 = vadd.xlane.f32.xlu0 %v6520
    %v6522 = vpop.xlane.xlu0 %6521
    %v6523 = vsel %vm6492, %v6473, 0.0
    %6524 = vadd.xlane.f32.xlu0 %v6523
    %v6525 = vpop.xlane.xlu0 %6524
    %v6526 = vsel %vm6492, %v6475, 0.0
    %6527 = vadd.xlane.f32.xlu0 %v6526
    %v6528 = vpop.xlane.xlu0 %6527
    %v6529 = vsel %vm6492, %v6478, 0.0
    %6530 = vadd.xlane.f32.xlu0 %v6529
    %v6531 = vpop.xlane.xlu0 %6530
    %v6532 = vsel %vm6492, %v6480, 0.0
    %6533 = vadd.xlane.f32.xlu0 %v6532
    %v6534 = vpop.xlane.xlu0 %6533
    %v6535 = vsel %vm6492, %v6483, 0.0
    %6536 = vadd.xlane.f32.xlu0 %v6535
    %v6537 = vpop.xlane.xlu0 %6536
    %v6538 = vsel %vm6492, %v6485, 0.0
    %6539 = vadd.xlane.f32.xlu0 %v6538
    %v6540 = vpop.xlane.xlu0 %6539
    %v6541 = vsel %vm6492, %v6488, 0.0
    %6542 = vadd.xlane.f32.xlu0 %v6541
    %v6543 = vpop.xlane.xlu0 %6542
    %v6544 = vsel %vm6492, %v6490, 0.0
    %6545 = vadd.xlane.f32.xlu0 %v6544
    %v6546 = vpop.xlane.xlu0 %6545
    %v6547 = vmul.f32 %v6448, %v6448
    %v6548 = vmul.f32 %v6450, %v6450
    %v6549 = vmul.f32 %v6453, %v6453
    %v6550 = vmul.f32 %v6455, %v6455
    %v6551 = vmul.f32 %v6458, %v6458
    %v6552 = vmul.f32 %v6460, %v6460
    %v6553 = vmul.f32 %v6463, %v6463
    %v6554 = vmul.f32 %v6465, %v6465
    %v6555 = vmul.f32 %v6468, %v6468
    %v6556 = vmul.f32 %v6470, %v6470
    %v6557 = vmul.f32 %v6473, %v6473
    %v6558 = vmul.f32 %v6475, %v6475
    %v6559 = vmul.f32 %v6478, %v6478
    %v6560 = vmul.f32 %v6480, %v6480
    %v6561 = vmul.f32 %v6483, %v6483
    %v6562 = vmul.f32 %v6485, %v6485
    %v6563 = vmul.f32 %v6488, %v6488
    %v6564 = vmul.f32 %v6490, %v6490
    %v6565 = vsel %vm6492, %v6547, 0.0
    %6566 = vadd.xlane.f32.xlu0 %v6565
    %v6567 = vpop.xlane.xlu0 %6566
    %v6568 = vsel %vm6492, %v6548, 0.0
    %6569 = vadd.xlane.f32.xlu0 %v6568
    %v6570 = vpop.xlane.xlu0 %6569
    %v6571 = vsel %vm6492, %v6549, 0.0
    %6572 = vadd.xlane.f32.xlu0 %v6571
    %v6573 = vpop.xlane.xlu0 %6572
    %v6574 = vsel %vm6492, %v6550, 0.0
    %6575 = vadd.xlane.f32.xlu0 %v6574
    %v6576 = vpop.xlane.xlu0 %6575
    %v6577 = vsel %vm6492, %v6551, 0.0
    %6578 = vadd.xlane.f32.xlu0 %v6577
    %v6579 = vpop.xlane.xlu0 %6578
    %v6580 = vsel %vm6492, %v6552, 0.0
    %6581 = vadd.xlane.f32.xlu0 %v6580
    %v6582 = vpop.xlane.xlu0 %6581
    %v6583 = vsel %vm6492, %v6553, 0.0
    %6584 = vadd.xlane.f32.xlu0 %v6583
    %v6585 = vpop.xlane.xlu0 %6584
    %v6586 = vsel %vm6492, %v6554, 0.0
    %6587 = vadd.xlane.f32.xlu0 %v6586
    %v6588 = vpop.xlane.xlu0 %6587
    %v6589 = vsel %vm6492, %v6555, 0.0
    %6590 = vadd.xlane.f32.xlu0 %v6589
    %v6591 = vpop.xlane.xlu0 %6590
    %v6592 = vsel %vm6492, %v6556, 0.0
    %6593 = vadd.xlane.f32.xlu0 %v6592
    %v6594 = vpop.xlane.xlu0 %6593
    %v6595 = vsel %vm6492, %v6557, 0.0
    %6596 = vadd.xlane.f32.xlu0 %v6595
    %v6597 = vpop.xlane.xlu0 %6596
    %v6598 = vsel %vm6492, %v6558, 0.0
    %6599 = vadd.xlane.f32.xlu0 %v6598
    %v6600 = vpop.xlane.xlu0 %6599
    %v6601 = vsel %vm6492, %v6559, 0.0
    %6602 = vadd.xlane.f32.xlu0 %v6601
    %v6603 = vpop.xlane.xlu0 %6602
    %v6604 = vsel %vm6492, %v6560, 0.0
    %6605 = vadd.xlane.f32.xlu0 %v6604
    %v6606 = vpop.xlane.xlu0 %6605
    %v6607 = vsel %vm6492, %v6561, 0.0
    %6608 = vadd.xlane.f32.xlu0 %v6607
    %v6609 = vpop.xlane.xlu0 %6608
    %v6610 = vsel %vm6492, %v6562, 0.0
    %6611 = vadd.xlane.f32.xlu0 %v6610
    %v6612 = vpop.xlane.xlu0 %6611
    %v6613 = vsel %vm6492, %v6563, 0.0
    %6614 = vadd.xlane.f32.xlu0 %v6613
    %v6615 = vpop.xlane.xlu0 %6614
    %v6616 = vsel %vm6492, %v6564, 0.0
    %6617 = vadd.xlane.f32.xlu0 %v6616
    %v6618 = vpop.xlane.xlu0 %6617
    %v6619 = vld [vmem:[%s8] sm:$0x3f]
    %v6620 = vld [vmem:[%s8 + $0x8] sm:$0x3f]
    %vm6621 = vcmask 130048
    %v6623 = vsel %vm6621, %v6620, 0
    %6625 = vmatpush.msra.mxu0 %v6540
    %6626 = vmatpush.msra.mxu0 %v6537
    %6627 = vmatpush.msra.mxu0 %v6534
    %6628 = vmatpush.msra.mxu0 %v6531
    %6629 = vmatpush.msra.mxu0 %v6528
    %6630 = vmatpush.msra.mxu0 %v6525
    %6631 = vmatpush.msra.mxu0 %v6522
    %6632 = vmatpush.msra.mxu0 %v6519
    %6633 = vmatpush.msra.mxu0 %v6516
    %6634 = vmatpush.msra.mxu0 %v6513
    %6635 = vmatpush.msra.mxu0 %v6510
    %6636 = vmatpush.msra.mxu0 %v6507
    %6637 = vmatpush.msra.mxu0 %v6504
    %6638 = vmatpush.msra.mxu0 %v6501
    %6639 = vmatpush.msra.mxu0 %v6498
    %6640 = vmatpush.msra.mxu0 %v6495
    %6641 = vmatmul.f32.gmra.mxu0 %v6619
    %v6642 = vpop.f32.mrf.mxu0
    %v6643 = vadd.f32 0.0, %v6642
    %6644 = vdwg.mxu0
    %6645 = vmatpush.msra.mxu0 0.0
    %6646 = vmatpush.msra.mxu0 0.0
    %6647 = vmatpush.msra.mxu0 0.0
    %6648 = vmatpush.msra.mxu0 0.0
    %6649 = vmatpush.msra.mxu0 0.0
    %6650 = vmatpush.msra.mxu0 0.0
    %6651 = vmatpush.msra.mxu0 0.0
    %6652 = vmatpush.msra.mxu0 0.0
    %6653 = vmatpush.msra.mxu0 0.0
    %6654 = vmatpush.msra.mxu0 0.0
    %6655 = vmatpush.msra.mxu0 0.0
    %6656 = vmatpush.msra.mxu0 0.0
    %6657 = vmatpush.msra.mxu0 0.0
    %6658 = vmatpush.msra.mxu0 0.0
    %6659 = vmatpush.msra.mxu0 %v6546
    %6660 = vmatpush.msra.mxu0 %v6543
    %6661 = vmatmul.f32.gmra.mxu0 %v6623
    %v6662 = vpop.f32.mrf.mxu0
    %v6663 = vadd.f32 %v6643, %v6662
    %6664 = vdwg.mxu0
    %6665 = vmatpush.msra.mxu0 %v6612
    %6666 = vmatpush.msra.mxu0 %v6609
    %6667 = vmatpush.msra.mxu0 %v6606
    %6668 = vmatpush.msra.mxu0 %v6603
    %6669 = vmatpush.msra.mxu0 %v6600
    %6670 = vmatpush.msra.mxu0 %v6597
    %6671 = vmatpush.msra.mxu0 %v6594
    %6672 = vmatpush.msra.mxu0 %v6591
    %6673 = vmatpush.msra.mxu0 %v6588
    %6674 = vmatpush.msra.mxu0 %v6585
    %6675 = vmatpush.msra.mxu0 %v6582
    %6676 = vmatpush.msra.mxu0 %v6579
    %6677 = vmatpush.msra.mxu0 %v6576
    %6678 = vmatpush.msra.mxu0 %v6573
    %6679 = vmatpush.msra.mxu0 %v6570
    %6680 = vmatpush.msra.mxu0 %v6567
    %6681 = vmatmul.f32.gmra.mxu0 %v6619
    %v6682 = vpop.f32.mrf.mxu0
    %v6683 = vadd.f32 0.0, %v6682
    %6684 = vdwg.mxu0
    %6685 = vmatpush.msra.mxu0 0.0
    %6686 = vmatpush.msra.mxu0 0.0
    %6687 = vmatpush.msra.mxu0 0.0
    %6688 = vmatpush.msra.mxu0 0.0
    %6689 = vmatpush.msra.mxu0 0.0
    %6690 = vmatpush.msra.mxu0 0.0
    %6691 = vmatpush.msra.mxu0 0.0
    %6692 = vmatpush.msra.mxu0 0.0
    %6693 = vmatpush.msra.mxu0 0.0
    %6694 = vmatpush.msra.mxu0 0.0
    %6695 = vmatpush.msra.mxu0 0.0
    %6696 = vmatpush.msra.mxu0 0.0
    %6697 = vmatpush.msra.mxu0 0.0
    %6698 = vmatpush.msra.mxu0 0.0
    %6699 = vmatpush.msra.mxu0 %v6618
    %6700 = vmatpush.msra.mxu0 %v6615
    %6701 = vmatmul.f32.gmra.mxu0 %v6623
    %v6702 = vpop.f32.mrf.mxu0
    %v6703 = vadd.f32 %v6683, %v6702
    %6704 = vdwg.mxu0
    %v6705 = vmul.f32 %v6663, 0.00065876154
    %v6706 = vmul.f32 %v6703, 0.00065876154
    %v6707 = vmul.f32 %v6705, %v6705
    %v6708 = vsub.f32 %v6706, %v6707
    %v6709 = vmax.f32 %v6708, 0.0
    %v6710 = vadd.f32 %v6709, 1e-05
    %v6711 = vrsqrt.pop %v6710
    %v6712 = vmul.f32 %v6711, %v6710
    %v6713 = vmul.f32 %v6712, %v6711
    %v6714 = vmul.f32 0.5, %v6713
    %v6715 = vsub.f32 1.5, %v6714
    %v6716 = vmul.f32 %v6711, %v6715
    %vm6717 = vweird.f32 %v6710
    %vm6718 = vweird.f32 %v6711
    %vm6719 = vmor %vm6717, %vm6718
    %v6720 = vsel %vm6719, %v6711, %v6716
    %v6721 = vld [vmem:[%s9] sm:$0xff]
    %v6722 = vld [vmem:[%s9 + $0x8] sm:$0xff]
    %v6723 = vld [vmem:[%s9 + $0x10] sm:$0xff]
    %v6724 = vld [vmem:[%s9 + $0x18] sm:$0xff]
    %v6725 = vld [vmem:[%s9 + $0x20] sm:$0xff]
    %v6726 = vld [vmem:[%s9 + $0x28] sm:$0xff]
    %v6727 = vld [vmem:[%s9 + $0x30] sm:$0xff]
    %v6728 = vld [vmem:[%s9 + $0x38] sm:$0xff]
    %v6729 = vld [vmem:[%s9 + $0x40] sm:$0xff]
    %v6730 = vld [vmem:[%s9 + $0x48] sm:$0xff]
    %v6731 = vld [vmem:[%s9 + $0x50] sm:$0xff]
    %v6732 = vld [vmem:[%s9 + $0x58] sm:$0xff]
    %v6733 = vld [vmem:[%s9 + $0x60] sm:$0xff]
    %v6734 = vld [vmem:[%s9 + $0x68] sm:$0xff]
    %v6735 = vld [vmem:[%s9 + $0x70] sm:$0xff]
    %v6736 = vld [vmem:[%s9 + $0x78] sm:$0xff]
    %v6737 = vld [vmem:[%s9 + $0x80] sm:$0xff]
    %v6738 = vld [vmem:[%s9 + $0x88] sm:$0xff]
    %vm6739 = vcmask 48128
    %v6741 = vsel %vm6739, %v6721, 0
    %v6744 = vsel %vm6739, %v6722, 0
    %v6747 = vsel %vm6739, %v6723, 0
    %v6750 = vsel %vm6739, %v6724, 0
    %v6753 = vsel %vm6739, %v6725, 0
    %v6756 = vsel %vm6739, %v6726, 0
    %v6759 = vsel %vm6739, %v6727, 0
    %v6762 = vsel %vm6739, %v6728, 0
    %v6765 = vsel %vm6739, %v6729, 0
    %v6768 = vsel %vm6739, %v6730, 0
    %v6771 = vsel %vm6739, %v6731, 0
    %v6774 = vsel %vm6739, %v6732, 0
    %v6777 = vsel %vm6739, %v6733, 0
    %v6780 = vsel %vm6739, %v6734, 0
    %v6783 = vsel %vm6739, %v6735, 0
    %v6786 = vsel %vm6739, %v6736, 0
    %v6789 = vsel %vm6739, %v6737, 0
    %v6792 = vsel %vm6739, %v6738, 0
    %vm6794 = vcmask 1045504
    %v6796 = vsel %vm6794, %v6720, 0
    %6798 = vmatpush.msra.mxu0 0.0
    %6799 = vmatpush.msra.mxu0 0.0
    %6800 = vmatpush.msra.mxu0 0.0
    %6801 = vmatpush.msra.mxu0 0.0
    %6802 = vmatpush.msra.mxu0 0.0
    %6803 = vmatpush.msra.mxu0 0.0
    %6804 = vmatpush.msra.mxu0 0.0
    %6805 = vmatpush.msra.mxu0 0.0
    %6806 = vmatpush.msra.mxu0 0.0
    %6807 = vmatpush.msra.mxu0 0.0
    %6808 = vmatpush.msra.mxu0 0.0
    %6809 = vmatpush.msra.mxu0 0.0
    %6810 = vmatpush.msra.mxu0 0.0
    %6811 = vmatpush.msra.mxu0 0.0
    %6812 = vmatpush.msra.mxu0 0.0
    %6813 = vmatpush.msra.mxu0 %v6796
    %6814 = vmatmul.f32.gmra.mxu0 %v6741
    %v6815 = vpop.f32.mrf.mxu0
    %v6816 = vadd.f32 0.0, %v6815
    %6817 = vmatmul.f32.gmra.mxu0 %v6744
    %v6818 = vpop.f32.mrf.mxu0
    %v6819 = vadd.f32 0.0, %v6818
    %6820 = vmatmul.f32.gmra.mxu0 %v6747
    %v6821 = vpop.f32.mrf.mxu0
    %v6822 = vadd.f32 0.0, %v6821
    %6823 = vmatmul.f32.gmra.mxu0 %v6750
    %v6824 = vpop.f32.mrf.mxu0
    %v6825 = vadd.f32 0.0, %v6824
    %6826 = vmatmul.f32.gmra.mxu0 %v6753
    %v6827 = vpop.f32.mrf.mxu0
    %v6828 = vadd.f32 0.0, %v6827
    %6829 = vmatmul.f32.gmra.mxu0 %v6756
    %v6830 = vpop.f32.mrf.mxu0
    %v6831 = vadd.f32 0.0, %v6830
    %6832 = vmatmul.f32.gmra.mxu0 %v6759
    %v6833 = vpop.f32.mrf.mxu0
    %v6834 = vadd.f32 0.0, %v6833
    %6835 = vmatmul.f32.gmra.mxu0 %v6762
    %v6836 = vpop.f32.mrf.mxu0
    %v6837 = vadd.f32 0.0, %v6836
    %6838 = vmatmul.f32.gmra.mxu0 %v6765
    %v6839 = vpop.f32.mrf.mxu0
    %v6840 = vadd.f32 0.0, %v6839
    %6841 = vmatmul.f32.gmra.mxu0 %v6768
    %v6842 = vpop.f32.mrf.mxu0
    %v6843 = vadd.f32 0.0, %v6842
    %6844 = vmatmul.f32.gmra.mxu0 %v6771
    %v6845 = vpop.f32.mrf.mxu0
    %v6846 = vadd.f32 0.0, %v6845
    %6847 = vmatmul.f32.gmra.mxu0 %v6774
    %v6848 = vpop.f32.mrf.mxu0
    %v6849 = vadd.f32 0.0, %v6848
    %6850 = vmatmul.f32.gmra.mxu0 %v6777
    %v6851 = vpop.f32.mrf.mxu0
    %v6852 = vadd.f32 0.0, %v6851
    %6853 = vmatmul.f32.gmra.mxu0 %v6780
    %v6854 = vpop.f32.mrf.mxu0
    %v6855 = vadd.f32 0.0, %v6854
    %6856 = vmatmul.f32.gmra.mxu0 %v6783
    %v6857 = vpop.f32.mrf.mxu0
    %v6858 = vadd.f32 0.0, %v6857
    %6859 = vmatmul.f32.gmra.mxu0 %v6786
    %v6860 = vpop.f32.mrf.mxu0
    %v6861 = vadd.f32 0.0, %v6860
    %6862 = vmatmul.f32.gmra.mxu0 %v6789
    %v6863 = vpop.f32.mrf.mxu0
    %v6864 = vadd.f32 0.0, %v6863
    %6865 = vmatmul.f32.gmra.mxu0 %v6792
    %v6866 = vpop.f32.mrf.mxu0
    %v6867 = vadd.f32 0.0, %v6866
    %6868 = vdwg.mxu0
    %v6869 = vld [vmem:[%s10] sm:$0xff]
    %v6870 = vld [vmem:[%s10 + $0x8] sm:$0xff]
    %v6871 = vld [vmem:[%s10 + $0x10] sm:$0xff]
    %v6872 = vld [vmem:[%s10 + $0x18] sm:$0xff]
    %v6873 = vld [vmem:[%s10 + $0x20] sm:$0xff]
    %v6874 = vld [vmem:[%s10 + $0x28] sm:$0xff]
    %v6875 = vld [vmem:[%s10 + $0x30] sm:$0xff]
    %v6876 = vld [vmem:[%s10 + $0x38] sm:$0xff]
    %v6877 = vld [vmem:[%s10 + $0x40] sm:$0xff]
    %v6878 = vld [vmem:[%s10 + $0x48] sm:$0xff]
    %v6879 = vld [vmem:[%s10 + $0x50] sm:$0xff]
    %v6880 = vld [vmem:[%s10 + $0x58] sm:$0xff]
    %v6881 = vld [vmem:[%s10 + $0x60] sm:$0xff]
    %v6882 = vld [vmem:[%s10 + $0x68] sm:$0xff]
    %v6883 = vld [vmem:[%s10 + $0x70] sm:$0xff]
    %v6884 = vld [vmem:[%s10 + $0x78] sm:$0xff]
    %v6885 = vld [vmem:[%s10 + $0x80] sm:$0xff]
    %v6886 = vld [vmem:[%s10 + $0x88] sm:$0xff]
    %v6887 = vmul.f32 %v6705, %v6720
    %v6889 = vsel %vm6794, %v6887, 0
    %6891 = vmatpush.msra.mxu0 0.0
    %6892 = vmatpush.msra.mxu0 0.0
    %6893 = vmatpush.msra.mxu0 0.0
    %6894 = vmatpush.msra.mxu0 0.0
    %6895 = vmatpush.msra.mxu0 0.0
    %6896 = vmatpush.msra.mxu0 0.0
    %6897 = vmatpush.msra.mxu0 0.0
    %6898 = vmatpush.msra.mxu0 0.0
    %6899 = vmatpush.msra.mxu0 0.0
    %6900 = vmatpush.msra.mxu0 0.0
    %6901 = vmatpush.msra.mxu0 0.0
    %6902 = vmatpush.msra.mxu0 0.0
    %6903 = vmatpush.msra.mxu0 0.0
    %6904 = vmatpush.msra.mxu0 0.0
    %6905 = vmatpush.msra.mxu0 0.0
    %6906 = vmatpush.msra.mxu0 %v6889
    %6907 = vmatmul.f32.gmra.mxu0 %v6741
    %v6908 = vpop.f32.mrf.mxu0
    %v6909 = vadd.f32 0.0, %v6908
    %6910 = vmatmul.f32.gmra.mxu0 %v6744
    %v6911 = vpop.f32.mrf.mxu0
    %v6912 = vadd.f32 0.0, %v6911
    %6913 = vmatmul.f32.gmra.mxu0 %v6747
    %v6914 = vpop.f32.mrf.mxu0
    %v6915 = vadd.f32 0.0, %v6914
    %6916 = vmatmul.f32.gmra.mxu0 %v6750
    %v6917 = vpop.f32.mrf.mxu0
    %v6918 = vadd.f32 0.0, %v6917
    %6919 = vmatmul.f32.gmra.mxu0 %v6753
    %v6920 = vpop.f32.mrf.mxu0
    %v6921 = vadd.f32 0.0, %v6920
    %6922 = vmatmul.f32.gmra.mxu0 %v6756
    %v6923 = vpop.f32.mrf.mxu0
    %v6924 = vadd.f32 0.0, %v6923
    %6925 = vmatmul.f32.gmra.mxu0 %v6759
    %v6926 = vpop.f32.mrf.mxu0
    %v6927 = vadd.f32 0.0, %v6926
    %6928 = vmatmul.f32.gmra.mxu0 %v6762
    %v6929 = vpop.f32.mrf.mxu0
    %v6930 = vadd.f32 0.0, %v6929
    %6931 = vmatmul.f32.gmra.mxu0 %v6765
    %v6932 = vpop.f32.mrf.mxu0
    %v6933 = vadd.f32 0.0, %v6932
    %6934 = vmatmul.f32.gmra.mxu0 %v6768
    %v6935 = vpop.f32.mrf.mxu0
    %v6936 = vadd.f32 0.0, %v6935
    %6937 = vmatmul.f32.gmra.mxu0 %v6771
    %v6938 = vpop.f32.mrf.mxu0
    %v6939 = vadd.f32 0.0, %v6938
    %6940 = vmatmul.f32.gmra.mxu0 %v6774
    %v6941 = vpop.f32.mrf.mxu0
    %v6942 = vadd.f32 0.0, %v6941
    %6943 = vmatmul.f32.gmra.mxu0 %v6777
    %v6944 = vpop.f32.mrf.mxu0
    %v6945 = vadd.f32 0.0, %v6944
    %6946 = vmatmul.f32.gmra.mxu0 %v6780
    %v6947 = vpop.f32.mrf.mxu0
    %v6948 = vadd.f32 0.0, %v6947
    %6949 = vmatmul.f32.gmra.mxu0 %v6783
    %v6950 = vpop.f32.mrf.mxu0
    %v6951 = vadd.f32 0.0, %v6950
    %6952 = vmatmul.f32.gmra.mxu0 %v6786
    %v6953 = vpop.f32.mrf.mxu0
    %v6954 = vadd.f32 0.0, %v6953
    %6955 = vmatmul.f32.gmra.mxu0 %v6789
    %v6956 = vpop.f32.mrf.mxu0
    %v6957 = vadd.f32 0.0, %v6956
    %6958 = vmatmul.f32.gmra.mxu0 %v6792
    %v6959 = vpop.f32.mrf.mxu0
    %v6960 = vadd.f32 0.0, %v6959
    %6961 = vdwg.mxu0
    %v6962 = vsub.f32 %v6869, %v6909
    %v6963 = vsub.f32 %v6870, %v6912
    %v6964 = vsub.f32 %v6871, %v6915
    %v6965 = vsub.f32 %v6872, %v6918
    %v6966 = vsub.f32 %v6873, %v6921
    %v6967 = vsub.f32 %v6874, %v6924
    %v6968 = vsub.f32 %v6875, %v6927
    %v6969 = vsub.f32 %v6876, %v6930
    %v6970 = vsub.f32 %v6877, %v6933
    %v6971 = vsub.f32 %v6878, %v6936
    %v6972 = vsub.f32 %v6879, %v6939
    %v6973 = vsub.f32 %v6880, %v6942
    %v6974 = vsub.f32 %v6881, %v6945
    %v6975 = vsub.f32 %v6882, %v6948
    %v6976 = vsub.f32 %v6883, %v6951
    %v6977 = vsub.f32 %v6884, %v6954
    %v6978 = vsub.f32 %v6885, %v6957
    %v6979 = vsub.f32 %v6886, %v6960
    %6981 = vset.pattern.permute.xlu0 0
    %6982 = vperm.xlu0 %6981, %v6816
    %v6983 = vpop.permute.xlu0 %6982
    %6986 = vset.pattern.permute.xlu0 0
    %6987 = vperm.xlu0 %6986, %v6819
    %v6988 = vpop.permute.xlu0 %6987
    %6991 = vset.pattern.permute.xlu0 0
    %6992 = vperm.xlu0 %6991, %v6822
    %v6993 = vpop.permute.xlu0 %6992
    %6996 = vset.pattern.permute.xlu0 0
    %6997 = vperm.xlu0 %6996, %v6825
    %v6998 = vpop.permute.xlu0 %6997
    %7001 = vset.pattern.permute.xlu0 0
    %7002 = vperm.xlu0 %7001, %v6828
    %v7003 = vpop.permute.xlu0 %7002
    %7006 = vset.pattern.permute.xlu0 0
    %7007 = vperm.xlu0 %7006, %v6831
    %v7008 = vpop.permute.xlu0 %7007
    %7011 = vset.pattern.permute.xlu0 0
    %7012 = vperm.xlu0 %7011, %v6834
    %v7013 = vpop.permute.xlu0 %7012
    %7016 = vset.pattern.permute.xlu0 0
    %7017 = vperm.xlu0 %7016, %v6837
    %v7018 = vpop.permute.xlu0 %7017
    %7021 = vset.pattern.permute.xlu0 0
    %7022 = vperm.xlu0 %7021, %v6840
    %v7023 = vpop.permute.xlu0 %7022
    %7026 = vset.pattern.permute.xlu0 0
    %7027 = vperm.xlu0 %7026, %v6843
    %v7028 = vpop.permute.xlu0 %7027
    %7031 = vset.pattern.permute.xlu0 0
    %7032 = vperm.xlu0 %7031, %v6846
    %v7033 = vpop.permute.xlu0 %7032
    %7036 = vset.pattern.permute.xlu0 0
    %7037 = vperm.xlu0 %7036, %v6849
    %v7038 = vpop.permute.xlu0 %7037
    %7041 = vset.pattern.permute.xlu0 0
    %7042 = vperm.xlu0 %7041, %v6852
    %v7043 = vpop.permute.xlu0 %7042
    %7046 = vset.pattern.permute.xlu0 0
    %7047 = vperm.xlu0 %7046, %v6855
    %v7048 = vpop.permute.xlu0 %7047
    %7051 = vset.pattern.permute.xlu0 0
    %7052 = vperm.xlu0 %7051, %v6858
    %v7053 = vpop.permute.xlu0 %7052
    %7056 = vset.pattern.permute.xlu0 0
    %7057 = vperm.xlu0 %7056, %v6861
    %v7058 = vpop.permute.xlu0 %7057
    %7061 = vset.pattern.permute.xlu0 0
    %7062 = vperm.xlu0 %7061, %v6864
    %v7063 = vpop.permute.xlu0 %7062
    %7066 = vset.pattern.permute.xlu0 0
    %7067 = vperm.xlu0 %7066, %v6867
    %v7068 = vpop.permute.xlu0 %7067
    %v7070 = vmul.f32 %v6448, %v6983
    %v7071 = vmul.f32 %v6450, %v6988
    %v7072 = vmul.f32 %v6453, %v6993
    %v7073 = vmul.f32 %v6455, %v6998
    %v7074 = vmul.f32 %v6458, %v7003
    %v7075 = vmul.f32 %v6460, %v7008
    %v7076 = vmul.f32 %v6463, %v7013
    %v7077 = vmul.f32 %v6465, %v7018
    %v7078 = vmul.f32 %v6468, %v7023
    %v7079 = vmul.f32 %v6470, %v7028
    %v7080 = vmul.f32 %v6473, %v7033
    %v7081 = vmul.f32 %v6475, %v7038
    %v7082 = vmul.f32 %v6478, %v7043
    %v7083 = vmul.f32 %v6480, %v7048
    %v7084 = vmul.f32 %v6483, %v7053
    %v7085 = vmul.f32 %v6485, %v7058
    %v7086 = vmul.f32 %v6488, %v7063
    %v7087 = vmul.f32 %v6490, %v7068
    %7089 = vset.pattern.permute.xlu0 0
    %7090 = vperm.xlu0 %7089, %v6962
    %v7091 = vpop.permute.xlu0 %7090
    %7094 = vset.pattern.permute.xlu0 0
    %7095 = vperm.xlu0 %7094, %v6963
    %v7096 = vpop.permute.xlu0 %7095
    %7099 = vset.pattern.permute.xlu0 0
    %7100 = vperm.xlu0 %7099, %v6964
    %v7101 = vpop.permute.xlu0 %7100
    %7104 = vset.pattern.permute.xlu0 0
    %7105 = vperm.xlu0 %7104, %v6965
    %v7106 = vpop.permute.xlu0 %7105
    %7109 = vset.pattern.permute.xlu0 0
    %7110 = vperm.xlu0 %7109, %v6966
    %v7111 = vpop.permute.xlu0 %7110
    %7114 = vset.pattern.permute.xlu0 0
    %7115 = vperm.xlu0 %7114, %v6967
    %v7116 = vpop.permute.xlu0 %7115
    %7119 = vset.pattern.permute.xlu0 0
    %7120 = vperm.xlu0 %7119, %v6968
    %v7121 = vpop.permute.xlu0 %7120
    %7124 = vset.pattern.permute.xlu0 0
    %7125 = vperm.xlu0 %7124, %v6969
    %v7126 = vpop.permute.xlu0 %7125
    %7129 = vset.pattern.permute.xlu0 0
    %7130 = vperm.xlu0 %7129, %v6970
    %v7131 = vpop.permute.xlu0 %7130
    %7134 = vset.pattern.permute.xlu0 0
    %7135 = vperm.xlu0 %7134, %v6971
    %v7136 = vpop.permute.xlu0 %7135
    %7139 = vset.pattern.permute.xlu0 0
    %7140 = vperm.xlu0 %7139, %v6972
    %v7141 = vpop.permute.xlu0 %7140
    %7144 = vset.pattern.permute.xlu0 0
    %7145 = vperm.xlu0 %7144, %v6973
    %v7146 = vpop.permute.xlu0 %7145
    %7149 = vset.pattern.permute.xlu0 0
    %7150 = vperm.xlu0 %7149, %v6974
    %v7151 = vpop.permute.xlu0 %7150
    %7154 = vset.pattern.permute.xlu0 0
    %7155 = vperm.xlu0 %7154, %v6975
    %v7156 = vpop.permute.xlu0 %7155
    %7159 = vset.pattern.permute.xlu0 0
    %7160 = vperm.xlu0 %7159, %v6976
    %v7161 = vpop.permute.xlu0 %7160
    %7164 = vset.pattern.permute.xlu0 0
    %7165 = vperm.xlu0 %7164, %v6977
    %v7166 = vpop.permute.xlu0 %7165
    %7169 = vset.pattern.permute.xlu0 0
    %7170 = vperm.xlu0 %7169, %v6978
    %v7171 = vpop.permute.xlu0 %7170
    %7174 = vset.pattern.permute.xlu0 0
    %7175 = vperm.xlu0 %7174, %v6979
    %v7176 = vpop.permute.xlu0 %7175
    %v7178 = vadd.f32 %v7070, %v7091
    %v7179 = vadd.f32 %v7071, %v7096
    %v7180 = vadd.f32 %v7072, %v7101
    %v7181 = vadd.f32 %v7073, %v7106
    %v7182 = vadd.f32 %v7074, %v7111
    %v7183 = vadd.f32 %v7075, %v7116
    %v7184 = vadd.f32 %v7076, %v7121
    %v7185 = vadd.f32 %v7077, %v7126
    %v7186 = vadd.f32 %v7078, %v7131
    %v7187 = vadd.f32 %v7079, %v7136
    %v7188 = vadd.f32 %v7080, %v7141
    %v7189 = vadd.f32 %v7081, %v7146
    %v7190 = vadd.f32 %v7082, %v7151
    %v7191 = vadd.f32 %v7083, %v7156
    %v7192 = vadd.f32 %v7084, %v7161
    %v7193 = vadd.f32 %v7085, %v7166
    %v7194 = vadd.f32 %v7086, %v7171
    %v7195 = vadd.f32 %v7087, %v7176
    %v7196 = vmax.f32 %v7178, 0.0
    %v7197 = vmax.f32 %v7179, 0.0
    %v7198 = vmax.f32 %v7180, 0.0
    %v7199 = vmax.f32 %v7181, 0.0
    %v7200 = vmax.f32 %v7182, 0.0
    %v7201 = vmax.f32 %v7183, 0.0
    %v7202 = vmax.f32 %v7184, 0.0
    %v7203 = vmax.f32 %v7185, 0.0
    %v7204 = vmax.f32 %v7186, 0.0
    %v7205 = vmax.f32 %v7187, 0.0
    %v7206 = vmax.f32 %v7188, 0.0
    %v7207 = vmax.f32 %v7189, 0.0
    %v7208 = vmax.f32 %v7190, 0.0
    %v7209 = vmax.f32 %v7191, 0.0
    %v7210 = vmax.f32 %v7192, 0.0
    %v7211 = vmax.f32 %v7193, 0.0
    %v7212 = vmax.f32 %v7194, 0.0
    %v7213 = vmax.f32 %v7195, 0.0
    %v7214 = vpack.c.bf16 %v7197, %v7196
    %v7215 = vpack.c.bf16 %v7199, %v7198
    %v7216 = vpack.c.bf16 %v7201, %v7200
    %v7217 = vpack.c.bf16 %v7203, %v7202
    %v7218 = vpack.c.bf16 %v7205, %v7204
    %v7219 = vpack.c.bf16 %v7207, %v7206
    %v7220 = vpack.c.bf16 %v7209, %v7208
    %v7221 = vpack.c.bf16 %v7211, %v7210
    %v7222 = vpack.c.bf16 %v7213, %v7212
    %v7223 = vld [vmem:[%s12] sm:$0xf]
    %v7224 = vld [vmem:[%s12 + $0x4] sm:$0xf]
    %v7225 = vld [vmem:[%s12 + $0x8] sm:$0xf]
    %v7226 = vld [vmem:[%s12 + $0xc] sm:$0xf]
    %v7227 = vld [vmem:[%s12 + $0x10] sm:$0xf]
    %v7228 = vld [vmem:[%s12 + $0x14] sm:$0xf]
    %v7229 = vld [vmem:[%s12 + $0x18] sm:$0xf]
    %v7230 = vld [vmem:[%s12 + $0x1c] sm:$0xf]
    %v7231 = vld [vmem:[%s12 + $0x20] sm:$0x1]
    %v7241 = vunpack.c.l.b16 %v7223
    %v7242 = vunpack.c.l.b16 %v7224
    %v7243 = vunpack.c.l.b16 %v7225
    %v7244 = vunpack.c.l.b16 %v7226
    %v7245 = vunpack.c.l.b16 %v7227
    %v7246 = vunpack.c.l.b16 %v7228
    %v7247 = vunpack.c.l.b16 %v7229
    %v7248 = vunpack.c.l.b16 %v7230
    %v7249 = vunpack.c.l.b16 %v7231
    %v7250 = vpack.c.b16 %v7242, %v7241
    %v7251 = vpack.c.b16 %v7244, %v7243
    %v7252 = vpack.c.b16 %v7246, %v7245
    %v7253 = vpack.c.b16 %v7248, %v7247
    %v7254 = vpack.c.b16 %v7249, %v7249
    %v7260 = vsel %vm6492, %v7214, 0
    %v7263 = vsel %vm6492, %v7215, 0
    %v7266 = vsel %vm6492, %v7216, 0
    %v7269 = vsel %vm6492, %v7217, 0
    %v7272 = vsel %vm6492, %v7218, 0
    %v7275 = vsel %vm6492, %v7219, 0
    %v7278 = vsel %vm6492, %v7220, 0
    %v7281 = vsel %vm6492, %v7221, 0
    %v7284 = vsel %vm6492, %v7222, 0
    %vm7286 = vcmask 1040384
    %v7288 = vsel %vm7286, %v7254, 0
    %7290 = vmatpush.bf16.msra.mxu0 0
    %7291 = vmatpush.bf16.msra.mxu0 0
    %7292 = vmatpush.bf16.msra.mxu0 0
    %7293 = vmatpush.bf16.msra.mxu0 %v7288
    %7294 = vmatpush.bf16.msra.mxu0 %v7253
    %7295 = vmatpush.bf16.msra.mxu0 %v7252
    %7296 = vmatpush.bf16.msra.mxu0 %v7251
    %7297 = vmatpush.bf16.msra.mxu0 %v7250
    %7298 = vmatmul.bf16.gmra.mxu0 %v7260
    %v7299 = vpop.f32.mrf.mxu0
    %v7300 = vadd.f32 0.0, %v7299
    %v7301 = vpop.f32.mrf.mxu0
    %v7302 = vadd.f32 0.0, %v7301
    %7303 = vmatmul.bf16.gmra.mxu0 %v7263
    %v7304 = vpop.f32.mrf.mxu0
    %v7305 = vadd.f32 0.0, %v7304
    %v7306 = vpop.f32.mrf.mxu0
    %v7307 = vadd.f32 0.0, %v7306
    %7308 = vmatmul.bf16.gmra.mxu0 %v7266
    %v7309 = vpop.f32.mrf.mxu0
    %v7310 = vadd.f32 0.0, %v7309
    %v7311 = vpop.f32.mrf.mxu0
    %v7312 = vadd.f32 0.0, %v7311
    %7313 = vmatmul.bf16.gmra.mxu0 %v7269
    %v7314 = vpop.f32.mrf.mxu0
    %v7315 = vadd.f32 0.0, %v7314
    %v7316 = vpop.f32.mrf.mxu0
    %v7317 = vadd.f32 0.0, %v7316
    %7318 = vmatmul.bf16.gmra.mxu0 %v7272
    %v7319 = vpop.f32.mrf.mxu0
    %v7320 = vadd.f32 0.0, %v7319
    %v7321 = vpop.f32.mrf.mxu0
    %v7322 = vadd.f32 0.0, %v7321
    %7323 = vmatmul.bf16.gmra.mxu0 %v7275
    %v7324 = vpop.f32.mrf.mxu0
    %v7325 = vadd.f32 0.0, %v7324
    %v7326 = vpop.f32.mrf.mxu0
    %v7327 = vadd.f32 0.0, %v7326
    %7328 = vmatmul.bf16.gmra.mxu0 %v7278
    %v7329 = vpop.f32.mrf.mxu0
    %v7330 = vadd.f32 0.0, %v7329
    %v7331 = vpop.f32.mrf.mxu0
    %v7332 = vadd.f32 0.0, %v7331
    %7333 = vmatmul.bf16.gmra.mxu0 %v7281
    %v7334 = vpop.f32.mrf.mxu0
    %v7335 = vadd.f32 0.0, %v7334
    %v7336 = vpop.f32.mrf.mxu0
    %v7337 = vadd.f32 0.0, %v7336
    %7338 = vmatmul.bf16.gmra.mxu0 %v7284
    %v7339 = vpop.f32.mrf.mxu0
    %v7340 = vadd.f32 0.0, %v7339
    %v7341 = vpop.f32.mrf.mxu0
    %v7342 = vadd.f32 0.0, %v7341
    %7343 = vdwg.mxu0
    %s7344 = scalar_lea.vmem %s12, 36
    %v7345 = vld [vmem:[%s7344] sm:$0xf]
    %v7346 = vld [vmem:[%s7344 + $0x4] sm:$0xf]
    %v7347 = vld [vmem:[%s7344 + $0x8] sm:$0xf]
    %v7348 = vld [vmem:[%s7344 + $0xc] sm:$0xf]
    %v7349 = vld [vmem:[%s7344 + $0x10] sm:$0xf]
    %v7350 = vld [vmem:[%s7344 + $0x14] sm:$0xf]
    %v7351 = vld [vmem:[%s7344 + $0x18] sm:$0xf]
    %v7352 = vld [vmem:[%s7344 + $0x1c] sm:$0xf]
    %v7353 = vld [vmem:[%s7344 + $0x20] sm:$0x1]
    %v7363 = vunpack.c.l.b16 %v7345
    %v7364 = vunpack.c.l.b16 %v7346
    %v7365 = vunpack.c.l.b16 %v7347
    %v7366 = vunpack.c.l.b16 %v7348
    %v7367 = vunpack.c.l.b16 %v7349
    %v7368 = vunpack.c.l.b16 %v7350
    %v7369 = vunpack.c.l.b16 %v7351
    %v7370 = vunpack.c.l.b16 %v7352
    %v7371 = vunpack.c.l.b16 %v7353
    %v7372 = vpack.c.b16 %v7364, %v7363
    %v7373 = vpack.c.b16 %v7366, %v7365
    %v7374 = vpack.c.b16 %v7368, %v7367
    %v7375 = vpack.c.b16 %v7370, %v7369
    %v7376 = vpack.c.b16 %v7371, %v7371
    %v7382 = vsel %vm7286, %v7376, 0
    %7384 = vmatpush.bf16.msra.mxu0 0
    %7385 = vmatpush.bf16.msra.mxu0 0
    %7386 = vmatpush.bf16.msra.mxu0 0
    %7387 = vmatpush.bf16.msra.mxu0 %v7382
    %7388 = vmatpush.bf16.msra.mxu0 %v7375
    %7389 = vmatpush.bf16.msra.mxu0 %v7374
    %7390 = vmatpush.bf16.msra.mxu0 %v7373
    %7391 = vmatpush.bf16.msra.mxu0 %v7372
    %7392 = vmatmul.bf16.gmra.mxu0 %v7260
    %v7393 = vpop.f32.mrf.mxu0
    %v7394 = vadd.f32 0.0, %v7393
    %v7395 = vpop.f32.mrf.mxu0
    %v7396 = vadd.f32 0.0, %v7395
    %7397 = vmatmul.bf16.gmra.mxu0 %v7263
    %v7398 = vpop.f32.mrf.mxu0
    %v7399 = vadd.f32 0.0, %v7398
    %v7400 = vpop.f32.mrf.mxu0
    %v7401 = vadd.f32 0.0, %v7400
    %7402 = vmatmul.bf16.gmra.mxu0 %v7266
    %v7403 = vpop.f32.mrf.mxu0
    %v7404 = vadd.f32 0.0, %v7403
    %v7405 = vpop.f32.mrf.mxu0
    %v7406 = vadd.f32 0.0, %v7405
    %7407 = vmatmul.bf16.gmra.mxu0 %v7269
    %v7408 = vpop.f32.mrf.mxu0
    %v7409 = vadd.f32 0.0, %v7408
    %v7410 = vpop.f32.mrf.mxu0
    %v7411 = vadd.f32 0.0, %v7410
    %7412 = vmatmul.bf16.gmra.mxu0 %v7272
    %v7413 = vpop.f32.mrf.mxu0
    %v7414 = vadd.f32 0.0, %v7413
    %v7415 = vpop.f32.mrf.mxu0
    %v7416 = vadd.f32 0.0, %v7415
    %7417 = vmatmul.bf16.gmra.mxu0 %v7275
    %v7418 = vpop.f32.mrf.mxu0
    %v7419 = vadd.f32 0.0, %v7418
    %v7420 = vpop.f32.mrf.mxu0
    %v7421 = vadd.f32 0.0, %v7420
    %7422 = vmatmul.bf16.gmra.mxu0 %v7278
    %v7423 = vpop.f32.mrf.mxu0
    %v7424 = vadd.f32 0.0, %v7423
    %v7425 = vpop.f32.mrf.mxu0
    %v7426 = vadd.f32 0.0, %v7425
    %7427 = vmatmul.bf16.gmra.mxu0 %v7281
    %v7428 = vpop.f32.mrf.mxu0
    %v7429 = vadd.f32 0.0, %v7428
    %v7430 = vpop.f32.mrf.mxu0
    %v7431 = vadd.f32 0.0, %v7430
    %7432 = vmatmul.bf16.gmra.mxu0 %v7284
    %v7433 = vpop.f32.mrf.mxu0
    %v7434 = vadd.f32 0.0, %v7433
    %v7435 = vpop.f32.mrf.mxu0
    %v7436 = vadd.f32 0.0, %v7435
    %7437 = vdwg.mxu0
    %s7438 = scalar_lea.vmem %s12, 72
    %v7439 = vld [vmem:[%s7438] sm:$0xf]
    %v7440 = vld [vmem:[%s7438 + $0x4] sm:$0xf]
    %v7441 = vld [vmem:[%s7438 + $0x8] sm:$0xf]
    %v7442 = vld [vmem:[%s7438 + $0xc] sm:$0xf]
    %v7443 = vld [vmem:[%s7438 + $0x10] sm:$0xf]
    %v7444 = vld [vmem:[%s7438 + $0x14] sm:$0xf]
    %v7445 = vld [vmem:[%s7438 + $0x18] sm:$0xf]
    %v7446 = vld [vmem:[%s7438 + $0x1c] sm:$0xf]
    %v7447 = vld [vmem:[%s7438 + $0x20] sm:$0x1]
    %v7457 = vunpack.c.l.b16 %v7439
    %v7458 = vunpack.c.l.b16 %v7440
    %v7459 = vunpack.c.l.b16 %v7441
    %v7460 = vunpack.c.l.b16 %v7442
    %v7461 = vunpack.c.l.b16 %v7443
    %v7462 = vunpack.c.l.b16 %v7444
    %v7463 = vunpack.c.l.b16 %v7445
    %v7464 = vunpack.c.l.b16 %v7446
    %v7465 = vunpack.c.l.b16 %v7447
    %v7466 = vpack.c.b16 %v7458, %v7457
    %v7467 = vpack.c.b16 %v7460, %v7459
    %v7468 = vpack.c.b16 %v7462, %v7461
    %v7469 = vpack.c.b16 %v7464, %v7463
    %v7470 = vpack.c.b16 %v7465, %v7465
    %v7476 = vsel %vm7286, %v7470, 0
    %7478 = vmatpush.bf16.msra.mxu0 0
    %7479 = vmatpush.bf16.msra.mxu0 0
    %7480 = vmatpush.bf16.msra.mxu0 0
    %7481 = vmatpush.bf16.msra.mxu0 %v7476
    %7482 = vmatpush.bf16.msra.mxu0 %v7469
    %7483 = vmatpush.bf16.msra.mxu0 %v7468
    %7484 = vmatpush.bf16.msra.mxu0 %v7467
    %7485 = vmatpush.bf16.msra.mxu0 %v7466
    %7486 = vmatmul.bf16.gmra.mxu0 %v7260
    %v7487 = vpop.f32.mrf.mxu0
    %v7488 = vadd.f32 0.0, %v7487
    %v7489 = vpop.f32.mrf.mxu0
    %v7490 = vadd.f32 0.0, %v7489
    %7491 = vmatmul.bf16.gmra.mxu0 %v7263
    %v7492 = vpop.f32.mrf.mxu0
    %v7493 = vadd.f32 0.0, %v7492
    %v7494 = vpop.f32.mrf.mxu0
    %v7495 = vadd.f32 0.0, %v7494
    %7496 = vmatmul.bf16.gmra.mxu0 %v7266
    %v7497 = vpop.f32.mrf.mxu0
    %v7498 = vadd.f32 0.0, %v7497
    %v7499 = vpop.f32.mrf.mxu0
    %v7500 = vadd.f32 0.0, %v7499
    %7501 = vmatmul.bf16.gmra.mxu0 %v7269
    %v7502 = vpop.f32.mrf.mxu0
    %v7503 = vadd.f32 0.0, %v7502
    %v7504 = vpop.f32.mrf.mxu0
    %v7505 = vadd.f32 0.0, %v7504
    %7506 = vmatmul.bf16.gmra.mxu0 %v7272
    %v7507 = vpop.f32.mrf.mxu0
    %v7508 = vadd.f32 0.0, %v7507
    %v7509 = vpop.f32.mrf.mxu0
    %v7510 = vadd.f32 0.0, %v7509
    %7511 = vmatmul.bf16.gmra.mxu0 %v7275
    %v7512 = vpop.f32.mrf.mxu0
    %v7513 = vadd.f32 0.0, %v7512
    %v7514 = vpop.f32.mrf.mxu0
    %v7515 = vadd.f32 0.0, %v7514
    %7516 = vmatmul.bf16.gmra.mxu0 %v7278
    %v7517 = vpop.f32.mrf.mxu0
    %v7518 = vadd.f32 0.0, %v7517
    %v7519 = vpop.f32.mrf.mxu0
    %v7520 = vadd.f32 0.0, %v7519
    %7521 = vmatmul.bf16.gmra.mxu0 %v7281
    %v7522 = vpop.f32.mrf.mxu0
    %v7523 = vadd.f32 0.0, %v7522
    %v7524 = vpop.f32.mrf.mxu0
    %v7525 = vadd.f32 0.0, %v7524
    %7526 = vmatmul.bf16.gmra.mxu0 %v7284
    %v7527 = vpop.f32.mrf.mxu0
    %v7528 = vadd.f32 0.0, %v7527
    %v7529 = vpop.f32.mrf.mxu0
    %v7530 = vadd.f32 0.0, %v7529
    %7531 = vdwg.mxu0
    %s7532 = scalar_lea.vmem %s12, 108
    %v7533 = vld [vmem:[%s7532] sm:$0xf]
    %v7534 = vld [vmem:[%s7532 + $0x4] sm:$0xf]
    %v7535 = vld [vmem:[%s7532 + $0x8] sm:$0xf]
    %v7536 = vld [vmem:[%s7532 + $0xc] sm:$0xf]
    %v7537 = vld [vmem:[%s7532 + $0x10] sm:$0xf]
    %v7538 = vld [vmem:[%s7532 + $0x14] sm:$0xf]
    %v7539 = vld [vmem:[%s7532 + $0x18] sm:$0xf]
    %v7540 = vld [vmem:[%s7532 + $0x1c] sm:$0xf]
    %v7541 = vld [vmem:[%s7532 + $0x20] sm:$0x1]
    %v7551 = vunpack.c.l.b16 %v7533
    %v7552 = vunpack.c.l.b16 %v7534
    %v7553 = vunpack.c.l.b16 %v7535
    %v7554 = vunpack.c.l.b16 %v7536
    %v7555 = vunpack.c.l.b16 %v7537
    %v7556 = vunpack.c.l.b16 %v7538
    %v7557 = vunpack.c.l.b16 %v7539
    %v7558 = vunpack.c.l.b16 %v7540
    %v7559 = vunpack.c.l.b16 %v7541
    %v7560 = vpack.c.b16 %v7552, %v7551
    %v7561 = vpack.c.b16 %v7554, %v7553
    %v7562 = vpack.c.b16 %v7556, %v7555
    %v7563 = vpack.c.b16 %v7558, %v7557
    %v7564 = vpack.c.b16 %v7559, %v7559
    %v7570 = vsel %vm7286, %v7564, 0
    %7572 = vmatpush.bf16.msra.mxu0 0
    %7573 = vmatpush.bf16.msra.mxu0 0
    %7574 = vmatpush.bf16.msra.mxu0 0
    %7575 = vmatpush.bf16.msra.mxu0 %v7570
    %7576 = vmatpush.bf16.msra.mxu0 %v7563
    %7577 = vmatpush.bf16.msra.mxu0 %v7562
    %7578 = vmatpush.bf16.msra.mxu0 %v7561
    %7579 = vmatpush.bf16.msra.mxu0 %v7560
    %7580 = vmatmul.bf16.gmra.mxu0 %v7260
    %v7581 = vpop.f32.mrf.mxu0
    %v7582 = vadd.f32 0.0, %v7581
    %v7583 = vpop.f32.mrf.mxu0
    %v7584 = vadd.f32 0.0, %v7583
    %7585 = vmatmul.bf16.gmra.mxu0 %v7263
    %v7586 = vpop.f32.mrf.mxu0
    %v7587 = vadd.f32 0.0, %v7586
    %v7588 = vpop.f32.mrf.mxu0
    %v7589 = vadd.f32 0.0, %v7588
    %7590 = vmatmul.bf16.gmra.mxu0 %v7266
    %v7591 = vpop.f32.mrf.mxu0
    %v7592 = vadd.f32 0.0, %v7591
    %v7593 = vpop.f32.mrf.mxu0
    %v7594 = vadd.f32 0.0, %v7593
    %7595 = vmatmul.bf16.gmra.mxu0 %v7269
    %v7596 = vpop.f32.mrf.mxu0
    %v7597 = vadd.f32 0.0, %v7596
    %v7598 = vpop.f32.mrf.mxu0
    %v7599 = vadd.f32 0.0, %v7598
    %7600 = vmatmul.bf16.gmra.mxu0 %v7272
    %v7601 = vpop.f32.mrf.mxu0
    %v7602 = vadd.f32 0.0, %v7601
    %v7603 = vpop.f32.mrf.mxu0
    %v7604 = vadd.f32 0.0, %v7603
    %7605 = vmatmul.bf16.gmra.mxu0 %v7275
    %v7606 = vpop.f32.mrf.mxu0
    %v7607 = vadd.f32 0.0, %v7606
    %v7608 = vpop.f32.mrf.mxu0
    %v7609 = vadd.f32 0.0, %v7608
    %7610 = vmatmul.bf16.gmra.mxu0 %v7278
    %v7611 = vpop.f32.mrf.mxu0
    %v7612 = vadd.f32 0.0, %v7611
    %v7613 = vpop.f32.mrf.mxu0
    %v7614 = vadd.f32 0.0, %v7613
    %7615 = vmatmul.bf16.gmra.mxu0 %v7281
    %v7616 = vpop.f32.mrf.mxu0
    %v7617 = vadd.f32 0.0, %v7616
    %v7618 = vpop.f32.mrf.mxu0
    %v7619 = vadd.f32 0.0, %v7618
    %7620 = vmatmul.bf16.gmra.mxu0 %v7284
    %v7621 = vpop.f32.mrf.mxu0
    %v7622 = vadd.f32 0.0, %v7621
    %v7623 = vpop.f32.mrf.mxu0
    %v7624 = vadd.f32 0.0, %v7623
    %7625 = vdwg.mxu0
    %s7626 = scalar_lea.vmem %s12, 144
    %v7627 = vld [vmem:[%s7626] sm:$0xf]
    %v7628 = vld [vmem:[%s7626 + $0x4] sm:$0xf]
    %v7629 = vld [vmem:[%s7626 + $0x8] sm:$0xf]
    %v7630 = vld [vmem:[%s7626 + $0xc] sm:$0xf]
    %v7631 = vld [vmem:[%s7626 + $0x10] sm:$0xf]
    %v7632 = vld [vmem:[%s7626 + $0x14] sm:$0xf]
    %v7633 = vld [vmem:[%s7626 + $0x18] sm:$0xf]
    %v7634 = vld [vmem:[%s7626 + $0x1c] sm:$0xf]
    %v7635 = vld [vmem:[%s7626 + $0x20] sm:$0x1]
    %v7645 = vunpack.c.l.b16 %v7627
    %v7646 = vunpack.c.l.b16 %v7628
    %v7647 = vunpack.c.l.b16 %v7629
    %v7648 = vunpack.c.l.b16 %v7630
    %v7649 = vunpack.c.l.b16 %v7631
    %v7650 = vunpack.c.l.b16 %v7632
    %v7651 = vunpack.c.l.b16 %v7633
    %v7652 = vunpack.c.l.b16 %v7634
    %v7653 = vunpack.c.l.b16 %v7635
    %v7654 = vpack.c.b16 %v7646, %v7645
    %v7655 = vpack.c.b16 %v7648, %v7647
    %v7656 = vpack.c.b16 %v7650, %v7649
    %v7657 = vpack.c.b16 %v7652, %v7651
    %v7658 = vpack.c.b16 %v7653, %v7653
    %v7664 = vsel %vm7286, %v7658, 0
    %7666 = vmatpush.bf16.msra.mxu0 0
    %7667 = vmatpush.bf16.msra.mxu0 0
    %7668 = vmatpush.bf16.msra.mxu0 0
    %7669 = vmatpush.bf16.msra.mxu0 %v7664
    %7670 = vmatpush.bf16.msra.mxu0 %v7657
    %7671 = vmatpush.bf16.msra.mxu0 %v7656
    %7672 = vmatpush.bf16.msra.mxu0 %v7655
    %7673 = vmatpush.bf16.msra.mxu0 %v7654
    %7674 = vmatmul.bf16.gmra.mxu0 %v7260
    %v7675 = vpop.f32.mrf.mxu0
    %v7676 = vadd.f32 0.0, %v7675
    %v7677 = vpop.f32.mrf.mxu0
    %v7678 = vadd.f32 0.0, %v7677
    %7679 = vmatmul.bf16.gmra.mxu0 %v7263
    %v7680 = vpop.f32.mrf.mxu0
    %v7681 = vadd.f32 0.0, %v7680
    %v7682 = vpop.f32.mrf.mxu0
    %v7683 = vadd.f32 0.0, %v7682
    %7684 = vmatmul.bf16.gmra.mxu0 %v7266
    %v7685 = vpop.f32.mrf.mxu0
    %v7686 = vadd.f32 0.0, %v7685
    %v7687 = vpop.f32.mrf.mxu0
    %v7688 = vadd.f32 0.0, %v7687
    %7689 = vmatmul.bf16.gmra.mxu0 %v7269
    %v7690 = vpop.f32.mrf.mxu0
    %v7691 = vadd.f32 0.0, %v7690
    %v7692 = vpop.f32.mrf.mxu0
    %v7693 = vadd.f32 0.0, %v7692
    %7694 = vmatmul.bf16.gmra.mxu0 %v7272
    %v7695 = vpop.f32.mrf.mxu0
    %v7696 = vadd.f32 0.0, %v7695
    %v7697 = vpop.f32.mrf.mxu0
    %v7698 = vadd.f32 0.0, %v7697
    %7699 = vmatmul.bf16.gmra.mxu0 %v7275
    %v7700 = vpop.f32.mrf.mxu0
    %v7701 = vadd.f32 0.0, %v7700
    %v7702 = vpop.f32.mrf.mxu0
    %v7703 = vadd.f32 0.0, %v7702
    %7704 = vmatmul.bf16.gmra.mxu0 %v7278
    %v7705 = vpop.f32.mrf.mxu0
    %v7706 = vadd.f32 0.0, %v7705
    %v7707 = vpop.f32.mrf.mxu0
    %v7708 = vadd.f32 0.0, %v7707
    %7709 = vmatmul.bf16.gmra.mxu0 %v7281
    %v7710 = vpop.f32.mrf.mxu0
    %v7711 = vadd.f32 0.0, %v7710
    %v7712 = vpop.f32.mrf.mxu0
    %v7713 = vadd.f32 0.0, %v7712
    %7714 = vmatmul.bf16.gmra.mxu0 %v7284
    %v7715 = vpop.f32.mrf.mxu0
    %v7716 = vadd.f32 0.0, %v7715
    %v7717 = vpop.f32.mrf.mxu0
    %v7718 = vadd.f32 0.0, %v7717
    %7719 = vdwg.mxu0
    %v7720 = vpack.c.bf16 %v7302, %v7300
    %v7721 = vpack.c.bf16 %v7307, %v7305
    %v7722 = vpack.c.bf16 %v7312, %v7310
    %v7723 = vpack.c.bf16 %v7317, %v7315
    %v7724 = vpack.c.bf16 %v7322, %v7320
    %v7725 = vpack.c.bf16 %v7327, %v7325
    %v7726 = vpack.c.bf16 %v7332, %v7330
    %v7727 = vpack.c.bf16 %v7337, %v7335
    %v7728 = vpack.c.bf16 %v7342, %v7340
    %v7729 = vpack.c.bf16 %v7396, %v7394
    %v7730 = vpack.c.bf16 %v7401, %v7399
    %v7731 = vpack.c.bf16 %v7406, %v7404
    %v7732 = vpack.c.bf16 %v7411, %v7409
    %v7733 = vpack.c.bf16 %v7416, %v7414
    %v7734 = vpack.c.bf16 %v7421, %v7419
    %v7735 = vpack.c.bf16 %v7426, %v7424
    %v7736 = vpack.c.bf16 %v7431, %v7429
    %v7737 = vpack.c.bf16 %v7436, %v7434
    %v7738 = vpack.c.bf16 %v7490, %v7488
    %v7739 = vpack.c.bf16 %v7495, %v7493
    %v7740 = vpack.c.bf16 %v7500, %v7498
    %v7741 = vpack.c.bf16 %v7505, %v7503
    %v7742 = vpack.c.bf16 %v7510, %v7508
    %v7743 = vpack.c.bf16 %v7515, %v7513
    %v7744 = vpack.c.bf16 %v7520, %v7518
    %v7745 = vpack.c.bf16 %v7525, %v7523
    %v7746 = vpack.c.bf16 %v7530, %v7528
    %v7747 = vpack.c.bf16 %v7584, %v7582
    %v7748 = vpack.c.bf16 %v7589, %v7587
    %v7749 = vpack.c.bf16 %v7594, %v7592
    %v7750 = vpack.c.bf16 %v7599, %v7597
    %v7751 = vpack.c.bf16 %v7604, %v7602
    %v7752 = vpack.c.bf16 %v7609, %v7607
    %v7753 = vpack.c.bf16 %v7614, %v7612
    %v7754 = vpack.c.bf16 %v7619, %v7617
    %v7755 = vpack.c.bf16 %v7624, %v7622
    %v7756 = vpack.c.bf16 %v7678, %v7676
    %v7757 = vpack.c.bf16 %v7683, %v7681
    %v7758 = vpack.c.bf16 %v7688, %v7686
    %v7759 = vpack.c.bf16 %v7693, %v7691
    %v7760 = vpack.c.bf16 %v7698, %v7696
    %v7761 = vpack.c.bf16 %v7703, %v7701
    %v7762 = vpack.c.bf16 %v7708, %v7706
    %v7763 = vpack.c.bf16 %v7713, %v7711
    %v7764 = vpack.c.bf16 %v7718, %v7716
    %v7765 = vld [vmem:[%s11] sm:$0xff]
    %v7766 = vld [vmem:[%s11 + $0x8] sm:$0xff]
    %v7767 = vld [vmem:[%s11 + $0x10] sm:$0xff]
    %v7768 = vld [vmem:[%s11 + $0x18] sm:$0xff]
    %v7769 = vld [vmem:[%s11 + $0x20] sm:$0xff]
    %v7770 = vld [vmem:[%s11 + $0x28] sm:$0xff]
    %v7771 = vld [vmem:[%s11 + $0x30] sm:$0xff]
    %v7772 = vld [vmem:[%s11 + $0x38] sm:$0xff]
    %v7773 = vld [vmem:[%s11 + $0x40] sm:$0xff]
    %v7774 = vld [vmem:[%s11 + $0x48] sm:$0xff]
    %v7775 = vld [vmem:[%s11 + $0x50] sm:$0xff]
    %v7776 = vld [vmem:[%s11 + $0x58] sm:$0xff]
    %v7777 = vld [vmem:[%s11 + $0x60] sm:$0xff]
    %v7778 = vld [vmem:[%s11 + $0x68] sm:$0xff]
    %v7779 = vld [vmem:[%s11 + $0x70] sm:$0xff]
    %v7780 = vld [vmem:[%s11 + $0x78] sm:$0xff]
    %v7781 = vld [vmem:[%s11 + $0x80] sm:$0xff]
    %v7782 = vld [vmem:[%s11 + $0x88] sm:$0xff]
    %v7783 = vld [vmem:[%s11 + $0x90] sm:$0xff]
    %v7784 = vld [vmem:[%s11 + $0x98] sm:$0xff]
    %v7785 = vld [vmem:[%s11 + $0xa0] sm:$0xff]
    %v7786 = vld [vmem:[%s11 + $0xa8] sm:$0xff]
    %v7787 = vld [vmem:[%s11 + $0xb0] sm:$0xff]
    %v7788 = vld [vmem:[%s11 + $0xb8] sm:$0xff]
    %v7789 = vld [vmem:[%s11 + $0xc0] sm:$0xff]
    %v7790 = vld [vmem:[%s11 + $0xc8] sm:$0xff]
    %v7791 = vld [vmem:[%s11 + $0xd0] sm:$0xff]
    %v7792 = vld [vmem:[%s11 + $0xd8] sm:$0xff]
    %v7793 = vld [vmem:[%s11 + $0xe0] sm:$0xff]
    %v7794 = vld [vmem:[%s11 + $0xe8] sm:$0xff]
    %v7795 = vld [vmem:[%s11 + $0xf0] sm:$0xff]
    %v7796 = vld [vmem:[%s11 + $0xf8] sm:$0xff]
    %v7797 = vld [vmem:[%s11 + $0x100] sm:$0xff]
    %v7798 = vld [vmem:[%s11 + $0x108] sm:$0xff]
    %v7799 = vld [vmem:[%s11 + $0x110] sm:$0xff]
    %v7800 = vld [vmem:[%s11 + $0x118] sm:$0xff]
    %v7801 = vld [vmem:[%s11 + $0x120] sm:$0xff]
    %v7802 = vld [vmem:[%s11 + $0x128] sm:$0xff]
    %v7803 = vld [vmem:[%s11 + $0x130] sm:$0xff]
    %v7804 = vld [vmem:[%s11 + $0x138] sm:$0xff]
    %v7805 = vld [vmem:[%s11 + $0x140] sm:$0xff]
    %v7806 = vld [vmem:[%s11 + $0x148] sm:$0xff]
    %v7807 = vld [vmem:[%s11 + $0x150] sm:$0xff]
    %v7808 = vld [vmem:[%s11 + $0x158] sm:$0xff]
    %v7809 = vld [vmem:[%s11 + $0x160] sm:$0xff]
    %v7810 = vld [vmem:[%s11 + $0x168] sm:$0xff]
    %v7811 = vld [vmem:[%s11 + $0x170] sm:$0xff]
    %v7812 = vld [vmem:[%s11 + $0x178] sm:$0xff]
    %v7813 = vld [vmem:[%s11 + $0x180] sm:$0xff]
    %v7814 = vld [vmem:[%s11 + $0x188] sm:$0xff]
    %v7815 = vld [vmem:[%s11 + $0x190] sm:$0xff]
    %v7816 = vld [vmem:[%s11 + $0x198] sm:$0xff]
    %v7817 = vld [vmem:[%s11 + $0x1a0] sm:$0xff]
    %v7818 = vld [vmem:[%s11 + $0x1a8] sm:$0xff]
    %v7873 = vunpack.c.l.b16 %v7765
    %v7874 = vunpack.c.h.b16 %v7765
    %v7875 = vunpack.c.l.b16 %v7766
    %v7876 = vunpack.c.h.b16 %v7766
    %v7877 = vunpack.c.l.b16 %v7767
    %v7878 = vunpack.c.h.b16 %v7767
    %v7879 = vunpack.c.l.b16 %v7768
    %v7880 = vunpack.c.h.b16 %v7768
    %v7881 = vunpack.c.l.b16 %v7769
    %v7882 = vunpack.c.h.b16 %v7769
    %v7883 = vunpack.c.l.b16 %v7770
    %v7884 = vunpack.c.h.b16 %v7770
    %v7885 = vunpack.c.l.b16 %v7771
    %v7886 = vunpack.c.h.b16 %v7771
    %v7887 = vunpack.c.l.b16 %v7772
    %v7888 = vunpack.c.h.b16 %v7772
    %v7889 = vunpack.c.l.b16 %v7773
    %v7890 = vunpack.c.h.b16 %v7773
    %v7891 = vunpack.c.l.b16 %v7774
    %v7892 = vunpack.c.h.b16 %v7774
    %v7893 = vunpack.c.l.b16 %v7775
    %v7894 = vunpack.c.h.b16 %v7775
    %v7895 = vunpack.c.l.b16 %v7776
    %v7896 = vunpack.c.h.b16 %v7776
    %v7897 = vunpack.c.l.b16 %v7777
    %v7898 = vunpack.c.h.b16 %v7777
    %v7899 = vunpack.c.l.b16 %v7778
    %v7900 = vunpack.c.h.b16 %v7778
    %v7901 = vunpack.c.l.b16 %v7779
    %v7902 = vunpack.c.h.b16 %v7779
    %v7903 = vunpack.c.l.b16 %v7780
    %v7904 = vunpack.c.h.b16 %v7780
    %v7905 = vunpack.c.l.b16 %v7781
    %v7906 = vunpack.c.h.b16 %v7781
    %v7907 = vunpack.c.l.b16 %v7782
    %v7908 = vunpack.c.h.b16 %v7782
    %v7909 = vunpack.c.l.b16 %v7783
    %v7910 = vunpack.c.h.b16 %v7783
    %v7911 = vunpack.c.l.b16 %v7784
    %v7912 = vunpack.c.h.b16 %v7784
    %v7913 = vunpack.c.l.b16 %v7785
    %v7914 = vunpack.c.h.b16 %v7785
    %v7915 = vunpack.c.l.b16 %v7786
    %v7916 = vunpack.c.h.b16 %v7786
    %v7917 = vunpack.c.l.b16 %v7787
    %v7918 = vunpack.c.h.b16 %v7787
    %v7919 = vunpack.c.l.b16 %v7788
    %v7920 = vunpack.c.h.b16 %v7788
    %v7921 = vunpack.c.l.b16 %v7789
    %v7922 = vunpack.c.h.b16 %v7789
    %v7923 = vunpack.c.l.b16 %v7790
    %v7924 = vunpack.c.h.b16 %v7790
    %v7925 = vunpack.c.l.b16 %v7791
    %v7926 = vunpack.c.h.b16 %v7791
    %v7927 = vunpack.c.l.b16 %v7792
    %v7928 = vunpack.c.h.b16 %v7792
    %v7929 = vunpack.c.l.b16 %v7793
    %v7930 = vunpack.c.h.b16 %v7793
    %v7931 = vunpack.c.l.b16 %v7794
    %v7932 = vunpack.c.h.b16 %v7794
    %v7933 = vunpack.c.l.b16 %v7795
    %v7934 = vunpack.c.h.b16 %v7795
    %v7935 = vunpack.c.l.b16 %v7796
    %v7936 = vunpack.c.h.b16 %v7796
    %v7937 = vunpack.c.l.b16 %v7797
    %v7938 = vunpack.c.h.b16 %v7797
    %v7939 = vunpack.c.l.b16 %v7798
    %v7940 = vunpack.c.h.b16 %v7798
    %v7941 = vunpack.c.l.b16 %v7799
    %v7942 = vunpack.c.h.b16 %v7799
    %v7943 = vunpack.c.l.b16 %v7800
    %v7944 = vunpack.c.h.b16 %v7800
    %v7945 = vunpack.c.l.b16 %v7801
    %v7946 = vunpack.c.h.b16 %v7801
    %v7947 = vunpack.c.l.b16 %v7802
    %v7948 = vunpack.c.h.b16 %v7802
    %v7949 = vunpack.c.l.b16 %v7803
    %v7950 = vunpack.c.h.b16 %v7803
    %v7951 = vunpack.c.l.b16 %v7804
    %v7952 = vunpack.c.h.b16 %v7804
    %v7953 = vunpack.c.l.b16 %v7805
    %v7954 = vunpack.c.h.b16 %v7805
    %v7955 = vunpack.c.l.b16 %v7806
    %v7956 = vunpack.c.h.b16 %v7806
    %v7957 = vunpack.c.l.b16 %v7807
    %v7958 = vunpack.c.h.b16 %v7807
    %v7959 = vunpack.c.l.b16 %v7808
    %v7960 = vunpack.c.h.b16 %v7808
    %v7961 = vunpack.c.l.b16 %v7809
    %v7962 = vunpack.c.h.b16 %v7809
    %v7963 = vunpack.c.l.b16 %v7810
    %v7964 = vunpack.c.h.b16 %v7810
    %v7965 = vunpack.c.l.b16 %v7811
    %v7966 = vunpack.c.h.b16 %v7811
    %v7967 = vunpack.c.l.b16 %v7812
    %v7968 = vunpack.c.h.b16 %v7812
    %v7969 = vunpack.c.l.b16 %v7813
    %v7970 = vunpack.c.h.b16 %v7813
    %v7971 = vunpack.c.l.b16 %v7814
    %v7972 = vunpack.c.h.b16 %v7814
    %v7973 = vunpack.c.l.b16 %v7815
    %v7974 = vunpack.c.h.b16 %v7815
    %v7975 = vunpack.c.l.b16 %v7816
    %v7976 = vunpack.c.h.b16 %v7816
    %v7977 = vunpack.c.l.b16 %v7817
    %v7978 = vunpack.c.h.b16 %v7817
    %v7979 = vunpack.c.l.b16 %v7818
    %v7980 = vunpack.c.h.b16 %v7818
    %v7981 = vpack.c.b16 %v7879, %v7873
    %v7982 = vpack.c.b16 %v7880, %v7874
    %v7983 = vpack.c.b16 %v7881, %v7875
    %v7984 = vpack.c.b16 %v7882, %v7876
    %v7985 = vpack.c.b16 %v7883, %v7877
    %v7986 = vpack.c.b16 %v7884, %v7878
    %v7987 = vpack.c.b16 %v7891, %v7885
    %v7988 = vpack.c.b16 %v7892, %v7886
    %v7989 = vpack.c.b16 %v7893, %v7887
    %v7990 = vpack.c.b16 %v7894, %v7888
    %v7991 = vpack.c.b16 %v7895, %v7889
    %v7992 = vpack.c.b16 %v7896, %v7890
    %v7993 = vpack.c.b16 %v7903, %v7897
    %v7994 = vpack.c.b16 %v7904, %v7898
    %v7995 = vpack.c.b16 %v7905, %v7899
    %v7996 = vpack.c.b16 %v7906, %v7900
    %v7997 = vpack.c.b16 %v7907, %v7901
    %v7998 = vpack.c.b16 %v7908, %v7902
    %v7999 = vpack.c.b16 %v7915, %v7909
    %v8000 = vpack.c.b16 %v7916, %v7910
    %v8001 = vpack.c.b16 %v7917, %v7911
    %v8002 = vpack.c.b16 %v7918, %v7912
    %v8003 = vpack.c.b16 %v7919, %v7913
    %v8004 = vpack.c.b16 %v7920, %v7914
    %v8005 = vpack.c.b16 %v7927, %v7921
    %v8006 = vpack.c.b16 %v7928, %v7922
    %v8007 = vpack.c.b16 %v7929, %v7923
    %v8008 = vpack.c.b16 %v7930, %v7924
    %v8009 = vpack.c.b16 %v7931, %v7925
    %v8010 = vpack.c.b16 %v7932, %v7926
    %v8011 = vpack.c.b16 %v7939, %v7933
    %v8012 = vpack.c.b16 %v7940, %v7934
    %v8013 = vpack.c.b16 %v7941, %v7935
    %v8014 = vpack.c.b16 %v7942, %v7936
    %v8015 = vpack.c.b16 %v7943, %v7937
    %v8016 = vpack.c.b16 %v7944, %v7938
    %v8017 = vpack.c.b16 %v7951, %v7945
    %v8018 = vpack.c.b16 %v7952, %v7946
    %v8019 = vpack.c.b16 %v7953, %v7947
    %v8020 = vpack.c.b16 %v7954, %v7948
    %v8021 = vpack.c.b16 %v7955, %v7949
    %v8022 = vpack.c.b16 %v7956, %v7950
    %v8023 = vpack.c.b16 %v7963, %v7957
    %v8024 = vpack.c.b16 %v7964, %v7958
    %v8025 = vpack.c.b16 %v7965, %v7959
    %v8026 = vpack.c.b16 %v7966, %v7960
    %v8027 = vpack.c.b16 %v7967, %v7961
    %v8028 = vpack.c.b16 %v7968, %v7962
    %v8029 = vpack.c.b16 %v7975, %v7969
    %v8030 = vpack.c.b16 %v7976, %v7970
    %v8031 = vpack.c.b16 %v7977, %v7971
    %v8032 = vpack.c.b16 %v7978, %v7972
    %v8033 = vpack.c.b16 %v7979, %v7973
    %v8034 = vpack.c.b16 %v7980, %v7974
    %vm8080 = vcmask 654336
    %v8082 = vsel %vm8080, %v7986, 0
    %v8085 = vsel %vm8080, %v7992, 0
    %v8088 = vsel %vm8080, %v7998, 0
    %v8091 = vsel %vm8080, %v8004, 0
    %v8094 = vsel %vm8080, %v8010, 0
    %v8097 = vsel %vm8080, %v8016, 0
    %v8100 = vsel %vm8080, %v8022, 0
    %v8103 = vsel %vm8080, %v8028, 0
    %v8106 = vsel %vm8080, %v8034, 0
    %8108 = vmatpush.bf16.msra.mxu0 %v7727
    %8109 = vmatpush.bf16.msra.mxu0 %v7726
    %8110 = vmatpush.bf16.msra.mxu0 %v7725
    %8111 = vmatpush.bf16.msra.mxu0 %v7724
    %8112 = vmatpush.bf16.msra.mxu0 %v7723
    %8113 = vmatpush.bf16.msra.mxu0 %v7722
    %8114 = vmatpush.bf16.msra.mxu0 %v7721
    %8115 = vmatpush.bf16.msra.mxu0 %v7720
    %8116 = vmatmul.bf16.gmra.mxu0 %v7981
    %v8117 = vpop.f32.mrf.mxu0
    %v8118 = vadd.f32 0.0, %v8117
    %v8119 = vpop.f32.mrf.mxu0
    %v8120 = vadd.f32 0.0, %v8119
    %8121 = vmatmul.bf16.gmra.mxu0 %v7987
    %v8122 = vpop.f32.mrf.mxu0
    %v8123 = vadd.f32 0.0, %v8122
    %v8124 = vpop.f32.mrf.mxu0
    %v8125 = vadd.f32 0.0, %v8124
    %8126 = vmatmul.bf16.gmra.mxu0 %v7993
    %v8127 = vpop.f32.mrf.mxu0
    %v8128 = vadd.f32 0.0, %v8127
    %v8129 = vpop.f32.mrf.mxu0
    %v8130 = vadd.f32 0.0, %v8129
    %8131 = vmatmul.bf16.gmra.mxu0 %v7999
    %v8132 = vpop.f32.mrf.mxu0
    %v8133 = vadd.f32 0.0, %v8132
    %v8134 = vpop.f32.mrf.mxu0
    %v8135 = vadd.f32 0.0, %v8134
    %8136 = vmatmul.bf16.gmra.mxu0 %v8005
    %v8137 = vpop.f32.mrf.mxu0
    %v8138 = vadd.f32 0.0, %v8137
    %v8139 = vpop.f32.mrf.mxu0
    %v8140 = vadd.f32 0.0, %v8139
    %8141 = vmatmul.bf16.gmra.mxu0 %v8011
    %v8142 = vpop.f32.mrf.mxu0
    %v8143 = vadd.f32 0.0, %v8142
    %v8144 = vpop.f32.mrf.mxu0
    %v8145 = vadd.f32 0.0, %v8144
    %8146 = vmatmul.bf16.gmra.mxu0 %v8017
    %v8147 = vpop.f32.mrf.mxu0
    %v8148 = vadd.f32 0.0, %v8147
    %v8149 = vpop.f32.mrf.mxu0
    %v8150 = vadd.f32 0.0, %v8149
    %8151 = vmatmul.bf16.gmra.mxu0 %v8023
    %v8152 = vpop.f32.mrf.mxu0
    %v8153 = vadd.f32 0.0, %v8152
    %v8154 = vpop.f32.mrf.mxu0
    %v8155 = vadd.f32 0.0, %v8154
    %8156 = vmatmul.bf16.gmra.mxu0 %v8029
    %v8157 = vpop.f32.mrf.mxu0
    %v8158 = vadd.f32 0.0, %v8157
    %v8159 = vpop.f32.mrf.mxu0
    %v8160 = vadd.f32 0.0, %v8159
    %8161 = vdwg.mxu0
    %8162 = vmatpush.bf16.msra.mxu0 %v7735
    %8163 = vmatpush.bf16.msra.mxu0 %v7734
    %8164 = vmatpush.bf16.msra.mxu0 %v7733
    %8165 = vmatpush.bf16.msra.mxu0 %v7732
    %8166 = vmatpush.bf16.msra.mxu0 %v7731
    %8167 = vmatpush.bf16.msra.mxu0 %v7730
    %8168 = vmatpush.bf16.msra.mxu0 %v7729
    %8169 = vmatpush.bf16.msra.mxu0 %v7728
    %8170 = vmatmul.bf16.gmra.mxu0 %v7982
    %v8171 = vpop.f32.mrf.mxu0
    %v8172 = vadd.f32 %v8118, %v8171
    %v8173 = vpop.f32.mrf.mxu0
    %v8174 = vadd.f32 %v8120, %v8173
    %8175 = vmatmul.bf16.gmra.mxu0 %v7988
    %v8176 = vpop.f32.mrf.mxu0
    %v8177 = vadd.f32 %v8123, %v8176
    %v8178 = vpop.f32.mrf.mxu0
    %v8179 = vadd.f32 %v8125, %v8178
    %8180 = vmatmul.bf16.gmra.mxu0 %v7994
    %v8181 = vpop.f32.mrf.mxu0
    %v8182 = vadd.f32 %v8128, %v8181
    %v8183 = vpop.f32.mrf.mxu0
    %v8184 = vadd.f32 %v8130, %v8183
    %8185 = vmatmul.bf16.gmra.mxu0 %v8000
    %v8186 = vpop.f32.mrf.mxu0
    %v8187 = vadd.f32 %v8133, %v8186
    %v8188 = vpop.f32.mrf.mxu0
    %v8189 = vadd.f32 %v8135, %v8188
    %8190 = vmatmul.bf16.gmra.mxu0 %v8006
    %v8191 = vpop.f32.mrf.mxu0
    %v8192 = vadd.f32 %v8138, %v8191
    %v8193 = vpop.f32.mrf.mxu0
    %v8194 = vadd.f32 %v8140, %v8193
    %8195 = vmatmul.bf16.gmra.mxu0 %v8012
    %v8196 = vpop.f32.mrf.mxu0
    %v8197 = vadd.f32 %v8143, %v8196
    %v8198 = vpop.f32.mrf.mxu0
    %v8199 = vadd.f32 %v8145, %v8198
    %8200 = vmatmul.bf16.gmra.mxu0 %v8018
    %v8201 = vpop.f32.mrf.mxu0
    %v8202 = vadd.f32 %v8148, %v8201
    %v8203 = vpop.f32.mrf.mxu0
    %v8204 = vadd.f32 %v8150, %v8203
    %8205 = vmatmul.bf16.gmra.mxu0 %v8024
    %v8206 = vpop.f32.mrf.mxu0
    %v8207 = vadd.f32 %v8153, %v8206
    %v8208 = vpop.f32.mrf.mxu0
    %v8209 = vadd.f32 %v8155, %v8208
    %8210 = vmatmul.bf16.gmra.mxu0 %v8030
    %v8211 = vpop.f32.mrf.mxu0
    %v8212 = vadd.f32 %v8158, %v8211
    %v8213 = vpop.f32.mrf.mxu0
    %v8214 = vadd.f32 %v8160, %v8213
    %8215 = vdwg.mxu0
    %8216 = vmatpush.bf16.msra.mxu0 %v7743
    %8217 = vmatpush.bf16.msra.mxu0 %v7742
    %8218 = vmatpush.bf16.msra.mxu0 %v7741
    %8219 = vmatpush.bf16.msra.mxu0 %v7740
    %8220 = vmatpush.bf16.msra.mxu0 %v7739
    %8221 = vmatpush.bf16.msra.mxu0 %v7738
    %8222 = vmatpush.bf16.msra.mxu0 %v7737
    %8223 = vmatpush.bf16.msra.mxu0 %v7736
    %8224 = vmatmul.bf16.gmra.mxu0 %v7983
    %v8225 = vpop.f32.mrf.mxu0
    %v8226 = vadd.f32 %v8172, %v8225
    %v8227 = vpop.f32.mrf.mxu0
    %v8228 = vadd.f32 %v8174, %v8227
    %8229 = vmatmul.bf16.gmra.mxu0 %v7989
    %v8230 = vpop.f32.mrf.mxu0
    %v8231 = vadd.f32 %v8177, %v8230
    %v8232 = vpop.f32.mrf.mxu0
    %v8233 = vadd.f32 %v8179, %v8232
    %8234 = vmatmul.bf16.gmra.mxu0 %v7995
    %v8235 = vpop.f32.mrf.mxu0
    %v8236 = vadd.f32 %v8182, %v8235
    %v8237 = vpop.f32.mrf.mxu0
    %v8238 = vadd.f32 %v8184, %v8237
    %8239 = vmatmul.bf16.gmra.mxu0 %v8001
    %v8240 = vpop.f32.mrf.mxu0
    %v8241 = vadd.f32 %v8187, %v8240
    %v8242 = vpop.f32.mrf.mxu0
    %v8243 = vadd.f32 %v8189, %v8242
    %8244 = vmatmul.bf16.gmra.mxu0 %v8007
    %v8245 = vpop.f32.mrf.mxu0
    %v8246 = vadd.f32 %v8192, %v8245
    %v8247 = vpop.f32.mrf.mxu0
    %v8248 = vadd.f32 %v8194, %v8247
    %8249 = vmatmul.bf16.gmra.mxu0 %v8013
    %v8250 = vpop.f32.mrf.mxu0
    %v8251 = vadd.f32 %v8197, %v8250
    %v8252 = vpop.f32.mrf.mxu0
    %v8253 = vadd.f32 %v8199, %v8252
    %8254 = vmatmul.bf16.gmra.mxu0 %v8019
    %v8255 = vpop.f32.mrf.mxu0
    %v8256 = vadd.f32 %v8202, %v8255
    %v8257 = vpop.f32.mrf.mxu0
    %v8258 = vadd.f32 %v8204, %v8257
    %8259 = vmatmul.bf16.gmra.mxu0 %v8025
    %v8260 = vpop.f32.mrf.mxu0
    %v8261 = vadd.f32 %v8207, %v8260
    %v8262 = vpop.f32.mrf.mxu0
    %v8263 = vadd.f32 %v8209, %v8262
    %8264 = vmatmul.bf16.gmra.mxu0 %v8031
    %v8265 = vpop.f32.mrf.mxu0
    %v8266 = vadd.f32 %v8212, %v8265
    %v8267 = vpop.f32.mrf.mxu0
    %v8268 = vadd.f32 %v8214, %v8267
    %8269 = vdwg.mxu0
    %8270 = vmatpush.bf16.msra.mxu0 %v7751
    %8271 = vmatpush.bf16.msra.mxu0 %v7750
    %8272 = vmatpush.bf16.msra.mxu0 %v7749
    %8273 = vmatpush.bf16.msra.mxu0 %v7748
    %8274 = vmatpush.bf16.msra.mxu0 %v7747
    %8275 = vmatpush.bf16.msra.mxu0 %v7746
    %8276 = vmatpush.bf16.msra.mxu0 %v7745
    %8277 = vmatpush.bf16.msra.mxu0 %v7744
    %8278 = vmatmul.bf16.gmra.mxu0 %v7984
    %v8279 = vpop.f32.mrf.mxu0
    %v8280 = vadd.f32 %v8226, %v8279
    %v8281 = vpop.f32.mrf.mxu0
    %v8282 = vadd.f32 %v8228, %v8281
    %8283 = vmatmul.bf16.gmra.mxu0 %v7990
    %v8284 = vpop.f32.mrf.mxu0
    %v8285 = vadd.f32 %v8231, %v8284
    %v8286 = vpop.f32.mrf.mxu0
    %v8287 = vadd.f32 %v8233, %v8286
    %8288 = vmatmul.bf16.gmra.mxu0 %v7996
    %v8289 = vpop.f32.mrf.mxu0
    %v8290 = vadd.f32 %v8236, %v8289
    %v8291 = vpop.f32.mrf.mxu0
    %v8292 = vadd.f32 %v8238, %v8291
    %8293 = vmatmul.bf16.gmra.mxu0 %v8002
    %v8294 = vpop.f32.mrf.mxu0
    %v8295 = vadd.f32 %v8241, %v8294
    %v8296 = vpop.f32.mrf.mxu0
    %v8297 = vadd.f32 %v8243, %v8296
    %8298 = vmatmul.bf16.gmra.mxu0 %v8008
    %v8299 = vpop.f32.mrf.mxu0
    %v8300 = vadd.f32 %v8246, %v8299
    %v8301 = vpop.f32.mrf.mxu0
    %v8302 = vadd.f32 %v8248, %v8301
    %8303 = vmatmul.bf16.gmra.mxu0 %v8014
    %v8304 = vpop.f32.mrf.mxu0
    %v8305 = vadd.f32 %v8251, %v8304
    %v8306 = vpop.f32.mrf.mxu0
    %v8307 = vadd.f32 %v8253, %v8306
    %8308 = vmatmul.bf16.gmra.mxu0 %v8020
    %v8309 = vpop.f32.mrf.mxu0
    %v8310 = vadd.f32 %v8256, %v8309
    %v8311 = vpop.f32.mrf.mxu0
    %v8312 = vadd.f32 %v8258, %v8311
    %8313 = vmatmul.bf16.gmra.mxu0 %v8026
    %v8314 = vpop.f32.mrf.mxu0
    %v8315 = vadd.f32 %v8261, %v8314
    %v8316 = vpop.f32.mrf.mxu0
    %v8317 = vadd.f32 %v8263, %v8316
    %8318 = vmatmul.bf16.gmra.mxu0 %v8032
    %v8319 = vpop.f32.mrf.mxu0
    %v8320 = vadd.f32 %v8266, %v8319
    %v8321 = vpop.f32.mrf.mxu0
    %v8322 = vadd.f32 %v8268, %v8321
    %8323 = vdwg.mxu0
    %8324 = vmatpush.bf16.msra.mxu0 %v7759
    %8325 = vmatpush.bf16.msra.mxu0 %v7758
    %8326 = vmatpush.bf16.msra.mxu0 %v7757
    %8327 = vmatpush.bf16.msra.mxu0 %v7756
    %8328 = vmatpush.bf16.msra.mxu0 %v7755
    %8329 = vmatpush.bf16.msra.mxu0 %v7754
    %8330 = vmatpush.bf16.msra.mxu0 %v7753
    %8331 = vmatpush.bf16.msra.mxu0 %v7752
    %8332 = vmatmul.bf16.gmra.mxu0 %v7985
    %v8333 = vpop.f32.mrf.mxu0
    %v8334 = vadd.f32 %v8280, %v8333
    %v8335 = vpop.f32.mrf.mxu0
    %v8336 = vadd.f32 %v8282, %v8335
    %8337 = vmatmul.bf16.gmra.mxu0 %v7991
    %v8338 = vpop.f32.mrf.mxu0
    %v8339 = vadd.f32 %v8285, %v8338
    %v8340 = vpop.f32.mrf.mxu0
    %v8341 = vadd.f32 %v8287, %v8340
    %8342 = vmatmul.bf16.gmra.mxu0 %v7997
    %v8343 = vpop.f32.mrf.mxu0
    %v8344 = vadd.f32 %v8290, %v8343
    %v8345 = vpop.f32.mrf.mxu0
    %v8346 = vadd.f32 %v8292, %v8345
    %8347 = vmatmul.bf16.gmra.mxu0 %v8003
    %v8348 = vpop.f32.mrf.mxu0
    %v8349 = vadd.f32 %v8295, %v8348
    %v8350 = vpop.f32.mrf.mxu0
    %v8351 = vadd.f32 %v8297, %v8350
    %8352 = vmatmul.bf16.gmra.mxu0 %v8009
    %v8353 = vpop.f32.mrf.mxu0
    %v8354 = vadd.f32 %v8300, %v8353
    %v8355 = vpop.f32.mrf.mxu0
    %v8356 = vadd.f32 %v8302, %v8355
    %8357 = vmatmul.bf16.gmra.mxu0 %v8015
    %v8358 = vpop.f32.mrf.mxu0
    %v8359 = vadd.f32 %v8305, %v8358
    %v8360 = vpop.f32.mrf.mxu0
    %v8361 = vadd.f32 %v8307, %v8360
    %8362 = vmatmul.bf16.gmra.mxu0 %v8021
    %v8363 = vpop.f32.mrf.mxu0
    %v8364 = vadd.f32 %v8310, %v8363
    %v8365 = vpop.f32.mrf.mxu0
    %v8366 = vadd.f32 %v8312, %v8365
    %8367 = vmatmul.bf16.gmra.mxu0 %v8027
    %v8368 = vpop.f32.mrf.mxu0
    %v8369 = vadd.f32 %v8315, %v8368
    %v8370 = vpop.f32.mrf.mxu0
    %v8371 = vadd.f32 %v8317, %v8370
    %8372 = vmatmul.bf16.gmra.mxu0 %v8033
    %v8373 = vpop.f32.mrf.mxu0
    %v8374 = vadd.f32 %v8320, %v8373
    %v8375 = vpop.f32.mrf.mxu0
    %v8376 = vadd.f32 %v8322, %v8375
    %8377 = vdwg.mxu0
    %8378 = vmatpush.bf16.msra.mxu0 0
    %8379 = vmatpush.bf16.msra.mxu0 0
    %8380 = vmatpush.bf16.msra.mxu0 0
    %8381 = vmatpush.bf16.msra.mxu0 %v7764
    %8382 = vmatpush.bf16.msra.mxu0 %v7763
    %8383 = vmatpush.bf16.msra.mxu0 %v7762
    %8384 = vmatpush.bf16.msra.mxu0 %v7761
    %8385 = vmatpush.bf16.msra.mxu0 %v7760
    %8386 = vmatmul.bf16.gmra.mxu0 %v8082
    %v8387 = vpop.f32.mrf.mxu0
    %v8388 = vadd.f32 %v8334, %v8387
    %v8389 = vpop.f32.mrf.mxu0
    %v8390 = vadd.f32 %v8336, %v8389
    %8391 = vmatmul.bf16.gmra.mxu0 %v8085
    %v8392 = vpop.f32.mrf.mxu0
    %v8393 = vadd.f32 %v8339, %v8392
    %v8394 = vpop.f32.mrf.mxu0
    %v8395 = vadd.f32 %v8341, %v8394
    %8396 = vmatmul.bf16.gmra.mxu0 %v8088
    %v8397 = vpop.f32.mrf.mxu0
    %v8398 = vadd.f32 %v8344, %v8397
    %v8399 = vpop.f32.mrf.mxu0
    %v8400 = vadd.f32 %v8346, %v8399
    %8401 = vmatmul.bf16.gmra.mxu0 %v8091
    %v8402 = vpop.f32.mrf.mxu0
    %v8403 = vadd.f32 %v8349, %v8402
    %v8404 = vpop.f32.mrf.mxu0
    %v8405 = vadd.f32 %v8351, %v8404
    %8406 = vmatmul.bf16.gmra.mxu0 %v8094
    %v8407 = vpop.f32.mrf.mxu0
    %v8408 = vadd.f32 %v8354, %v8407
    %v8409 = vpop.f32.mrf.mxu0
    %v8410 = vadd.f32 %v8356, %v8409
    %8411 = vmatmul.bf16.gmra.mxu0 %v8097
    %v8412 = vpop.f32.mrf.mxu0
    %v8413 = vadd.f32 %v8359, %v8412
    %v8414 = vpop.f32.mrf.mxu0
    %v8415 = vadd.f32 %v8361, %v8414
    %8416 = vmatmul.bf16.gmra.mxu0 %v8100
    %v8417 = vpop.f32.mrf.mxu0
    %v8418 = vadd.f32 %v8364, %v8417
    %v8419 = vpop.f32.mrf.mxu0
    %v8420 = vadd.f32 %v8366, %v8419
    %8421 = vmatmul.bf16.gmra.mxu0 %v8103
    %v8422 = vpop.f32.mrf.mxu0
    %v8423 = vadd.f32 %v8369, %v8422
    %v8424 = vpop.f32.mrf.mxu0
    %v8425 = vadd.f32 %v8371, %v8424
    %8426 = vmatmul.bf16.gmra.mxu0 %v8106
    %v8427 = vpop.f32.mrf.mxu0
    %v8428 = vadd.f32 %v8374, %v8427
    %v8429 = vpop.f32.mrf.mxu0
    %v8430 = vadd.f32 %v8376, %v8429
    %8431 = vdwg.mxu0
    %vm8432 = vcmask 244736
    %v8433 = vsel %vm8432, %v8388, 0.0
    %8434 = vadd.xlane.f32.xlu0 %v8433
    %v8435 = vpop.xlane.xlu0 %8434
    %v8436 = vsel %vm8432, %v8390, 0.0
    %8437 = vadd.xlane.f32.xlu0 %v8436
    %v8438 = vpop.xlane.xlu0 %8437
    %v8439 = vsel %vm8432, %v8393, 0.0
    %8440 = vadd.xlane.f32.xlu0 %v8439
    %v8441 = vpop.xlane.xlu0 %8440
    %v8442 = vsel %vm8432, %v8395, 0.0
    %8443 = vadd.xlane.f32.xlu0 %v8442
    %v8444 = vpop.xlane.xlu0 %8443
    %v8445 = vsel %vm8432, %v8398, 0.0
    %8446 = vadd.xlane.f32.xlu0 %v8445
    %v8447 = vpop.xlane.xlu0 %8446
    %v8448 = vsel %vm8432, %v8400, 0.0
    %8449 = vadd.xlane.f32.xlu0 %v8448
    %v8450 = vpop.xlane.xlu0 %8449
    %v8451 = vsel %vm8432, %v8403, 0.0
    %8452 = vadd.xlane.f32.xlu0 %v8451
    %v8453 = vpop.xlane.xlu0 %8452
    %v8454 = vsel %vm8432, %v8405, 0.0
    %8455 = vadd.xlane.f32.xlu0 %v8454
    %v8456 = vpop.xlane.xlu0 %8455
    %v8457 = vsel %vm8432, %v8408, 0.0
    %8458 = vadd.xlane.f32.xlu0 %v8457
    %v8459 = vpop.xlane.xlu0 %8458
    %v8460 = vsel %vm8432, %v8410, 0.0
    %8461 = vadd.xlane.f32.xlu0 %v8460
    %v8462 = vpop.xlane.xlu0 %8461
    %v8463 = vsel %vm8432, %v8413, 0.0
    %8464 = vadd.xlane.f32.xlu0 %v8463
    %v8465 = vpop.xlane.xlu0 %8464
    %v8466 = vsel %vm8432, %v8415, 0.0
    %8467 = vadd.xlane.f32.xlu0 %v8466
    %v8468 = vpop.xlane.xlu0 %8467
    %v8469 = vsel %vm8432, %v8418, 0.0
    %8470 = vadd.xlane.f32.xlu0 %v8469
    %v8471 = vpop.xlane.xlu0 %8470
    %v8472 = vsel %vm8432, %v8420, 0.0
    %8473 = vadd.xlane.f32.xlu0 %v8472
    %v8474 = vpop.xlane.xlu0 %8473
    %v8475 = vsel %vm8432, %v8423, 0.0
    %8476 = vadd.xlane.f32.xlu0 %v8475
    %v8477 = vpop.xlane.xlu0 %8476
    %v8478 = vsel %vm8432, %v8425, 0.0
    %8479 = vadd.xlane.f32.xlu0 %v8478
    %v8480 = vpop.xlane.xlu0 %8479
    %v8481 = vsel %vm8432, %v8428, 0.0
    %8482 = vadd.xlane.f32.xlu0 %v8481
    %v8483 = vpop.xlane.xlu0 %8482
    %v8484 = vsel %vm8432, %v8430, 0.0
    %8485 = vadd.xlane.f32.xlu0 %v8484
    %v8486 = vpop.xlane.xlu0 %8485
    %v8487 = vmul.f32 %v8388, %v8388
    %v8488 = vmul.f32 %v8390, %v8390
    %v8489 = vmul.f32 %v8393, %v8393
    %v8490 = vmul.f32 %v8395, %v8395
    %v8491 = vmul.f32 %v8398, %v8398
    %v8492 = vmul.f32 %v8400, %v8400
    %v8493 = vmul.f32 %v8403, %v8403
    %v8494 = vmul.f32 %v8405, %v8405
    %v8495 = vmul.f32 %v8408, %v8408
    %v8496 = vmul.f32 %v8410, %v8410
    %v8497 = vmul.f32 %v8413, %v8413
    %v8498 = vmul.f32 %v8415, %v8415
    %v8499 = vmul.f32 %v8418, %v8418
    %v8500 = vmul.f32 %v8420, %v8420
    %v8501 = vmul.f32 %v8423, %v8423
    %v8502 = vmul.f32 %v8425, %v8425
    %v8503 = vmul.f32 %v8428, %v8428
    %v8504 = vmul.f32 %v8430, %v8430
    %v8505 = vsel %vm8432, %v8487, 0.0
    %8506 = vadd.xlane.f32.xlu0 %v8505
    %v8507 = vpop.xlane.xlu0 %8506
    %v8508 = vsel %vm8432, %v8488, 0.0
    %8509 = vadd.xlane.f32.xlu0 %v8508
    %v8510 = vpop.xlane.xlu0 %8509
    %v8511 = vsel %vm8432, %v8489, 0.0
    %8512 = vadd.xlane.f32.xlu0 %v8511
    %v8513 = vpop.xlane.xlu0 %8512
    %v8514 = vsel %vm8432, %v8490, 0.0
    %8515 = vadd.xlane.f32.xlu0 %v8514
    %v8516 = vpop.xlane.xlu0 %8515
    %v8517 = vsel %vm8432, %v8491, 0.0
    %8518 = vadd.xlane.f32.xlu0 %v8517
    %v8519 = vpop.xlane.xlu0 %8518
    %v8520 = vsel %vm8432, %v8492, 0.0
    %8521 = vadd.xlane.f32.xlu0 %v8520
    %v8522 = vpop.xlane.xlu0 %8521
    %v8523 = vsel %vm8432, %v8493, 0.0
    %8524 = vadd.xlane.f32.xlu0 %v8523
    %v8525 = vpop.xlane.xlu0 %8524
    %v8526 = vsel %vm8432, %v8494, 0.0
    %8527 = vadd.xlane.f32.xlu0 %v8526
    %v8528 = vpop.xlane.xlu0 %8527
    %v8529 = vsel %vm8432, %v8495, 0.0
    %8530 = vadd.xlane.f32.xlu0 %v8529
    %v8531 = vpop.xlane.xlu0 %8530
    %v8532 = vsel %vm8432, %v8496, 0.0
    %8533 = vadd.xlane.f32.xlu0 %v8532
    %v8534 = vpop.xlane.xlu0 %8533
    %v8535 = vsel %vm8432, %v8497, 0.0
    %8536 = vadd.xlane.f32.xlu0 %v8535
    %v8537 = vpop.xlane.xlu0 %8536
    %v8538 = vsel %vm8432, %v8498, 0.0
    %8539 = vadd.xlane.f32.xlu0 %v8538
    %v8540 = vpop.xlane.xlu0 %8539
    %v8541 = vsel %vm8432, %v8499, 0.0
    %8542 = vadd.xlane.f32.xlu0 %v8541
    %v8543 = vpop.xlane.xlu0 %8542
    %v8544 = vsel %vm8432, %v8500, 0.0
    %8545 = vadd.xlane.f32.xlu0 %v8544
    %v8546 = vpop.xlane.xlu0 %8545
    %v8547 = vsel %vm8432, %v8501, 0.0
    %8548 = vadd.xlane.f32.xlu0 %v8547
    %v8549 = vpop.xlane.xlu0 %8548
    %v8550 = vsel %vm8432, %v8502, 0.0
    %8551 = vadd.xlane.f32.xlu0 %v8550
    %v8552 = vpop.xlane.xlu0 %8551
    %v8553 = vsel %vm8432, %v8503, 0.0
    %8554 = vadd.xlane.f32.xlu0 %v8553
    %v8555 = vpop.xlane.xlu0 %8554
    %v8556 = vsel %vm8432, %v8504, 0.0
    %8557 = vadd.xlane.f32.xlu0 %v8556
    %v8558 = vpop.xlane.xlu0 %8557
    %v8559 = vld [vmem:[%s13] sm:$0xff]
    %v8560 = vld [vmem:[%s13 + $0x8] sm:$0xff]
    %v8561 = vld [vmem:[%s13 + $0x10] sm:$0x1]
    %v8562 = vld [vmem:[%s13 + $0x18] sm:$0x1]
    %v8564 = vsel %vm6621, %v8560, 0
    %v8567 = vsel %vm6621, %v8562, 0
    %8569 = vmatpush.msra.mxu0 %v8480
    %8570 = vmatpush.msra.mxu0 %v8477
    %8571 = vmatpush.msra.mxu0 %v8474
    %8572 = vmatpush.msra.mxu0 %v8471
    %8573 = vmatpush.msra.mxu0 %v8468
    %8574 = vmatpush.msra.mxu0 %v8465
    %8575 = vmatpush.msra.mxu0 %v8462
    %8576 = vmatpush.msra.mxu0 %v8459
    %8577 = vmatpush.msra.mxu0 %v8456
    %8578 = vmatpush.msra.mxu0 %v8453
    %8579 = vmatpush.msra.mxu0 %v8450
    %8580 = vmatpush.msra.mxu0 %v8447
    %8581 = vmatpush.msra.mxu0 %v8444
    %8582 = vmatpush.msra.mxu0 %v8441
    %8583 = vmatpush.msra.mxu0 %v8438
    %8584 = vmatpush.msra.mxu0 %v8435
    %8585 = vmatmul.f32.gmra.mxu0 %v8559
    %v8586 = vpop.f32.mrf.mxu0
    %v8587 = vadd.f32 0.0, %v8586
    %8588 = vmatmul.f32.gmra.mxu0 %v8561
    %v8589 = vpop.f32.mrf.mxu0
    %v8590 = vadd.f32 0.0, %v8589
    %8591 = vdwg.mxu0
    %8592 = vmatpush.msra.mxu0 0.0
    %8593 = vmatpush.msra.mxu0 0.0
    %8594 = vmatpush.msra.mxu0 0.0
    %8595 = vmatpush.msra.mxu0 0.0
    %8596 = vmatpush.msra.mxu0 0.0
    %8597 = vmatpush.msra.mxu0 0.0
    %8598 = vmatpush.msra.mxu0 0.0
    %8599 = vmatpush.msra.mxu0 0.0
    %8600 = vmatpush.msra.mxu0 0.0
    %8601 = vmatpush.msra.mxu0 0.0
    %8602 = vmatpush.msra.mxu0 0.0
    %8603 = vmatpush.msra.mxu0 0.0
    %8604 = vmatpush.msra.mxu0 0.0
    %8605 = vmatpush.msra.mxu0 0.0
    %8606 = vmatpush.msra.mxu0 %v8486
    %8607 = vmatpush.msra.mxu0 %v8483
    %8608 = vmatmul.f32.gmra.mxu0 %v8564
    %v8609 = vpop.f32.mrf.mxu0
    %v8610 = vadd.f32 %v8587, %v8609
    %8611 = vmatmul.f32.gmra.mxu0 %v8567
    %v8612 = vpop.f32.mrf.mxu0
    %v8613 = vadd.f32 %v8590, %v8612
    %8614 = vdwg.mxu0
    %8615 = vmatpush.msra.mxu0 %v8552
    %8616 = vmatpush.msra.mxu0 %v8549
    %8617 = vmatpush.msra.mxu0 %v8546
    %8618 = vmatpush.msra.mxu0 %v8543
    %8619 = vmatpush.msra.mxu0 %v8540
    %8620 = vmatpush.msra.mxu0 %v8537
    %8621 = vmatpush.msra.mxu0 %v8534
    %8622 = vmatpush.msra.mxu0 %v8531
    %8623 = vmatpush.msra.mxu0 %v8528
    %8624 = vmatpush.msra.mxu0 %v8525
    %8625 = vmatpush.msra.mxu0 %v8522
    %8626 = vmatpush.msra.mxu0 %v8519
    %8627 = vmatpush.msra.mxu0 %v8516
    %8628 = vmatpush.msra.mxu0 %v8513
    %8629 = vmatpush.msra.mxu0 %v8510
    %8630 = vmatpush.msra.mxu0 %v8507
    %8631 = vmatmul.f32.gmra.mxu0 %v8559
    %v8632 = vpop.f32.mrf.mxu0
    %v8633 = vadd.f32 0.0, %v8632
    %8634 = vmatmul.f32.gmra.mxu0 %v8561
    %v8635 = vpop.f32.mrf.mxu0
    %v8636 = vadd.f32 0.0, %v8635
    %8637 = vdwg.mxu0
    %8638 = vmatpush.msra.mxu0 0.0
    %8639 = vmatpush.msra.mxu0 0.0
    %8640 = vmatpush.msra.mxu0 0.0
    %8641 = vmatpush.msra.mxu0 0.0
    %8642 = vmatpush.msra.mxu0 0.0
    %8643 = vmatpush.msra.mxu0 0.0
    %8644 = vmatpush.msra.mxu0 0.0
    %8645 = vmatpush.msra.mxu0 0.0
    %8646 = vmatpush.msra.mxu0 0.0
    %8647 = vmatpush.msra.mxu0 0.0
    %8648 = vmatpush.msra.mxu0 0.0
    %8649 = vmatpush.msra.mxu0 0.0
    %8650 = vmatpush.msra.mxu0 0.0
    %8651 = vmatpush.msra.mxu0 0.0
    %8652 = vmatpush.msra.mxu0 %v8558
    %8653 = vmatpush.msra.mxu0 %v8555
    %8654 = vmatmul.f32.gmra.mxu0 %v8564
    %v8655 = vpop.f32.mrf.mxu0
    %v8656 = vadd.f32 %v8633, %v8655
    %8657 = vmatmul.f32.gmra.mxu0 %v8567
    %v8658 = vpop.f32.mrf.mxu0
    %v8659 = vadd.f32 %v8636, %v8658
    %8660 = vdwg.mxu0
    %v8661 = vmul.f32 %v8610, 0.0033333334
    %v8662 = vmul.f32 %v8613, 0.0033333334
    %v8663 = vmul.f32 %v8656, 0.0033333334
    %v8664 = vmul.f32 %v8659, 0.0033333334
    %v8665 = vmul.f32 %v8661, %v8661
    %v8666 = vmul.f32 %v8662, %v8662
    %v8667 = vsub.f32 %v8663, %v8665
    %v8668 = vsub.f32 %v8664, %v8666
    %v8669 = vmax.f32 %v8667, 0.0
    %v8670 = vmax.f32 %v8668, 0.0
    %v8671 = vadd.f32 %v8669, 1e-05
    %v8672 = vadd.f32 %v8670, 1e-05
    %v8673 = vrsqrt.pop %v8671
    %v8674 = vmul.f32 %v8673, %v8671
    %v8675 = vmul.f32 %v8674, %v8673
    %v8676 = vmul.f32 0.5, %v8675
    %v8677 = vsub.f32 1.5, %v8676
    %v8678 = vmul.f32 %v8673, %v8677
    %vm8679 = vweird.f32 %v8671
    %vm8680 = vweird.f32 %v8673
    %vm8681 = vmor %vm8679, %vm8680
    %v8682 = vsel %vm8681, %v8673, %v8678
    %v8683 = vrsqrt.pop %v8672
    %v8684 = vmul.f32 %v8683, %v8672
    %v8685 = vmul.f32 %v8684, %v8683
    %v8686 = vmul.f32 0.5, %v8685
    %v8687 = vsub.f32 1.5, %v8686
    %v8688 = vmul.f32 %v8683, %v8687
    %vm8689 = vweird.f32 %v8672
    %vm8690 = vweird.f32 %v8683
    %vm8691 = vmor %vm8689, %vm8690
    %v8692 = vsel %vm8691, %v8683, %v8688
    %v8693 = vld [vmem:[%s14] sm:$0xff]
    %v8694 = vld [vmem:[%s14 + $0x8] sm:$0xff]
    %v8695 = vld [vmem:[%s14 + $0x10] sm:$0xff]
    %v8696 = vld [vmem:[%s14 + $0x18] sm:$0xff]
    %v8697 = vld [vmem:[%s14 + $0x20] sm:$0xff]
    %v8698 = vld [vmem:[%s14 + $0x28] sm:$0xff]
    %v8699 = vld [vmem:[%s14 + $0x30] sm:$0xff]
    %v8700 = vld [vmem:[%s14 + $0x38] sm:$0xff]
    %v8701 = vld [vmem:[%s14 + $0x40] sm:$0xff]
    %v8702 = vld [vmem:[%s14 + $0x48] sm:$0xff]
    %v8703 = vld [vmem:[%s14 + $0x50] sm:$0xff]
    %v8704 = vld [vmem:[%s14 + $0x58] sm:$0xff]
    %v8705 = vld [vmem:[%s14 + $0x60] sm:$0xff]
    %v8706 = vld [vmem:[%s14 + $0x68] sm:$0xff]
    %v8707 = vld [vmem:[%s14 + $0x70] sm:$0xff]
    %v8708 = vld [vmem:[%s14 + $0x78] sm:$0xff]
    %v8709 = vld [vmem:[%s14 + $0x80] sm:$0xff]
    %v8710 = vld [vmem:[%s14 + $0x88] sm:$0xff]
    %vm8711 = vcmask 72704
    %v8713 = vsel %vm8711, %v8693, 0
    %v8716 = vsel %vm8711, %v8694, 0
    %v8719 = vsel %vm8711, %v8695, 0
    %v8722 = vsel %vm8711, %v8696, 0
    %v8725 = vsel %vm8711, %v8697, 0
    %v8728 = vsel %vm8711, %v8698, 0
    %v8731 = vsel %vm8711, %v8699, 0
    %v8734 = vsel %vm8711, %v8700, 0
    %v8737 = vsel %vm8711, %v8701, 0
    %v8740 = vsel %vm8711, %v8702, 0
    %v8743 = vsel %vm8711, %v8703, 0
    %v8746 = vsel %vm8711, %v8704, 0
    %v8749 = vsel %vm8711, %v8705, 0
    %v8752 = vsel %vm8711, %v8706, 0
    %v8755 = vsel %vm8711, %v8707, 0
    %v8758 = vsel %vm8711, %v8708, 0
    %v8761 = vsel %vm8711, %v8709, 0
    %v8764 = vsel %vm8711, %v8710, 0
    %v8767 = vsel %vm7286, %v8692, 0
    %8769 = vmatpush.msra.mxu0 0.0
    %8770 = vmatpush.msra.mxu0 0.0
    %8771 = vmatpush.msra.mxu0 0.0
    %8772 = vmatpush.msra.mxu0 0.0
    %8773 = vmatpush.msra.mxu0 0.0
    %8774 = vmatpush.msra.mxu0 0.0
    %8775 = vmatpush.msra.mxu0 0.0
    %8776 = vmatpush.msra.mxu0 0.0
    %8777 = vmatpush.msra.mxu0 0.0
    %8778 = vmatpush.msra.mxu0 0.0
    %8779 = vmatpush.msra.mxu0 0.0
    %8780 = vmatpush.msra.mxu0 0.0
    %8781 = vmatpush.msra.mxu0 0.0
    %8782 = vmatpush.msra.mxu0 0.0
    %8783 = vmatpush.msra.mxu0 %v8767
    %8784 = vmatpush.msra.mxu0 %v8682
    %8785 = vmatmul.f32.gmra.mxu0 %v8713
    %v8786 = vpop.f32.mrf.mxu0
    %v8787 = vadd.f32 0.0, %v8786
    %8788 = vmatmul.f32.gmra.mxu0 %v8716
    %v8789 = vpop.f32.mrf.mxu0
    %v8790 = vadd.f32 0.0, %v8789
    %8791 = vmatmul.f32.gmra.mxu0 %v8719
    %v8792 = vpop.f32.mrf.mxu0
    %v8793 = vadd.f32 0.0, %v8792
    %8794 = vmatmul.f32.gmra.mxu0 %v8722
    %v8795 = vpop.f32.mrf.mxu0
    %v8796 = vadd.f32 0.0, %v8795
    %8797 = vmatmul.f32.gmra.mxu0 %v8725
    %v8798 = vpop.f32.mrf.mxu0
    %v8799 = vadd.f32 0.0, %v8798
    %8800 = vmatmul.f32.gmra.mxu0 %v8728
    %v8801 = vpop.f32.mrf.mxu0
    %v8802 = vadd.f32 0.0, %v8801
    %8803 = vmatmul.f32.gmra.mxu0 %v8731
    %v8804 = vpop.f32.mrf.mxu0
    %v8805 = vadd.f32 0.0, %v8804
    %8806 = vmatmul.f32.gmra.mxu0 %v8734
    %v8807 = vpop.f32.mrf.mxu0
    %v8808 = vadd.f32 0.0, %v8807
    %8809 = vmatmul.f32.gmra.mxu0 %v8737
    %v8810 = vpop.f32.mrf.mxu0
    %v8811 = vadd.f32 0.0, %v8810
    %8812 = vmatmul.f32.gmra.mxu0 %v8740
    %v8813 = vpop.f32.mrf.mxu0
    %v8814 = vadd.f32 0.0, %v8813
    %8815 = vmatmul.f32.gmra.mxu0 %v8743
    %v8816 = vpop.f32.mrf.mxu0
    %v8817 = vadd.f32 0.0, %v8816
    %8818 = vmatmul.f32.gmra.mxu0 %v8746
    %v8819 = vpop.f32.mrf.mxu0
    %v8820 = vadd.f32 0.0, %v8819
    %8821 = vmatmul.f32.gmra.mxu0 %v8749
    %v8822 = vpop.f32.mrf.mxu0
    %v8823 = vadd.f32 0.0, %v8822
    %8824 = vmatmul.f32.gmra.mxu0 %v8752
    %v8825 = vpop.f32.mrf.mxu0
    %v8826 = vadd.f32 0.0, %v8825
    %8827 = vmatmul.f32.gmra.mxu0 %v8755
    %v8828 = vpop.f32.mrf.mxu0
    %v8829 = vadd.f32 0.0, %v8828
    %8830 = vmatmul.f32.gmra.mxu0 %v8758
    %v8831 = vpop.f32.mrf.mxu0
    %v8832 = vadd.f32 0.0, %v8831
    %8833 = vmatmul.f32.gmra.mxu0 %v8761
    %v8834 = vpop.f32.mrf.mxu0
    %v8835 = vadd.f32 0.0, %v8834
    %8836 = vmatmul.f32.gmra.mxu0 %v8764
    %v8837 = vpop.f32.mrf.mxu0
    %v8838 = vadd.f32 0.0, %v8837
    %8839 = vdwg.mxu0
    %v8840 = vld [vmem:[%s15] sm:$0xff]
    %v8841 = vld [vmem:[%s15 + $0x8] sm:$0xff]
    %v8842 = vld [vmem:[%s15 + $0x10] sm:$0xff]
    %v8843 = vld [vmem:[%s15 + $0x18] sm:$0xff]
    %v8844 = vld [vmem:[%s15 + $0x20] sm:$0xff]
    %v8845 = vld [vmem:[%s15 + $0x28] sm:$0xff]
    %v8846 = vld [vmem:[%s15 + $0x30] sm:$0xff]
    %v8847 = vld [vmem:[%s15 + $0x38] sm:$0xff]
    %v8848 = vld [vmem:[%s15 + $0x40] sm:$0xff]
    %v8849 = vld [vmem:[%s15 + $0x48] sm:$0xff]
    %v8850 = vld [vmem:[%s15 + $0x50] sm:$0xff]
    %v8851 = vld [vmem:[%s15 + $0x58] sm:$0xff]
    %v8852 = vld [vmem:[%s15 + $0x60] sm:$0xff]
    %v8853 = vld [vmem:[%s15 + $0x68] sm:$0xff]
    %v8854 = vld [vmem:[%s15 + $0x70] sm:$0xff]
    %v8855 = vld [vmem:[%s15 + $0x78] sm:$0xff]
    %v8856 = vld [vmem:[%s15 + $0x80] sm:$0xff]
    %v8857 = vld [vmem:[%s15 + $0x88] sm:$0xff]
    %v8858 = vmul.f32 %v8661, %v8682
    %v8859 = vmul.f32 %v8662, %v8692
    %v8861 = vsel %vm7286, %v8859, 0
    %8863 = vmatpush.msra.mxu0 0.0
    %8864 = vmatpush.msra.mxu0 0.0
    %8865 = vmatpush.msra.mxu0 0.0
    %8866 = vmatpush.msra.mxu0 0.0
    %8867 = vmatpush.msra.mxu0 0.0
    %8868 = vmatpush.msra.mxu0 0.0
    %8869 = vmatpush.msra.mxu0 0.0
    %8870 = vmatpush.msra.mxu0 0.0
    %8871 = vmatpush.msra.mxu0 0.0
    %8872 = vmatpush.msra.mxu0 0.0
    %8873 = vmatpush.msra.mxu0 0.0
    %8874 = vmatpush.msra.mxu0 0.0
    %8875 = vmatpush.msra.mxu0 0.0
    %8876 = vmatpush.msra.mxu0 0.0
    %8877 = vmatpush.msra.mxu0 %v8861
    %8878 = vmatpush.msra.mxu0 %v8858
    %8879 = vmatmul.f32.gmra.mxu0 %v8713
    %v8880 = vpop.f32.mrf.mxu0
    %v8881 = vadd.f32 0.0, %v8880
    %8882 = vmatmul.f32.gmra.mxu0 %v8716
    %v8883 = vpop.f32.mrf.mxu0
    %v8884 = vadd.f32 0.0, %v8883
    %8885 = vmatmul.f32.gmra.mxu0 %v8719
    %v8886 = vpop.f32.mrf.mxu0
    %v8887 = vadd.f32 0.0, %v8886
    %8888 = vmatmul.f32.gmra.mxu0 %v8722
    %v8889 = vpop.f32.mrf.mxu0
    %v8890 = vadd.f32 0.0, %v8889
    %8891 = vmatmul.f32.gmra.mxu0 %v8725
    %v8892 = vpop.f32.mrf.mxu0
    %v8893 = vadd.f32 0.0, %v8892
    %8894 = vmatmul.f32.gmra.mxu0 %v8728
    %v8895 = vpop.f32.mrf.mxu0
    %v8896 = vadd.f32 0.0, %v8895
    %8897 = vmatmul.f32.gmra.mxu0 %v8731
    %v8898 = vpop.f32.mrf.mxu0
    %v8899 = vadd.f32 0.0, %v8898
    %8900 = vmatmul.f32.gmra.mxu0 %v8734
    %v8901 = vpop.f32.mrf.mxu0
    %v8902 = vadd.f32 0.0, %v8901
    %8903 = vmatmul.f32.gmra.mxu0 %v8737
    %v8904 = vpop.f32.mrf.mxu0
    %v8905 = vadd.f32 0.0, %v8904
    %8906 = vmatmul.f32.gmra.mxu0 %v8740
    %v8907 = vpop.f32.mrf.mxu0
    %v8908 = vadd.f32 0.0, %v8907
    %8909 = vmatmul.f32.gmra.mxu0 %v8743
    %v8910 = vpop.f32.mrf.mxu0
    %v8911 = vadd.f32 0.0, %v8910
    %8912 = vmatmul.f32.gmra.mxu0 %v8746
    %v8913 = vpop.f32.mrf.mxu0
    %v8914 = vadd.f32 0.0, %v8913
    %8915 = vmatmul.f32.gmra.mxu0 %v8749
    %v8916 = vpop.f32.mrf.mxu0
    %v8917 = vadd.f32 0.0, %v8916
    %8918 = vmatmul.f32.gmra.mxu0 %v8752
    %v8919 = vpop.f32.mrf.mxu0
    %v8920 = vadd.f32 0.0, %v8919
    %8921 = vmatmul.f32.gmra.mxu0 %v8755
    %v8922 = vpop.f32.mrf.mxu0
    %v8923 = vadd.f32 0.0, %v8922
    %8924 = vmatmul.f32.gmra.mxu0 %v8758
    %v8925 = vpop.f32.mrf.mxu0
    %v8926 = vadd.f32 0.0, %v8925
    %8927 = vmatmul.f32.gmra.mxu0 %v8761
    %v8928 = vpop.f32.mrf.mxu0
    %v8929 = vadd.f32 0.0, %v8928
    %8930 = vmatmul.f32.gmra.mxu0 %v8764
    %v8931 = vpop.f32.mrf.mxu0
    %v8932 = vadd.f32 0.0, %v8931
    %8933 = vdwg.mxu0
    %v8934 = vsub.f32 %v8840, %v8881
    %v8935 = vsub.f32 %v8841, %v8884
    %v8936 = vsub.f32 %v8842, %v8887
    %v8937 = vsub.f32 %v8843, %v8890
    %v8938 = vsub.f32 %v8844, %v8893
    %v8939 = vsub.f32 %v8845, %v8896
    %v8940 = vsub.f32 %v8846, %v8899
    %v8941 = vsub.f32 %v8847, %v8902
    %v8942 = vsub.f32 %v8848, %v8905
    %v8943 = vsub.f32 %v8849, %v8908
    %v8944 = vsub.f32 %v8850, %v8911
    %v8945 = vsub.f32 %v8851, %v8914
    %v8946 = vsub.f32 %v8852, %v8917
    %v8947 = vsub.f32 %v8853, %v8920
    %v8948 = vsub.f32 %v8854, %v8923
    %v8949 = vsub.f32 %v8855, %v8926
    %v8950 = vsub.f32 %v8856, %v8929
    %v8951 = vsub.f32 %v8857, %v8932
    %8953 = vset.pattern.permute.xlu0 0
    %8954 = vperm.xlu0 %8953, %v8787
    %v8955 = vpop.permute.xlu0 %8954
    %8958 = vset.pattern.permute.xlu0 0
    %8959 = vperm.xlu0 %8958, %v8790
    %v8960 = vpop.permute.xlu0 %8959
    %8963 = vset.pattern.permute.xlu0 0
    %8964 = vperm.xlu0 %8963, %v8793
    %v8965 = vpop.permute.xlu0 %8964
    %8968 = vset.pattern.permute.xlu0 0
    %8969 = vperm.xlu0 %8968, %v8796
    %v8970 = vpop.permute.xlu0 %8969
    %8973 = vset.pattern.permute.xlu0 0
    %8974 = vperm.xlu0 %8973, %v8799
    %v8975 = vpop.permute.xlu0 %8974
    %8978 = vset.pattern.permute.xlu0 0
    %8979 = vperm.xlu0 %8978, %v8802
    %v8980 = vpop.permute.xlu0 %8979
    %8983 = vset.pattern.permute.xlu0 0
    %8984 = vperm.xlu0 %8983, %v8805
    %v8985 = vpop.permute.xlu0 %8984
    %8988 = vset.pattern.permute.xlu0 0
    %8989 = vperm.xlu0 %8988, %v8808
    %v8990 = vpop.permute.xlu0 %8989
    %8993 = vset.pattern.permute.xlu0 0
    %8994 = vperm.xlu0 %8993, %v8811
    %v8995 = vpop.permute.xlu0 %8994
    %8998 = vset.pattern.permute.xlu0 0
    %8999 = vperm.xlu0 %8998, %v8814
    %v9000 = vpop.permute.xlu0 %8999
    %9003 = vset.pattern.permute.xlu0 0
    %9004 = vperm.xlu0 %9003, %v8817
    %v9005 = vpop.permute.xlu0 %9004
    %9008 = vset.pattern.permute.xlu0 0
    %9009 = vperm.xlu0 %9008, %v8820
    %v9010 = vpop.permute.xlu0 %9009
    %9013 = vset.pattern.permute.xlu0 0
    %9014 = vperm.xlu0 %9013, %v8823
    %v9015 = vpop.permute.xlu0 %9014
    %9018 = vset.pattern.permute.xlu0 0
    %9019 = vperm.xlu0 %9018, %v8826
    %v9020 = vpop.permute.xlu0 %9019
    %9023 = vset.pattern.permute.xlu0 0
    %9024 = vperm.xlu0 %9023, %v8829
    %v9025 = vpop.permute.xlu0 %9024
    %9028 = vset.pattern.permute.xlu0 0
    %9029 = vperm.xlu0 %9028, %v8832
    %v9030 = vpop.permute.xlu0 %9029
    %9033 = vset.pattern.permute.xlu0 0
    %9034 = vperm.xlu0 %9033, %v8835
    %v9035 = vpop.permute.xlu0 %9034
    %9038 = vset.pattern.permute.xlu0 0
    %9039 = vperm.xlu0 %9038, %v8838
    %v9040 = vpop.permute.xlu0 %9039
    %v9042 = vmul.f32 %v8388, %v8955
    %v9043 = vmul.f32 %v8390, %v8960
    %v9044 = vmul.f32 %v8393, %v8965
    %v9045 = vmul.f32 %v8395, %v8970
    %v9046 = vmul.f32 %v8398, %v8975
    %v9047 = vmul.f32 %v8400, %v8980
    %v9048 = vmul.f32 %v8403, %v8985
    %v9049 = vmul.f32 %v8405, %v8990
    %v9050 = vmul.f32 %v8408, %v8995
    %v9051 = vmul.f32 %v8410, %v9000
    %v9052 = vmul.f32 %v8413, %v9005
    %v9053 = vmul.f32 %v8415, %v9010
    %v9054 = vmul.f32 %v8418, %v9015
    %v9055 = vmul.f32 %v8420, %v9020
    %v9056 = vmul.f32 %v8423, %v9025
    %v9057 = vmul.f32 %v8425, %v9030
    %v9058 = vmul.f32 %v8428, %v9035
    %v9059 = vmul.f32 %v8430, %v9040
    %9061 = vset.pattern.permute.xlu0 0
    %9062 = vperm.xlu0 %9061, %v8934
    %v9063 = vpop.permute.xlu0 %9062
    %9066 = vset.pattern.permute.xlu0 0
    %9067 = vperm.xlu0 %9066, %v8935
    %v9068 = vpop.permute.xlu0 %9067
    %9071 = vset.pattern.permute.xlu0 0
    %9072 = vperm.xlu0 %9071, %v8936
    %v9073 = vpop.permute.xlu0 %9072
    %9076 = vset.pattern.permute.xlu0 0
    %9077 = vperm.xlu0 %9076, %v8937
    %v9078 = vpop.permute.xlu0 %9077
    %9081 = vset.pattern.permute.xlu0 0
    %9082 = vperm.xlu0 %9081, %v8938
    %v9083 = vpop.permute.xlu0 %9082
    %9086 = vset.pattern.permute.xlu0 0
    %9087 = vperm.xlu0 %9086, %v8939
    %v9088 = vpop.permute.xlu0 %9087
    %9091 = vset.pattern.permute.xlu0 0
    %9092 = vperm.xlu0 %9091, %v8940
    %v9093 = vpop.permute.xlu0 %9092
    %9096 = vset.pattern.permute.xlu0 0
    %9097 = vperm.xlu0 %9096, %v8941
    %v9098 = vpop.permute.xlu0 %9097
    %9101 = vset.pattern.permute.xlu0 0
    %9102 = vperm.xlu0 %9101, %v8942
    %v9103 = vpop.permute.xlu0 %9102
    %9106 = vset.pattern.permute.xlu0 0
    %9107 = vperm.xlu0 %9106, %v8943
    %v9108 = vpop.permute.xlu0 %9107
    %9111 = vset.pattern.permute.xlu0 0
    %9112 = vperm.xlu0 %9111, %v8944
    %v9113 = vpop.permute.xlu0 %9112
    %9116 = vset.pattern.permute.xlu0 0
    %9117 = vperm.xlu0 %9116, %v8945
    %v9118 = vpop.permute.xlu0 %9117
    %9121 = vset.pattern.permute.xlu0 0
    %9122 = vperm.xlu0 %9121, %v8946
    %v9123 = vpop.permute.xlu0 %9122
    %9126 = vset.pattern.permute.xlu0 0
    %9127 = vperm.xlu0 %9126, %v8947
    %v9128 = vpop.permute.xlu0 %9127
    %9131 = vset.pattern.permute.xlu0 0
    %9132 = vperm.xlu0 %9131, %v8948
    %v9133 = vpop.permute.xlu0 %9132
    %9136 = vset.pattern.permute.xlu0 0
    %9137 = vperm.xlu0 %9136, %v8949
    %v9138 = vpop.permute.xlu0 %9137
    %9141 = vset.pattern.permute.xlu0 0
    %9142 = vperm.xlu0 %9141, %v8950
    %v9143 = vpop.permute.xlu0 %9142
    %9146 = vset.pattern.permute.xlu0 0
    %9147 = vperm.xlu0 %9146, %v8951
    %v9148 = vpop.permute.xlu0 %9147
    %v9150 = vadd.f32 %v9042, %v9063
    %v9151 = vadd.f32 %v9043, %v9068
    %v9152 = vadd.f32 %v9044, %v9073
    %v9153 = vadd.f32 %v9045, %v9078
    %v9154 = vadd.f32 %v9046, %v9083
    %v9155 = vadd.f32 %v9047, %v9088
    %v9156 = vadd.f32 %v9048, %v9093
    %v9157 = vadd.f32 %v9049, %v9098
    %v9158 = vadd.f32 %v9050, %v9103
    %v9159 = vadd.f32 %v9051, %v9108
    %v9160 = vadd.f32 %v9052, %v9113
    %v9161 = vadd.f32 %v9053, %v9118
    %v9162 = vadd.f32 %v9054, %v9123
    %v9163 = vadd.f32 %v9055, %v9128
    %v9164 = vadd.f32 %v9056, %v9133
    %v9165 = vadd.f32 %v9057, %v9138
    %v9166 = vadd.f32 %v9058, %v9143
    %v9167 = vadd.f32 %v9059, %v9148
    %v9168 = vmax.f32 %v9150, 0.0
    %v9169 = vmax.f32 %v9151, 0.0
    %v9170 = vmax.f32 %v9152, 0.0
    %v9171 = vmax.f32 %v9153, 0.0
    %v9172 = vmax.f32 %v9154, 0.0
    %v9173 = vmax.f32 %v9155, 0.0
    %v9174 = vmax.f32 %v9156, 0.0
    %v9175 = vmax.f32 %v9157, 0.0
    %v9176 = vmax.f32 %v9158, 0.0
    %v9177 = vmax.f32 %v9159, 0.0
    %v9178 = vmax.f32 %v9160, 0.0
    %v9179 = vmax.f32 %v9161, 0.0
    %v9180 = vmax.f32 %v9162, 0.0
    %v9181 = vmax.f32 %v9163, 0.0
    %v9182 = vmax.f32 %v9164, 0.0
    %v9183 = vmax.f32 %v9165, 0.0
    %v9184 = vmax.f32 %v9166, 0.0
    %v9185 = vmax.f32 %v9167, 0.0
    %v9186 = vpack.c.bf16 %v9169, %v9168
    %v9187 = vpack.c.bf16 %v9171, %v9170
    %v9188 = vpack.c.bf16 %v9173, %v9172
    %v9189 = vpack.c.bf16 %v9175, %v9174
    %v9190 = vpack.c.bf16 %v9177, %v9176
    %v9191 = vpack.c.bf16 %v9179, %v9178
    %v9192 = vpack.c.bf16 %v9181, %v9180
    %v9193 = vpack.c.bf16 %v9183, %v9182
    %v9194 = vpack.c.bf16 %v9185, %v9184
    %v9195 = vld [vmem:[%s17] sm:$0xf]
    %v9196 = vld [vmem:[%s17 + $0x4] sm:$0xf]
    %v9197 = vld [vmem:[%s17 + $0x8] sm:$0xf]
    %v9198 = vld [vmem:[%s17 + $0xc] sm:$0x7]
    %v9203 = vunpack.c.l.b16 %v9195
    %v9204 = vunpack.c.l.b16 %v9196
    %v9205 = vunpack.c.l.b16 %v9197
    %v9206 = vunpack.c.l.b16 %v9198
    %v9207 = vpack.c.b16 %v9204, %v9203
    %v9208 = vpack.c.b16 %v9206, %v9205
    %v9211 = vsel %vm8432, %v9186, 0
    %v9214 = vsel %vm8432, %v9187, 0
    %v9217 = vsel %vm8432, %v9188, 0
    %v9220 = vsel %vm8432, %v9189, 0
    %v9223 = vsel %vm8432, %v9190, 0
    %v9226 = vsel %vm8432, %v9191, 0
    %v9229 = vsel %vm8432, %v9192, 0
    %v9232 = vsel %vm8432, %v9193, 0
    %v9235 = vsel %vm8432, %v9194, 0
    %vm9237 = vcmask 1046528
    %v9239 = vsel %vm9237, %v9208, 0
    %9241 = vmatpush.bf16.msra.mxu0 0
    %9242 = vmatpush.bf16.msra.mxu0 0
    %9243 = vmatpush.bf16.msra.mxu0 0
    %9244 = vmatpush.bf16.msra.mxu0 0
    %9245 = vmatpush.bf16.msra.mxu0 0
    %9246 = vmatpush.bf16.msra.mxu0 0
    %9247 = vmatpush.bf16.msra.mxu0 %v9239
    %9248 = vmatpush.bf16.msra.mxu0 %v9207
    %9249 = vmatmul.bf16.gmra.mxu0 %v9211
    %v9250 = vpop.f32.mrf.mxu0
    %v9251 = vadd.f32 0.0, %v9250
    %v9252 = vpop.f32.mrf.mxu0
    %v9253 = vadd.f32 0.0, %v9252
    %9254 = vmatmul.bf16.gmra.mxu0 %v9214
    %v9255 = vpop.f32.mrf.mxu0
    %v9256 = vadd.f32 0.0, %v9255
    %v9257 = vpop.f32.mrf.mxu0
    %v9258 = vadd.f32 0.0, %v9257
    %9259 = vmatmul.bf16.gmra.mxu0 %v9217
    %v9260 = vpop.f32.mrf.mxu0
    %v9261 = vadd.f32 0.0, %v9260
    %v9262 = vpop.f32.mrf.mxu0
    %v9263 = vadd.f32 0.0, %v9262
    %9264 = vmatmul.bf16.gmra.mxu0 %v9220
    %v9265 = vpop.f32.mrf.mxu0
    %v9266 = vadd.f32 0.0, %v9265
    %v9267 = vpop.f32.mrf.mxu0
    %v9268 = vadd.f32 0.0, %v9267
    %9269 = vmatmul.bf16.gmra.mxu0 %v9223
    %v9270 = vpop.f32.mrf.mxu0
    %v9271 = vadd.f32 0.0, %v9270
    %v9272 = vpop.f32.mrf.mxu0
    %v9273 = vadd.f32 0.0, %v9272
    %9274 = vmatmul.bf16.gmra.mxu0 %v9226
    %v9275 = vpop.f32.mrf.mxu0
    %v9276 = vadd.f32 0.0, %v9275
    %v9277 = vpop.f32.mrf.mxu0
    %v9278 = vadd.f32 0.0, %v9277
    %9279 = vmatmul.bf16.gmra.mxu0 %v9229
    %v9280 = vpop.f32.mrf.mxu0
    %v9281 = vadd.f32 0.0, %v9280
    %v9282 = vpop.f32.mrf.mxu0
    %v9283 = vadd.f32 0.0, %v9282
    %9284 = vmatmul.bf16.gmra.mxu0 %v9232
    %v9285 = vpop.f32.mrf.mxu0
    %v9286 = vadd.f32 0.0, %v9285
    %v9287 = vpop.f32.mrf.mxu0
    %v9288 = vadd.f32 0.0, %v9287
    %9289 = vmatmul.bf16.gmra.mxu0 %v9235
    %v9290 = vpop.f32.mrf.mxu0
    %v9291 = vadd.f32 0.0, %v9290
    %v9292 = vpop.f32.mrf.mxu0
    %v9293 = vadd.f32 0.0, %v9292
    %9294 = vdwg.mxu0
    %s9295 = scalar_lea.vmem %s17, 16
    %v9296 = vld [vmem:[%s9295] sm:$0xf]
    %v9297 = vld [vmem:[%s9295 + $0x4] sm:$0xf]
    %v9298 = vld [vmem:[%s9295 + $0x8] sm:$0xf]
    %v9299 = vld [vmem:[%s9295 + $0xc] sm:$0x7]
    %v9304 = vunpack.c.l.b16 %v9296
    %v9305 = vunpack.c.l.b16 %v9297
    %v9306 = vunpack.c.l.b16 %v9298
    %v9307 = vunpack.c.l.b16 %v9299
    %v9308 = vpack.c.b16 %v9305, %v9304
    %v9309 = vpack.c.b16 %v9307, %v9306
    %v9312 = vsel %vm9237, %v9309, 0
    %9314 = vmatpush.bf16.msra.mxu0 0
    %9315 = vmatpush.bf16.msra.mxu0 0
    %9316 = vmatpush.bf16.msra.mxu0 0
    %9317 = vmatpush.bf16.msra.mxu0 0
    %9318 = vmatpush.bf16.msra.mxu0 0
    %9319 = vmatpush.bf16.msra.mxu0 0
    %9320 = vmatpush.bf16.msra.mxu0 %v9312
    %9321 = vmatpush.bf16.msra.mxu0 %v9308
    %9322 = vmatmul.bf16.gmra.mxu0 %v9211
    %v9323 = vpop.f32.mrf.mxu0
    %v9324 = vadd.f32 0.0, %v9323
    %v9325 = vpop.f32.mrf.mxu0
    %v9326 = vadd.f32 0.0, %v9325
    %9327 = vmatmul.bf16.gmra.mxu0 %v9214
    %v9328 = vpop.f32.mrf.mxu0
    %v9329 = vadd.f32 0.0, %v9328
    %v9330 = vpop.f32.mrf.mxu0
    %v9331 = vadd.f32 0.0, %v9330
    %9332 = vmatmul.bf16.gmra.mxu0 %v9217
    %v9333 = vpop.f32.mrf.mxu0
    %v9334 = vadd.f32 0.0, %v9333
    %v9335 = vpop.f32.mrf.mxu0
    %v9336 = vadd.f32 0.0, %v9335
    %9337 = vmatmul.bf16.gmra.mxu0 %v9220
    %v9338 = vpop.f32.mrf.mxu0
    %v9339 = vadd.f32 0.0, %v9338
    %v9340 = vpop.f32.mrf.mxu0
    %v9341 = vadd.f32 0.0, %v9340
    %9342 = vmatmul.bf16.gmra.mxu0 %v9223
    %v9343 = vpop.f32.mrf.mxu0
    %v9344 = vadd.f32 0.0, %v9343
    %v9345 = vpop.f32.mrf.mxu0
    %v9346 = vadd.f32 0.0, %v9345
    %9347 = vmatmul.bf16.gmra.mxu0 %v9226
    %v9348 = vpop.f32.mrf.mxu0
    %v9349 = vadd.f32 0.0, %v9348
    %v9350 = vpop.f32.mrf.mxu0
    %v9351 = vadd.f32 0.0, %v9350
    %9352 = vmatmul.bf16.gmra.mxu0 %v9229
    %v9353 = vpop.f32.mrf.mxu0
    %v9354 = vadd.f32 0.0, %v9353
    %v9355 = vpop.f32.mrf.mxu0
    %v9356 = vadd.f32 0.0, %v9355
    %9357 = vmatmul.bf16.gmra.mxu0 %v9232
    %v9358 = vpop.f32.mrf.mxu0
    %v9359 = vadd.f32 0.0, %v9358
    %v9360 = vpop.f32.mrf.mxu0
    %v9361 = vadd.f32 0.0, %v9360
    %9362 = vmatmul.bf16.gmra.mxu0 %v9235
    %v9363 = vpop.f32.mrf.mxu0
    %v9364 = vadd.f32 0.0, %v9363
    %v9365 = vpop.f32.mrf.mxu0
    %v9366 = vadd.f32 0.0, %v9365
    %9367 = vdwg.mxu0
    %s9368 = scalar_lea.vmem %s17, 32
    %v9369 = vld [vmem:[%s9368] sm:$0xf]
    %v9370 = vld [vmem:[%s9368 + $0x4] sm:$0xf]
    %v9371 = vld [vmem:[%s9368 + $0x8] sm:$0xf]
    %v9372 = vld [vmem:[%s9368 + $0xc] sm:$0x7]
    %v9377 = vunpack.c.l.b16 %v9369
    %v9378 = vunpack.c.l.b16 %v9370
    %v9379 = vunpack.c.l.b16 %v9371
    %v9380 = vunpack.c.l.b16 %v9372
    %v9381 = vpack.c.b16 %v9378, %v9377
    %v9382 = vpack.c.b16 %v9380, %v9379
    %v9385 = vsel %vm9237, %v9382, 0
    %9387 = vmatpush.bf16.msra.mxu0 0
    %9388 = vmatpush.bf16.msra.mxu0 0
    %9389 = vmatpush.bf16.msra.mxu0 0
    %9390 = vmatpush.bf16.msra.mxu0 0
    %9391 = vmatpush.bf16.msra.mxu0 0
    %9392 = vmatpush.bf16.msra.mxu0 0
    %9393 = vmatpush.bf16.msra.mxu0 %v9385
    %9394 = vmatpush.bf16.msra.mxu0 %v9381
    %9395 = vmatmul.bf16.gmra.mxu0 %v9211
    %v9396 = vpop.f32.mrf.mxu0
    %v9397 = vadd.f32 0.0, %v9396
    %v9398 = vpop.f32.mrf.mxu0
    %v9399 = vadd.f32 0.0, %v9398
    %9400 = vmatmul.bf16.gmra.mxu0 %v9214
    %v9401 = vpop.f32.mrf.mxu0
    %v9402 = vadd.f32 0.0, %v9401
    %v9403 = vpop.f32.mrf.mxu0
    %v9404 = vadd.f32 0.0, %v9403
    %9405 = vmatmul.bf16.gmra.mxu0 %v9217
    %v9406 = vpop.f32.mrf.mxu0
    %v9407 = vadd.f32 0.0, %v9406
    %v9408 = vpop.f32.mrf.mxu0
    %v9409 = vadd.f32 0.0, %v9408
    %9410 = vmatmul.bf16.gmra.mxu0 %v9220
    %v9411 = vpop.f32.mrf.mxu0
    %v9412 = vadd.f32 0.0, %v9411
    %v9413 = vpop.f32.mrf.mxu0
    %v9414 = vadd.f32 0.0, %v9413
    %9415 = vmatmul.bf16.gmra.mxu0 %v9223
    %v9416 = vpop.f32.mrf.mxu0
    %v9417 = vadd.f32 0.0, %v9416
    %v9418 = vpop.f32.mrf.mxu0
    %v9419 = vadd.f32 0.0, %v9418
    %9420 = vmatmul.bf16.gmra.mxu0 %v9226
    %v9421 = vpop.f32.mrf.mxu0
    %v9422 = vadd.f32 0.0, %v9421
    %v9423 = vpop.f32.mrf.mxu0
    %v9424 = vadd.f32 0.0, %v9423
    %9425 = vmatmul.bf16.gmra.mxu0 %v9229
    %v9426 = vpop.f32.mrf.mxu0
    %v9427 = vadd.f32 0.0, %v9426
    %v9428 = vpop.f32.mrf.mxu0
    %v9429 = vadd.f32 0.0, %v9428
    %9430 = vmatmul.bf16.gmra.mxu0 %v9232
    %v9431 = vpop.f32.mrf.mxu0
    %v9432 = vadd.f32 0.0, %v9431
    %v9433 = vpop.f32.mrf.mxu0
    %v9434 = vadd.f32 0.0, %v9433
    %9435 = vmatmul.bf16.gmra.mxu0 %v9235
    %v9436 = vpop.f32.mrf.mxu0
    %v9437 = vadd.f32 0.0, %v9436
    %v9438 = vpop.f32.mrf.mxu0
    %v9439 = vadd.f32 0.0, %v9438
    %9440 = vdwg.mxu0
    %s9441 = scalar_lea.vmem %s17, 48
    %v9442 = vld [vmem:[%s9441] sm:$0xf]
    %v9443 = vld [vmem:[%s9441 + $0x4] sm:$0xf]
    %v9444 = vld [vmem:[%s9441 + $0x8] sm:$0xf]
    %v9445 = vld [vmem:[%s9441 + $0xc] sm:$0x7]
    %v9450 = vunpack.c.l.b16 %v9442
    %v9451 = vunpack.c.l.b16 %v9443
    %v9452 = vunpack.c.l.b16 %v9444
    %v9453 = vunpack.c.l.b16 %v9445
    %v9454 = vpack.c.b16 %v9451, %v9450
    %v9455 = vpack.c.b16 %v9453, %v9452
    %v9458 = vsel %vm9237, %v9455, 0
    %9460 = vmatpush.bf16.msra.mxu0 0
    %9461 = vmatpush.bf16.msra.mxu0 0
    %9462 = vmatpush.bf16.msra.mxu0 0
    %9463 = vmatpush.bf16.msra.mxu0 0
    %9464 = vmatpush.bf16.msra.mxu0 0
    %9465 = vmatpush.bf16.msra.mxu0 0
    %9466 = vmatpush.bf16.msra.mxu0 %v9458
    %9467 = vmatpush.bf16.msra.mxu0 %v9454
    %9468 = vmatmul.bf16.gmra.mxu0 %v9211
    %v9469 = vpop.f32.mrf.mxu0
    %v9470 = vadd.f32 0.0, %v9469
    %v9471 = vpop.f32.mrf.mxu0
    %v9472 = vadd.f32 0.0, %v9471
    %9473 = vmatmul.bf16.gmra.mxu0 %v9214
    %v9474 = vpop.f32.mrf.mxu0
    %v9475 = vadd.f32 0.0, %v9474
    %v9476 = vpop.f32.mrf.mxu0
    %v9477 = vadd.f32 0.0, %v9476
    %9478 = vmatmul.bf16.gmra.mxu0 %v9217
    %v9479 = vpop.f32.mrf.mxu0
    %v9480 = vadd.f32 0.0, %v9479
    %v9481 = vpop.f32.mrf.mxu0
    %v9482 = vadd.f32 0.0, %v9481
    %9483 = vmatmul.bf16.gmra.mxu0 %v9220
    %v9484 = vpop.f32.mrf.mxu0
    %v9485 = vadd.f32 0.0, %v9484
    %v9486 = vpop.f32.mrf.mxu0
    %v9487 = vadd.f32 0.0, %v9486
    %9488 = vmatmul.bf16.gmra.mxu0 %v9223
    %v9489 = vpop.f32.mrf.mxu0
    %v9490 = vadd.f32 0.0, %v9489
    %v9491 = vpop.f32.mrf.mxu0
    %v9492 = vadd.f32 0.0, %v9491
    %9493 = vmatmul.bf16.gmra.mxu0 %v9226
    %v9494 = vpop.f32.mrf.mxu0
    %v9495 = vadd.f32 0.0, %v9494
    %v9496 = vpop.f32.mrf.mxu0
    %v9497 = vadd.f32 0.0, %v9496
    %9498 = vmatmul.bf16.gmra.mxu0 %v9229
    %v9499 = vpop.f32.mrf.mxu0
    %v9500 = vadd.f32 0.0, %v9499
    %v9501 = vpop.f32.mrf.mxu0
    %v9502 = vadd.f32 0.0, %v9501
    %9503 = vmatmul.bf16.gmra.mxu0 %v9232
    %v9504 = vpop.f32.mrf.mxu0
    %v9505 = vadd.f32 0.0, %v9504
    %v9506 = vpop.f32.mrf.mxu0
    %v9507 = vadd.f32 0.0, %v9506
    %9508 = vmatmul.bf16.gmra.mxu0 %v9235
    %v9509 = vpop.f32.mrf.mxu0
    %v9510 = vadd.f32 0.0, %v9509
    %v9511 = vpop.f32.mrf.mxu0
    %v9512 = vadd.f32 0.0, %v9511
    %9513 = vdwg.mxu0
    %s9514 = scalar_lea.vmem %s17, 64
    %v9515 = vld [vmem:[%s9514] sm:$0xf]
    %v9516 = vld [vmem:[%s9514 + $0x4] sm:$0xf]
    %v9517 = vld [vmem:[%s9514 + $0x8] sm:$0xf]
    %v9518 = vld [vmem:[%s9514 + $0xc] sm:$0x7]
    %v9523 = vunpack.c.l.b16 %v9515
    %v9524 = vunpack.c.l.b16 %v9516
    %v9525 = vunpack.c.l.b16 %v9517
    %v9526 = vunpack.c.l.b16 %v9518
    %v9527 = vpack.c.b16 %v9524, %v9523
    %v9528 = vpack.c.b16 %v9526, %v9525
    %v9531 = vsel %vm9237, %v9528, 0
    %9533 = vmatpush.bf16.msra.mxu0 0
    %9534 = vmatpush.bf16.msra.mxu0 0
    %9535 = vmatpush.bf16.msra.mxu0 0
    %9536 = vmatpush.bf16.msra.mxu0 0
    %9537 = vmatpush.bf16.msra.mxu0 0
    %9538 = vmatpush.bf16.msra.mxu0 0
    %9539 = vmatpush.bf16.msra.mxu0 %v9531
    %9540 = vmatpush.bf16.msra.mxu0 %v9527
    %9541 = vmatmul.bf16.gmra.mxu0 %v9211
    %v9542 = vpop.f32.mrf.mxu0
    %v9543 = vadd.f32 0.0, %v9542
    %v9544 = vpop.f32.mrf.mxu0
    %v9545 = vadd.f32 0.0, %v9544
    %9546 = vmatmul.bf16.gmra.mxu0 %v9214
    %v9547 = vpop.f32.mrf.mxu0
    %v9548 = vadd.f32 0.0, %v9547
    %v9549 = vpop.f32.mrf.mxu0
    %v9550 = vadd.f32 0.0, %v9549
    %9551 = vmatmul.bf16.gmra.mxu0 %v9217
    %v9552 = vpop.f32.mrf.mxu0
    %v9553 = vadd.f32 0.0, %v9552
    %v9554 = vpop.f32.mrf.mxu0
    %v9555 = vadd.f32 0.0, %v9554
    %9556 = vmatmul.bf16.gmra.mxu0 %v9220
    %v9557 = vpop.f32.mrf.mxu0
    %v9558 = vadd.f32 0.0, %v9557
    %v9559 = vpop.f32.mrf.mxu0
    %v9560 = vadd.f32 0.0, %v9559
    %9561 = vmatmul.bf16.gmra.mxu0 %v9223
    %v9562 = vpop.f32.mrf.mxu0
    %v9563 = vadd.f32 0.0, %v9562
    %v9564 = vpop.f32.mrf.mxu0
    %v9565 = vadd.f32 0.0, %v9564
    %9566 = vmatmul.bf16.gmra.mxu0 %v9226
    %v9567 = vpop.f32.mrf.mxu0
    %v9568 = vadd.f32 0.0, %v9567
    %v9569 = vpop.f32.mrf.mxu0
    %v9570 = vadd.f32 0.0, %v9569
    %9571 = vmatmul.bf16.gmra.mxu0 %v9229
    %v9572 = vpop.f32.mrf.mxu0
    %v9573 = vadd.f32 0.0, %v9572
    %v9574 = vpop.f32.mrf.mxu0
    %v9575 = vadd.f32 0.0, %v9574
    %9576 = vmatmul.bf16.gmra.mxu0 %v9232
    %v9577 = vpop.f32.mrf.mxu0
    %v9578 = vadd.f32 0.0, %v9577
    %v9579 = vpop.f32.mrf.mxu0
    %v9580 = vadd.f32 0.0, %v9579
    %9581 = vmatmul.bf16.gmra.mxu0 %v9235
    %v9582 = vpop.f32.mrf.mxu0
    %v9583 = vadd.f32 0.0, %v9582
    %v9584 = vpop.f32.mrf.mxu0
    %v9585 = vadd.f32 0.0, %v9584
    %9586 = vdwg.mxu0
    %v9587 = vpack.c.bf16 %v9253, %v9251
    %v9588 = vpack.c.bf16 %v9258, %v9256
    %v9589 = vpack.c.bf16 %v9263, %v9261
    %v9590 = vpack.c.bf16 %v9268, %v9266
    %v9591 = vpack.c.bf16 %v9273, %v9271
    %v9592 = vpack.c.bf16 %v9278, %v9276
    %v9593 = vpack.c.bf16 %v9283, %v9281
    %v9594 = vpack.c.bf16 %v9288, %v9286
    %v9595 = vpack.c.bf16 %v9293, %v9291
    %v9596 = vpack.c.bf16 %v9326, %v9324
    %v9597 = vpack.c.bf16 %v9331, %v9329
    %v9598 = vpack.c.bf16 %v9336, %v9334
    %v9599 = vpack.c.bf16 %v9341, %v9339
    %v9600 = vpack.c.bf16 %v9346, %v9344
    %v9601 = vpack.c.bf16 %v9351, %v9349
    %v9602 = vpack.c.bf16 %v9356, %v9354
    %v9603 = vpack.c.bf16 %v9361, %v9359
    %v9604 = vpack.c.bf16 %v9366, %v9364
    %v9605 = vpack.c.bf16 %v9399, %v9397
    %v9606 = vpack.c.bf16 %v9404, %v9402
    %v9607 = vpack.c.bf16 %v9409, %v9407
    %v9608 = vpack.c.bf16 %v9414, %v9412
    %v9609 = vpack.c.bf16 %v9419, %v9417
    %v9610 = vpack.c.bf16 %v9424, %v9422
    %v9611 = vpack.c.bf16 %v9429, %v9427
    %v9612 = vpack.c.bf16 %v9434, %v9432
    %v9613 = vpack.c.bf16 %v9439, %v9437
    %v9614 = vpack.c.bf16 %v9472, %v9470
    %v9615 = vpack.c.bf16 %v9477, %v9475
    %v9616 = vpack.c.bf16 %v9482, %v9480
    %v9617 = vpack.c.bf16 %v9487, %v9485
    %v9618 = vpack.c.bf16 %v9492, %v9490
    %v9619 = vpack.c.bf16 %v9497, %v9495
    %v9620 = vpack.c.bf16 %v9502, %v9500
    %v9621 = vpack.c.bf16 %v9507, %v9505
    %v9622 = vpack.c.bf16 %v9512, %v9510
    %v9623 = vpack.c.bf16 %v9545, %v9543
    %v9624 = vpack.c.bf16 %v9550, %v9548
    %v9625 = vpack.c.bf16 %v9555, %v9553
    %v9626 = vpack.c.bf16 %v9560, %v9558
    %v9627 = vpack.c.bf16 %v9565, %v9563
    %v9628 = vpack.c.bf16 %v9570, %v9568
    %v9629 = vpack.c.bf16 %v9575, %v9573
    %v9630 = vpack.c.bf16 %v9580, %v9578
    %v9631 = vpack.c.bf16 %v9585, %v9583
    %v9632 = vld [vmem:[%s16] sm:$0xff]
    %v9633 = vld [vmem:[%s16 + $0x8] sm:$0xff]
    %v9634 = vld [vmem:[%s16 + $0x10] sm:$0xff]
    %v9635 = vld [vmem:[%s16 + $0x18] sm:$0xff]
    %v9636 = vld [vmem:[%s16 + $0x20] sm:$0xff]
    %v9637 = vld [vmem:[%s16 + $0x28] sm:$0xff]
    %v9638 = vld [vmem:[%s16 + $0x30] sm:$0xff]
    %v9639 = vld [vmem:[%s16 + $0x38] sm:$0xff]
    %v9640 = vld [vmem:[%s16 + $0x40] sm:$0xff]
    %v9641 = vld [vmem:[%s16 + $0x48] sm:$0xff]
    %v9642 = vld [vmem:[%s16 + $0x50] sm:$0xff]
    %v9643 = vld [vmem:[%s16 + $0x58] sm:$0xff]
    %v9644 = vld [vmem:[%s16 + $0x60] sm:$0xff]
    %v9645 = vld [vmem:[%s16 + $0x68] sm:$0xff]
    %v9646 = vld [vmem:[%s16 + $0x70] sm:$0xff]
    %v9647 = vld [vmem:[%s16 + $0x78] sm:$0xff]
    %v9648 = vld [vmem:[%s16 + $0x80] sm:$0xff]
    %v9649 = vld [vmem:[%s16 + $0x88] sm:$0xff]
    %v9650 = vld [vmem:[%s16 + $0x90] sm:$0xff]
    %v9651 = vld [vmem:[%s16 + $0x98] sm:$0xff]
    %v9652 = vld [vmem:[%s16 + $0xa0] sm:$0xff]
    %v9653 = vld [vmem:[%s16 + $0xa8] sm:$0xff]
    %v9654 = vld [vmem:[%s16 + $0xb0] sm:$0xff]
    %v9655 = vld [vmem:[%s16 + $0xb8] sm:$0xff]
    %v9656 = vld [vmem:[%s16 + $0xc0] sm:$0xff]
    %v9657 = vld [vmem:[%s16 + $0xc8] sm:$0xff]
    %v9658 = vld [vmem:[%s16 + $0xd0] sm:$0xff]
    %v9659 = vld [vmem:[%s16 + $0xd8] sm:$0xff]
    %v9660 = vld [vmem:[%s16 + $0xe0] sm:$0xff]
    %v9661 = vld [vmem:[%s16 + $0xe8] sm:$0xff]
    %v9662 = vld [vmem:[%s16 + $0xf0] sm:$0xff]
    %v9663 = vld [vmem:[%s16 + $0xf8] sm:$0xff]
    %v9664 = vld [vmem:[%s16 + $0x100] sm:$0xff]
    %v9665 = vld [vmem:[%s16 + $0x108] sm:$0xff]
    %v9666 = vld [vmem:[%s16 + $0x110] sm:$0xff]
    %v9667 = vld [vmem:[%s16 + $0x118] sm:$0xff]
    %v9704 = vunpack.c.l.b16 %v9632
    %v9705 = vunpack.c.h.b16 %v9632
    %v9706 = vunpack.c.l.b16 %v9633
    %v9707 = vunpack.c.h.b16 %v9633
    %v9708 = vunpack.c.l.b16 %v9634
    %v9709 = vunpack.c.h.b16 %v9634
    %v9710 = vunpack.c.l.b16 %v9635
    %v9711 = vunpack.c.h.b16 %v9635
    %v9712 = vunpack.c.l.b16 %v9636
    %v9713 = vunpack.c.h.b16 %v9636
    %v9714 = vunpack.c.l.b16 %v9637
    %v9715 = vunpack.c.h.b16 %v9637
    %v9716 = vunpack.c.l.b16 %v9638
    %v9717 = vunpack.c.h.b16 %v9638
    %v9718 = vunpack.c.l.b16 %v9639
    %v9719 = vunpack.c.h.b16 %v9639
    %v9720 = vunpack.c.l.b16 %v9640
    %v9721 = vunpack.c.h.b16 %v9640
    %v9722 = vunpack.c.l.b16 %v9641
    %v9723 = vunpack.c.h.b16 %v9641
    %v9724 = vunpack.c.l.b16 %v9642
    %v9725 = vunpack.c.h.b16 %v9642
    %v9726 = vunpack.c.l.b16 %v9643
    %v9727 = vunpack.c.h.b16 %v9643
    %v9728 = vunpack.c.l.b16 %v9644
    %v9729 = vunpack.c.h.b16 %v9644
    %v9730 = vunpack.c.l.b16 %v9645
    %v9731 = vunpack.c.h.b16 %v9645
    %v9732 = vunpack.c.l.b16 %v9646
    %v9733 = vunpack.c.h.b16 %v9646
    %v9734 = vunpack.c.l.b16 %v9647
    %v9735 = vunpack.c.h.b16 %v9647
    %v9736 = vunpack.c.l.b16 %v9648
    %v9737 = vunpack.c.h.b16 %v9648
    %v9738 = vunpack.c.l.b16 %v9649
    %v9739 = vunpack.c.h.b16 %v9649
    %v9740 = vunpack.c.l.b16 %v9650
    %v9741 = vunpack.c.h.b16 %v9650
    %v9742 = vunpack.c.l.b16 %v9651
    %v9743 = vunpack.c.h.b16 %v9651
    %v9744 = vunpack.c.l.b16 %v9652
    %v9745 = vunpack.c.h.b16 %v9652
    %v9746 = vunpack.c.l.b16 %v9653
    %v9747 = vunpack.c.h.b16 %v9653
    %v9748 = vunpack.c.l.b16 %v9654
    %v9749 = vunpack.c.h.b16 %v9654
    %v9750 = vunpack.c.l.b16 %v9655
    %v9751 = vunpack.c.h.b16 %v9655
    %v9752 = vunpack.c.l.b16 %v9656
    %v9753 = vunpack.c.h.b16 %v9656
    %v9754 = vunpack.c.l.b16 %v9657
    %v9755 = vunpack.c.h.b16 %v9657
    %v9756 = vunpack.c.l.b16 %v9658
    %v9757 = vunpack.c.h.b16 %v9658
    %v9758 = vunpack.c.l.b16 %v9659
    %v9759 = vunpack.c.h.b16 %v9659
    %v9760 = vunpack.c.l.b16 %v9660
    %v9761 = vunpack.c.h.b16 %v9660
    %v9762 = vunpack.c.l.b16 %v9661
    %v9763 = vunpack.c.h.b16 %v9661
    %v9764 = vunpack.c.l.b16 %v9662
    %v9765 = vunpack.c.h.b16 %v9662
    %v9766 = vunpack.c.l.b16 %v9663
    %v9767 = vunpack.c.h.b16 %v9663
    %v9768 = vunpack.c.l.b16 %v9664
    %v9769 = vunpack.c.h.b16 %v9664
    %v9770 = vunpack.c.l.b16 %v9665
    %v9771 = vunpack.c.h.b16 %v9665
    %v9772 = vunpack.c.l.b16 %v9666
    %v9773 = vunpack.c.h.b16 %v9666
    %v9774 = vunpack.c.l.b16 %v9667
    %v9775 = vunpack.c.h.b16 %v9667
    %v9776 = vpack.c.b16 %v9710, %v9704
    %v9777 = vpack.c.b16 %v9711, %v9705
    %v9778 = vpack.c.b16 %v9712, %v9706
    %v9779 = vpack.c.b16 %v9713, %v9707
    %v9780 = vpack.c.b16 %v9714, %v9708
    %v9781 = vpack.c.b16 %v9715, %v9709
    %v9782 = vpack.c.b16 %v9722, %v9716
    %v9783 = vpack.c.b16 %v9723, %v9717
    %v9784 = vpack.c.b16 %v9724, %v9718
    %v9785 = vpack.c.b16 %v9725, %v9719
    %v9786 = vpack.c.b16 %v9726, %v9720
    %v9787 = vpack.c.b16 %v9727, %v9721
    %v9788 = vpack.c.b16 %v9734, %v9728
    %v9789 = vpack.c.b16 %v9735, %v9729
    %v9790 = vpack.c.b16 %v9736, %v9730
    %v9791 = vpack.c.b16 %v9737, %v9731
    %v9792 = vpack.c.b16 %v9738, %v9732
    %v9793 = vpack.c.b16 %v9739, %v9733
    %v9794 = vpack.c.b16 %v9746, %v9740
    %v9795 = vpack.c.b16 %v9747, %v9741
    %v9796 = vpack.c.b16 %v9748, %v9742
    %v9797 = vpack.c.b16 %v9749, %v9743
    %v9798 = vpack.c.b16 %v9750, %v9744
    %v9799 = vpack.c.b16 %v9751, %v9745
    %v9800 = vpack.c.b16 %v9758, %v9752
    %v9801 = vpack.c.b16 %v9759, %v9753
    %v9802 = vpack.c.b16 %v9760, %v9754
    %v9803 = vpack.c.b16 %v9761, %v9755
    %v9804 = vpack.c.b16 %v9762, %v9756
    %v9805 = vpack.c.b16 %v9763, %v9757
    %v9806 = vpack.c.b16 %v9770, %v9764
    %v9807 = vpack.c.b16 %v9771, %v9765
    %v9808 = vpack.c.b16 %v9772, %v9766
    %v9809 = vpack.c.b16 %v9773, %v9767
    %v9810 = vpack.c.b16 %v9774, %v9768
    %v9811 = vpack.c.b16 %v9775, %v9769
    %v9843 = vsel %vm8080, %v9781, 0
    %v9846 = vsel %vm8080, %v9787, 0
    %v9849 = vsel %vm8080, %v9793, 0
    %v9852 = vsel %vm8080, %v9799, 0
    %v9855 = vsel %vm8080, %v9805, 0
    %v9858 = vsel %vm8080, %v9811, 0
    %9860 = vmatpush.bf16.msra.mxu0 %v9594
    %9861 = vmatpush.bf16.msra.mxu0 %v9593
    %9862 = vmatpush.bf16.msra.mxu0 %v9592
    %9863 = vmatpush.bf16.msra.mxu0 %v9591
    %9864 = vmatpush.bf16.msra.mxu0 %v9590
    %9865 = vmatpush.bf16.msra.mxu0 %v9589
    %9866 = vmatpush.bf16.msra.mxu0 %v9588
    %9867 = vmatpush.bf16.msra.mxu0 %v9587
    %9868 = vmatmul.bf16.gmra.mxu0 %v9776
    %v9869 = vpop.f32.mrf.mxu0
    %v9870 = vadd.f32 0.0, %v9869
    %v9871 = vpop.f32.mrf.mxu0
    %v9872 = vadd.f32 0.0, %v9871
    %9873 = vmatmul.bf16.gmra.mxu0 %v9782
    %v9874 = vpop.f32.mrf.mxu0
    %v9875 = vadd.f32 0.0, %v9874
    %v9876 = vpop.f32.mrf.mxu0
    %v9877 = vadd.f32 0.0, %v9876
    %9878 = vmatmul.bf16.gmra.mxu0 %v9788
    %v9879 = vpop.f32.mrf.mxu0
    %v9880 = vadd.f32 0.0, %v9879
    %v9881 = vpop.f32.mrf.mxu0
    %v9882 = vadd.f32 0.0, %v9881
    %9883 = vmatmul.bf16.gmra.mxu0 %v9794
    %v9884 = vpop.f32.mrf.mxu0
    %v9885 = vadd.f32 0.0, %v9884
    %v9886 = vpop.f32.mrf.mxu0
    %v9887 = vadd.f32 0.0, %v9886
    %9888 = vmatmul.bf16.gmra.mxu0 %v9800
    %v9889 = vpop.f32.mrf.mxu0
    %v9890 = vadd.f32 0.0, %v9889
    %v9891 = vpop.f32.mrf.mxu0
    %v9892 = vadd.f32 0.0, %v9891
    %9893 = vmatmul.bf16.gmra.mxu0 %v9806
    %v9894 = vpop.f32.mrf.mxu0
    %v9895 = vadd.f32 0.0, %v9894
    %v9896 = vpop.f32.mrf.mxu0
    %v9897 = vadd.f32 0.0, %v9896
    %9898 = vdwg.mxu0
    %9899 = vmatpush.bf16.msra.mxu0 %v9602
    %9900 = vmatpush.bf16.msra.mxu0 %v9601
    %9901 = vmatpush.bf16.msra.mxu0 %v9600
    %9902 = vmatpush.bf16.msra.mxu0 %v9599
    %9903 = vmatpush.bf16.msra.mxu0 %v9598
    %9904 = vmatpush.bf16.msra.mxu0 %v9597
    %9905 = vmatpush.bf16.msra.mxu0 %v9596
    %9906 = vmatpush.bf16.msra.mxu0 %v9595
    %9907 = vmatmul.bf16.gmra.mxu0 %v9777
    %v9908 = vpop.f32.mrf.mxu0
    %v9909 = vadd.f32 %v9870, %v9908
    %v9910 = vpop.f32.mrf.mxu0
    %v9911 = vadd.f32 %v9872, %v9910
    %9912 = vmatmul.bf16.gmra.mxu0 %v9783
    %v9913 = vpop.f32.mrf.mxu0
    %v9914 = vadd.f32 %v9875, %v9913
    %v9915 = vpop.f32.mrf.mxu0
    %v9916 = vadd.f32 %v9877, %v9915
    %9917 = vmatmul.bf16.gmra.mxu0 %v9789
    %v9918 = vpop.f32.mrf.mxu0
    %v9919 = vadd.f32 %v9880, %v9918
    %v9920 = vpop.f32.mrf.mxu0
    %v9921 = vadd.f32 %v9882, %v9920
    %9922 = vmatmul.bf16.gmra.mxu0 %v9795
    %v9923 = vpop.f32.mrf.mxu0
    %v9924 = vadd.f32 %v9885, %v9923
    %v9925 = vpop.f32.mrf.mxu0
    %v9926 = vadd.f32 %v9887, %v9925
    %9927 = vmatmul.bf16.gmra.mxu0 %v9801
    %v9928 = vpop.f32.mrf.mxu0
    %v9929 = vadd.f32 %v9890, %v9928
    %v9930 = vpop.f32.mrf.mxu0
    %v9931 = vadd.f32 %v9892, %v9930
    %9932 = vmatmul.bf16.gmra.mxu0 %v9807
    %v9933 = vpop.f32.mrf.mxu0
    %v9934 = vadd.f32 %v9895, %v9933
    %v9935 = vpop.f32.mrf.mxu0
    %v9936 = vadd.f32 %v9897, %v9935
    %9937 = vdwg.mxu0
    %9938 = vmatpush.bf16.msra.mxu0 %v9610
    %9939 = vmatpush.bf16.msra.mxu0 %v9609
    %9940 = vmatpush.bf16.msra.mxu0 %v9608
    %9941 = vmatpush.bf16.msra.mxu0 %v9607
    %9942 = vmatpush.bf16.msra.mxu0 %v9606
    %9943 = vmatpush.bf16.msra.mxu0 %v9605
    %9944 = vmatpush.bf16.msra.mxu0 %v9604
    %9945 = vmatpush.bf16.msra.mxu0 %v9603
    %9946 = vmatmul.bf16.gmra.mxu0 %v9778
    %v9947 = vpop.f32.mrf.mxu0
    %v9948 = vadd.f32 %v9909, %v9947
    %v9949 = vpop.f32.mrf.mxu0
    %v9950 = vadd.f32 %v9911, %v9949
    %9951 = vmatmul.bf16.gmra.mxu0 %v9784
    %v9952 = vpop.f32.mrf.mxu0
    %v9953 = vadd.f32 %v9914, %v9952
    %v9954 = vpop.f32.mrf.mxu0
    %v9955 = vadd.f32 %v9916, %v9954
    %9956 = vmatmul.bf16.gmra.mxu0 %v9790
    %v9957 = vpop.f32.mrf.mxu0
    %v9958 = vadd.f32 %v9919, %v9957
    %v9959 = vpop.f32.mrf.mxu0
    %v9960 = vadd.f32 %v9921, %v9959
    %9961 = vmatmul.bf16.gmra.mxu0 %v9796
    %v9962 = vpop.f32.mrf.mxu0
    %v9963 = vadd.f32 %v9924, %v9962
    %v9964 = vpop.f32.mrf.mxu0
    %v9965 = vadd.f32 %v9926, %v9964
    %9966 = vmatmul.bf16.gmra.mxu0 %v9802
    %v9967 = vpop.f32.mrf.mxu0
    %v9968 = vadd.f32 %v9929, %v9967
    %v9969 = vpop.f32.mrf.mxu0
    %v9970 = vadd.f32 %v9931, %v9969
    %9971 = vmatmul.bf16.gmra.mxu0 %v9808
    %v9972 = vpop.f32.mrf.mxu0
    %v9973 = vadd.f32 %v9934, %v9972
    %v9974 = vpop.f32.mrf.mxu0
    %v9975 = vadd.f32 %v9936, %v9974
    %9976 = vdwg.mxu0
    %9977 = vmatpush.bf16.msra.mxu0 %v9618
    %9978 = vmatpush.bf16.msra.mxu0 %v9617
    %9979 = vmatpush.bf16.msra.mxu0 %v9616
    %9980 = vmatpush.bf16.msra.mxu0 %v9615
    %9981 = vmatpush.bf16.msra.mxu0 %v9614
    %9982 = vmatpush.bf16.msra.mxu0 %v9613
    %9983 = vmatpush.bf16.msra.mxu0 %v9612
    %9984 = vmatpush.bf16.msra.mxu0 %v9611
    %9985 = vmatmul.bf16.gmra.mxu0 %v9779
    %v9986 = vpop.f32.mrf.mxu0
    %v9987 = vadd.f32 %v9948, %v9986
    %v9988 = vpop.f32.mrf.mxu0
    %v9989 = vadd.f32 %v9950, %v9988
    %9990 = vmatmul.bf16.gmra.mxu0 %v9785
    %v9991 = vpop.f32.mrf.mxu0
    %v9992 = vadd.f32 %v9953, %v9991
    %v9993 = vpop.f32.mrf.mxu0
    %v9994 = vadd.f32 %v9955, %v9993
    %9995 = vmatmul.bf16.gmra.mxu0 %v9791
    %v9996 = vpop.f32.mrf.mxu0
    %v9997 = vadd.f32 %v9958, %v9996
    %v9998 = vpop.f32.mrf.mxu0
    %v9999 = vadd.f32 %v9960, %v9998
    %10000 = vmatmul.bf16.gmra.mxu0 %v9797
    %v10001 = vpop.f32.mrf.mxu0
    %v10002 = vadd.f32 %v9963, %v10001
    %v10003 = vpop.f32.mrf.mxu0
    %v10004 = vadd.f32 %v9965, %v10003
    %10005 = vmatmul.bf16.gmra.mxu0 %v9803
    %v10006 = vpop.f32.mrf.mxu0
    %v10007 = vadd.f32 %v9968, %v10006
    %v10008 = vpop.f32.mrf.mxu0
    %v10009 = vadd.f32 %v9970, %v10008
    %10010 = vmatmul.bf16.gmra.mxu0 %v9809
    %v10011 = vpop.f32.mrf.mxu0
    %v10012 = vadd.f32 %v9973, %v10011
    %v10013 = vpop.f32.mrf.mxu0
    %v10014 = vadd.f32 %v9975, %v10013
    %10015 = vdwg.mxu0
    %10016 = vmatpush.bf16.msra.mxu0 %v9626
    %10017 = vmatpush.bf16.msra.mxu0 %v9625
    %10018 = vmatpush.bf16.msra.mxu0 %v9624
    %10019 = vmatpush.bf16.msra.mxu0 %v9623
    %10020 = vmatpush.bf16.msra.mxu0 %v9622
    %10021 = vmatpush.bf16.msra.mxu0 %v9621
    %10022 = vmatpush.bf16.msra.mxu0 %v9620
    %10023 = vmatpush.bf16.msra.mxu0 %v9619
    %10024 = vmatmul.bf16.gmra.mxu0 %v9780
    %v10025 = vpop.f32.mrf.mxu0
    %v10026 = vadd.f32 %v9987, %v10025
    %v10027 = vpop.f32.mrf.mxu0
    %v10028 = vadd.f32 %v9989, %v10027
    %10029 = vmatmul.bf16.gmra.mxu0 %v9786
    %v10030 = vpop.f32.mrf.mxu0
    %v10031 = vadd.f32 %v9992, %v10030
    %v10032 = vpop.f32.mrf.mxu0
    %v10033 = vadd.f32 %v9994, %v10032
    %10034 = vmatmul.bf16.gmra.mxu0 %v9792
    %v10035 = vpop.f32.mrf.mxu0
    %v10036 = vadd.f32 %v9997, %v10035
    %v10037 = vpop.f32.mrf.mxu0
    %v10038 = vadd.f32 %v9999, %v10037
    %10039 = vmatmul.bf16.gmra.mxu0 %v9798
    %v10040 = vpop.f32.mrf.mxu0
    %v10041 = vadd.f32 %v10002, %v10040
    %v10042 = vpop.f32.mrf.mxu0
    %v10043 = vadd.f32 %v10004, %v10042
    %10044 = vmatmul.bf16.gmra.mxu0 %v9804
    %v10045 = vpop.f32.mrf.mxu0
    %v10046 = vadd.f32 %v10007, %v10045
    %v10047 = vpop.f32.mrf.mxu0
    %v10048 = vadd.f32 %v10009, %v10047
    %10049 = vmatmul.bf16.gmra.mxu0 %v9810
    %v10050 = vpop.f32.mrf.mxu0
    %v10051 = vadd.f32 %v10012, %v10050
    %v10052 = vpop.f32.mrf.mxu0
    %v10053 = vadd.f32 %v10014, %v10052
    %10054 = vdwg.mxu0
    %10055 = vmatpush.bf16.msra.mxu0 0
    %10056 = vmatpush.bf16.msra.mxu0 0
    %10057 = vmatpush.bf16.msra.mxu0 0
    %10058 = vmatpush.bf16.msra.mxu0 %v9631
    %10059 = vmatpush.bf16.msra.mxu0 %v9630
    %10060 = vmatpush.bf16.msra.mxu0 %v9629
    %10061 = vmatpush.bf16.msra.mxu0 %v9628
    %10062 = vmatpush.bf16.msra.mxu0 %v9627
    %10063 = vmatmul.bf16.gmra.mxu0 %v9843
    %v10064 = vpop.f32.mrf.mxu0
    %v10065 = vadd.f32 %v10026, %v10064
    %v10066 = vpop.f32.mrf.mxu0
    %v10067 = vadd.f32 %v10028, %v10066
    %10068 = vmatmul.bf16.gmra.mxu0 %v9846
    %v10069 = vpop.f32.mrf.mxu0
    %v10070 = vadd.f32 %v10031, %v10069
    %v10071 = vpop.f32.mrf.mxu0
    %v10072 = vadd.f32 %v10033, %v10071
    %10073 = vmatmul.bf16.gmra.mxu0 %v9849
    %v10074 = vpop.f32.mrf.mxu0
    %v10075 = vadd.f32 %v10036, %v10074
    %v10076 = vpop.f32.mrf.mxu0
    %v10077 = vadd.f32 %v10038, %v10076
    %10078 = vmatmul.bf16.gmra.mxu0 %v9852
    %v10079 = vpop.f32.mrf.mxu0
    %v10080 = vadd.f32 %v10041, %v10079
    %v10081 = vpop.f32.mrf.mxu0
    %v10082 = vadd.f32 %v10043, %v10081
    %10083 = vmatmul.bf16.gmra.mxu0 %v9855
    %v10084 = vpop.f32.mrf.mxu0
    %v10085 = vadd.f32 %v10046, %v10084
    %v10086 = vpop.f32.mrf.mxu0
    %v10087 = vadd.f32 %v10048, %v10086
    %10088 = vmatmul.bf16.gmra.mxu0 %v9858
    %v10089 = vpop.f32.mrf.mxu0
    %v10090 = vadd.f32 %v10051, %v10089
    %v10091 = vpop.f32.mrf.mxu0
    %v10092 = vadd.f32 %v10053, %v10091
    %10093 = vdwg.mxu0
    %vm10094 = vcmask 179200
    %v10095 = vsel %vm10094, %v10065, 0.0
    %10096 = vadd.xlane.f32.xlu0 %v10095
    %v10097 = vpop.xlane.xlu0 %10096
    %v10098 = vsel %vm10094, %v10067, 0.0
    %10099 = vadd.xlane.f32.xlu0 %v10098
    %v10100 = vpop.xlane.xlu0 %10099
    %v10101 = vsel %vm10094, %v10070, 0.0
    %10102 = vadd.xlane.f32.xlu0 %v10101
    %v10103 = vpop.xlane.xlu0 %10102
    %v10104 = vsel %vm10094, %v10072, 0.0
    %10105 = vadd.xlane.f32.xlu0 %v10104
    %v10106 = vpop.xlane.xlu0 %10105
    %v10107 = vsel %vm10094, %v10075, 0.0
    %10108 = vadd.xlane.f32.xlu0 %v10107
    %v10109 = vpop.xlane.xlu0 %10108
    %v10110 = vsel %vm10094, %v10077, 0.0
    %10111 = vadd.xlane.f32.xlu0 %v10110
    %v10112 = vpop.xlane.xlu0 %10111
    %v10113 = vsel %vm10094, %v10080, 0.0
    %10114 = vadd.xlane.f32.xlu0 %v10113
    %v10115 = vpop.xlane.xlu0 %10114
    %v10116 = vsel %vm10094, %v10082, 0.0
    %10117 = vadd.xlane.f32.xlu0 %v10116
    %v10118 = vpop.xlane.xlu0 %10117
    %v10119 = vsel %vm10094, %v10085, 0.0
    %10120 = vadd.xlane.f32.xlu0 %v10119
    %v10121 = vpop.xlane.xlu0 %10120
    %v10122 = vsel %vm10094, %v10087, 0.0
    %10123 = vadd.xlane.f32.xlu0 %v10122
    %v10124 = vpop.xlane.xlu0 %10123
    %v10125 = vsel %vm10094, %v10090, 0.0
    %10126 = vadd.xlane.f32.xlu0 %v10125
    %v10127 = vpop.xlane.xlu0 %10126
    %v10128 = vsel %vm10094, %v10092, 0.0
    %10129 = vadd.xlane.f32.xlu0 %v10128
    %v10130 = vpop.xlane.xlu0 %10129
    %v10131 = vmul.f32 %v10065, %v10065
    %v10132 = vmul.f32 %v10067, %v10067
    %v10133 = vmul.f32 %v10070, %v10070
    %v10134 = vmul.f32 %v10072, %v10072
    %v10135 = vmul.f32 %v10075, %v10075
    %v10136 = vmul.f32 %v10077, %v10077
    %v10137 = vmul.f32 %v10080, %v10080
    %v10138 = vmul.f32 %v10082, %v10082
    %v10139 = vmul.f32 %v10085, %v10085
    %v10140 = vmul.f32 %v10087, %v10087
    %v10141 = vmul.f32 %v10090, %v10090
    %v10142 = vmul.f32 %v10092, %v10092
    %v10143 = vsel %vm10094, %v10131, 0.0
    %10144 = vadd.xlane.f32.xlu0 %v10143
    %v10145 = vpop.xlane.xlu0 %10144
    %v10146 = vsel %vm10094, %v10132, 0.0
    %10147 = vadd.xlane.f32.xlu0 %v10146
    %v10148 = vpop.xlane.xlu0 %10147
    %v10149 = vsel %vm10094, %v10133, 0.0
    %10150 = vadd.xlane.f32.xlu0 %v10149
    %v10151 = vpop.xlane.xlu0 %10150
    %v10152 = vsel %vm10094, %v10134, 0.0
    %10153 = vadd.xlane.f32.xlu0 %v10152
    %v10154 = vpop.xlane.xlu0 %10153
    %v10155 = vsel %vm10094, %v10135, 0.0
    %10156 = vadd.xlane.f32.xlu0 %v10155
    %v10157 = vpop.xlane.xlu0 %10156
    %v10158 = vsel %vm10094, %v10136, 0.0
    %10159 = vadd.xlane.f32.xlu0 %v10158
    %v10160 = vpop.xlane.xlu0 %10159
    %v10161 = vsel %vm10094, %v10137, 0.0
    %10162 = vadd.xlane.f32.xlu0 %v10161
    %v10163 = vpop.xlane.xlu0 %10162
    %v10164 = vsel %vm10094, %v10138, 0.0
    %10165 = vadd.xlane.f32.xlu0 %v10164
    %v10166 = vpop.xlane.xlu0 %10165
    %v10167 = vsel %vm10094, %v10139, 0.0
    %10168 = vadd.xlane.f32.xlu0 %v10167
    %v10169 = vpop.xlane.xlu0 %10168
    %v10170 = vsel %vm10094, %v10140, 0.0
    %10171 = vadd.xlane.f32.xlu0 %v10170
    %v10172 = vpop.xlane.xlu0 %10171
    %v10173 = vsel %vm10094, %v10141, 0.0
    %10174 = vadd.xlane.f32.xlu0 %v10173
    %v10175 = vpop.xlane.xlu0 %10174
    %v10176 = vsel %vm10094, %v10142, 0.0
    %10177 = vadd.xlane.f32.xlu0 %v10176
    %v10178 = vpop.xlane.xlu0 %10177
    %v10179 = vld [vmem:[%s18] sm:$0xff]
    %v10180 = vld [vmem:[%s18 + $0x8] sm:$0xf]
    %vm10181 = vcmask 785408
    %v10183 = vsel %vm10181, %v10179, 0
    %v10186 = vsel %vm10181, %v10180, 0
    %10188 = vmatpush.msra.mxu0 0.0
    %10189 = vmatpush.msra.mxu0 0.0
    %10190 = vmatpush.msra.mxu0 0.0
    %10191 = vmatpush.msra.mxu0 0.0
    %10192 = vmatpush.msra.mxu0 %v10130
    %10193 = vmatpush.msra.mxu0 %v10127
    %10194 = vmatpush.msra.mxu0 %v10124
    %10195 = vmatpush.msra.mxu0 %v10121
    %10196 = vmatpush.msra.mxu0 %v10118
    %10197 = vmatpush.msra.mxu0 %v10115
    %10198 = vmatpush.msra.mxu0 %v10112
    %10199 = vmatpush.msra.mxu0 %v10109
    %10200 = vmatpush.msra.mxu0 %v10106
    %10201 = vmatpush.msra.mxu0 %v10103
    %10202 = vmatpush.msra.mxu0 %v10100
    %10203 = vmatpush.msra.mxu0 %v10097
    %10204 = vmatmul.f32.gmra.mxu0 %v10183
    %v10205 = vpop.f32.mrf.mxu0
    %v10206 = vadd.f32 0.0, %v10205
    %10207 = vmatmul.f32.gmra.mxu0 %v10186
    %v10208 = vpop.f32.mrf.mxu0
    %v10209 = vadd.f32 0.0, %v10208
    %10210 = vdwg.mxu0
    %10211 = vmatpush.msra.mxu0 0.0
    %10212 = vmatpush.msra.mxu0 0.0
    %10213 = vmatpush.msra.mxu0 0.0
    %10214 = vmatpush.msra.mxu0 0.0
    %10215 = vmatpush.msra.mxu0 %v10178
    %10216 = vmatpush.msra.mxu0 %v10175
    %10217 = vmatpush.msra.mxu0 %v10172
    %10218 = vmatpush.msra.mxu0 %v10169
    %10219 = vmatpush.msra.mxu0 %v10166
    %10220 = vmatpush.msra.mxu0 %v10163
    %10221 = vmatpush.msra.mxu0 %v10160
    %10222 = vmatpush.msra.mxu0 %v10157
    %10223 = vmatpush.msra.mxu0 %v10154
    %10224 = vmatpush.msra.mxu0 %v10151
    %10225 = vmatpush.msra.mxu0 %v10148
    %10226 = vmatpush.msra.mxu0 %v10145
    %10227 = vmatmul.f32.gmra.mxu0 %v10183
    %v10228 = vpop.f32.mrf.mxu0
    %v10229 = vadd.f32 0.0, %v10228
    %10230 = vmatmul.f32.gmra.mxu0 %v10186
    %v10231 = vpop.f32.mrf.mxu0
    %v10232 = vadd.f32 0.0, %v10231
    %10233 = vdwg.mxu0
    %v10234 = vmul.f32 %v10206, 0.007575758
    %v10235 = vmul.f32 %v10209, 0.007575758
    %v10236 = vmul.f32 %v10229, 0.007575758
    %v10237 = vmul.f32 %v10232, 0.007575758
    %v10238 = vmul.f32 %v10234, %v10234
    %v10239 = vmul.f32 %v10235, %v10235
    %v10240 = vsub.f32 %v10236, %v10238
    %v10241 = vsub.f32 %v10237, %v10239
    %v10242 = vmax.f32 %v10240, 0.0
    %v10243 = vmax.f32 %v10241, 0.0
    %v10244 = vadd.f32 %v10242, 1e-05
    %v10245 = vadd.f32 %v10243, 1e-05
    %v10246 = vrsqrt.pop %v10244
    %v10247 = vmul.f32 %v10246, %v10244
    %v10248 = vmul.f32 %v10247, %v10246
    %v10249 = vmul.f32 0.5, %v10248
    %v10250 = vsub.f32 1.5, %v10249
    %v10251 = vmul.f32 %v10246, %v10250
    %vm10252 = vweird.f32 %v10244
    %vm10253 = vweird.f32 %v10246
    %vm10254 = vmor %vm10252, %vm10253
    %v10255 = vsel %vm10254, %v10246, %v10251
    %v10256 = vrsqrt.pop %v10245
    %v10257 = vmul.f32 %v10256, %v10245
    %v10258 = vmul.f32 %v10257, %v10256
    %v10259 = vmul.f32 0.5, %v10258
    %v10260 = vsub.f32 1.5, %v10259
    %v10261 = vmul.f32 %v10256, %v10260
    %vm10262 = vweird.f32 %v10245
    %vm10263 = vweird.f32 %v10256
    %vm10264 = vmor %vm10262, %vm10263
    %v10265 = vsel %vm10264, %v10256, %v10261
    %v10266 = vld [vmem:[%s19] sm:$0xff]
    %v10267 = vld [vmem:[%s19 + $0x8] sm:$0xff]
    %v10268 = vld [vmem:[%s19 + $0x10] sm:$0xff]
    %v10269 = vld [vmem:[%s19 + $0x18] sm:$0xff]
    %v10270 = vld [vmem:[%s19 + $0x20] sm:$0xff]
    %v10271 = vld [vmem:[%s19 + $0x28] sm:$0xff]
    %v10272 = vld [vmem:[%s19 + $0x30] sm:$0xff]
    %v10273 = vld [vmem:[%s19 + $0x38] sm:$0xff]
    %v10274 = vld [vmem:[%s19 + $0x40] sm:$0xff]
    %v10275 = vld [vmem:[%s19 + $0x48] sm:$0xff]
    %v10276 = vld [vmem:[%s19 + $0x50] sm:$0xff]
    %v10277 = vld [vmem:[%s19 + $0x58] sm:$0xff]
    %vm10278 = vcmask 97280
    %v10280 = vsel %vm10278, %v10266, 0
    %v10283 = vsel %vm10278, %v10267, 0
    %v10286 = vsel %vm10278, %v10268, 0
    %v10289 = vsel %vm10278, %v10269, 0
    %v10292 = vsel %vm10278, %v10270, 0
    %v10295 = vsel %vm10278, %v10271, 0
    %v10298 = vsel %vm10278, %v10272, 0
    %v10301 = vsel %vm10278, %v10273, 0
    %v10304 = vsel %vm10278, %v10274, 0
    %v10307 = vsel %vm10278, %v10275, 0
    %v10310 = vsel %vm10278, %v10276, 0
    %v10313 = vsel %vm10278, %v10277, 0
    %v10316 = vsel %vm2994, %v10265, 0
    %10318 = vmatpush.msra.mxu0 0.0
    %10319 = vmatpush.msra.mxu0 0.0
    %10320 = vmatpush.msra.mxu0 0.0
    %10321 = vmatpush.msra.mxu0 0.0
    %10322 = vmatpush.msra.mxu0 0.0
    %10323 = vmatpush.msra.mxu0 0.0
    %10324 = vmatpush.msra.mxu0 0.0
    %10325 = vmatpush.msra.mxu0 0.0
    %10326 = vmatpush.msra.mxu0 0.0
    %10327 = vmatpush.msra.mxu0 0.0
    %10328 = vmatpush.msra.mxu0 0.0
    %10329 = vmatpush.msra.mxu0 0.0
    %10330 = vmatpush.msra.mxu0 0.0
    %10331 = vmatpush.msra.mxu0 0.0
    %10332 = vmatpush.msra.mxu0 %v10316
    %10333 = vmatpush.msra.mxu0 %v10255
    %10334 = vmatmul.f32.gmra.mxu0 %v10280
    %v10335 = vpop.f32.mrf.mxu0
    %v10336 = vadd.f32 0.0, %v10335
    %10337 = vmatmul.f32.gmra.mxu0 %v10283
    %v10338 = vpop.f32.mrf.mxu0
    %v10339 = vadd.f32 0.0, %v10338
    %10340 = vmatmul.f32.gmra.mxu0 %v10286
    %v10341 = vpop.f32.mrf.mxu0
    %v10342 = vadd.f32 0.0, %v10341
    %10343 = vmatmul.f32.gmra.mxu0 %v10289
    %v10344 = vpop.f32.mrf.mxu0
    %v10345 = vadd.f32 0.0, %v10344
    %10346 = vmatmul.f32.gmra.mxu0 %v10292
    %v10347 = vpop.f32.mrf.mxu0
    %v10348 = vadd.f32 0.0, %v10347
    %10349 = vmatmul.f32.gmra.mxu0 %v10295
    %v10350 = vpop.f32.mrf.mxu0
    %v10351 = vadd.f32 0.0, %v10350
    %10352 = vmatmul.f32.gmra.mxu0 %v10298
    %v10353 = vpop.f32.mrf.mxu0
    %v10354 = vadd.f32 0.0, %v10353
    %10355 = vmatmul.f32.gmra.mxu0 %v10301
    %v10356 = vpop.f32.mrf.mxu0
    %v10357 = vadd.f32 0.0, %v10356
    %10358 = vmatmul.f32.gmra.mxu0 %v10304
    %v10359 = vpop.f32.mrf.mxu0
    %v10360 = vadd.f32 0.0, %v10359
    %10361 = vmatmul.f32.gmra.mxu0 %v10307
    %v10362 = vpop.f32.mrf.mxu0
    %v10363 = vadd.f32 0.0, %v10362
    %10364 = vmatmul.f32.gmra.mxu0 %v10310
    %v10365 = vpop.f32.mrf.mxu0
    %v10366 = vadd.f32 0.0, %v10365
    %10367 = vmatmul.f32.gmra.mxu0 %v10313
    %v10368 = vpop.f32.mrf.mxu0
    %v10369 = vadd.f32 0.0, %v10368
    %10370 = vdwg.mxu0
    %v10371 = vld [vmem:[%s20] sm:$0xff]
    %v10372 = vld [vmem:[%s20 + $0x8] sm:$0xff]
    %v10373 = vld [vmem:[%s20 + $0x10] sm:$0xff]
    %v10374 = vld [vmem:[%s20 + $0x18] sm:$0xff]
    %v10375 = vld [vmem:[%s20 + $0x20] sm:$0xff]
    %v10376 = vld [vmem:[%s20 + $0x28] sm:$0xff]
    %v10377 = vld [vmem:[%s20 + $0x30] sm:$0xff]
    %v10378 = vld [vmem:[%s20 + $0x38] sm:$0xff]
    %v10379 = vld [vmem:[%s20 + $0x40] sm:$0xff]
    %v10380 = vld [vmem:[%s20 + $0x48] sm:$0xff]
    %v10381 = vld [vmem:[%s20 + $0x50] sm:$0xff]
    %v10382 = vld [vmem:[%s20 + $0x58] sm:$0xff]
    %v10383 = vmul.f32 %v10234, %v10255
    %v10384 = vmul.f32 %v10235, %v10265
    %v10386 = vsel %vm2994, %v10384, 0
    %10388 = vmatpush.msra.mxu0 0.0
    %10389 = vmatpush.msra.mxu0 0.0
    %10390 = vmatpush.msra.mxu0 0.0
    %10391 = vmatpush.msra.mxu0 0.0
    %10392 = vmatpush.msra.mxu0 0.0
    %10393 = vmatpush.msra.mxu0 0.0
    %10394 = vmatpush.msra.mxu0 0.0
    %10395 = vmatpush.msra.mxu0 0.0
    %10396 = vmatpush.msra.mxu0 0.0
    %10397 = vmatpush.msra.mxu0 0.0
    %10398 = vmatpush.msra.mxu0 0.0
    %10399 = vmatpush.msra.mxu0 0.0
    %10400 = vmatpush.msra.mxu0 0.0
    %10401 = vmatpush.msra.mxu0 0.0
    %10402 = vmatpush.msra.mxu0 %v10386
    %10403 = vmatpush.msra.mxu0 %v10383
    %10404 = vmatmul.f32.gmra.mxu0 %v10280
    %v10405 = vpop.f32.mrf.mxu0
    %v10406 = vadd.f32 0.0, %v10405
    %10407 = vmatmul.f32.gmra.mxu0 %v10283
    %v10408 = vpop.f32.mrf.mxu0
    %v10409 = vadd.f32 0.0, %v10408
    %10410 = vmatmul.f32.gmra.mxu0 %v10286
    %v10411 = vpop.f32.mrf.mxu0
    %v10412 = vadd.f32 0.0, %v10411
    %10413 = vmatmul.f32.gmra.mxu0 %v10289
    %v10414 = vpop.f32.mrf.mxu0
    %v10415 = vadd.f32 0.0, %v10414
    %10416 = vmatmul.f32.gmra.mxu0 %v10292
    %v10417 = vpop.f32.mrf.mxu0
    %v10418 = vadd.f32 0.0, %v10417
    %10419 = vmatmul.f32.gmra.mxu0 %v10295
    %v10420 = vpop.f32.mrf.mxu0
    %v10421 = vadd.f32 0.0, %v10420
    %10422 = vmatmul.f32.gmra.mxu0 %v10298
    %v10423 = vpop.f32.mrf.mxu0
    %v10424 = vadd.f32 0.0, %v10423
    %10425 = vmatmul.f32.gmra.mxu0 %v10301
    %v10426 = vpop.f32.mrf.mxu0
    %v10427 = vadd.f32 0.0, %v10426
    %10428 = vmatmul.f32.gmra.mxu0 %v10304
    %v10429 = vpop.f32.mrf.mxu0
    %v10430 = vadd.f32 0.0, %v10429
    %10431 = vmatmul.f32.gmra.mxu0 %v10307
    %v10432 = vpop.f32.mrf.mxu0
    %v10433 = vadd.f32 0.0, %v10432
    %10434 = vmatmul.f32.gmra.mxu0 %v10310
    %v10435 = vpop.f32.mrf.mxu0
    %v10436 = vadd.f32 0.0, %v10435
    %10437 = vmatmul.f32.gmra.mxu0 %v10313
    %v10438 = vpop.f32.mrf.mxu0
    %v10439 = vadd.f32 0.0, %v10438
    %10440 = vdwg.mxu0
    %v10441 = vsub.f32 %v10371, %v10406
    %v10442 = vsub.f32 %v10372, %v10409
    %v10443 = vsub.f32 %v10373, %v10412
    %v10444 = vsub.f32 %v10374, %v10415
    %v10445 = vsub.f32 %v10375, %v10418
    %v10446 = vsub.f32 %v10376, %v10421
    %v10447 = vsub.f32 %v10377, %v10424
    %v10448 = vsub.f32 %v10378, %v10427
    %v10449 = vsub.f32 %v10379, %v10430
    %v10450 = vsub.f32 %v10380, %v10433
    %v10451 = vsub.f32 %v10381, %v10436
    %v10452 = vsub.f32 %v10382, %v10439
    %10454 = vset.pattern.permute.xlu0 0
    %10455 = vperm.xlu0 %10454, %v10336
    %v10456 = vpop.permute.xlu0 %10455
    %10459 = vset.pattern.permute.xlu0 0
    %10460 = vperm.xlu0 %10459, %v10339
    %v10461 = vpop.permute.xlu0 %10460
    %10464 = vset.pattern.permute.xlu0 0
    %10465 = vperm.xlu0 %10464, %v10342
    %v10466 = vpop.permute.xlu0 %10465
    %10469 = vset.pattern.permute.xlu0 0
    %10470 = vperm.xlu0 %10469, %v10345
    %v10471 = vpop.permute.xlu0 %10470
    %10474 = vset.pattern.permute.xlu0 0
    %10475 = vperm.xlu0 %10474, %v10348
    %v10476 = vpop.permute.xlu0 %10475
    %10479 = vset.pattern.permute.xlu0 0
    %10480 = vperm.xlu0 %10479, %v10351
    %v10481 = vpop.permute.xlu0 %10480
    %10484 = vset.pattern.permute.xlu0 0
    %10485 = vperm.xlu0 %10484, %v10354
    %v10486 = vpop.permute.xlu0 %10485
    %10489 = vset.pattern.permute.xlu0 0
    %10490 = vperm.xlu0 %10489, %v10357
    %v10491 = vpop.permute.xlu0 %10490
    %10494 = vset.pattern.permute.xlu0 0
    %10495 = vperm.xlu0 %10494, %v10360
    %v10496 = vpop.permute.xlu0 %10495
    %10499 = vset.pattern.permute.xlu0 0
    %10500 = vperm.xlu0 %10499, %v10363
    %v10501 = vpop.permute.xlu0 %10500
    %10504 = vset.pattern.permute.xlu0 0
    %10505 = vperm.xlu0 %10504, %v10366
    %v10506 = vpop.permute.xlu0 %10505
    %10509 = vset.pattern.permute.xlu0 0
    %10510 = vperm.xlu0 %10509, %v10369
    %v10511 = vpop.permute.xlu0 %10510
    %v10513 = vmul.f32 %v10065, %v10456
    %v10514 = vmul.f32 %v10067, %v10461
    %v10515 = vmul.f32 %v10070, %v10466
    %v10516 = vmul.f32 %v10072, %v10471
    %v10517 = vmul.f32 %v10075, %v10476
    %v10518 = vmul.f32 %v10077, %v10481
    %v10519 = vmul.f32 %v10080, %v10486
    %v10520 = vmul.f32 %v10082, %v10491
    %v10521 = vmul.f32 %v10085, %v10496
    %v10522 = vmul.f32 %v10087, %v10501
    %v10523 = vmul.f32 %v10090, %v10506
    %v10524 = vmul.f32 %v10092, %v10511
    %10526 = vset.pattern.permute.xlu0 0
    %10527 = vperm.xlu0 %10526, %v10441
    %v10528 = vpop.permute.xlu0 %10527
    %10531 = vset.pattern.permute.xlu0 0
    %10532 = vperm.xlu0 %10531, %v10442
    %v10533 = vpop.permute.xlu0 %10532
    %10536 = vset.pattern.permute.xlu0 0
    %10537 = vperm.xlu0 %10536, %v10443
    %v10538 = vpop.permute.xlu0 %10537
    %10541 = vset.pattern.permute.xlu0 0
    %10542 = vperm.xlu0 %10541, %v10444
    %v10543 = vpop.permute.xlu0 %10542
    %10546 = vset.pattern.permute.xlu0 0
    %10547 = vperm.xlu0 %10546, %v10445
    %v10548 = vpop.permute.xlu0 %10547
    %10551 = vset.pattern.permute.xlu0 0
    %10552 = vperm.xlu0 %10551, %v10446
    %v10553 = vpop.permute.xlu0 %10552
    %10556 = vset.pattern.permute.xlu0 0
    %10557 = vperm.xlu0 %10556, %v10447
    %v10558 = vpop.permute.xlu0 %10557
    %10561 = vset.pattern.permute.xlu0 0
    %10562 = vperm.xlu0 %10561, %v10448
    %v10563 = vpop.permute.xlu0 %10562
    %10566 = vset.pattern.permute.xlu0 0
    %10567 = vperm.xlu0 %10566, %v10449
    %v10568 = vpop.permute.xlu0 %10567
    %10571 = vset.pattern.permute.xlu0 0
    %10572 = vperm.xlu0 %10571, %v10450
    %v10573 = vpop.permute.xlu0 %10572
    %10576 = vset.pattern.permute.xlu0 0
    %10577 = vperm.xlu0 %10576, %v10451
    %v10578 = vpop.permute.xlu0 %10577
    %10581 = vset.pattern.permute.xlu0 0
    %10582 = vperm.xlu0 %10581, %v10452
    %v10583 = vpop.permute.xlu0 %10582
    %v10585 = vadd.f32 %v10513, %v10528
    %v10586 = vadd.f32 %v10514, %v10533
    %v10587 = vadd.f32 %v10515, %v10538
    %v10588 = vadd.f32 %v10516, %v10543
    %v10589 = vadd.f32 %v10517, %v10548
    %v10590 = vadd.f32 %v10518, %v10553
    %v10591 = vadd.f32 %v10519, %v10558
    %v10592 = vadd.f32 %v10520, %v10563
    %v10593 = vadd.f32 %v10521, %v10568
    %v10594 = vadd.f32 %v10522, %v10573
    %v10595 = vadd.f32 %v10523, %v10578
    %v10596 = vadd.f32 %v10524, %v10583
    %v10597 = vmax.f32 %v10585, 0.0
    %v10598 = vmax.f32 %v10586, 0.0
    %v10599 = vmax.f32 %v10587, 0.0
    %v10600 = vmax.f32 %v10588, 0.0
    %v10601 = vmax.f32 %v10589, 0.0
    %v10602 = vmax.f32 %v10590, 0.0
    %v10603 = vmax.f32 %v10591, 0.0
    %v10604 = vmax.f32 %v10592, 0.0
    %v10605 = vmax.f32 %v10593, 0.0
    %v10606 = vmax.f32 %v10594, 0.0
    %v10607 = vmax.f32 %v10595, 0.0
    %v10608 = vmax.f32 %v10596, 0.0
    %v10609 = vpack.c.bf16 %v10598, %v10597
    %v10610 = vpack.c.bf16 %v10600, %v10599
    %v10611 = vpack.c.bf16 %v10602, %v10601
    %v10612 = vpack.c.bf16 %v10604, %v10603
    %v10613 = vpack.c.bf16 %v10606, %v10605
    %v10614 = vpack.c.bf16 %v10608, %v10607
    %v10615 = vld [vmem:[%s22] sm:$0xf]
    %v10616 = vld [vmem:[%s22 + $0x4] sm:$0xf]
    %v10617 = vld [vmem:[%s22 + $0x8] sm:$0x7]
    %v10621 = vunpack.c.l.b16 %v10615
    %v10622 = vunpack.c.l.b16 %v10616
    %v10623 = vunpack.c.l.b16 %v10617
    %v10624 = vpack.c.b16 %v10622, %v10621
    %v10625 = vpack.c.b16 %v10623, %v10623
    %v10628 = vsel %vm10094, %v10609, 0
    %v10631 = vsel %vm10094, %v10610, 0
    %v10634 = vsel %vm10094, %v10611, 0
    %v10637 = vsel %vm10094, %v10612, 0
    %v10640 = vsel %vm10094, %v10613, 0
    %v10643 = vsel %vm10094, %v10614, 0
    %v10646 = vsel %vm4038, %v10625, 0
    %10648 = vmatpush.bf16.msra.mxu0 0
    %10649 = vmatpush.bf16.msra.mxu0 0
    %10650 = vmatpush.bf16.msra.mxu0 0
    %10651 = vmatpush.bf16.msra.mxu0 0
    %10652 = vmatpush.bf16.msra.mxu0 0
    %10653 = vmatpush.bf16.msra.mxu0 0
    %10654 = vmatpush.bf16.msra.mxu0 %v10646
    %10655 = vmatpush.bf16.msra.mxu0 %v10624
    %10656 = vmatmul.bf16.gmra.mxu0 %v10628
    %v10657 = vpop.f32.mrf.mxu0
    %v10658 = vadd.f32 0.0, %v10657
    %v10659 = vpop.f32.mrf.mxu0
    %v10660 = vadd.f32 0.0, %v10659
    %10661 = vmatmul.bf16.gmra.mxu0 %v10631
    %v10662 = vpop.f32.mrf.mxu0
    %v10663 = vadd.f32 0.0, %v10662
    %v10664 = vpop.f32.mrf.mxu0
    %v10665 = vadd.f32 0.0, %v10664
    %10666 = vmatmul.bf16.gmra.mxu0 %v10634
    %v10667 = vpop.f32.mrf.mxu0
    %v10668 = vadd.f32 0.0, %v10667
    %v10669 = vpop.f32.mrf.mxu0
    %v10670 = vadd.f32 0.0, %v10669
    %10671 = vmatmul.bf16.gmra.mxu0 %v10637
    %v10672 = vpop.f32.mrf.mxu0
    %v10673 = vadd.f32 0.0, %v10672
    %v10674 = vpop.f32.mrf.mxu0
    %v10675 = vadd.f32 0.0, %v10674
    %10676 = vmatmul.bf16.gmra.mxu0 %v10640
    %v10677 = vpop.f32.mrf.mxu0
    %v10678 = vadd.f32 0.0, %v10677
    %v10679 = vpop.f32.mrf.mxu0
    %v10680 = vadd.f32 0.0, %v10679
    %10681 = vmatmul.bf16.gmra.mxu0 %v10643
    %v10682 = vpop.f32.mrf.mxu0
    %v10683 = vadd.f32 0.0, %v10682
    %v10684 = vpop.f32.mrf.mxu0
    %v10685 = vadd.f32 0.0, %v10684
    %10686 = vdwg.mxu0
    %s10687 = scalar_lea.vmem %s22, 12
    %v10688 = vld [vmem:[%s10687] sm:$0xf]
    %v10689 = vld [vmem:[%s10687 + $0x4] sm:$0xf]
    %v10690 = vld [vmem:[%s10687 + $0x8] sm:$0x7]
    %v10694 = vunpack.c.l.b16 %v10688
    %v10695 = vunpack.c.l.b16 %v10689
    %v10696 = vunpack.c.l.b16 %v10690
    %v10697 = vpack.c.b16 %v10695, %v10694
    %v10698 = vpack.c.b16 %v10696, %v10696
    %v10701 = vsel %vm4038, %v10698, 0
    %10703 = vmatpush.bf16.msra.mxu0 0
    %10704 = vmatpush.bf16.msra.mxu0 0
    %10705 = vmatpush.bf16.msra.mxu0 0
    %10706 = vmatpush.bf16.msra.mxu0 0
    %10707 = vmatpush.bf16.msra.mxu0 0
    %10708 = vmatpush.bf16.msra.mxu0 0
    %10709 = vmatpush.bf16.msra.mxu0 %v10701
    %10710 = vmatpush.bf16.msra.mxu0 %v10697
    %10711 = vmatmul.bf16.gmra.mxu0 %v10628
    %v10712 = vpop.f32.mrf.mxu0
    %v10713 = vadd.f32 0.0, %v10712
    %v10714 = vpop.f32.mrf.mxu0
    %v10715 = vadd.f32 0.0, %v10714
    %10716 = vmatmul.bf16.gmra.mxu0 %v10631
    %v10717 = vpop.f32.mrf.mxu0
    %v10718 = vadd.f32 0.0, %v10717
    %v10719 = vpop.f32.mrf.mxu0
    %v10720 = vadd.f32 0.0, %v10719
    %10721 = vmatmul.bf16.gmra.mxu0 %v10634
    %v10722 = vpop.f32.mrf.mxu0
    %v10723 = vadd.f32 0.0, %v10722
    %v10724 = vpop.f32.mrf.mxu0
    %v10725 = vadd.f32 0.0, %v10724
    %10726 = vmatmul.bf16.gmra.mxu0 %v10637
    %v10727 = vpop.f32.mrf.mxu0
    %v10728 = vadd.f32 0.0, %v10727
    %v10729 = vpop.f32.mrf.mxu0
    %v10730 = vadd.f32 0.0, %v10729
    %10731 = vmatmul.bf16.gmra.mxu0 %v10640
    %v10732 = vpop.f32.mrf.mxu0
    %v10733 = vadd.f32 0.0, %v10732
    %v10734 = vpop.f32.mrf.mxu0
    %v10735 = vadd.f32 0.0, %v10734
    %10736 = vmatmul.bf16.gmra.mxu0 %v10643
    %v10737 = vpop.f32.mrf.mxu0
    %v10738 = vadd.f32 0.0, %v10737
    %v10739 = vpop.f32.mrf.mxu0
    %v10740 = vadd.f32 0.0, %v10739
    %10741 = vdwg.mxu0
    %s10742 = scalar_lea.vmem %s22, 24
    %v10743 = vld [vmem:[%s10742] sm:$0xf]
    %v10744 = vld [vmem:[%s10742 + $0x4] sm:$0xf]
    %v10745 = vld [vmem:[%s10742 + $0x8] sm:$0x7]
    %v10749 = vunpack.c.l.b16 %v10743
    %v10750 = vunpack.c.l.b16 %v10744
    %v10751 = vunpack.c.l.b16 %v10745
    %v10752 = vpack.c.b16 %v10750, %v10749
    %v10753 = vpack.c.b16 %v10751, %v10751
    %v10756 = vsel %vm4038, %v10753, 0
    %10758 = vmatpush.bf16.msra.mxu0 0
    %10759 = vmatpush.bf16.msra.mxu0 0
    %10760 = vmatpush.bf16.msra.mxu0 0
    %10761 = vmatpush.bf16.msra.mxu0 0
    %10762 = vmatpush.bf16.msra.mxu0 0
    %10763 = vmatpush.bf16.msra.mxu0 0
    %10764 = vmatpush.bf16.msra.mxu0 %v10756
    %10765 = vmatpush.bf16.msra.mxu0 %v10752
    %10766 = vmatmul.bf16.gmra.mxu0 %v10628
    %v10767 = vpop.f32.mrf.mxu0
    %v10768 = vadd.f32 0.0, %v10767
    %v10769 = vpop.f32.mrf.mxu0
    %v10770 = vadd.f32 0.0, %v10769
    %10771 = vmatmul.bf16.gmra.mxu0 %v10631
    %v10772 = vpop.f32.mrf.mxu0
    %v10773 = vadd.f32 0.0, %v10772
    %v10774 = vpop.f32.mrf.mxu0
    %v10775 = vadd.f32 0.0, %v10774
    %10776 = vmatmul.bf16.gmra.mxu0 %v10634
    %v10777 = vpop.f32.mrf.mxu0
    %v10778 = vadd.f32 0.0, %v10777
    %v10779 = vpop.f32.mrf.mxu0
    %v10780 = vadd.f32 0.0, %v10779
    %10781 = vmatmul.bf16.gmra.mxu0 %v10637
    %v10782 = vpop.f32.mrf.mxu0
    %v10783 = vadd.f32 0.0, %v10782
    %v10784 = vpop.f32.mrf.mxu0
    %v10785 = vadd.f32 0.0, %v10784
    %10786 = vmatmul.bf16.gmra.mxu0 %v10640
    %v10787 = vpop.f32.mrf.mxu0
    %v10788 = vadd.f32 0.0, %v10787
    %v10789 = vpop.f32.mrf.mxu0
    %v10790 = vadd.f32 0.0, %v10789
    %10791 = vmatmul.bf16.gmra.mxu0 %v10643
    %v10792 = vpop.f32.mrf.mxu0
    %v10793 = vadd.f32 0.0, %v10792
    %v10794 = vpop.f32.mrf.mxu0
    %v10795 = vadd.f32 0.0, %v10794
    %10796 = vdwg.mxu0
    %s10797 = scalar_lea.vmem %s22, 36
    %v10798 = vld [vmem:[%s10797] sm:$0xf]
    %v10799 = vld [vmem:[%s10797 + $0x4] sm:$0xf]
    %v10800 = vld [vmem:[%s10797 + $0x8] sm:$0x7]
    %v10804 = vunpack.c.l.b16 %v10798
    %v10805 = vunpack.c.l.b16 %v10799
    %v10806 = vunpack.c.l.b16 %v10800
    %v10807 = vpack.c.b16 %v10805, %v10804
    %v10808 = vpack.c.b16 %v10806, %v10806
    %v10811 = vsel %vm4038, %v10808, 0
    %10813 = vmatpush.bf16.msra.mxu0 0
    %10814 = vmatpush.bf16.msra.mxu0 0
    %10815 = vmatpush.bf16.msra.mxu0 0
    %10816 = vmatpush.bf16.msra.mxu0 0
    %10817 = vmatpush.bf16.msra.mxu0 0
    %10818 = vmatpush.bf16.msra.mxu0 0
    %10819 = vmatpush.bf16.msra.mxu0 %v10811
    %10820 = vmatpush.bf16.msra.mxu0 %v10807
    %10821 = vmatmul.bf16.gmra.mxu0 %v10628
    %v10822 = vpop.f32.mrf.mxu0
    %v10823 = vadd.f32 0.0, %v10822
    %v10824 = vpop.f32.mrf.mxu0
    %v10825 = vadd.f32 0.0, %v10824
    %10826 = vmatmul.bf16.gmra.mxu0 %v10631
    %v10827 = vpop.f32.mrf.mxu0
    %v10828 = vadd.f32 0.0, %v10827
    %v10829 = vpop.f32.mrf.mxu0
    %v10830 = vadd.f32 0.0, %v10829
    %10831 = vmatmul.bf16.gmra.mxu0 %v10634
    %v10832 = vpop.f32.mrf.mxu0
    %v10833 = vadd.f32 0.0, %v10832
    %v10834 = vpop.f32.mrf.mxu0
    %v10835 = vadd.f32 0.0, %v10834
    %10836 = vmatmul.bf16.gmra.mxu0 %v10637
    %v10837 = vpop.f32.mrf.mxu0
    %v10838 = vadd.f32 0.0, %v10837
    %v10839 = vpop.f32.mrf.mxu0
    %v10840 = vadd.f32 0.0, %v10839
    %10841 = vmatmul.bf16.gmra.mxu0 %v10640
    %v10842 = vpop.f32.mrf.mxu0
    %v10843 = vadd.f32 0.0, %v10842
    %v10844 = vpop.f32.mrf.mxu0
    %v10845 = vadd.f32 0.0, %v10844
    %10846 = vmatmul.bf16.gmra.mxu0 %v10643
    %v10847 = vpop.f32.mrf.mxu0
    %v10848 = vadd.f32 0.0, %v10847
    %v10849 = vpop.f32.mrf.mxu0
    %v10850 = vadd.f32 0.0, %v10849
    %10851 = vdwg.mxu0
    %s10852 = scalar_lea.vmem %s22, 48
    %v10853 = vld [vmem:[%s10852] sm:$0xf]
    %v10854 = vld [vmem:[%s10852 + $0x4] sm:$0xf]
    %v10855 = vld [vmem:[%s10852 + $0x8] sm:$0x7]
    %v10859 = vunpack.c.l.b16 %v10853
    %v10860 = vunpack.c.l.b16 %v10854
    %v10861 = vunpack.c.l.b16 %v10855
    %v10862 = vpack.c.b16 %v10860, %v10859
    %v10863 = vpack.c.b16 %v10861, %v10861
    %v10866 = vsel %vm4038, %v10863, 0
    %10868 = vmatpush.bf16.msra.mxu0 0
    %10869 = vmatpush.bf16.msra.mxu0 0
    %10870 = vmatpush.bf16.msra.mxu0 0
    %10871 = vmatpush.bf16.msra.mxu0 0
    %10872 = vmatpush.bf16.msra.mxu0 0
    %10873 = vmatpush.bf16.msra.mxu0 0
    %10874 = vmatpush.bf16.msra.mxu0 %v10866
    %10875 = vmatpush.bf16.msra.mxu0 %v10862
    %10876 = vmatmul.bf16.gmra.mxu0 %v10628
    %v10877 = vpop.f32.mrf.mxu0
    %v10878 = vadd.f32 0.0, %v10877
    %v10879 = vpop.f32.mrf.mxu0
    %v10880 = vadd.f32 0.0, %v10879
    %10881 = vmatmul.bf16.gmra.mxu0 %v10631
    %v10882 = vpop.f32.mrf.mxu0
    %v10883 = vadd.f32 0.0, %v10882
    %v10884 = vpop.f32.mrf.mxu0
    %v10885 = vadd.f32 0.0, %v10884
    %10886 = vmatmul.bf16.gmra.mxu0 %v10634
    %v10887 = vpop.f32.mrf.mxu0
    %v10888 = vadd.f32 0.0, %v10887
    %v10889 = vpop.f32.mrf.mxu0
    %v10890 = vadd.f32 0.0, %v10889
    %10891 = vmatmul.bf16.gmra.mxu0 %v10637
    %v10892 = vpop.f32.mrf.mxu0
    %v10893 = vadd.f32 0.0, %v10892
    %v10894 = vpop.f32.mrf.mxu0
    %v10895 = vadd.f32 0.0, %v10894
    %10896 = vmatmul.bf16.gmra.mxu0 %v10640
    %v10897 = vpop.f32.mrf.mxu0
    %v10898 = vadd.f32 0.0, %v10897
    %v10899 = vpop.f32.mrf.mxu0
    %v10900 = vadd.f32 0.0, %v10899
    %10901 = vmatmul.bf16.gmra.mxu0 %v10643
    %v10902 = vpop.f32.mrf.mxu0
    %v10903 = vadd.f32 0.0, %v10902
    %v10904 = vpop.f32.mrf.mxu0
    %v10905 = vadd.f32 0.0, %v10904
    %10906 = vdwg.mxu0
    %v10907 = vpack.c.bf16 %v10660, %v10658
    %v10908 = vpack.c.bf16 %v10665, %v10663
    %v10909 = vpack.c.bf16 %v10670, %v10668
    %v10910 = vpack.c.bf16 %v10675, %v10673
    %v10911 = vpack.c.bf16 %v10680, %v10678
    %v10912 = vpack.c.bf16 %v10685, %v10683
    %v10913 = vpack.c.bf16 %v10715, %v10713
    %v10914 = vpack.c.bf16 %v10720, %v10718
    %v10915 = vpack.c.bf16 %v10725, %v10723
    %v10916 = vpack.c.bf16 %v10730, %v10728
    %v10917 = vpack.c.bf16 %v10735, %v10733
    %v10918 = vpack.c.bf16 %v10740, %v10738
    %v10919 = vpack.c.bf16 %v10770, %v10768
    %v10920 = vpack.c.bf16 %v10775, %v10773
    %v10921 = vpack.c.bf16 %v10780, %v10778
    %v10922 = vpack.c.bf16 %v10785, %v10783
    %v10923 = vpack.c.bf16 %v10790, %v10788
    %v10924 = vpack.c.bf16 %v10795, %v10793
    %v10925 = vpack.c.bf16 %v10825, %v10823
    %v10926 = vpack.c.bf16 %v10830, %v10828
    %v10927 = vpack.c.bf16 %v10835, %v10833
    %v10928 = vpack.c.bf16 %v10840, %v10838
    %v10929 = vpack.c.bf16 %v10845, %v10843
    %v10930 = vpack.c.bf16 %v10850, %v10848
    %v10931 = vpack.c.bf16 %v10880, %v10878
    %v10932 = vpack.c.bf16 %v10885, %v10883
    %v10933 = vpack.c.bf16 %v10890, %v10888
    %v10934 = vpack.c.bf16 %v10895, %v10893
    %v10935 = vpack.c.bf16 %v10900, %v10898
    %v10936 = vpack.c.bf16 %v10905, %v10903
    %v10937 = vld [vmem:[%s21] sm:$0xff]
    %v10938 = vld [vmem:[%s21 + $0x8] sm:$0xff]
    %v10939 = vld [vmem:[%s21 + $0x10] sm:$0xff]
    %v10940 = vld [vmem:[%s21 + $0x18] sm:$0xff]
    %v10941 = vld [vmem:[%s21 + $0x20] sm:$0xff]
    %v10942 = vld [vmem:[%s21 + $0x28] sm:$0xff]
    %v10943 = vld [vmem:[%s21 + $0x30] sm:$0xff]
    %v10944 = vld [vmem:[%s21 + $0x38] sm:$0xff]
    %v10945 = vld [vmem:[%s21 + $0x40] sm:$0xff]
    %v10946 = vld [vmem:[%s21 + $0x48] sm:$0xff]
    %v10947 = vld [vmem:[%s21 + $0x50] sm:$0xff]
    %v10948 = vld [vmem:[%s21 + $0x58] sm:$0xff]
    %v10949 = vld [vmem:[%s21 + $0x60] sm:$0xff]
    %v10950 = vld [vmem:[%s21 + $0x68] sm:$0xff]
    %v10951 = vld [vmem:[%s21 + $0x70] sm:$0xff]
    %v10952 = vld [vmem:[%s21 + $0x78] sm:$0xff]
    %v10953 = vld [vmem:[%s21 + $0x80] sm:$0xff]
    %v10954 = vld [vmem:[%s21 + $0x88] sm:$0xff]
    %v10955 = vld [vmem:[%s21 + $0x90] sm:$0xff]
    %v10956 = vld [vmem:[%s21 + $0x98] sm:$0xff]
    %v10957 = vld [vmem:[%s21 + $0xa0] sm:$0xff]
    %v10958 = vld [vmem:[%s21 + $0xa8] sm:$0xff]
    %v10959 = vld [vmem:[%s21 + $0xb0] sm:$0xff]
    %v10960 = vld [vmem:[%s21 + $0xb8] sm:$0xff]
    %v10961 = vld [vmem:[%s21 + $0xc0] sm:$0xff]
    %v10962 = vld [vmem:[%s21 + $0xc8] sm:$0xff]
    %v10963 = vld [vmem:[%s21 + $0xd0] sm:$0xff]
    %v10964 = vld [vmem:[%s21 + $0xd8] sm:$0xff]
    %v10965 = vld [vmem:[%s21 + $0xe0] sm:$0xff]
    %v10966 = vld [vmem:[%s21 + $0xe8] sm:$0xff]
    %v10967 = vld [vmem:[%s21 + $0xf0] sm:$0xff]
    %v10968 = vld [vmem:[%s21 + $0xf8] sm:$0xff]
    %v10969 = vld [vmem:[%s21 + $0x100] sm:$0xff]
    %v10970 = vld [vmem:[%s21 + $0x108] sm:$0xff]
    %v10971 = vld [vmem:[%s21 + $0x110] sm:$0xff]
    %v10972 = vld [vmem:[%s21 + $0x118] sm:$0xff]
    %v11009 = vunpack.c.l.b16 %v10937
    %v11010 = vunpack.c.h.b16 %v10937
    %v11011 = vunpack.c.l.b16 %v10938
    %v11012 = vunpack.c.h.b16 %v10938
    %v11013 = vunpack.c.l.b16 %v10939
    %v11014 = vunpack.c.h.b16 %v10939
    %v11015 = vunpack.c.l.b16 %v10940
    %v11016 = vunpack.c.h.b16 %v10940
    %v11017 = vunpack.c.l.b16 %v10941
    %v11018 = vunpack.c.h.b16 %v10941
    %v11019 = vunpack.c.l.b16 %v10942
    %v11020 = vunpack.c.h.b16 %v10942
    %v11021 = vunpack.c.l.b16 %v10943
    %v11022 = vunpack.c.h.b16 %v10943
    %v11023 = vunpack.c.l.b16 %v10944
    %v11024 = vunpack.c.h.b16 %v10944
    %v11025 = vunpack.c.l.b16 %v10945
    %v11026 = vunpack.c.h.b16 %v10945
    %v11027 = vunpack.c.l.b16 %v10946
    %v11028 = vunpack.c.h.b16 %v10946
    %v11029 = vunpack.c.l.b16 %v10947
    %v11030 = vunpack.c.h.b16 %v10947
    %v11031 = vunpack.c.l.b16 %v10948
    %v11032 = vunpack.c.h.b16 %v10948
    %v11033 = vunpack.c.l.b16 %v10949
    %v11034 = vunpack.c.h.b16 %v10949
    %v11035 = vunpack.c.l.b16 %v10950
    %v11036 = vunpack.c.h.b16 %v10950
    %v11037 = vunpack.c.l.b16 %v10951
    %v11038 = vunpack.c.h.b16 %v10951
    %v11039 = vunpack.c.l.b16 %v10952
    %v11040 = vunpack.c.h.b16 %v10952
    %v11041 = vunpack.c.l.b16 %v10953
    %v11042 = vunpack.c.h.b16 %v10953
    %v11043 = vunpack.c.l.b16 %v10954
    %v11044 = vunpack.c.h.b16 %v10954
    %v11045 = vunpack.c.l.b16 %v10955
    %v11046 = vunpack.c.h.b16 %v10955
    %v11047 = vunpack.c.l.b16 %v10956
    %v11048 = vunpack.c.h.b16 %v10956
    %v11049 = vunpack.c.l.b16 %v10957
    %v11050 = vunpack.c.h.b16 %v10957
    %v11051 = vunpack.c.l.b16 %v10958
    %v11052 = vunpack.c.h.b16 %v10958
    %v11053 = vunpack.c.l.b16 %v10959
    %v11054 = vunpack.c.h.b16 %v10959
    %v11055 = vunpack.c.l.b16 %v10960
    %v11056 = vunpack.c.h.b16 %v10960
    %v11057 = vunpack.c.l.b16 %v10961
    %v11058 = vunpack.c.h.b16 %v10961
    %v11059 = vunpack.c.l.b16 %v10962
    %v11060 = vunpack.c.h.b16 %v10962
    %v11061 = vunpack.c.l.b16 %v10963
    %v11062 = vunpack.c.h.b16 %v10963
    %v11063 = vunpack.c.l.b16 %v10964
    %v11064 = vunpack.c.h.b16 %v10964
    %v11065 = vunpack.c.l.b16 %v10965
    %v11066 = vunpack.c.h.b16 %v10965
    %v11067 = vunpack.c.l.b16 %v10966
    %v11068 = vunpack.c.h.b16 %v10966
    %v11069 = vunpack.c.l.b16 %v10967
    %v11070 = vunpack.c.h.b16 %v10967
    %v11071 = vunpack.c.l.b16 %v10968
    %v11072 = vunpack.c.h.b16 %v10968
    %v11073 = vunpack.c.l.b16 %v10969
    %v11074 = vunpack.c.h.b16 %v10969
    %v11075 = vunpack.c.l.b16 %v10970
    %v11076 = vunpack.c.h.b16 %v10970
    %v11077 = vunpack.c.l.b16 %v10971
    %v11078 = vunpack.c.h.b16 %v10971
    %v11079 = vunpack.c.l.b16 %v10972
    %v11080 = vunpack.c.h.b16 %v10972
    %v11081 = vpack.c.b16 %v11013, %v11009
    %v11082 = vpack.c.b16 %v11014, %v11010
    %v11083 = vpack.c.b16 %v11015, %v11011
    %v11084 = vpack.c.b16 %v11016, %v11012
    %v11085 = vpack.c.b16 %v11021, %v11017
    %v11086 = vpack.c.b16 %v11022, %v11018
    %v11087 = vpack.c.b16 %v11023, %v11019
    %v11088 = vpack.c.b16 %v11024, %v11020
    %v11089 = vpack.c.b16 %v11029, %v11025
    %v11090 = vpack.c.b16 %v11030, %v11026
    %v11091 = vpack.c.b16 %v11031, %v11027
    %v11092 = vpack.c.b16 %v11032, %v11028
    %v11093 = vpack.c.b16 %v11037, %v11033
    %v11094 = vpack.c.b16 %v11038, %v11034
    %v11095 = vpack.c.b16 %v11039, %v11035
    %v11096 = vpack.c.b16 %v11040, %v11036
    %v11097 = vpack.c.b16 %v11045, %v11041
    %v11098 = vpack.c.b16 %v11046, %v11042
    %v11099 = vpack.c.b16 %v11047, %v11043
    %v11100 = vpack.c.b16 %v11048, %v11044
    %v11101 = vpack.c.b16 %v11053, %v11049
    %v11102 = vpack.c.b16 %v11054, %v11050
    %v11103 = vpack.c.b16 %v11055, %v11051
    %v11104 = vpack.c.b16 %v11056, %v11052
    %v11105 = vpack.c.b16 %v11061, %v11057
    %v11106 = vpack.c.b16 %v11062, %v11058
    %v11107 = vpack.c.b16 %v11063, %v11059
    %v11108 = vpack.c.b16 %v11064, %v11060
    %v11109 = vpack.c.b16 %v11069, %v11065
    %v11110 = vpack.c.b16 %v11070, %v11066
    %v11111 = vpack.c.b16 %v11071, %v11067
    %v11112 = vpack.c.b16 %v11072, %v11068
    %v11113 = vpack.c.b16 %v11077, %v11073
    %v11114 = vpack.c.b16 %v11078, %v11074
    %v11115 = vpack.c.b16 %v11079, %v11075
    %v11116 = vpack.c.b16 %v11080, %v11076
    %v11145 = vsel %vm10181, %v11084, 0
    %v11148 = vsel %vm10181, %v11088, 0
    %v11151 = vsel %vm10181, %v11092, 0
    %v11154 = vsel %vm10181, %v11096, 0
    %v11157 = vsel %vm10181, %v11100, 0
    %v11160 = vsel %vm10181, %v11104, 0
    %v11163 = vsel %vm10181, %v11108, 0
    %v11166 = vsel %vm10181, %v11112, 0
    %v11169 = vsel %vm10181, %v11116, 0
    %11171 = vmatpush.bf16.msra.mxu0 %v10914
    %11172 = vmatpush.bf16.msra.mxu0 %v10913
    %11173 = vmatpush.bf16.msra.mxu0 %v10912
    %11174 = vmatpush.bf16.msra.mxu0 %v10911
    %11175 = vmatpush.bf16.msra.mxu0 %v10910
    %11176 = vmatpush.bf16.msra.mxu0 %v10909
    %11177 = vmatpush.bf16.msra.mxu0 %v10908
    %11178 = vmatpush.bf16.msra.mxu0 %v10907
    %11179 = vmatmul.bf16.gmra.mxu0 %v11081
    %v11180 = vpop.f32.mrf.mxu0
    %v11181 = vadd.f32 0.0, %v11180
    %v11182 = vpop.f32.mrf.mxu0
    %v11183 = vadd.f32 0.0, %v11182
    %11184 = vmatmul.bf16.gmra.mxu0 %v11085
    %v11185 = vpop.f32.mrf.mxu0
    %v11186 = vadd.f32 0.0, %v11185
    %v11187 = vpop.f32.mrf.mxu0
    %v11188 = vadd.f32 0.0, %v11187
    %11189 = vmatmul.bf16.gmra.mxu0 %v11089
    %v11190 = vpop.f32.mrf.mxu0
    %v11191 = vadd.f32 0.0, %v11190
    %v11192 = vpop.f32.mrf.mxu0
    %v11193 = vadd.f32 0.0, %v11192
    %11194 = vmatmul.bf16.gmra.mxu0 %v11093
    %v11195 = vpop.f32.mrf.mxu0
    %v11196 = vadd.f32 0.0, %v11195
    %v11197 = vpop.f32.mrf.mxu0
    %v11198 = vadd.f32 0.0, %v11197
    %11199 = vmatmul.bf16.gmra.mxu0 %v11097
    %v11200 = vpop.f32.mrf.mxu0
    %v11201 = vadd.f32 0.0, %v11200
    %v11202 = vpop.f32.mrf.mxu0
    %v11203 = vadd.f32 0.0, %v11202
    %11204 = vmatmul.bf16.gmra.mxu0 %v11101
    %v11205 = vpop.f32.mrf.mxu0
    %v11206 = vadd.f32 0.0, %v11205
    %v11207 = vpop.f32.mrf.mxu0
    %v11208 = vadd.f32 0.0, %v11207
    %11209 = vmatmul.bf16.gmra.mxu0 %v11105
    %v11210 = vpop.f32.mrf.mxu0
    %v11211 = vadd.f32 0.0, %v11210
    %v11212 = vpop.f32.mrf.mxu0
    %v11213 = vadd.f32 0.0, %v11212
    %11214 = vmatmul.bf16.gmra.mxu0 %v11109
    %v11215 = vpop.f32.mrf.mxu0
    %v11216 = vadd.f32 0.0, %v11215
    %v11217 = vpop.f32.mrf.mxu0
    %v11218 = vadd.f32 0.0, %v11217
    %11219 = vmatmul.bf16.gmra.mxu0 %v11113
    %v11220 = vpop.f32.mrf.mxu0
    %v11221 = vadd.f32 0.0, %v11220
    %v11222 = vpop.f32.mrf.mxu0
    %v11223 = vadd.f32 0.0, %v11222
    %11224 = vdwg.mxu0
    %11225 = vmatpush.bf16.msra.mxu0 %v10922
    %11226 = vmatpush.bf16.msra.mxu0 %v10921
    %11227 = vmatpush.bf16.msra.mxu0 %v10920
    %11228 = vmatpush.bf16.msra.mxu0 %v10919
    %11229 = vmatpush.bf16.msra.mxu0 %v10918
    %11230 = vmatpush.bf16.msra.mxu0 %v10917
    %11231 = vmatpush.bf16.msra.mxu0 %v10916
    %11232 = vmatpush.bf16.msra.mxu0 %v10915
    %11233 = vmatmul.bf16.gmra.mxu0 %v11082
    %v11234 = vpop.f32.mrf.mxu0
    %v11235 = vadd.f32 %v11181, %v11234
    %v11236 = vpop.f32.mrf.mxu0
    %v11237 = vadd.f32 %v11183, %v11236
    %11238 = vmatmul.bf16.gmra.mxu0 %v11086
    %v11239 = vpop.f32.mrf.mxu0
    %v11240 = vadd.f32 %v11186, %v11239
    %v11241 = vpop.f32.mrf.mxu0
    %v11242 = vadd.f32 %v11188, %v11241
    %11243 = vmatmul.bf16.gmra.mxu0 %v11090
    %v11244 = vpop.f32.mrf.mxu0
    %v11245 = vadd.f32 %v11191, %v11244
    %v11246 = vpop.f32.mrf.mxu0
    %v11247 = vadd.f32 %v11193, %v11246
    %11248 = vmatmul.bf16.gmra.mxu0 %v11094
    %v11249 = vpop.f32.mrf.mxu0
    %v11250 = vadd.f32 %v11196, %v11249
    %v11251 = vpop.f32.mrf.mxu0
    %v11252 = vadd.f32 %v11198, %v11251
    %11253 = vmatmul.bf16.gmra.mxu0 %v11098
    %v11254 = vpop.f32.mrf.mxu0
    %v11255 = vadd.f32 %v11201, %v11254
    %v11256 = vpop.f32.mrf.mxu0
    %v11257 = vadd.f32 %v11203, %v11256
    %11258 = vmatmul.bf16.gmra.mxu0 %v11102
    %v11259 = vpop.f32.mrf.mxu0
    %v11260 = vadd.f32 %v11206, %v11259
    %v11261 = vpop.f32.mrf.mxu0
    %v11262 = vadd.f32 %v11208, %v11261
    %11263 = vmatmul.bf16.gmra.mxu0 %v11106
    %v11264 = vpop.f32.mrf.mxu0
    %v11265 = vadd.f32 %v11211, %v11264
    %v11266 = vpop.f32.mrf.mxu0
    %v11267 = vadd.f32 %v11213, %v11266
    %11268 = vmatmul.bf16.gmra.mxu0 %v11110
    %v11269 = vpop.f32.mrf.mxu0
    %v11270 = vadd.f32 %v11216, %v11269
    %v11271 = vpop.f32.mrf.mxu0
    %v11272 = vadd.f32 %v11218, %v11271
    %11273 = vmatmul.bf16.gmra.mxu0 %v11114
    %v11274 = vpop.f32.mrf.mxu0
    %v11275 = vadd.f32 %v11221, %v11274
    %v11276 = vpop.f32.mrf.mxu0
    %v11277 = vadd.f32 %v11223, %v11276
    %11278 = vdwg.mxu0
    %11279 = vmatpush.bf16.msra.mxu0 %v10930
    %11280 = vmatpush.bf16.msra.mxu0 %v10929
    %11281 = vmatpush.bf16.msra.mxu0 %v10928
    %11282 = vmatpush.bf16.msra.mxu0 %v10927
    %11283 = vmatpush.bf16.msra.mxu0 %v10926
    %11284 = vmatpush.bf16.msra.mxu0 %v10925
    %11285 = vmatpush.bf16.msra.mxu0 %v10924
    %11286 = vmatpush.bf16.msra.mxu0 %v10923
    %11287 = vmatmul.bf16.gmra.mxu0 %v11083
    %v11288 = vpop.f32.mrf.mxu0
    %v11289 = vadd.f32 %v11235, %v11288
    %v11290 = vpop.f32.mrf.mxu0
    %v11291 = vadd.f32 %v11237, %v11290
    %11292 = vmatmul.bf16.gmra.mxu0 %v11087
    %v11293 = vpop.f32.mrf.mxu0
    %v11294 = vadd.f32 %v11240, %v11293
    %v11295 = vpop.f32.mrf.mxu0
    %v11296 = vadd.f32 %v11242, %v11295
    %11297 = vmatmul.bf16.gmra.mxu0 %v11091
    %v11298 = vpop.f32.mrf.mxu0
    %v11299 = vadd.f32 %v11245, %v11298
    %v11300 = vpop.f32.mrf.mxu0
    %v11301 = vadd.f32 %v11247, %v11300
    %11302 = vmatmul.bf16.gmra.mxu0 %v11095
    %v11303 = vpop.f32.mrf.mxu0
    %v11304 = vadd.f32 %v11250, %v11303
    %v11305 = vpop.f32.mrf.mxu0
    %v11306 = vadd.f32 %v11252, %v11305
    %11307 = vmatmul.bf16.gmra.mxu0 %v11099
    %v11308 = vpop.f32.mrf.mxu0
    %v11309 = vadd.f32 %v11255, %v11308
    %v11310 = vpop.f32.mrf.mxu0
    %v11311 = vadd.f32 %v11257, %v11310
    %11312 = vmatmul.bf16.gmra.mxu0 %v11103
    %v11313 = vpop.f32.mrf.mxu0
    %v11314 = vadd.f32 %v11260, %v11313
    %v11315 = vpop.f32.mrf.mxu0
    %v11316 = vadd.f32 %v11262, %v11315
    %11317 = vmatmul.bf16.gmra.mxu0 %v11107
    %v11318 = vpop.f32.mrf.mxu0
    %v11319 = vadd.f32 %v11265, %v11318
    %v11320 = vpop.f32.mrf.mxu0
    %v11321 = vadd.f32 %v11267, %v11320
    %11322 = vmatmul.bf16.gmra.mxu0 %v11111
    %v11323 = vpop.f32.mrf.mxu0
    %v11324 = vadd.f32 %v11270, %v11323
    %v11325 = vpop.f32.mrf.mxu0
    %v11326 = vadd.f32 %v11272, %v11325
    %11327 = vmatmul.bf16.gmra.mxu0 %v11115
    %v11328 = vpop.f32.mrf.mxu0
    %v11329 = vadd.f32 %v11275, %v11328
    %v11330 = vpop.f32.mrf.mxu0
    %v11331 = vadd.f32 %v11277, %v11330
    %11332 = vdwg.mxu0
    %11333 = vmatpush.bf16.msra.mxu0 0
    %11334 = vmatpush.bf16.msra.mxu0 0
    %11335 = vmatpush.bf16.msra.mxu0 %v10936
    %11336 = vmatpush.bf16.msra.mxu0 %v10935
    %11337 = vmatpush.bf16.msra.mxu0 %v10934
    %11338 = vmatpush.bf16.msra.mxu0 %v10933
    %11339 = vmatpush.bf16.msra.mxu0 %v10932
    %11340 = vmatpush.bf16.msra.mxu0 %v10931
    %11341 = vmatmul.bf16.gmra.mxu0 %v11145
    %v11342 = vpop.f32.mrf.mxu0
    %v11343 = vadd.f32 %v11289, %v11342
    %v11344 = vpop.f32.mrf.mxu0
    %v11345 = vadd.f32 %v11291, %v11344
    %11346 = vmatmul.bf16.gmra.mxu0 %v11148
    %v11347 = vpop.f32.mrf.mxu0
    %v11348 = vadd.f32 %v11294, %v11347
    %v11349 = vpop.f32.mrf.mxu0
    %v11350 = vadd.f32 %v11296, %v11349
    %11351 = vmatmul.bf16.gmra.mxu0 %v11151
    %v11352 = vpop.f32.mrf.mxu0
    %v11353 = vadd.f32 %v11299, %v11352
    %v11354 = vpop.f32.mrf.mxu0
    %v11355 = vadd.f32 %v11301, %v11354
    %11356 = vmatmul.bf16.gmra.mxu0 %v11154
    %v11357 = vpop.f32.mrf.mxu0
    %v11358 = vadd.f32 %v11304, %v11357
    %v11359 = vpop.f32.mrf.mxu0
    %v11360 = vadd.f32 %v11306, %v11359
    %11361 = vmatmul.bf16.gmra.mxu0 %v11157
    %v11362 = vpop.f32.mrf.mxu0
    %v11363 = vadd.f32 %v11309, %v11362
    %v11364 = vpop.f32.mrf.mxu0
    %v11365 = vadd.f32 %v11311, %v11364
    %11366 = vmatmul.bf16.gmra.mxu0 %v11160
    %v11367 = vpop.f32.mrf.mxu0
    %v11368 = vadd.f32 %v11314, %v11367
    %v11369 = vpop.f32.mrf.mxu0
    %v11370 = vadd.f32 %v11316, %v11369
    %11371 = vmatmul.bf16.gmra.mxu0 %v11163
    %v11372 = vpop.f32.mrf.mxu0
    %v11373 = vadd.f32 %v11319, %v11372
    %v11374 = vpop.f32.mrf.mxu0
    %v11375 = vadd.f32 %v11321, %v11374
    %11376 = vmatmul.bf16.gmra.mxu0 %v11166
    %v11377 = vpop.f32.mrf.mxu0
    %v11378 = vadd.f32 %v11324, %v11377
    %v11379 = vpop.f32.mrf.mxu0
    %v11380 = vadd.f32 %v11326, %v11379
    %11381 = vmatmul.bf16.gmra.mxu0 %v11169
    %v11382 = vpop.f32.mrf.mxu0
    %v11383 = vadd.f32 %v11329, %v11382
    %v11384 = vpop.f32.mrf.mxu0
    %v11385 = vadd.f32 %v11331, %v11384
    %11386 = vdwg.mxu0
    %v11387 = vld [vmem:[%s23] sm:$0xff]
    %v11388 = vld [vmem:[%s23 + $0x8] sm:$0xff]
    %v11389 = vld [vmem:[%s23 + $0x10] sm:$0xff]
    %v11390 = vld [vmem:[%s23 + $0x18] sm:$0xff]
    %v11391 = vld [vmem:[%s23 + $0x20] sm:$0xff]
    %v11392 = vld [vmem:[%s23 + $0x28] sm:$0xff]
    %v11393 = vld [vmem:[%s23 + $0x30] sm:$0xff]
    %v11394 = vld [vmem:[%s23 + $0x38] sm:$0xff]
    %v11395 = vld [vmem:[%s23 + $0x40] sm:$0xff]
    %v11396 = vld [vmem:[%s23 + $0x48] sm:$0xff]
    %v11397 = vld [vmem:[%s23 + $0x50] sm:$0xff]
    %v11398 = vld [vmem:[%s23 + $0x58] sm:$0xff]
    %v11399 = vld [vmem:[%s23 + $0x60] sm:$0xff]
    %v11400 = vld [vmem:[%s23 + $0x68] sm:$0xff]
    %v11401 = vld [vmem:[%s23 + $0x70] sm:$0xff]
    %v11402 = vld [vmem:[%s23 + $0x78] sm:$0xff]
    %v11403 = vld [vmem:[%s23 + $0x80] sm:$0xff]
    %v11404 = vld [vmem:[%s23 + $0x88] sm:$0xff]
    %v11405 = vmul.f32 %v11343, %v11387
    %v11406 = vmul.f32 %v11345, %v11388
    %v11407 = vmul.f32 %v11348, %v11389
    %v11408 = vmul.f32 %v11350, %v11390
    %v11409 = vmul.f32 %v11353, %v11391
    %v11410 = vmul.f32 %v11355, %v11392
    %v11411 = vmul.f32 %v11358, %v11393
    %v11412 = vmul.f32 %v11360, %v11394
    %v11413 = vmul.f32 %v11363, %v11395
    %v11414 = vmul.f32 %v11365, %v11396
    %v11415 = vmul.f32 %v11368, %v11397
    %v11416 = vmul.f32 %v11370, %v11398
    %v11417 = vmul.f32 %v11373, %v11399
    %v11418 = vmul.f32 %v11375, %v11400
    %v11419 = vmul.f32 %v11378, %v11401
    %v11420 = vmul.f32 %v11380, %v11402
    %v11421 = vmul.f32 %v11383, %v11403
    %v11422 = vmul.f32 %v11385, %v11404
    %v11423 = vld [vmem:[%s24] sm:$0xff]
    %v11424 = vld [vmem:[%s24 + $0x8] sm:$0x3f]
    %vm11425 = vcmask 113664
    %v11427 = vsel %vm11425, %v11405, 0
    %v11430 = vsel %vm11425, %v11406, 0
    %v11433 = vsel %vm11425, %v11407, 0
    %v11436 = vsel %vm11425, %v11408, 0
    %v11439 = vsel %vm11425, %v11409, 0
    %v11442 = vsel %vm11425, %v11410, 0
    %v11445 = vsel %vm11425, %v11411, 0
    %v11448 = vsel %vm11425, %v11412, 0
    %v11451 = vsel %vm11425, %v11413, 0
    %v11454 = vsel %vm11425, %v11414, 0
    %v11457 = vsel %vm11425, %v11415, 0
    %v11460 = vsel %vm11425, %v11416, 0
    %v11463 = vsel %vm11425, %v11417, 0
    %v11466 = vsel %vm11425, %v11418, 0
    %v11469 = vsel %vm11425, %v11419, 0
    %v11472 = vsel %vm11425, %v11420, 0
    %v11475 = vsel %vm11425, %v11421, 0
    %v11478 = vsel %vm11425, %v11422, 0
    %v11481 = vsel %vm6794, %v11424, 0
    %11483 = vmatpush.msra.mxu0 0.0
    %11484 = vmatpush.msra.mxu0 0.0
    %11485 = vmatpush.msra.mxu0 0.0
    %11486 = vmatpush.msra.mxu0 0.0
    %11487 = vmatpush.msra.mxu0 0.0
    %11488 = vmatpush.msra.mxu0 0.0
    %11489 = vmatpush.msra.mxu0 0.0
    %11490 = vmatpush.msra.mxu0 0.0
    %11491 = vmatpush.msra.mxu0 0.0
    %11492 = vmatpush.msra.mxu0 0.0
    %11493 = vmatpush.msra.mxu0 0.0
    %11494 = vmatpush.msra.mxu0 0.0
    %11495 = vmatpush.msra.mxu0 0.0
    %11496 = vmatpush.msra.mxu0 0.0
    %11497 = vmatpush.msra.mxu0 %v11481
    %11498 = vmatpush.msra.mxu0 %v11423
    %11499 = vmatmul.f32.gmra.mxu0 %v11427
    %v11500 = vpop.f32.mrf.mxu0
    %v11501 = vadd.f32 0.0, %v11500
    %11502 = vmatmul.f32.gmra.mxu0 %v11430
    %v11503 = vpop.f32.mrf.mxu0
    %v11504 = vadd.f32 0.0, %v11503
    %11505 = vmatmul.f32.gmra.mxu0 %v11433
    %v11506 = vpop.f32.mrf.mxu0
    %v11507 = vadd.f32 0.0, %v11506
    %11508 = vmatmul.f32.gmra.mxu0 %v11436
    %v11509 = vpop.f32.mrf.mxu0
    %v11510 = vadd.f32 0.0, %v11509
    %11511 = vmatmul.f32.gmra.mxu0 %v11439
    %v11512 = vpop.f32.mrf.mxu0
    %v11513 = vadd.f32 0.0, %v11512
    %11514 = vmatmul.f32.gmra.mxu0 %v11442
    %v11515 = vpop.f32.mrf.mxu0
    %v11516 = vadd.f32 0.0, %v11515
    %11517 = vmatmul.f32.gmra.mxu0 %v11445
    %v11518 = vpop.f32.mrf.mxu0
    %v11519 = vadd.f32 0.0, %v11518
    %11520 = vmatmul.f32.gmra.mxu0 %v11448
    %v11521 = vpop.f32.mrf.mxu0
    %v11522 = vadd.f32 0.0, %v11521
    %11523 = vmatmul.f32.gmra.mxu0 %v11451
    %v11524 = vpop.f32.mrf.mxu0
    %v11525 = vadd.f32 0.0, %v11524
    %11526 = vmatmul.f32.gmra.mxu0 %v11454
    %v11527 = vpop.f32.mrf.mxu0
    %v11528 = vadd.f32 0.0, %v11527
    %11529 = vmatmul.f32.gmra.mxu0 %v11457
    %v11530 = vpop.f32.mrf.mxu0
    %v11531 = vadd.f32 0.0, %v11530
    %11532 = vmatmul.f32.gmra.mxu0 %v11460
    %v11533 = vpop.f32.mrf.mxu0
    %v11534 = vadd.f32 0.0, %v11533
    %11535 = vmatmul.f32.gmra.mxu0 %v11463
    %v11536 = vpop.f32.mrf.mxu0
    %v11537 = vadd.f32 0.0, %v11536
    %11538 = vmatmul.f32.gmra.mxu0 %v11466
    %v11539 = vpop.f32.mrf.mxu0
    %v11540 = vadd.f32 0.0, %v11539
    %11541 = vmatmul.f32.gmra.mxu0 %v11469
    %v11542 = vpop.f32.mrf.mxu0
    %v11543 = vadd.f32 0.0, %v11542
    %11544 = vmatmul.f32.gmra.mxu0 %v11472
    %v11545 = vpop.f32.mrf.mxu0
    %v11546 = vadd.f32 0.0, %v11545
    %11547 = vmatmul.f32.gmra.mxu0 %v11475
    %v11548 = vpop.f32.mrf.mxu0
    %v11549 = vadd.f32 0.0, %v11548
    %11550 = vmatmul.f32.gmra.mxu0 %v11478
    %v11551 = vpop.f32.mrf.mxu0
    %v11552 = vadd.f32 0.0, %v11551
    %11553 = vdwg.mxu0
    %vm11554 = vcmask 15360
    %v11555 = vsel %vm11554, %v11501, 0.0
    %v11556 = vsel %vm11554, %v11504, 0.0
    %v11557 = vadd.f32 %v11555, %v11556
    %v11558 = vsel %vm11554, %v11507, 0.0
    %v11559 = vadd.f32 %v11557, %v11558
    %v11560 = vsel %vm11554, %v11510, 0.0
    %v11561 = vadd.f32 %v11559, %v11560
    %v11562 = vsel %vm11554, %v11513, 0.0
    %v11563 = vadd.f32 %v11561, %v11562
    %v11564 = vsel %vm11554, %v11516, 0.0
    %v11565 = vadd.f32 %v11563, %v11564
    %v11566 = vsel %vm11554, %v11519, 0.0
    %v11567 = vadd.f32 %v11565, %v11566
    %v11568 = vsel %vm11554, %v11522, 0.0
    %v11569 = vadd.f32 %v11567, %v11568
    %v11570 = vsel %vm11554, %v11525, 0.0
    %v11571 = vadd.f32 %v11569, %v11570
    %v11572 = vsel %vm11554, %v11528, 0.0
    %v11573 = vadd.f32 %v11571, %v11572
    %v11574 = vsel %vm11554, %v11531, 0.0
    %v11575 = vadd.f32 %v11573, %v11574
    %v11576 = vsel %vm11554, %v11534, 0.0
    %v11577 = vadd.f32 %v11575, %v11576
    %v11578 = vsel %vm11554, %v11537, 0.0
    %v11579 = vadd.f32 %v11577, %v11578
    %v11580 = vsel %vm11554, %v11540, 0.0
    %v11581 = vadd.f32 %v11579, %v11580
    %v11582 = vsel %vm11554, %v11543, 0.0
    %v11583 = vadd.f32 %v11581, %v11582
    %v11584 = vsel %vm11554, %v11546, 0.0
    %v11585 = vadd.f32 %v11583, %v11584
    %v11586 = vsel %vm11554, %v11549, 0.0
    %v11587 = vadd.f32 %v11585, %v11586
    %v11588 = vsel %vm11554, %v11552, 0.0
    %v11589 = vadd.f32 %v11587, %v11588
    %v11590 = vrot.slane %v11589, 4
    %v11591 = vadd.f32 %v11589, %v11590
    %v11592 = vrot.slane %v11591, 2
    %v11593 = vadd.f32 %v11591, %v11592
    %v11594 = vrot.slane %v11593, 1
    %v11595 = vadd.f32 %v11593, %v11594
    %v11596 = vld [vmem:[#allocation2] sm:$0x1]
    %11598 = vset.pattern.permute.xlu0 0
    %11599 = vperm.xlu0 %11598, %v11596
    %v11600 = vpop.permute.xlu0 %11599
    %v11602 = vperm.slane %v11600, 0
    %v11603 = vadd.f32 %v11595, %v11602
    %v11604 = vxor.u32 %v11603, 2147483648
    %v11605 = vmul.f32 %v11604, 1.442695
    %v11606 = vpow.pop %v11605
    %v11607 = vadd.f32 %v11606, 1.0
    %v11608 = vrcp.pop %v11607
    %v11609 = vmul.f32 %v11607, %v11608
    %v11610 = vsub.f32 1.0, %v11609
    %v11611 = vmul.f32 %v11608, %v11610
    %v11612 = vadd.f32 %v11608, %v11611
    %vm11613 = vweird.f32 %v11607
    %vm11614 = vweird.f32 %v11608
    %vm11615 = vmor %vm11613, %vm11614
    %v11616 = vsel %vm11615, %v11608, %v11612
    %v11617 = vand.u32 2147483647, %v11607
    %vm11618 = vcmp.eq.f32.partialorder %v11617, 8.507059e+37
    %v11619 = vand.u32 %v11607, 2147483648
    %v11620 = vor.u32 1.1754944e-38, %v11619
    %v11621 = vsel %vm11618, %v11620, %v11616
    %v11622 = vmul.f32 1.0, %v11621
    %vm11623 = vcmask 8192
    %11624 = vst.msk [vmem:[#allocation3] sm:$0x1] %vm11623, %v11622
    // Predicated region
    $region106: #{eye_classifier_forward.1} parent=1 // pred_check
      _
    $region107: #{eye_classifier_forward.1} parent=1 // pred_check_branch
      %11626 = sbr.rel (0) target = $region109
    $region108: #{eye_classifier_forward.1} parent=1 // pred_region
      %11628 = vsyncadd [#allocation4], 0
      %s11630 = sshll.u32 [#allocation3], 4
      %s11631 = int_to_ptr.vmem [resolvable:$true] %s11630
      %s11632 = sshll.u32 %s26, 4
      %s11633 = int_to_ptr.hbm [resolvable:$true] %s11632
      %11635 = dma.vmem_to_hbm [thread:$0]  %s11631, 16, %s11633, [#allocation4]
    $region109: #{eye_classifier_forward.1} parent=1 // pred_fallthru
      _
    // Predicated region
    $region110: #{eye_classifier_forward.1} parent=1 // pred_check
      _
    $region111: #{eye_classifier_forward.1} parent=1 // pred_check_branch
      %11637 = sbr.rel (0) target = $region113
    $region112: #{eye_classifier_forward.1} parent=1 // pred_region
      %11639 = dma.done [#allocation4], 16
    $region113: #{eye_classifier_forward.1} parent=1 // pred_fallthru
      _
    %11640 = vsyncpa [#allocation4], 1

</llo_original>
